<compile_context>
chip_gen: v6e
topology: v6e:2x2x1
jax: 0.10.0
libtpu: 0.0.40
codegen_flags: <defaults>
</compile_context>

<pallas_src>
import functools

import jax
import jax.numpy as jnp
from jax.experimental import pallas as pl
from jax.experimental.pallas import tpu as pltpu

EPS = 1e-5
F32 = jnp.float32
BF16 = jnp.bfloat16


# ------------------------------ small helpers --------------------------------

def _round_up(x, k):
    return (x + k - 1) // k * k


@functools.lru_cache(maxsize=1)
def _vmem_limit_bytes():
    """Generation-dependent VMEM cap: physical - 16MiB, clamped to [32,112]MiB."""
    try:
        cap = int(pltpu.get_tpu_info().vmem_capacity_bytes)
    except Exception:
        cap = 64 * 1024 * 1024          # conservative (v7x-sized) fallback
    return int(min(max(cap - (16 << 20), 32 << 20), 112 << 20))


def _cparams():
    return pltpu.CompilerParams(dimension_semantics=("parallel",),
                                vmem_limit_bytes=_vmem_limit_bytes())


def _pick_tile(m, max_c):
    """Largest row tile (mult. of 8, <=1024, VMEM-bounded) dividing M, >=2 tiles."""
    budget = 24 * 1024 * 1024                       # rough per-step block budget
    cap = min(1024, m // 2, budget // (20 * max(max_c, 1)))
    cap = max(cap - cap % 8, 8)
    for t in range(cap, 7, -8):
        if m % t == 0:
            return t
    # TODO(synk): remainder tiles (masked partial tile) for M with no small
    # multiple-of-8 divisor; single-tile fallback disables pipelining.
    return m


def _tile_stats(y):
    """Per-tile [row-sum ; centered sum-of-squares] -> (2, C), f32."""
    n = y.shape[0]
    s = jnp.sum(y, axis=0, keepdims=True)
    d = y - s * (1.0 / n)
    return jnp.concatenate([s, jnp.sum(d * d, axis=0, keepdims=True)], axis=0)


def _finalize_bn(stats, gamma, beta, n_per_tile, total):
    """Merge per-tile (sum, centered-SSQ) partials -> per-channel scale/shift."""
    s = stats[:, 0, :]                      # (nt, C)
    ssd = stats[:, 1, :]                    # (nt, C)
    mean = jnp.sum(s, axis=0) / total
    tile_mean = s / n_per_tile
    var = (jnp.sum(ssd, axis=0)
           + n_per_tile * jnp.sum((tile_mean - mean) ** 2, axis=0)) / total
    var = jnp.maximum(var, 0.0)             # biased (training-mode) variance
    scale = gamma * jax.lax.rsqrt(var + EPS)
    shift = beta - mean * scale
    return scale.reshape(1, -1).astype(F32), shift.reshape(1, -1).astype(F32)


# ------------------------------ Pallas kernels -------------------------------

def conv1x1_stats_kernel(x_ref, w_ref, y_ref, st_ref):
    """y = x @ w (explicit bf16 MXU, f32 acc); emit per-tile BN partials."""
    x = x_ref[...].astype(BF16)
    y = jnp.dot(x, w_ref[...], preferred_element_type=jnp.float32)
    y_ref[...] = y.astype(y_ref.dtype)
    st_ref[0] = _tile_stats(y)


def bn_conv1x1_stats_kernel(y_in_ref, sc_ref, sh_ref, w_ref, y_ref, st_ref):
    """h = relu(y_in*scale + shift); y = h @ w; emit per-tile BN partials."""
    h = jnp.maximum(y_in_ref[...].astype(F32) * sc_ref[...] + sh_ref[...], 0.0)
    y = jnp.dot(h.astype(BF16), w_ref[...], preferred_element_type=jnp.float32)
    y_ref[...] = y.astype(y_ref.dtype)
    st_ref[0] = _tile_stats(y)


def bn_conv3x3_stats_kernel(H, W, Wp8, y1_ref, sc_ref, sh_ref, w_ref,
                            y_ref, st_ref, pad_ref, acc_ref):
    """Per image: h = relu(bn1(y1)) placed in a zero-bordered flat slab
    (row pitch Wp8, 1-wide border); 3x3 conv = 9 contiguous flat-offset MXU
    matmuls accumulated into an f32 VMEM scratch; masked BN2 partial stats;
    valid interior compacted into the output."""
    C = y1_ref.shape[-1]
    P = (H - 1) * Wp8 + W                       # accumulator rows (flat, padded)
    scale = sc_ref[...]                          # (1, C) f32
    shift = sh_ref[...]

    # Zero only the thin border (top row + row-1 col0, bottom row); the per-row
    # right/left border strips are zeroed inside the placement loop.
    pad_ref[0:Wp8 + 1, :] = jnp.zeros((Wp8 + 1, C), pad_ref.dtype)
    pad_ref[(H + 1) * Wp8:(H + 2) * Wp8, :] = jnp.zeros((Wp8, C), pad_ref.dtype)

    # BN1 + ReLU, row-by-row placement at column offset 1 inside the border.
    for h in range(H):
        r0 = (h + 1) * Wp8
        row = y1_ref[0, h * W:(h + 1) * W, :].astype(F32)
        pad_ref[r0 + 1:r0 + 1 + W, :] = jnp.maximum(row * scale + shift, 0.0)
        pad_ref[r0 + W + 1:r0 + Wp8 + 1, :] = jnp.zeros((Wp8 - W, C),
                                                        pad_ref.dtype)

    # 9 taps: contiguous flat-offset loads -> bf16 MXU matmul -> f32 VMEM acc.
    for t in range(9):
        dy, dx = divmod(t, 3)
        off = dy * Wp8 + dx
        tap = pad_ref[off:off + P, :].astype(BF16)
        part = jnp.dot(tap, w_ref[t], preferred_element_type=jnp.float32)
        if t == 0:
            acc_ref[...] = part
        else:
            acc_ref[...] = acc_ref[...] + part

    # Masked BN2 partial stats (only the H*W valid positions of the flat slab).
    acc = acc_ref[...]
    col = jax.lax.broadcasted_iota(jnp.int32, (P, 1), 0) % Wp8
    valid = col < W
    s = jnp.sum(jnp.where(valid, acc, 0.0), axis=0, keepdims=True)
    d = jnp.where(valid, acc - s * (1.0 / (H * W)), 0.0)
    st_ref[0] = jnp.concatenate([s, jnp.sum(d * d, axis=0, keepdims=True)],
                                axis=0)

    # Compact the valid interior rows into the (bf16) output.
    for h in range(H):
        y_ref[0, h * W:(h + 1) * W, :] = (
            acc_ref[h * Wp8:h * Wp8 + W, :].astype(y_ref.dtype))


def bn_add_relu_kernel(y_ref, sc_ref, sh_ref, res_ref, o_ref):
    """out = relu(y*scale + shift + identity)."""
    o_ref[...] = jnp.maximum(
        y_ref[...].astype(F32) * sc_ref[...] + sh_ref[...] + res_ref[...], 0.0)


# --------------------------------- forward -----------------------------------

@jax.jit
def block_forward(x_nchw, params):
    # TODO(synk): stride>1 and a non-None identity_downsample path are not
    # implemented (module defaults used: stride=1, identity_downsample=None).
    N, Cin, H, W = x_nchw.shape
    w1, w2, w3 = params["w1"], params["w2"], params["w3"]
    Cmid, Cexp = w1.shape[1], w3.shape[1]
    M = N * H * W
    TM = _pick_tile(M, max(Cin, Cexp))
    nt = M // TM
    Wp8 = _round_up(W + 2, 8)                 # padded row pitch (sublane aligned)
    P = (H - 1) * Wp8 + W

    # TODO(synk): accepting/returning NHWC (or folding the relayout into the
    # first/last kernel via in-kernel transposes) would remove these two
    # activation-sized HBM passes; kept in XLA for lowering robustness.
    x_flat = jnp.transpose(x_nchw, (0, 2, 3, 1)).astype(F32).reshape(M, Cin)

    row_spec = lambda c: pl.BlockSpec((TM, c), lambda i: (i, 0))
    vec_spec = lambda c: pl.BlockSpec((1, c), lambda i: (0, 0))
    stat_spec = lambda c: pl.BlockSpec((1, 2, c), lambda i: (i, 0, 0))
    full2 = lambda a, b: pl.BlockSpec((a, b), lambda i: (0, 0))

    # ---- stage 1: conv1 (1x1) + BN1 partial stats, tiled over M -------------
    y1, st1 = pl.pallas_call(
        conv1x1_stats_kernel,
        grid=(nt,),
        in_specs=[row_spec(Cin), full2(Cin, Cmid)],
        out_specs=(row_spec(Cmid), stat_spec(Cmid)),
        out_shape=(jax.ShapeDtypeStruct((M, Cmid), BF16),
                   jax.ShapeDtypeStruct((nt, 2, Cmid), F32)),
        compiler_params=_cparams(),
        cost_estimate=pl.CostEstimate(
            flops=2 * M * Cin * Cmid, transcendentals=0,
            bytes_accessed=4 * M * Cin + 2 * (Cin * Cmid + M * Cmid)),
    )(x_flat, w1)
    sc1, sh1 = _finalize_bn(st1, params["g1"], params["beta1"],
                            float(TM), float(M))

    # ---- stage 2: fused BN1+ReLU + conv2 (3x3, pad=1) + BN2 partial stats ---
    y1_img = y1.reshape(N, H * W, Cmid)
    k2 = functools.partial(bn_conv3x3_stats_kernel, H, W, Wp8)
    y2, st2 = pl.pallas_call(
        k2,
        grid=(N,),
        in_specs=[pl.BlockSpec((1, H * W, Cmid), lambda n: (n, 0, 0)),
                  pl.BlockSpec((1, Cmid), lambda n: (0, 0)),
                  pl.BlockSpec((1, Cmid), lambda n: (0, 0)),
                  pl.BlockSpec((9, Cmid, Cmid), lambda n: (0, 0, 0))],
        out_specs=(pl.BlockSpec((1, H * W, Cmid), lambda n: (n, 0, 0)),
                   pl.BlockSpec((1, 2, Cmid), lambda n: (n, 0, 0))),
        out_shape=(jax.ShapeDtypeStruct((N, H * W, Cmid), BF16),
                   jax.ShapeDtypeStruct((N, 2, Cmid), F32)),
        scratch_shapes=[pltpu.VMEM(((H + 2) * Wp8, Cmid), F32),   # padded slab
                        pltpu.VMEM((P, Cmid), F32)],              # f32 acc
        compiler_params=_cparams(),
        cost_estimate=pl.CostEstimate(
            flops=2 * N * P * 9 * Cmid * Cmid, transcendentals=0,
            bytes_accessed=2 * (2 * M * Cmid + 9 * Cmid * Cmid)),
    )(y1_img, sc1, sh1, w2)
    sc2, sh2 = _finalize_bn(st2, params["g2"], params["beta2"],
                            float(H * W), float(M))

    # ---- stage 3: fused BN2+ReLU + conv3 (1x1) + BN3 partial stats ----------
    y3, st3 = pl.pallas_call(
        bn_conv1x1_stats_kernel,
        grid=(nt,),
        in_specs=[row_spec(Cmid), vec_spec(Cmid), vec_spec(Cmid),
                  full2(Cmid, Cexp)],
        out_specs=(row_spec(Cexp), stat_spec(Cexp)),
        out_shape=(jax.ShapeDtypeStruct((M, Cexp), BF16),
                   jax.ShapeDtypeStruct((nt, 2, Cexp), F32)),
        compiler_params=_cparams(),
        cost_estimate=pl.CostEstimate(
            flops=2 * M * Cmid * Cexp, transcendentals=0,
            bytes_accessed=2 * (M * Cmid + Cmid * Cexp + M * Cexp)),
    )(y2.reshape(M, Cmid), sc2, sh2, w3)
    sc3, sh3 = _finalize_bn(st3, params["g3"], params["beta3"],
                            float(TM), float(M))

    # ---- stage 4: BN3 + residual add + ReLU, tiled over M -------------------
    out_flat = pl.pallas_call(
        bn_add_relu_kernel,
        grid=(nt,),
        in_specs=[row_spec(Cexp), vec_spec(Cexp), vec_spec(Cexp),
                  row_spec(Cexp)],
        out_specs=row_spec(Cexp),
        out_shape=jax.ShapeDtypeStruct((M, Cexp), F32),
        compiler_params=_cparams(),
        cost_estimate=pl.CostEstimate(
            flops=3 * M * Cexp, transcendentals=0,
            bytes_accessed=10 * M * Cexp),
    )(y3, sc3, sh3, x_flat)

    return jnp.transpose(out_flat.reshape(N, H, W, Cexp), (0, 3, 1, 2))


# ------------------------------ parameter setup -------------------------------

def init_params(key, in_channels, intermediate_channels):
    expansion = 4
    c_mid = intermediate_channels
    c_exp = c_mid * expansion
    assert in_channels == c_exp, "identity_downsample=None requires in == 4*mid"
    ks = jax.random.split(key, 12)

    # PyTorch-style OIHW weights (deterministic synthetic init)
    w1_oihw = 0.3 * jax.random.normal(ks[0], (c_mid, in_channels, 1, 1), F32)
    w2_oihw = 0.3 * jax.random.normal(ks[1], (c_mid, c_mid, 3, 3), F32)
    w3_oihw = 0.3 * jax.random.normal(ks[2], (c_exp, c_mid, 1, 1), F32)
    b1 = 0.1 * jax.random.normal(ks[3], (c_mid,), F32)
    b2 = 0.1 * jax.random.normal(ks[4], (c_mid,), F32)
    b3 = 0.1 * jax.random.normal(ks[5], (c_exp,), F32)
    g1 = 1.0 + 0.1 * jax.random.normal(ks[6], (c_mid,), F32)
    g2 = 1.0 + 0.1 * jax.random.normal(ks[7], (c_mid,), F32)
    g3 = 1.0 + 0.1 * jax.random.normal(ks[8], (c_exp,), F32)
    be1 = 0.1 * jax.random.normal(ks[9], (c_mid,), F32)
    be2 = 0.1 * jax.random.normal(ks[10], (c_mid,), F32)
    be3 = 0.1 * jax.random.normal(ks[11], (c_exp,), F32)

    torch_like = dict(w1=w1_oihw, w2=w2_oihw, w3=w3_oihw, b1=b1, b2=b2, b3=b3,
                      g1=g1, g2=g2, g3=g3, beta1=be1, beta2=be2, beta3=be3)

    # Kernel layout: bf16 [Cin, Cout] matmul weights; 3x3 as bf16 [9, Cin, Cout]
    # with tap index t = 3*kh + kw.  Conv biases are intentionally omitted:
    # a per-channel bias followed by training-mode BN cancels exactly.
    kernel_params = dict(
        w1=jnp.transpose(w1_oihw[:, :, 0, 0]).astype(BF16),
        w2=jnp.transpose(w2_oihw, (2, 3, 1, 0)).reshape(9, c_mid, c_mid)
              .astype(BF16),
        w3=jnp.transpose(w3_oihw[:, :, 0, 0]).astype(BF16),
        g1=g1, g2=g2, g3=g3, beta1=be1, beta2=be2, beta3=be3)
    return torch_like, kernel_params


# ------------------- pure-JAX (PyTorch-semantics) reference -------------------

def reference_forward(x, p):
    def conv(x, w, b, pad):
        y = jax.lax.conv_general_dilated(
            x, w, window_strides=(1, 1), padding=pad,
            dimension_numbers=("NCHW", "OIHW", "NCHW"),
            precision=jax.lax.Precision.HIGHEST)
        return y + b.reshape(1, -1, 1, 1)

    def bn(x, g, b):
        mu = jnp.mean(x, axis=(0, 2, 3), keepdims=True)
        var = jnp.mean((x - mu) ** 2, axis=(0, 2, 3), keepdims=True)
        return (g.reshape(1, -1, 1, 1) * (x - mu) * jax.lax.rsqrt(var + EPS)
                + b.reshape(1, -1, 1, 1))

    relu = lambda v: jnp.maximum(v, 0.0)
    identity = x
    h = relu(bn(conv(x, p["w1"], p["b1"], [(0, 0), (0, 0)]), p["g1"], p["beta1"]))
    h = relu(bn(conv(h, p["w2"], p["b2"], [(1, 1), (1, 1)]), p["g2"], p["beta2"]))
    h = bn(conv(h, p["w3"], p["b3"], [(0, 0), (0, 0)]), p["g3"], p["beta3"])
    return relu(h + identity)


# ------------------------------------ main ------------------------------------

if __name__ == "__main__":
    key = jax.random.PRNGKey(0)
    k_x, k_p = jax.random.split(key)

    N, H, W = 2, 16, 16
    intermediate_channels = 4
    in_channels = 4 * intermediate_channels       # 16: residual add is valid

    x = jax.random.normal(k_x, (N, in_channels, H, W), F32)
    torch_like, kernel_params = init_params(k_p, in_channels,
                                            intermediate_channels)

    out = jax.block_until_ready(block_forward(x, kernel_params))
    ref = reference_forward(x, torch_like)

    assert out.shape == (N, in_channels, H, W)
    max_err = float(jnp.max(jnp.abs(out - ref)))
    rel_err = float(jnp.linalg.norm(out - ref) / (jnp.linalg.norm(ref) + 1e-12))
    # Kernels use explicit bf16 MXU matmuls, bf16 weights and bf16 inter-stage
    # activations (f32 accumulation + f32 BN stats) vs. the f32-HIGHEST
    # reference; allow bf16-level elementwise error on O(1) activations.
    assert jnp.allclose(out, ref, atol=1e-1, rtol=1e-1), (max_err, rel_err)
    assert rel_err < 3e-2, rel_err
    print("KERNEL_OK")
</pallas_src>

<mosaic_0001>
module attributes {stable_mosaic.version = 11 : i64} {
  func.func @conv1x1_stats_kernel(%arg0: i32, %arg1: memref<256x16xf32, #tpu.memory_space<vmem>>, %arg2: memref<16x4xbf16, #tpu.memory_space<vmem>>, %arg3: memref<256x4xbf16, #tpu.memory_space<vmem>>, %arg4: memref<1x2x4xf32, #tpu.memory_space<vmem>>) attributes {dimension_semantics = [#tpu.dimension_semantics<parallel>], iteration_bounds = array<i64: 2>, scalar_prefetch = 0 : i64, scratch_operands = 0 : i64, tpu.core_type = #tpu.core_type<tc>, window_params = [{transform_indices = @transform_0, window_bounds = array<i64: 256, 16>}, {pipeline_mode = #tpu.pipeline_mode<synchronous>, transform_indices = @transform_1, window_bounds = array<i64: 16, 4>}, {transform_indices = @transform_2, window_bounds = array<i64: 256, 4>}, {transform_indices = @transform_3, window_bounds = array<i64: 1, 2, 4>}]} {
    %c0 = arith.constant 0 : index
    %c0_0 = arith.constant 0 : index
    %0 = vector.load %arg1[%c0, %c0_0] : memref<256x16xf32, #tpu.memory_space<vmem>>, vector<256x16xf32>
    %1 = arith.truncf %0 : vector<256x16xf32> to vector<256x16xbf16>
    %c0_1 = arith.constant 0 : index
    %c0_2 = arith.constant 0 : index
    %2 = vector.load %arg2[%c0_1, %c0_2] : memref<16x4xbf16, #tpu.memory_space<vmem>>, vector<16x4xbf16>
    %cst = arith.constant dense<0.000000e+00> : vector<256x4xf32>
    %3 = tpu.matmul %1, %2, %cst {dimension_numbers = #tpu.dot_dimension_numbers<[1], [0], [0], [1], [0, 0, 1, 1], [], []>} : vector<256x16xbf16>, vector<16x4xbf16>, vector<256x4xf32> -> vector<256x4xf32>
    %4 = arith.truncf %3 : vector<256x4xf32> to vector<256x4xbf16>
    %c0_3 = arith.constant 0 : index
    %c0_4 = arith.constant 0 : index
    %5 = vector.load %arg3[%c0_3, %c0_4] : memref<256x4xbf16, #tpu.memory_space<vmem>>, vector<256x4xbf16>
    tpu.vector_store %arg3[%c0_3, %c0_4], %4 {strides = array<i32>} : memref<256x4xbf16, #tpu.memory_space<vmem>>, vector<256x4xbf16>,
    %cst_5 = arith.constant dense<0.000000e+00> : vector<4xf32>
    %6 = vector.multi_reduction <add>, %3, %cst_5 [0] : vector<256x4xf32> to vector<4xf32>
    %7 = vector.shape_cast %6 : vector<4xf32> to vector<1x4xf32>
    %cst_6 = arith.constant 3.906250e-03 : f32
    %8 = vector.broadcast %cst_6 : f32 to vector<1x4xf32>
    %9 = arith.mulf %7, %8 : vector<1x4xf32>
    %10 = vector.broadcast %9 : vector<1x4xf32> to vector<256x4xf32>
    %11 = arith.subf %3, %10 : vector<256x4xf32>
    %12 = arith.mulf %11, %11 : vector<256x4xf32>
    %cst_7 = arith.constant dense<0.000000e+00> : vector<4xf32>
    %13 = vector.multi_reduction <add>, %12, %cst_7 [0] : vector<256x4xf32> to vector<4xf32>
    %14 = vector.shape_cast %13 : vector<4xf32> to vector<1x4xf32>
    %15 = tpu.concatenate %7, %14 in 0 : vector<1x4xf32>, vector<1x4xf32> -> vector<2x4xf32>
    %c0_8 = arith.constant 0 : index
    %c0_9 = arith.constant 0 : index
    %c0_10 = arith.constant 0 : index
    %16 = vector.load %arg4[%c0_8, %c0_9, %c0_10] : memref<1x2x4xf32, #tpu.memory_space<vmem>>, vector<1x2x4xf32>
    %17 = vector.shape_cast %16 : vector<1x2x4xf32> to vector<2x4xf32>
    %18 = vector.shape_cast %15 : vector<2x4xf32> to vector<1x2x4xf32>
    tpu.vector_store %arg4[%c0_8, %c0_9, %c0_10], %18 {strides = array<i32>} : memref<1x2x4xf32, #tpu.memory_space<vmem>>, vector<1x2x4xf32>,
    return
  }
  func.func @transform_0(%arg0: i32) -> (i32, i32) {
    %c0_i32 = arith.constant 0 : i32
    %c0_i32_0 = arith.constant 0 : i32
    return %arg0, %c0_i32 : i32, i32
  }
  func.func @transform_1(%arg0: i32) -> (i32, i32) {
    %c0_i32 = arith.constant 0 : i32
    %c0_i32_0 = arith.constant 0 : i32
    %c0_i32_1 = arith.constant 0 : i32
    return %c0_i32, %c0_i32_0 : i32, i32
  }
  func.func @transform_2(%arg0: i32) -> (i32, i32) {
    %c0_i32 = arith.constant 0 : i32
    %c0_i32_0 = arith.constant 0 : i32
    return %arg0, %c0_i32 : i32, i32
  }
  func.func @transform_3(%arg0: i32) -> (i32, i32, i32) {
    %c0_i32 = arith.constant 0 : i32
    %c0_i32_0 = arith.constant 0 : i32
    %c0_i32_1 = arith.constant 0 : i32
    return %arg0, %c0_i32, %c0_i32_0 : i32, i32, i32
  }
}

module attributes {stable_mosaic.version = 11 : i64} {
  func.func @bn_conv1x1_stats_kernel(%arg0: i32, %arg1: memref<256x4xbf16, #tpu.memory_space<vmem>>, %arg2: memref<1x4xf32, #tpu.memory_space<vmem>>, %arg3: memref<1x4xf32, #tpu.memory_space<vmem>>, %arg4: memref<4x16xbf16, #tpu.memory_space<vmem>>, %arg5: memref<256x16xbf16, #tpu.memory_space<vmem>>, %arg6: memref<1x2x16xf32, #tpu.memory_space<vmem>>) attributes {dimension_semantics = [#tpu.dimension_semantics<parallel>], iteration_bounds = array<i64: 2>, scalar_prefetch = 0 : i64, scratch_operands = 0 : i64, tpu.core_type = #tpu.core_type<tc>, window_params = [{transform_indices = @transform_0, window_bounds = array<i64: 256, 4>}, {pipeline_mode = #tpu.pipeline_mode<synchronous>, transform_indices = @transform_1, window_bounds = array<i64: 1, 4>}, {pipeline_mode = #tpu.pipeline_mode<synchronous>, transform_indices = @transform_2, window_bounds = array<i64: 1, 4>}, {pipeline_mode = #tpu.pipeline_mode<synchronous>, transform_indices = @transform_3, window_bounds = array<i64: 4, 16>}, {transform_indices = @transform_4, window_bounds = array<i64: 256, 16>}, {transform_indices = @transform_5, window_bounds = array<i64: 1, 2, 16>}]} {
    %c0 = arith.constant 0 : index
    %c0_0 = arith.constant 0 : index
    %0 = vector.load %arg1[%c0, %c0_0] : memref<256x4xbf16, #tpu.memory_space<vmem>>, vector<256x4xbf16>
    %1 = arith.extf %0 : vector<256x4xbf16> to vector<256x4xf32>
    %c0_1 = arith.constant 0 : index
    %c0_2 = arith.constant 0 : index
    %2 = vector.load %arg2[%c0_1, %c0_2] : memref<1x4xf32, #tpu.memory_space<vmem>>, vector<1x4xf32>
    %3 = vector.broadcast %2 : vector<1x4xf32> to vector<256x4xf32>
    %4 = arith.mulf %1, %3 : vector<256x4xf32>
    %c0_3 = arith.constant 0 : index
    %c0_4 = arith.constant 0 : index
    %5 = vector.load %arg3[%c0_3, %c0_4] : memref<1x4xf32, #tpu.memory_space<vmem>>, vector<1x4xf32>
    %6 = vector.broadcast %5 : vector<1x4xf32> to vector<256x4xf32>
    %7 = arith.addf %4, %6 : vector<256x4xf32>
    %cst = arith.constant 0.000000e+00 : f32
    %8 = vector.broadcast %cst : f32 to vector<256x4xf32>
    %9 = arith.maximumf %7, %8 : vector<256x4xf32>
    %10 = arith.truncf %9 : vector<256x4xf32> to vector<256x4xbf16>
    %c0_5 = arith.constant 0 : index
    %c0_6 = arith.constant 0 : index
    %11 = vector.load %arg4[%c0_5, %c0_6] : memref<4x16xbf16, #tpu.memory_space<vmem>>, vector<4x16xbf16>
    %cst_7 = arith.constant dense<0.000000e+00> : vector<256x16xf32>
    %12 = tpu.matmul %10, %11, %cst_7 {dimension_numbers = #tpu.dot_dimension_numbers<[1], [0], [0], [1], [0, 0, 1, 1], [], []>} : vector<256x4xbf16>, vector<4x16xbf16>, vector<256x16xf32> -> vector<256x16xf32>
    %13 = arith.truncf %12 : vector<256x16xf32> to vector<256x16xbf16>
    %c0_8 = arith.constant 0 : index
    %c0_9 = arith.constant 0 : index
    %14 = vector.load %arg5[%c0_8, %c0_9] : memref<256x16xbf16, #tpu.memory_space<vmem>>, vector<256x16xbf16>
    tpu.vector_store %arg5[%c0_8, %c0_9], %13 {strides = array<i32>} : memref<256x16xbf16, #tpu.memory_space<vmem>>, vector<256x16xbf16>,
    %cst_10 = arith.constant dense<0.000000e+00> : vector<16xf32>
    %15 = vector.multi_reduction <add>, %12, %cst_10 [0] : vector<256x16xf32> to vector<16xf32>
    %16 = vector.shape_cast %15 : vector<16xf32> to vector<1x16xf32>
    %cst_11 = arith.constant 3.906250e-03 : f32
    %17 = vector.broadcast %cst_11 : f32 to vector<1x16xf32>
    %18 = arith.mulf %16, %17 : vector<1x16xf32>
    %19 = vector.broadcast %18 : vector<1x16xf32> to vector<256x16xf32>
    %20 = arith.subf %12, %19 : vector<256x16xf32>
    %21 = arith.mulf %20, %20 : vector<256x16xf32>
    %cst_12 = arith.constant dense<0.000000e+00> : vector<16xf32>
    %22 = vector.multi_reduction <add>, %21, %cst_12 [0] : vector<256x16xf32> to vector<16xf32>
    %23 = vector.shape_cast %22 : vector<16xf32> to vector<1x16xf32>
    %24 = tpu.concatenate %16, %23 in 0 : vector<1x16xf32>, vector<1x16xf32> -> vector<2x16xf32>
    %c0_13 = arith.constant 0 : index
    %c0_14 = arith.constant 0 : index
    %c0_15 = arith.constant 0 : index
    %25 = vector.load %arg6[%c0_13, %c0_14, %c0_15] : memref<1x2x16xf32, #tpu.memory_space<vmem>>, vector<1x2x16xf32>
    %26 = vector.shape_cast %25 : vector<1x2x16xf32> to vector<2x16xf32>
    %27 = vector.shape_cast %24 : vector<2x16xf32> to vector<1x2x16xf32>
    tpu.vector_store %arg6[%c0_13, %c0_14, %c0_15], %27 {strides = array<i32>} : memref<1x2x16xf32, #tpu.memory_space<vmem>>, vector<1x2x16xf32>,
    return
  }
  func.func @transform_0(%arg0: i32) -> (i32, i32) {
    %c0_i32 = arith.constant 0 : i32
    %c0_i32_0 = arith.constant 0 : i32
    return %arg0, %c0_i32 : i32, i32
  }
  func.func @transform_1(%arg0: i32) -> (i32, i32) {
    %c0_i32 = arith.constant 0 : i32
    %c0_i32_0 = arith.constant 0 : i32
    %c0_i32_1 = arith.constant 0 : i32
    return %c0_i32, %c0_i32_0 : i32, i32
  }
  func.func @transform_2(%arg0: i32) -> (i32, i32) {
    %c0_i32 = arith.constant 0 : i32
    %c0_i32_0 = arith.constant 0 : i32
    %c0_i32_1 = arith.constant 0 : i32
    return %c0_i32, %c0_i32_0 : i32, i32
  }
  func.func @transform_3(%arg0: i32) -> (i32, i32) {
    %c0_i32 = arith.constant 0 : i32
    %c0_i32_0 = arith.constant 0 : i32
    %c0_i32_1 = arith.constant 0 : i32
    return %c0_i32, %c0_i32_0 : i32, i32
  }
  func.func @transform_4(%arg0: i32) -> (i32, i32) {
    %c0_i32 = arith.constant 0 : i32
    %c0_i32_0 = arith.constant 0 : i32
    return %arg0, %c0_i32 : i32, i32
  }
  func.func @transform_5(%arg0: i32) -> (i32, i32, i32) {
    %c0_i32 = arith.constant 0 : i32
    %c0_i32_0 = arith.constant 0 : i32
    %c0_i32_1 = arith.constant 0 : i32
    return %arg0, %c0_i32, %c0_i32_0 : i32, i32, i32
  }
}

module attributes {stable_mosaic.version = 11 : i64} {
  func.func @bn_conv3x3_stats_kernel(%arg0: i32, %arg1: memref<1x256x4xbf16, #tpu.memory_space<vmem>>, %arg2: memref<1x4xf32, #tpu.memory_space<vmem>>, %arg3: memref<1x4xf32, #tpu.memory_space<vmem>>, %arg4: memref<9x4x4xbf16, #tpu.memory_space<vmem>>, %arg5: memref<1x256x4xbf16, #tpu.memory_space<vmem>>, %arg6: memref<1x2x4xf32, #tpu.memory_space<vmem>>, %arg7: memref<432x4xf32, #tpu.memory_space<vmem>>, %arg8: memref<376x4xf32, #tpu.memory_space<vmem>>) attributes {dimension_semantics = [#tpu.dimension_semantics<parallel>], iteration_bounds = array<i64: 2>, scalar_prefetch = 0 : i64, scratch_operands = 2 : i64, tpu.core_type = #tpu.core_type<tc>, window_params = [{transform_indices = @transform_0, window_bounds = array<i64: 1, 256, 4>}, {pipeline_mode = #tpu.pipeline_mode<synchronous>, transform_indices = @transform_1, window_bounds = array<i64: 1, 4>}, {pipeline_mode = #tpu.pipeline_mode<synchronous>, transform_indices = @transform_2, window_bounds = array<i64: 1, 4>}, {pipeline_mode = #tpu.pipeline_mode<synchronous>, transform_indices = @transform_3, window_bounds = array<i64: 9, 4, 4>}, {transform_indices = @transform_4, window_bounds = array<i64: 1, 256, 4>}, {transform_indices = @transform_5, window_bounds = array<i64: 1, 2, 4>}]} {
    %c0 = arith.constant 0 : index
    %c0_0 = arith.constant 0 : index
    %0 = vector.load %arg2[%c0, %c0_0] : memref<1x4xf32, #tpu.memory_space<vmem>>, vector<1x4xf32>
    %c0_1 = arith.constant 0 : index
    %c0_2 = arith.constant 0 : index
    %1 = vector.load %arg3[%c0_1, %c0_2] : memref<1x4xf32, #tpu.memory_space<vmem>>, vector<1x4xf32>
    %cst = arith.constant 0.000000e+00 : f32
    %2 = vector.broadcast %cst : f32 to vector<25x4xf32>
    %c0_3 = arith.constant 0 : index
    %c0_4 = arith.constant 0 : index
    %3 = vector.load %arg7[%c0_3, %c0_4] : memref<432x4xf32, #tpu.memory_space<vmem>>, vector<25x4xf32>
    tpu.vector_store %arg7[%c0_3, %c0_4], %2 {strides = array<i32>} : memref<432x4xf32, #tpu.memory_space<vmem>>, vector<25x4xf32>,
    %cst_5 = arith.constant 0.000000e+00 : f32
    %4 = vector.broadcast %cst_5 : f32 to vector<24x4xf32>
    %c408 = arith.constant 408 : index
    %c0_6 = arith.constant 0 : index
    %5 = vector.load %arg7[%c408, %c0_6] : memref<432x4xf32, #tpu.memory_space<vmem>>, vector<24x4xf32>
    tpu.vector_store %arg7[%c408, %c0_6], %4 {strides = array<i32>} : memref<432x4xf32, #tpu.memory_space<vmem>>, vector<24x4xf32>,
    %c0_7 = arith.constant 0 : index
    %c0_8 = arith.constant 0 : index
    %c0_9 = arith.constant 0 : index
    %6 = vector.load %arg1[%c0_7, %c0_8, %c0_9] : memref<1x256x4xbf16, #tpu.memory_space<vmem>>, vector<1x16x4xbf16>
    %7 = vector.shape_cast %6 : vector<1x16x4xbf16> to vector<16x4xbf16>
    %8 = arith.extf %7 : vector<16x4xbf16> to vector<16x4xf32>
    %9 = vector.broadcast %0 : vector<1x4xf32> to vector<16x4xf32>
    %10 = arith.mulf %8, %9 : vector<16x4xf32>
    %11 = vector.broadcast %1 : vector<1x4xf32> to vector<16x4xf32>
    %12 = arith.addf %10, %11 : vector<16x4xf32>
    %cst_10 = arith.constant 0.000000e+00 : f32
    %13 = vector.broadcast %cst_10 : f32 to vector<16x4xf32>
    %14 = arith.maximumf %12, %13 : vector<16x4xf32>
    %c25 = arith.constant 25 : index
    %c0_11 = arith.constant 0 : index
    %15 = vector.load %arg7[%c25, %c0_11] : memref<432x4xf32, #tpu.memory_space<vmem>>, vector<16x4xf32>
    tpu.vector_store %arg7[%c25, %c0_11], %14 {strides = array<i32>} : memref<432x4xf32, #tpu.memory_space<vmem>>, vector<16x4xf32>,
    %cst_12 = arith.constant 0.000000e+00 : f32
    %16 = vector.broadcast %cst_12 : f32 to vector<8x4xf32>
    %c41 = arith.constant 41 : index
    %c0_13 = arith.constant 0 : index
    %17 = vector.load %arg7[%c41, %c0_13] : memref<432x4xf32, #tpu.memory_space<vmem>>, vector<8x4xf32>
    tpu.vector_store %arg7[%c41, %c0_13], %16 {strides = array<i32>} : memref<432x4xf32, #tpu.memory_space<vmem>>, vector<8x4xf32>,
    %c0_14 = arith.constant 0 : index
    %c16 = arith.constant 16 : index
    %c0_15 = arith.constant 0 : index
    %18 = vector.load %arg1[%c0_14, %c16, %c0_15] : memref<1x256x4xbf16, #tpu.memory_space<vmem>>, vector<1x16x4xbf16>
    %19 = vector.shape_cast %18 : vector<1x16x4xbf16> to vector<16x4xbf16>
    %20 = arith.extf %19 : vector<16x4xbf16> to vector<16x4xf32>
    %21 = vector.broadcast %0 : vector<1x4xf32> to vector<16x4xf32>
    %22 = arith.mulf %20, %21 : vector<16x4xf32>
    %23 = vector.broadcast %1 : vector<1x4xf32> to vector<16x4xf32>
    %24 = arith.addf %22, %23 : vector<16x4xf32>
    %cst_16 = arith.constant 0.000000e+00 : f32
    %25 = vector.broadcast %cst_16 : f32 to vector<16x4xf32>
    %26 = arith.maximumf %24, %25 : vector<16x4xf32>
    %c49 = arith.constant 49 : index
    %c0_17 = arith.constant 0 : index
    %27 = vector.load %arg7[%c49, %c0_17] : memref<432x4xf32, #tpu.memory_space<vmem>>, vector<16x4xf32>
    tpu.vector_store %arg7[%c49, %c0_17], %26 {strides = array<i32>} : memref<432x4xf32, #tpu.memory_space<vmem>>, vector<16x4xf32>,
    %cst_18 = arith.constant 0.000000e+00 : f32
    %28 = vector.broadcast %cst_18 : f32 to vector<8x4xf32>
    %c65 = arith.constant 65 : index
    %c0_19 = arith.constant 0 : index
    %29 = vector.load %arg7[%c65, %c0_19] : memref<432x4xf32, #tpu.memory_space<vmem>>, vector<8x4xf32>
    tpu.vector_store %arg7[%c65, %c0_19], %28 {strides = array<i32>} : memref<432x4xf32, #tpu.memory_space<vmem>>, vector<8x4xf32>,
    %c0_20 = arith.constant 0 : index
    %c32 = arith.constant 32 : index
    %c0_21 = arith.constant 0 : index
    %30 = vector.load %arg1[%c0_20, %c32, %c0_21] : memref<1x256x4xbf16, #tpu.memory_space<vmem>>, vector<1x16x4xbf16>
    %31 = vector.shape_cast %30 : vector<1x16x4xbf16> to vector<16x4xbf16>
    %32 = arith.extf %31 : vector<16x4xbf16> to vector<16x4xf32>
    %33 = vector.broadcast %0 : vector<1x4xf32> to vector<16x4xf32>
    %34 = arith.mulf %32, %33 : vector<16x4xf32>
    %35 = vector.broadcast %1 : vector<1x4xf32> to vector<16x4xf32>
    %36 = arith.addf %34, %35 : vector<16x4xf32>
    %cst_22 = arith.constant 0.000000e+00 : f32
    %37 = vector.broadcast %cst_22 : f32 to vector<16x4xf32>
    %38 = arith.maximumf %36, %37 : vector<16x4xf32>
    %c73 = arith.constant 73 : index
    %c0_23 = arith.constant 0 : index
    %39 = vector.load %arg7[%c73, %c0_23] : memref<432x4xf32, #tpu.memory_space<vmem>>, vector<16x4xf32>
    tpu.vector_store %arg7[%c73, %c0_23], %38 {strides = array<i32>} : memref<432x4xf32, #tpu.memory_space<vmem>>, vector<16x4xf32>,
    %cst_24 = arith.constant 0.000000e+00 : f32
    %40 = vector.broadcast %cst_24 : f32 to vector<8x4xf32>
    %c89 = arith.constant 89 : index
    %c0_25 = arith.constant 0 : index
    %41 = vector.load %arg7[%c89, %c0_25] : memref<432x4xf32, #tpu.memory_space<vmem>>, vector<8x4xf32>
    tpu.vector_store %arg7[%c89, %c0_25], %40 {strides = array<i32>} : memref<432x4xf32, #tpu.memory_space<vmem>>, vector<8x4xf32>,
    %c0_26 = arith.constant 0 : index
    %c48 = arith.constant 48 : index
    %c0_27 = arith.constant 0 : index
    %42 = vector.load %arg1[%c0_26, %c48, %c0_27] : memref<1x256x4xbf16, #tpu.memory_space<vmem>>, vector<1x16x4xbf16>
    %43 = vector.shape_cast %42 : vector<1x16x4xbf16> to vector<16x4xbf16>
    %44 = arith.extf %43 : vector<16x4xbf16> to vector<16x4xf32>
    %45 = vector.broadcast %0 : vector<1x4xf32> to vector<16x4xf32>
    %46 = arith.mulf %44, %45 : vector<16x4xf32>
    %47 = vector.broadcast %1 : vector<1x4xf32> to vector<16x4xf32>
    %48 = arith.addf %46, %47 : vector<16x4xf32>
    %cst_28 = arith.constant 0.000000e+00 : f32
    %49 = vector.broadcast %cst_28 : f32 to vector<16x4xf32>
    %50 = arith.maximumf %48, %49 : vector<16x4xf32>
    %c97 = arith.constant 97 : index
    %c0_29 = arith.constant 0 : index
    %51 = vector.load %arg7[%c97, %c0_29] : memref<432x4xf32, #tpu.memory_space<vmem>>, vector<16x4xf32>
    tpu.vector_store %arg7[%c97, %c0_29], %50 {strides = array<i32>} : memref<432x4xf32, #tpu.memory_space<vmem>>, vector<16x4xf32>,
    %cst_30 = arith.constant 0.000000e+00 : f32
    %52 = vector.broadcast %cst_30 : f32 to vector<8x4xf32>
    %c113 = arith.constant 113 : index
    %c0_31 = arith.constant 0 : index
    %53 = vector.load %arg7[%c113, %c0_31] : memref<432x4xf32, #tpu.memory_space<vmem>>, vector<8x4xf32>
    tpu.vector_store %arg7[%c113, %c0_31], %52 {strides = array<i32>} : memref<432x4xf32, #tpu.memory_space<vmem>>, vector<8x4xf32>,
    %c0_32 = arith.constant 0 : index
    %c64 = arith.constant 64 : index
    %c0_33 = arith.constant 0 : index
    %54 = vector.load %arg1[%c0_32, %c64, %c0_33] : memref<1x256x4xbf16, #tpu.memory_space<vmem>>, vector<1x16x4xbf16>
    %55 = vector.shape_cast %54 : vector<1x16x4xbf16> to vector<16x4xbf16>
    %56 = arith.extf %55 : vector<16x4xbf16> to vector<16x4xf32>
    %57 = vector.broadcast %0 : vector<1x4xf32> to vector<16x4xf32>
    %58 = arith.mulf %56, %57 : vector<16x4xf32>
    %59 = vector.broadcast %1 : vector<1x4xf32> to vector<16x4xf32>
    %60 = arith.addf %58, %59 : vector<16x4xf32>
    %cst_34 = arith.constant 0.000000e+00 : f32
    %61 = vector.broadcast %cst_34 : f32 to vector<16x4xf32>
    %62 = arith.maximumf %60, %61 : vector<16x4xf32>
    %c121 = arith.constant 121 : index
    %c0_35 = arith.constant 0 : index
    %63 = vector.load %arg7[%c121, %c0_35] : memref<432x4xf32, #tpu.memory_space<vmem>>, vector<16x4xf32>
    tpu.vector_store %arg7[%c121, %c0_35], %62 {strides = array<i32>} : memref<432x4xf32, #tpu.memory_space<vmem>>, vector<16x4xf32>,
    %cst_36 = arith.constant 0.000000e+00 : f32
    %64 = vector.broadcast %cst_36 : f32 to vector<8x4xf32>
    %c137 = arith.constant 137 : index
    %c0_37 = arith.constant 0 : index
    %65 = vector.load %arg7[%c137, %c0_37] : memref<432x4xf32, #tpu.memory_space<vmem>>, vector<8x4xf32>
    tpu.vector_store %arg7[%c137, %c0_37], %64 {strides = array<i32>} : memref<432x4xf32, #tpu.memory_space<vmem>>, vector<8x4xf32>,
    %c0_38 = arith.constant 0 : index
    %c80 = arith.constant 80 : index
    %c0_39 = arith.constant 0 : index
    %66 = vector.load %arg1[%c0_38, %c80, %c0_39] : memref<1x256x4xbf16, #tpu.memory_space<vmem>>, vector<1x16x4xbf16>
    %67 = vector.shape_cast %66 : vector<1x16x4xbf16> to vector<16x4xbf16>
    %68 = arith.extf %67 : vector<16x4xbf16> to vector<16x4xf32>
    %69 = vector.broadcast %0 : vector<1x4xf32> to vector<16x4xf32>
    %70 = arith.mulf %68, %69 : vector<16x4xf32>
    %71 = vector.broadcast %1 : vector<1x4xf32> to vector<16x4xf32>
    %72 = arith.addf %70, %71 : vector<16x4xf32>
    %cst_40 = arith.constant 0.000000e+00 : f32
    %73 = vector.broadcast %cst_40 : f32 to vector<16x4xf32>
    %74 = arith.maximumf %72, %73 : vector<16x4xf32>
    %c145 = arith.constant 145 : index
    %c0_41 = arith.constant 0 : index
    %75 = vector.load %arg7[%c145, %c0_41] : memref<432x4xf32, #tpu.memory_space<vmem>>, vector<16x4xf32>
    tpu.vector_store %arg7[%c145, %c0_41], %74 {strides = array<i32>} : memref<432x4xf32, #tpu.memory_space<vmem>>, vector<16x4xf32>,
    %cst_42 = arith.constant 0.000000e+00 : f32
    %76 = vector.broadcast %cst_42 : f32 to vector<8x4xf32>
    %c161 = arith.constant 161 : index
    %c0_43 = arith.constant 0 : index
    %77 = vector.load %arg7[%c161, %c0_43] : memref<432x4xf32, #tpu.memory_space<vmem>>, vector<8x4xf32>
    tpu.vector_store %arg7[%c161, %c0_43], %76 {strides = array<i32>} : memref<432x4xf32, #tpu.memory_space<vmem>>, vector<8x4xf32>,
    %c0_44 = arith.constant 0 : index
    %c96 = arith.constant 96 : index
    %c0_45 = arith.constant 0 : index
    %78 = vector.load %arg1[%c0_44, %c96, %c0_45] : memref<1x256x4xbf16, #tpu.memory_space<vmem>>, vector<1x16x4xbf16>
    %79 = vector.shape_cast %78 : vector<1x16x4xbf16> to vector<16x4xbf16>
    %80 = arith.extf %79 : vector<16x4xbf16> to vector<16x4xf32>
    %81 = vector.broadcast %0 : vector<1x4xf32> to vector<16x4xf32>
    %82 = arith.mulf %80, %81 : vector<16x4xf32>
    %83 = vector.broadcast %1 : vector<1x4xf32> to vector<16x4xf32>
    %84 = arith.addf %82, %83 : vector<16x4xf32>
    %cst_46 = arith.constant 0.000000e+00 : f32
    %85 = vector.broadcast %cst_46 : f32 to vector<16x4xf32>
    %86 = arith.maximumf %84, %85 : vector<16x4xf32>
    %c169 = arith.constant 169 : index
    %c0_47 = arith.constant 0 : index
    %87 = vector.load %arg7[%c169, %c0_47] : memref<432x4xf32, #tpu.memory_space<vmem>>, vector<16x4xf32>
    tpu.vector_store %arg7[%c169, %c0_47], %86 {strides = array<i32>} : memref<432x4xf32, #tpu.memory_space<vmem>>, vector<16x4xf32>,
    %cst_48 = arith.constant 0.000000e+00 : f32
    %88 = vector.broadcast %cst_48 : f32 to vector<8x4xf32>
    %c185 = arith.constant 185 : index
    %c0_49 = arith.constant 0 : index
    %89 = vector.load %arg7[%c185, %c0_49] : memref<432x4xf32, #tpu.memory_space<vmem>>, vector<8x4xf32>
    tpu.vector_store %arg7[%c185, %c0_49], %88 {strides = array<i32>} : memref<432x4xf32, #tpu.memory_space<vmem>>, vector<8x4xf32>,
    %c0_50 = arith.constant 0 : index
    %c112 = arith.constant 112 : index
    %c0_51 = arith.constant 0 : index
    %90 = vector.load %arg1[%c0_50, %c112, %c0_51] : memref<1x256x4xbf16, #tpu.memory_space<vmem>>, vector<1x16x4xbf16>
    %91 = vector.shape_cast %90 : vector<1x16x4xbf16> to vector<16x4xbf16>
    %92 = arith.extf %91 : vector<16x4xbf16> to vector<16x4xf32>
    %93 = vector.broadcast %0 : vector<1x4xf32> to vector<16x4xf32>
    %94 = arith.mulf %92, %93 : vector<16x4xf32>
    %95 = vector.broadcast %1 : vector<1x4xf32> to vector<16x4xf32>
    %96 = arith.addf %94, %95 : vector<16x4xf32>
    %cst_52 = arith.constant 0.000000e+00 : f32
    %97 = vector.broadcast %cst_52 : f32 to vector<16x4xf32>
    %98 = arith.maximumf %96, %97 : vector<16x4xf32>
    %c193 = arith.constant 193 : index
    %c0_53 = arith.constant 0 : index
    %99 = vector.load %arg7[%c193, %c0_53] : memref<432x4xf32, #tpu.memory_space<vmem>>, vector<16x4xf32>
    tpu.vector_store %arg7[%c193, %c0_53], %98 {strides = array<i32>} : memref<432x4xf32, #tpu.memory_space<vmem>>, vector<16x4xf32>,
    %cst_54 = arith.constant 0.000000e+00 : f32
    %100 = vector.broadcast %cst_54 : f32 to vector<8x4xf32>
    %c209 = arith.constant 209 : index
    %c0_55 = arith.constant 0 : index
    %101 = vector.load %arg7[%c209, %c0_55] : memref<432x4xf32, #tpu.memory_space<vmem>>, vector<8x4xf32>
    tpu.vector_store %arg7[%c209, %c0_55], %100 {strides = array<i32>} : memref<432x4xf32, #tpu.memory_space<vmem>>, vector<8x4xf32>,
    %c0_56 = arith.constant 0 : index
    %c128 = arith.constant 128 : index
    %c0_57 = arith.constant 0 : index
    %102 = vector.load %arg1[%c0_56, %c128, %c0_57] : memref<1x256x4xbf16, #tpu.memory_space<vmem>>, vector<1x16x4xbf16>
    %103 = vector.shape_cast %102 : vector<1x16x4xbf16> to vector<16x4xbf16>
    %104 = arith.extf %103 : vector<16x4xbf16> to vector<16x4xf32>
    %105 = vector.broadcast %0 : vector<1x4xf32> to vector<16x4xf32>
    %106 = arith.mulf %104, %105 : vector<16x4xf32>
    %107 = vector.broadcast %1 : vector<1x4xf32> to vector<16x4xf32>
    %108 = arith.addf %106, %107 : vector<16x4xf32>
    %cst_58 = arith.constant 0.000000e+00 : f32
    %109 = vector.broadcast %cst_58 : f32 to vector<16x4xf32>
    %110 = arith.maximumf %108, %109 : vector<16x4xf32>
    %c217 = arith.constant 217 : index
    %c0_59 = arith.constant 0 : index
    %111 = vector.load %arg7[%c217, %c0_59] : memref<432x4xf32, #tpu.memory_space<vmem>>, vector<16x4xf32>
    tpu.vector_store %arg7[%c217, %c0_59], %110 {strides = array<i32>} : memref<432x4xf32, #tpu.memory_space<vmem>>, vector<16x4xf32>,
    %cst_60 = arith.constant 0.000000e+00 : f32
    %112 = vector.broadcast %cst_60 : f32 to vector<8x4xf32>
    %c233 = arith.constant 233 : index
    %c0_61 = arith.constant 0 : index
    %113 = vector.load %arg7[%c233, %c0_61] : memref<432x4xf32, #tpu.memory_space<vmem>>, vector<8x4xf32>
    tpu.vector_store %arg7[%c233, %c0_61], %112 {strides = array<i32>} : memref<432x4xf32, #tpu.memory_space<vmem>>, vector<8x4xf32>,
    %c0_62 = arith.constant 0 : index
    %c144 = arith.constant 144 : index
    %c0_63 = arith.constant 0 : index
    %114 = vector.load %arg1[%c0_62, %c144, %c0_63] : memref<1x256x4xbf16, #tpu.memory_space<vmem>>, vector<1x16x4xbf16>
    %115 = vector.shape_cast %114 : vector<1x16x4xbf16> to vector<16x4xbf16>
    %116 = arith.extf %115 : vector<16x4xbf16> to vector<16x4xf32>
    %117 = vector.broadcast %0 : vector<1x4xf32> to vector<16x4xf32>
    %118 = arith.mulf %116, %117 : vector<16x4xf32>
    %119 = vector.broadcast %1 : vector<1x4xf32> to vector<16x4xf32>
    %120 = arith.addf %118, %119 : vector<16x4xf32>
    %cst_64 = arith.constant 0.000000e+00 : f32
    %121 = vector.broadcast %cst_64 : f32 to vector<16x4xf32>
    %122 = arith.maximumf %120, %121 : vector<16x4xf32>
    %c241 = arith.constant 241 : index
    %c0_65 = arith.constant 0 : index
    %123 = vector.load %arg7[%c241, %c0_65] : memref<432x4xf32, #tpu.memory_space<vmem>>, vector<16x4xf32>
    tpu.vector_store %arg7[%c241, %c0_65], %122 {strides = array<i32>} : memref<432x4xf32, #tpu.memory_space<vmem>>, vector<16x4xf32>,
    %cst_66 = arith.constant 0.000000e+00 : f32
    %124 = vector.broadcast %cst_66 : f32 to vector<8x4xf32>
    %c257 = arith.constant 257 : index
    %c0_67 = arith.constant 0 : index
    %125 = vector.load %arg7[%c257, %c0_67] : memref<432x4xf32, #tpu.memory_space<vmem>>, vector<8x4xf32>
    tpu.vector_store %arg7[%c257, %c0_67], %124 {strides = array<i32>} : memref<432x4xf32, #tpu.memory_space<vmem>>, vector<8x4xf32>,
    %c0_68 = arith.constant 0 : index
    %c160 = arith.constant 160 : index
    %c0_69 = arith.constant 0 : index
    %126 = vector.load %arg1[%c0_68, %c160, %c0_69] : memref<1x256x4xbf16, #tpu.memory_space<vmem>>, vector<1x16x4xbf16>
    %127 = vector.shape_cast %126 : vector<1x16x4xbf16> to vector<16x4xbf16>
    %128 = arith.extf %127 : vector<16x4xbf16> to vector<16x4xf32>
    %129 = vector.broadcast %0 : vector<1x4xf32> to vector<16x4xf32>
    %130 = arith.mulf %128, %129 : vector<16x4xf32>
    %131 = vector.broadcast %1 : vector<1x4xf32> to vector<16x4xf32>
    %132 = arith.addf %130, %131 : vector<16x4xf32>
    %cst_70 = arith.constant 0.000000e+00 : f32
    %133 = vector.broadcast %cst_70 : f32 to vector<16x4xf32>
    %134 = arith.maximumf %132, %133 : vector<16x4xf32>
    %c265 = arith.constant 265 : index
    %c0_71 = arith.constant 0 : index
    %135 = vector.load %arg7[%c265, %c0_71] : memref<432x4xf32, #tpu.memory_space<vmem>>, vector<16x4xf32>
    tpu.vector_store %arg7[%c265, %c0_71], %134 {strides = array<i32>} : memref<432x4xf32, #tpu.memory_space<vmem>>, vector<16x4xf32>,
    %cst_72 = arith.constant 0.000000e+00 : f32
    %136 = vector.broadcast %cst_72 : f32 to vector<8x4xf32>
    %c281 = arith.constant 281 : index
    %c0_73 = arith.constant 0 : index
    %137 = vector.load %arg7[%c281, %c0_73] : memref<432x4xf32, #tpu.memory_space<vmem>>, vector<8x4xf32>
    tpu.vector_store %arg7[%c281, %c0_73], %136 {strides = array<i32>} : memref<432x4xf32, #tpu.memory_space<vmem>>, vector<8x4xf32>,
    %c0_74 = arith.constant 0 : index
    %c176 = arith.constant 176 : index
    %c0_75 = arith.constant 0 : index
    %138 = vector.load %arg1[%c0_74, %c176, %c0_75] : memref<1x256x4xbf16, #tpu.memory_space<vmem>>, vector<1x16x4xbf16>
    %139 = vector.shape_cast %138 : vector<1x16x4xbf16> to vector<16x4xbf16>
    %140 = arith.extf %139 : vector<16x4xbf16> to vector<16x4xf32>
    %141 = vector.broadcast %0 : vector<1x4xf32> to vector<16x4xf32>
    %142 = arith.mulf %140, %141 : vector<16x4xf32>
    %143 = vector.broadcast %1 : vector<1x4xf32> to vector<16x4xf32>
    %144 = arith.addf %142, %143 : vector<16x4xf32>
    %cst_76 = arith.constant 0.000000e+00 : f32
    %145 = vector.broadcast %cst_76 : f32 to vector<16x4xf32>
    %146 = arith.maximumf %144, %145 : vector<16x4xf32>
    %c289 = arith.constant 289 : index
    %c0_77 = arith.constant 0 : index
    %147 = vector.load %arg7[%c289, %c0_77] : memref<432x4xf32, #tpu.memory_space<vmem>>, vector<16x4xf32>
    tpu.vector_store %arg7[%c289, %c0_77], %146 {strides = array<i32>} : memref<432x4xf32, #tpu.memory_space<vmem>>, vector<16x4xf32>,
    %cst_78 = arith.constant 0.000000e+00 : f32
    %148 = vector.broadcast %cst_78 : f32 to vector<8x4xf32>
    %c305 = arith.constant 305 : index
    %c0_79 = arith.constant 0 : index
    %149 = vector.load %arg7[%c305, %c0_79] : memref<432x4xf32, #tpu.memory_space<vmem>>, vector<8x4xf32>
    tpu.vector_store %arg7[%c305, %c0_79], %148 {strides = array<i32>} : memref<432x4xf32, #tpu.memory_space<vmem>>, vector<8x4xf32>,
    %c0_80 = arith.constant 0 : index
    %c192 = arith.constant 192 : index
    %c0_81 = arith.constant 0 : index
    %150 = vector.load %arg1[%c0_80, %c192, %c0_81] : memref<1x256x4xbf16, #tpu.memory_space<vmem>>, vector<1x16x4xbf16>
    %151 = vector.shape_cast %150 : vector<1x16x4xbf16> to vector<16x4xbf16>
    %152 = arith.extf %151 : vector<16x4xbf16> to vector<16x4xf32>
    %153 = vector.broadcast %0 : vector<1x4xf32> to vector<16x4xf32>
    %154 = arith.mulf %152, %153 : vector<16x4xf32>
    %155 = vector.broadcast %1 : vector<1x4xf32> to vector<16x4xf32>
    %156 = arith.addf %154, %155 : vector<16x4xf32>
    %cst_82 = arith.constant 0.000000e+00 : f32
    %157 = vector.broadcast %cst_82 : f32 to vector<16x4xf32>
    %158 = arith.maximumf %156, %157 : vector<16x4xf32>
    %c313 = arith.constant 313 : index
    %c0_83 = arith.constant 0 : index
    %159 = vector.load %arg7[%c313, %c0_83] : memref<432x4xf32, #tpu.memory_space<vmem>>, vector<16x4xf32>
    tpu.vector_store %arg7[%c313, %c0_83], %158 {strides = array<i32>} : memref<432x4xf32, #tpu.memory_space<vmem>>, vector<16x4xf32>,
    %cst_84 = arith.constant 0.000000e+00 : f32
    %160 = vector.broadcast %cst_84 : f32 to vector<8x4xf32>
    %c329 = arith.constant 329 : index
    %c0_85 = arith.constant 0 : index
    %161 = vector.load %arg7[%c329, %c0_85] : memref<432x4xf32, #tpu.memory_space<vmem>>, vector<8x4xf32>
    tpu.vector_store %arg7[%c329, %c0_85], %160 {strides = array<i32>} : memref<432x4xf32, #tpu.memory_space<vmem>>, vector<8x4xf32>,
    %c0_86 = arith.constant 0 : index
    %c208 = arith.constant 208 : index
    %c0_87 = arith.constant 0 : index
    %162 = vector.load %arg1[%c0_86, %c208, %c0_87] : memref<1x256x4xbf16, #tpu.memory_space<vmem>>, vector<1x16x4xbf16>
    %163 = vector.shape_cast %162 : vector<1x16x4xbf16> to vector<16x4xbf16>
    %164 = arith.extf %163 : vector<16x4xbf16> to vector<16x4xf32>
    %165 = vector.broadcast %0 : vector<1x4xf32> to vector<16x4xf32>
    %166 = arith.mulf %164, %165 : vector<16x4xf32>
    %167 = vector.broadcast %1 : vector<1x4xf32> to vector<16x4xf32>
    %168 = arith.addf %166, %167 : vector<16x4xf32>
    %cst_88 = arith.constant 0.000000e+00 : f32
    %169 = vector.broadcast %cst_88 : f32 to vector<16x4xf32>
    %170 = arith.maximumf %168, %169 : vector<16x4xf32>
    %c337 = arith.constant 337 : index
    %c0_89 = arith.constant 0 : index
    %171 = vector.load %arg7[%c337, %c0_89] : memref<432x4xf32, #tpu.memory_space<vmem>>, vector<16x4xf32>
    tpu.vector_store %arg7[%c337, %c0_89], %170 {strides = array<i32>} : memref<432x4xf32, #tpu.memory_space<vmem>>, vector<16x4xf32>,
    %cst_90 = arith.constant 0.000000e+00 : f32
    %172 = vector.broadcast %cst_90 : f32 to vector<8x4xf32>
    %c353 = arith.constant 353 : index
    %c0_91 = arith.constant 0 : index
    %173 = vector.load %arg7[%c353, %c0_91] : memref<432x4xf32, #tpu.memory_space<vmem>>, vector<8x4xf32>
    tpu.vector_store %arg7[%c353, %c0_91], %172 {strides = array<i32>} : memref<432x4xf32, #tpu.memory_space<vmem>>, vector<8x4xf32>,
    %c0_92 = arith.constant 0 : index
    %c224 = arith.constant 224 : index
    %c0_93 = arith.constant 0 : index
    %174 = vector.load %arg1[%c0_92, %c224, %c0_93] : memref<1x256x4xbf16, #tpu.memory_space<vmem>>, vector<1x16x4xbf16>
    %175 = vector.shape_cast %174 : vector<1x16x4xbf16> to vector<16x4xbf16>
    %176 = arith.extf %175 : vector<16x4xbf16> to vector<16x4xf32>
    %177 = vector.broadcast %0 : vector<1x4xf32> to vector<16x4xf32>
    %178 = arith.mulf %176, %177 : vector<16x4xf32>
    %179 = vector.broadcast %1 : vector<1x4xf32> to vector<16x4xf32>
    %180 = arith.addf %178, %179 : vector<16x4xf32>
    %cst_94 = arith.constant 0.000000e+00 : f32
    %181 = vector.broadcast %cst_94 : f32 to vector<16x4xf32>
    %182 = arith.maximumf %180, %181 : vector<16x4xf32>
    %c361 = arith.constant 361 : index
    %c0_95 = arith.constant 0 : index
    %183 = vector.load %arg7[%c361, %c0_95] : memref<432x4xf32, #tpu.memory_space<vmem>>, vector<16x4xf32>
    tpu.vector_store %arg7[%c361, %c0_95], %182 {strides = array<i32>} : memref<432x4xf32, #tpu.memory_space<vmem>>, vector<16x4xf32>,
    %cst_96 = arith.constant 0.000000e+00 : f32
    %184 = vector.broadcast %cst_96 : f32 to vector<8x4xf32>
    %c377 = arith.constant 377 : index
    %c0_97 = arith.constant 0 : index
    %185 = vector.load %arg7[%c377, %c0_97] : memref<432x4xf32, #tpu.memory_space<vmem>>, vector<8x4xf32>
    tpu.vector_store %arg7[%c377, %c0_97], %184 {strides = array<i32>} : memref<432x4xf32, #tpu.memory_space<vmem>>, vector<8x4xf32>,
    %c0_98 = arith.constant 0 : index
    %c240 = arith.constant 240 : index
    %c0_99 = arith.constant 0 : index
    %186 = vector.load %arg1[%c0_98, %c240, %c0_99] : memref<1x256x4xbf16, #tpu.memory_space<vmem>>, vector<1x16x4xbf16>
    %187 = vector.shape_cast %186 : vector<1x16x4xbf16> to vector<16x4xbf16>
    %188 = arith.extf %187 : vector<16x4xbf16> to vector<16x4xf32>
    %189 = vector.broadcast %0 : vector<1x4xf32> to vector<16x4xf32>
    %190 = arith.mulf %188, %189 : vector<16x4xf32>
    %191 = vector.broadcast %1 : vector<1x4xf32> to vector<16x4xf32>
    %192 = arith.addf %190, %191 : vector<16x4xf32>
    %cst_100 = arith.constant 0.000000e+00 : f32
    %193 = vector.broadcast %cst_100 : f32 to vector<16x4xf32>
    %194 = arith.maximumf %192, %193 : vector<16x4xf32>
    %c385 = arith.constant 385 : index
    %c0_101 = arith.constant 0 : index
    %195 = vector.load %arg7[%c385, %c0_101] : memref<432x4xf32, #tpu.memory_space<vmem>>, vector<16x4xf32>
    tpu.vector_store %arg7[%c385, %c0_101], %194 {strides = array<i32>} : memref<432x4xf32, #tpu.memory_space<vmem>>, vector<16x4xf32>,
    %cst_102 = arith.constant 0.000000e+00 : f32
    %196 = vector.broadcast %cst_102 : f32 to vector<8x4xf32>
    %c401 = arith.constant 401 : index
    %c0_103 = arith.constant 0 : index
    %197 = vector.load %arg7[%c401, %c0_103] : memref<432x4xf32, #tpu.memory_space<vmem>>, vector<8x4xf32>
    tpu.vector_store %arg7[%c401, %c0_103], %196 {strides = array<i32>} : memref<432x4xf32, #tpu.memory_space<vmem>>, vector<8x4xf32>,
    %c0_104 = arith.constant 0 : index
    %c0_105 = arith.constant 0 : index
    %198 = vector.load %arg7[%c0_104, %c0_105] : memref<432x4xf32, #tpu.memory_space<vmem>>, vector<376x4xf32>
    %199 = arith.truncf %198 : vector<376x4xf32> to vector<376x4xbf16>
    %c0_106 = arith.constant 0 : index
    %c0_107 = arith.constant 0 : index
    %c0_108 = arith.constant 0 : index
    %200 = vector.load %arg4[%c0_106, %c0_107, %c0_108] : memref<9x4x4xbf16, #tpu.memory_space<vmem>>, vector<1x4x4xbf16>
    %201 = vector.shape_cast %200 : vector<1x4x4xbf16> to vector<4x4xbf16>
    %cst_109 = arith.constant dense<0.000000e+00> : vector<376x4xf32>
    %202 = tpu.matmul %199, %201, %cst_109 {dimension_numbers = #tpu.dot_dimension_numbers<[1], [0], [0], [1], [0, 0, 1, 1], [], []>} : vector<376x4xbf16>, vector<4x4xbf16>, vector<376x4xf32> -> vector<376x4xf32>
    %c0_110 = arith.constant 0 : index
    %c0_111 = arith.constant 0 : index
    %203 = vector.load %arg8[%c0_110, %c0_111] : memref<376x4xf32, #tpu.memory_space<vmem>>, vector<376x4xf32>
    tpu.vector_store %arg8[%c0_110, %c0_111], %202 {strides = array<i32>} : memref<376x4xf32, #tpu.memory_space<vmem>>, vector<376x4xf32>,
    %c1 = arith.constant 1 : index
    %c0_112 = arith.constant 0 : index
    %204 = vector.load %arg7[%c1, %c0_112] : memref<432x4xf32, #tpu.memory_space<vmem>>, vector<376x4xf32>
    %205 = arith.truncf %204 : vector<376x4xf32> to vector<376x4xbf16>
    %c1_113 = arith.constant 1 : index
    %c0_114 = arith.constant 0 : index
    %c0_115 = arith.constant 0 : index
    %206 = vector.load %arg4[%c1_113, %c0_114, %c0_115] : memref<9x4x4xbf16, #tpu.memory_space<vmem>>, vector<1x4x4xbf16>
    %207 = vector.shape_cast %206 : vector<1x4x4xbf16> to vector<4x4xbf16>
    %cst_116 = arith.constant dense<0.000000e+00> : vector<376x4xf32>
    %208 = tpu.matmul %205, %207, %cst_116 {dimension_numbers = #tpu.dot_dimension_numbers<[1], [0], [0], [1], [0, 0, 1, 1], [], []>} : vector<376x4xbf16>, vector<4x4xbf16>, vector<376x4xf32> -> vector<376x4xf32>
    %c0_117 = arith.constant 0 : index
    %c0_118 = arith.constant 0 : index
    %209 = vector.load %arg8[%c0_117, %c0_118] : memref<376x4xf32, #tpu.memory_space<vmem>>, vector<376x4xf32>
    %210 = arith.addf %209, %208 : vector<376x4xf32>
    %c0_119 = arith.constant 0 : index
    %c0_120 = arith.constant 0 : index
    %211 = vector.load %arg8[%c0_119, %c0_120] : memref<376x4xf32, #tpu.memory_space<vmem>>, vector<376x4xf32>
    tpu.vector_store %arg8[%c0_119, %c0_120], %210 {strides = array<i32>} : memref<376x4xf32, #tpu.memory_space<vmem>>, vector<376x4xf32>,
    %c2 = arith.constant 2 : index
    %c0_121 = arith.constant 0 : index
    %212 = vector.load %arg7[%c2, %c0_121] : memref<432x4xf32, #tpu.memory_space<vmem>>, vector<376x4xf32>
    %213 = arith.truncf %212 : vector<376x4xf32> to vector<376x4xbf16>
    %c2_122 = arith.constant 2 : index
    %c0_123 = arith.constant 0 : index
    %c0_124 = arith.constant 0 : index
    %214 = vector.load %arg4[%c2_122, %c0_123, %c0_124] : memref<9x4x4xbf16, #tpu.memory_space<vmem>>, vector<1x4x4xbf16>
    %215 = vector.shape_cast %214 : vector<1x4x4xbf16> to vector<4x4xbf16>
    %cst_125 = arith.constant dense<0.000000e+00> : vector<376x4xf32>
    %216 = tpu.matmul %213, %215, %cst_125 {dimension_numbers = #tpu.dot_dimension_numbers<[1], [0], [0], [1], [0, 0, 1, 1], [], []>} : vector<376x4xbf16>, vector<4x4xbf16>, vector<376x4xf32> -> vector<376x4xf32>
    %c0_126 = arith.constant 0 : index
    %c0_127 = arith.constant 0 : index
    %217 = vector.load %arg8[%c0_126, %c0_127] : memref<376x4xf32, #tpu.memory_space<vmem>>, vector<376x4xf32>
    %218 = arith.addf %217, %216 : vector<376x4xf32>
    %c0_128 = arith.constant 0 : index
    %c0_129 = arith.constant 0 : index
    %219 = vector.load %arg8[%c0_128, %c0_129] : memref<376x4xf32, #tpu.memory_space<vmem>>, vector<376x4xf32>
    tpu.vector_store %arg8[%c0_128, %c0_129], %218 {strides = array<i32>} : memref<376x4xf32, #tpu.memory_space<vmem>>, vector<376x4xf32>,
    %c24 = arith.constant 24 : index
    %c0_130 = arith.constant 0 : index
    %220 = vector.load %arg7[%c24, %c0_130] : memref<432x4xf32, #tpu.memory_space<vmem>>, vector<376x4xf32>
    %221 = arith.truncf %220 : vector<376x4xf32> to vector<376x4xbf16>
    %c3 = arith.constant 3 : index
    %c0_131 = arith.constant 0 : index
    %c0_132 = arith.constant 0 : index
    %222 = vector.load %arg4[%c3, %c0_131, %c0_132] : memref<9x4x4xbf16, #tpu.memory_space<vmem>>, vector<1x4x4xbf16>
    %223 = vector.shape_cast %222 : vector<1x4x4xbf16> to vector<4x4xbf16>
    %cst_133 = arith.constant dense<0.000000e+00> : vector<376x4xf32>
    %224 = tpu.matmul %221, %223, %cst_133 {dimension_numbers = #tpu.dot_dimension_numbers<[1], [0], [0], [1], [0, 0, 1, 1], [], []>} : vector<376x4xbf16>, vector<4x4xbf16>, vector<376x4xf32> -> vector<376x4xf32>
    %c0_134 = arith.constant 0 : index
    %c0_135 = arith.constant 0 : index
    %225 = vector.load %arg8[%c0_134, %c0_135] : memref<376x4xf32, #tpu.memory_space<vmem>>, vector<376x4xf32>
    %226 = arith.addf %225, %224 : vector<376x4xf32>
    %c0_136 = arith.constant 0 : index
    %c0_137 = arith.constant 0 : index
    %227 = vector.load %arg8[%c0_136, %c0_137] : memref<376x4xf32, #tpu.memory_space<vmem>>, vector<376x4xf32>
    tpu.vector_store %arg8[%c0_136, %c0_137], %226 {strides = array<i32>} : memref<376x4xf32, #tpu.memory_space<vmem>>, vector<376x4xf32>,
    %c25_138 = arith.constant 25 : index
    %c0_139 = arith.constant 0 : index
    %228 = vector.load %arg7[%c25_138, %c0_139] : memref<432x4xf32, #tpu.memory_space<vmem>>, vector<376x4xf32>
    %229 = arith.truncf %228 : vector<376x4xf32> to vector<376x4xbf16>
    %c4 = arith.constant 4 : index
    %c0_140 = arith.constant 0 : index
    %c0_141 = arith.constant 0 : index
    %230 = vector.load %arg4[%c4, %c0_140, %c0_141] : memref<9x4x4xbf16, #tpu.memory_space<vmem>>, vector<1x4x4xbf16>
    %231 = vector.shape_cast %230 : vector<1x4x4xbf16> to vector<4x4xbf16>
    %cst_142 = arith.constant dense<0.000000e+00> : vector<376x4xf32>
    %232 = tpu.matmul %229, %231, %cst_142 {dimension_numbers = #tpu.dot_dimension_numbers<[1], [0], [0], [1], [0, 0, 1, 1], [], []>} : vector<376x4xbf16>, vector<4x4xbf16>, vector<376x4xf32> -> vector<376x4xf32>
    %c0_143 = arith.constant 0 : index
    %c0_144 = arith.constant 0 : index
    %233 = vector.load %arg8[%c0_143, %c0_144] : memref<376x4xf32, #tpu.memory_space<vmem>>, vector<376x4xf32>
    %234 = arith.addf %233, %232 : vector<376x4xf32>
    %c0_145 = arith.constant 0 : index
    %c0_146 = arith.constant 0 : index
    %235 = vector.load %arg8[%c0_145, %c0_146] : memref<376x4xf32, #tpu.memory_space<vmem>>, vector<376x4xf32>
    tpu.vector_store %arg8[%c0_145, %c0_146], %234 {strides = array<i32>} : memref<376x4xf32, #tpu.memory_space<vmem>>, vector<376x4xf32>,
    %c26 = arith.constant 26 : index
    %c0_147 = arith.constant 0 : index
    %236 = vector.load %arg7[%c26, %c0_147] : memref<432x4xf32, #tpu.memory_space<vmem>>, vector<376x4xf32>
    %237 = arith.truncf %236 : vector<376x4xf32> to vector<376x4xbf16>
    %c5 = arith.constant 5 : index
    %c0_148 = arith.constant 0 : index
    %c0_149 = arith.constant 0 : index
    %238 = vector.load %arg4[%c5, %c0_148, %c0_149] : memref<9x4x4xbf16, #tpu.memory_space<vmem>>, vector<1x4x4xbf16>
    %239 = vector.shape_cast %238 : vector<1x4x4xbf16> to vector<4x4xbf16>
    %cst_150 = arith.constant dense<0.000000e+00> : vector<376x4xf32>
    %240 = tpu.matmul %237, %239, %cst_150 {dimension_numbers = #tpu.dot_dimension_numbers<[1], [0], [0], [1], [0, 0, 1, 1], [], []>} : vector<376x4xbf16>, vector<4x4xbf16>, vector<376x4xf32> -> vector<376x4xf32>
    %c0_151 = arith.constant 0 : index
    %c0_152 = arith.constant 0 : index
    %241 = vector.load %arg8[%c0_151, %c0_152] : memref<376x4xf32, #tpu.memory_space<vmem>>, vector<376x4xf32>
    %242 = arith.addf %241, %240 : vector<376x4xf32>
    %c0_153 = arith.constant 0 : index
    %c0_154 = arith.constant 0 : index
    %243 = vector.load %arg8[%c0_153, %c0_154] : memref<376x4xf32, #tpu.memory_space<vmem>>, vector<376x4xf32>
    tpu.vector_store %arg8[%c0_153, %c0_154], %242 {strides = array<i32>} : memref<376x4xf32, #tpu.memory_space<vmem>>, vector<376x4xf32>,
    %c48_155 = arith.constant 48 : index
    %c0_156 = arith.constant 0 : index
    %244 = vector.load %arg7[%c48_155, %c0_156] : memref<432x4xf32, #tpu.memory_space<vmem>>, vector<376x4xf32>
    %245 = arith.truncf %244 : vector<376x4xf32> to vector<376x4xbf16>
    %c6 = arith.constant 6 : index
    %c0_157 = arith.constant 0 : index
    %c0_158 = arith.constant 0 : index
    %246 = vector.load %arg4[%c6, %c0_157, %c0_158] : memref<9x4x4xbf16, #tpu.memory_space<vmem>>, vector<1x4x4xbf16>
    %247 = vector.shape_cast %246 : vector<1x4x4xbf16> to vector<4x4xbf16>
    %cst_159 = arith.constant dense<0.000000e+00> : vector<376x4xf32>
    %248 = tpu.matmul %245, %247, %cst_159 {dimension_numbers = #tpu.dot_dimension_numbers<[1], [0], [0], [1], [0, 0, 1, 1], [], []>} : vector<376x4xbf16>, vector<4x4xbf16>, vector<376x4xf32> -> vector<376x4xf32>
    %c0_160 = arith.constant 0 : index
    %c0_161 = arith.constant 0 : index
    %249 = vector.load %arg8[%c0_160, %c0_161] : memref<376x4xf32, #tpu.memory_space<vmem>>, vector<376x4xf32>
    %250 = arith.addf %249, %248 : vector<376x4xf32>
    %c0_162 = arith.constant 0 : index
    %c0_163 = arith.constant 0 : index
    %251 = vector.load %arg8[%c0_162, %c0_163] : memref<376x4xf32, #tpu.memory_space<vmem>>, vector<376x4xf32>
    tpu.vector_store %arg8[%c0_162, %c0_163], %250 {strides = array<i32>} : memref<376x4xf32, #tpu.memory_space<vmem>>, vector<376x4xf32>,
    %c49_164 = arith.constant 49 : index
    %c0_165 = arith.constant 0 : index
    %252 = vector.load %arg7[%c49_164, %c0_165] : memref<432x4xf32, #tpu.memory_space<vmem>>, vector<376x4xf32>
    %253 = arith.truncf %252 : vector<376x4xf32> to vector<376x4xbf16>
    %c7 = arith.constant 7 : index
    %c0_166 = arith.constant 0 : index
    %c0_167 = arith.constant 0 : index
    %254 = vector.load %arg4[%c7, %c0_166, %c0_167] : memref<9x4x4xbf16, #tpu.memory_space<vmem>>, vector<1x4x4xbf16>
    %255 = vector.shape_cast %254 : vector<1x4x4xbf16> to vector<4x4xbf16>
    %cst_168 = arith.constant dense<0.000000e+00> : vector<376x4xf32>
    %256 = tpu.matmul %253, %255, %cst_168 {dimension_numbers = #tpu.dot_dimension_numbers<[1], [0], [0], [1], [0, 0, 1, 1], [], []>} : vector<376x4xbf16>, vector<4x4xbf16>, vector<376x4xf32> -> vector<376x4xf32>
    %c0_169 = arith.constant 0 : index
    %c0_170 = arith.constant 0 : index
    %257 = vector.load %arg8[%c0_169, %c0_170] : memref<376x4xf32, #tpu.memory_space<vmem>>, vector<376x4xf32>
    %258 = arith.addf %257, %256 : vector<376x4xf32>
    %c0_171 = arith.constant 0 : index
    %c0_172 = arith.constant 0 : index
    %259 = vector.load %arg8[%c0_171, %c0_172] : memref<376x4xf32, #tpu.memory_space<vmem>>, vector<376x4xf32>
    tpu.vector_store %arg8[%c0_171, %c0_172], %258 {strides = array<i32>} : memref<376x4xf32, #tpu.memory_space<vmem>>, vector<376x4xf32>,
    %c50 = arith.constant 50 : index
    %c0_173 = arith.constant 0 : index
    %260 = vector.load %arg7[%c50, %c0_173] : memref<432x4xf32, #tpu.memory_space<vmem>>, vector<376x4xf32>
    %261 = arith.truncf %260 : vector<376x4xf32> to vector<376x4xbf16>
    %c8 = arith.constant 8 : index
    %c0_174 = arith.constant 0 : index
    %c0_175 = arith.constant 0 : index
    %262 = vector.load %arg4[%c8, %c0_174, %c0_175] : memref<9x4x4xbf16, #tpu.memory_space<vmem>>, vector<1x4x4xbf16>
    %263 = vector.shape_cast %262 : vector<1x4x4xbf16> to vector<4x4xbf16>
    %cst_176 = arith.constant dense<0.000000e+00> : vector<376x4xf32>
    %264 = tpu.matmul %261, %263, %cst_176 {dimension_numbers = #tpu.dot_dimension_numbers<[1], [0], [0], [1], [0, 0, 1, 1], [], []>} : vector<376x4xbf16>, vector<4x4xbf16>, vector<376x4xf32> -> vector<376x4xf32>
    %c0_177 = arith.constant 0 : index
    %c0_178 = arith.constant 0 : index
    %265 = vector.load %arg8[%c0_177, %c0_178] : memref<376x4xf32, #tpu.memory_space<vmem>>, vector<376x4xf32>
    %266 = arith.addf %265, %264 : vector<376x4xf32>
    %c0_179 = arith.constant 0 : index
    %c0_180 = arith.constant 0 : index
    %267 = vector.load %arg8[%c0_179, %c0_180] : memref<376x4xf32, #tpu.memory_space<vmem>>, vector<376x4xf32>
    tpu.vector_store %arg8[%c0_179, %c0_180], %266 {strides = array<i32>} : memref<376x4xf32, #tpu.memory_space<vmem>>, vector<376x4xf32>,
    %c0_181 = arith.constant 0 : index
    %c0_182 = arith.constant 0 : index
    %268 = vector.load %arg8[%c0_181, %c0_182] : memref<376x4xf32, #tpu.memory_space<vmem>>, vector<376x4xf32>
    %269 = tpu.iota {dimensions = array<i32: 0>} : vector<376x1xi32>
    %c24_i32 = arith.constant 24 : i32
    %c0_i32 = arith.constant 0 : i32
    %270 = arith.cmpi eq, %c24_i32, %c0_i32 : i32
    %c1_i32 = arith.constant 1 : i32
    %271 = arith.select %270, %c1_i32, %c24_i32 : i32
    %272 = vector.broadcast %271 : i32 to vector<376x1xi32>
    %273 = arith.remsi %269, %272 : vector<376x1xi32>
    %c0_i32_183 = arith.constant 0 : i32
    %274 = vector.broadcast %c0_i32_183 : i32 to vector<376x1xi32>
    %275 = arith.cmpi ne, %273, %274 : vector<376x1xi32>
    %c0_i32_184 = arith.constant 0 : i32
    %276 = vector.broadcast %c0_i32_184 : i32 to vector<376x1xi32>
    %277 = arith.cmpi slt, %273, %276 : vector<376x1xi32>
    %c0_i32_185 = arith.constant 0 : i32
    %278 = arith.cmpi slt, %271, %c0_i32_185 : i32
    %279 = vector.broadcast %278 : i1 to vector<376x1xi1>
    %280 = vector.broadcast %279 : vector<376x1xi1> to vector<376x1xi1>
    %281 = arith.xori %277, %280 : vector<376x1xi1>
    %282 = arith.andi %281, %275 : vector<376x1xi1>
    %283 = vector.broadcast %271 : i32 to vector<376x1xi32>
    %284 = arith.addi %273, %283 : vector<376x1xi32>
    %285 = arith.select %282, %284, %273 : vector<376x1xi1>, vector<376x1xi32>
    %c16_i32 = arith.constant 16 : i32
    %286 = vector.broadcast %c16_i32 : i32 to vector<376x1xi32>
    %287 = arith.cmpi slt, %285, %286 : vector<376x1xi32>
    %cst_186 = arith.constant 0.000000e+00 : f32
    %288 = vector.shape_cast %287 : vector<376x1xi1> to vector<376x1xi1>
    %289 = vector.broadcast %288 : vector<376x1xi1> to vector<376x4xi1>
    %290 = vector.broadcast %cst_186 : f32 to vector<376x4xf32>
    %291 = arith.select %289, %268, %290 : vector<376x4xi1>, vector<376x4xf32>
    %cst_187 = arith.constant dense<0.000000e+00> : vector<4xf32>
    %292 = vector.multi_reduction <add>, %291, %cst_187 [0] : vector<376x4xf32> to vector<4xf32>
    %293 = vector.shape_cast %292 : vector<4xf32> to vector<1x4xf32>
    %cst_188 = arith.constant 3.906250e-03 : f32
    %294 = vector.broadcast %cst_188 : f32 to vector<1x4xf32>
    %295 = arith.mulf %293, %294 : vector<1x4xf32>
    %296 = vector.broadcast %295 : vector<1x4xf32> to vector<376x4xf32>
    %297 = arith.subf %268, %296 : vector<376x4xf32>
    %cst_189 = arith.constant 0.000000e+00 : f32
    %298 = vector.shape_cast %287 : vector<376x1xi1> to vector<376x1xi1>
    %299 = vector.broadcast %298 : vector<376x1xi1> to vector<376x4xi1>
    %300 = vector.broadcast %cst_189 : f32 to vector<376x4xf32>
    %301 = arith.select %299, %297, %300 : vector<376x4xi1>, vector<376x4xf32>
    %302 = arith.mulf %301, %301 : vector<376x4xf32>
    %cst_190 = arith.constant dense<0.000000e+00> : vector<4xf32>
    %303 = vector.multi_reduction <add>, %302, %cst_190 [0] : vector<376x4xf32> to vector<4xf32>
    %304 = vector.shape_cast %303 : vector<4xf32> to vector<1x4xf32>
    %305 = tpu.concatenate %293, %304 in 0 : vector<1x4xf32>, vector<1x4xf32> -> vector<2x4xf32>
    %c0_191 = arith.constant 0 : index
    %c0_192 = arith.constant 0 : index
    %c0_193 = arith.constant 0 : index
    %306 = vector.load %arg6[%c0_191, %c0_192, %c0_193] : memref<1x2x4xf32, #tpu.memory_space<vmem>>, vector<1x2x4xf32>
    %307 = vector.shape_cast %306 : vector<1x2x4xf32> to vector<2x4xf32>
    %308 = vector.shape_cast %305 : vector<2x4xf32> to vector<1x2x4xf32>
    tpu.vector_store %arg6[%c0_191, %c0_192, %c0_193], %308 {strides = array<i32>} : memref<1x2x4xf32, #tpu.memory_space<vmem>>, vector<1x2x4xf32>,
    %c0_194 = arith.constant 0 : index
    %c0_195 = arith.constant 0 : index
    %309 = vector.load %arg8[%c0_194, %c0_195] : memref<376x4xf32, #tpu.memory_space<vmem>>, vector<16x4xf32>
    %310 = arith.truncf %309 : vector<16x4xf32> to vector<16x4xbf16>
    %c0_196 = arith.constant 0 : index
    %c0_197 = arith.constant 0 : index
    %c0_198 = arith.constant 0 : index
    %311 = vector.load %arg5[%c0_196, %c0_197, %c0_198] : memref<1x256x4xbf16, #tpu.memory_space<vmem>>, vector<1x16x4xbf16>
    %312 = vector.shape_cast %311 : vector<1x16x4xbf16> to vector<16x4xbf16>
    %313 = vector.shape_cast %310 : vector<16x4xbf16> to vector<1x16x4xbf16>
    tpu.vector_store %arg5[%c0_196, %c0_197, %c0_198], %313 {strides = array<i32>} : memref<1x256x4xbf16, #tpu.memory_space<vmem>>, vector<1x16x4xbf16>,
    %c24_199 = arith.constant 24 : index
    %c0_200 = arith.constant 0 : index
    %314 = vector.load %arg8[%c24_199, %c0_200] : memref<376x4xf32, #tpu.memory_space<vmem>>, vector<16x4xf32>
    %315 = arith.truncf %314 : vector<16x4xf32> to vector<16x4xbf16>
    %c0_201 = arith.constant 0 : index
    %c16_202 = arith.constant 16 : index
    %c0_203 = arith.constant 0 : index
    %316 = vector.load %arg5[%c0_201, %c16_202, %c0_203] : memref<1x256x4xbf16, #tpu.memory_space<vmem>>, vector<1x16x4xbf16>
    %317 = vector.shape_cast %316 : vector<1x16x4xbf16> to vector<16x4xbf16>
    %318 = vector.shape_cast %315 : vector<16x4xbf16> to vector<1x16x4xbf16>
    tpu.vector_store %arg5[%c0_201, %c16_202, %c0_203], %318 {strides = array<i32>} : memref<1x256x4xbf16, #tpu.memory_space<vmem>>, vector<1x16x4xbf16>,
    %c48_204 = arith.constant 48 : index
    %c0_205 = arith.constant 0 : index
    %319 = vector.load %arg8[%c48_204, %c0_205] : memref<376x4xf32, #tpu.memory_space<vmem>>, vector<16x4xf32>
    %320 = arith.truncf %319 : vector<16x4xf32> to vector<16x4xbf16>
    %c0_206 = arith.constant 0 : index
    %c32_207 = arith.constant 32 : index
    %c0_208 = arith.constant 0 : index
    %321 = vector.load %arg5[%c0_206, %c32_207, %c0_208] : memref<1x256x4xbf16, #tpu.memory_space<vmem>>, vector<1x16x4xbf16>
    %322 = vector.shape_cast %321 : vector<1x16x4xbf16> to vector<16x4xbf16>
    %323 = vector.shape_cast %320 : vector<16x4xbf16> to vector<1x16x4xbf16>
    tpu.vector_store %arg5[%c0_206, %c32_207, %c0_208], %323 {strides = array<i32>} : memref<1x256x4xbf16, #tpu.memory_space<vmem>>, vector<1x16x4xbf16>,
    %c72 = arith.constant 72 : index
    %c0_209 = arith.constant 0 : index
    %324 = vector.load %arg8[%c72, %c0_209] : memref<376x4xf32, #tpu.memory_space<vmem>>, vector<16x4xf32>
    %325 = arith.truncf %324 : vector<16x4xf32> to vector<16x4xbf16>
    %c0_210 = arith.constant 0 : index
    %c48_211 = arith.constant 48 : index
    %c0_212 = arith.constant 0 : index
    %326 = vector.load %arg5[%c0_210, %c48_211, %c0_212] : memref<1x256x4xbf16, #tpu.memory_space<vmem>>, vector<1x16x4xbf16>
    %327 = vector.shape_cast %326 : vector<1x16x4xbf16> to vector<16x4xbf16>
    %328 = vector.shape_cast %325 : vector<16x4xbf16> to vector<1x16x4xbf16>
    tpu.vector_store %arg5[%c0_210, %c48_211, %c0_212], %328 {strides = array<i32>} : memref<1x256x4xbf16, #tpu.memory_space<vmem>>, vector<1x16x4xbf16>,
    %c96_213 = arith.constant 96 : index
    %c0_214 = arith.constant 0 : index
    %329 = vector.load %arg8[%c96_213, %c0_214] : memref<376x4xf32, #tpu.memory_space<vmem>>, vector<16x4xf32>
    %330 = arith.truncf %329 : vector<16x4xf32> to vector<16x4xbf16>
    %c0_215 = arith.constant 0 : index
    %c64_216 = arith.constant 64 : index
    %c0_217 = arith.constant 0 : index
    %331 = vector.load %arg5[%c0_215, %c64_216, %c0_217] : memref<1x256x4xbf16, #tpu.memory_space<vmem>>, vector<1x16x4xbf16>
    %332 = vector.shape_cast %331 : vector<1x16x4xbf16> to vector<16x4xbf16>
    %333 = vector.shape_cast %330 : vector<16x4xbf16> to vector<1x16x4xbf16>
    tpu.vector_store %arg5[%c0_215, %c64_216, %c0_217], %333 {strides = array<i32>} : memref<1x256x4xbf16, #tpu.memory_space<vmem>>, vector<1x16x4xbf16>,
    %c120 = arith.constant 120 : index
    %c0_218 = arith.constant 0 : index
    %334 = vector.load %arg8[%c120, %c0_218] : memref<376x4xf32, #tpu.memory_space<vmem>>, vector<16x4xf32>
    %335 = arith.truncf %334 : vector<16x4xf32> to vector<16x4xbf16>
    %c0_219 = arith.constant 0 : index
    %c80_220 = arith.constant 80 : index
    %c0_221 = arith.constant 0 : index
    %336 = vector.load %arg5[%c0_219, %c80_220, %c0_221] : memref<1x256x4xbf16, #tpu.memory_space<vmem>>, vector<1x16x4xbf16>
    %337 = vector.shape_cast %336 : vector<1x16x4xbf16> to vector<16x4xbf16>
    %338 = vector.shape_cast %335 : vector<16x4xbf16> to vector<1x16x4xbf16>
    tpu.vector_store %arg5[%c0_219, %c80_220, %c0_221], %338 {strides = array<i32>} : memref<1x256x4xbf16, #tpu.memory_space<vmem>>, vector<1x16x4xbf16>,
    %c144_222 = arith.constant 144 : index
    %c0_223 = arith.constant 0 : index
    %339 = vector.load %arg8[%c144_222, %c0_223] : memref<376x4xf32, #tpu.memory_space<vmem>>, vector<16x4xf32>
    %340 = arith.truncf %339 : vector<16x4xf32> to vector<16x4xbf16>
    %c0_224 = arith.constant 0 : index
    %c96_225 = arith.constant 96 : index
    %c0_226 = arith.constant 0 : index
    %341 = vector.load %arg5[%c0_224, %c96_225, %c0_226] : memref<1x256x4xbf16, #tpu.memory_space<vmem>>, vector<1x16x4xbf16>
    %342 = vector.shape_cast %341 : vector<1x16x4xbf16> to vector<16x4xbf16>
    %343 = vector.shape_cast %340 : vector<16x4xbf16> to vector<1x16x4xbf16>
    tpu.vector_store %arg5[%c0_224, %c96_225, %c0_226], %343 {strides = array<i32>} : memref<1x256x4xbf16, #tpu.memory_space<vmem>>, vector<1x16x4xbf16>,
    %c168 = arith.constant 168 : index
    %c0_227 = arith.constant 0 : index
    %344 = vector.load %arg8[%c168, %c0_227] : memref<376x4xf32, #tpu.memory_space<vmem>>, vector<16x4xf32>
    %345 = arith.truncf %344 : vector<16x4xf32> to vector<16x4xbf16>
    %c0_228 = arith.constant 0 : index
    %c112_229 = arith.constant 112 : index
    %c0_230 = arith.constant 0 : index
    %346 = vector.load %arg5[%c0_228, %c112_229, %c0_230] : memref<1x256x4xbf16, #tpu.memory_space<vmem>>, vector<1x16x4xbf16>
    %347 = vector.shape_cast %346 : vector<1x16x4xbf16> to vector<16x4xbf16>
    %348 = vector.shape_cast %345 : vector<16x4xbf16> to vector<1x16x4xbf16>
    tpu.vector_store %arg5[%c0_228, %c112_229, %c0_230], %348 {strides = array<i32>} : memref<1x256x4xbf16, #tpu.memory_space<vmem>>, vector<1x16x4xbf16>,
    %c192_231 = arith.constant 192 : index
    %c0_232 = arith.constant 0 : index
    %349 = vector.load %arg8[%c192_231, %c0_232] : memref<376x4xf32, #tpu.memory_space<vmem>>, vector<16x4xf32>
    %350 = arith.truncf %349 : vector<16x4xf32> to vector<16x4xbf16>
    %c0_233 = arith.constant 0 : index
    %c128_234 = arith.constant 128 : index
    %c0_235 = arith.constant 0 : index
    %351 = vector.load %arg5[%c0_233, %c128_234, %c0_235] : memref<1x256x4xbf16, #tpu.memory_space<vmem>>, vector<1x16x4xbf16>
    %352 = vector.shape_cast %351 : vector<1x16x4xbf16> to vector<16x4xbf16>
    %353 = vector.shape_cast %350 : vector<16x4xbf16> to vector<1x16x4xbf16>
    tpu.vector_store %arg5[%c0_233, %c128_234, %c0_235], %353 {strides = array<i32>} : memref<1x256x4xbf16, #tpu.memory_space<vmem>>, vector<1x16x4xbf16>,
    %c216 = arith.constant 216 : index
    %c0_236 = arith.constant 0 : index
    %354 = vector.load %arg8[%c216, %c0_236] : memref<376x4xf32, #tpu.memory_space<vmem>>, vector<16x4xf32>
    %355 = arith.truncf %354 : vector<16x4xf32> to vector<16x4xbf16>
    %c0_237 = arith.constant 0 : index
    %c144_238 = arith.constant 144 : index
    %c0_239 = arith.constant 0 : index
    %356 = vector.load %arg5[%c0_237, %c144_238, %c0_239] : memref<1x256x4xbf16, #tpu.memory_space<vmem>>, vector<1x16x4xbf16>
    %357 = vector.shape_cast %356 : vector<1x16x4xbf16> to vector<16x4xbf16>
    %358 = vector.shape_cast %355 : vector<16x4xbf16> to vector<1x16x4xbf16>
    tpu.vector_store %arg5[%c0_237, %c144_238, %c0_239], %358 {strides = array<i32>} : memref<1x256x4xbf16, #tpu.memory_space<vmem>>, vector<1x16x4xbf16>,
    %c240_240 = arith.constant 240 : index
    %c0_241 = arith.constant 0 : index
    %359 = vector.load %arg8[%c240_240, %c0_241] : memref<376x4xf32, #tpu.memory_space<vmem>>, vector<16x4xf32>
    %360 = arith.truncf %359 : vector<16x4xf32> to vector<16x4xbf16>
    %c0_242 = arith.constant 0 : index
    %c160_243 = arith.constant 160 : index
    %c0_244 = arith.constant 0 : index
    %361 = vector.load %arg5[%c0_242, %c160_243, %c0_244] : memref<1x256x4xbf16, #tpu.memory_space<vmem>>, vector<1x16x4xbf16>
    %362 = vector.shape_cast %361 : vector<1x16x4xbf16> to vector<16x4xbf16>
    %363 = vector.shape_cast %360 : vector<16x4xbf16> to vector<1x16x4xbf16>
    tpu.vector_store %arg5[%c0_242, %c160_243, %c0_244], %363 {strides = array<i32>} : memref<1x256x4xbf16, #tpu.memory_space<vmem>>, vector<1x16x4xbf16>,
    %c264 = arith.constant 264 : index
    %c0_245 = arith.constant 0 : index
    %364 = vector.load %arg8[%c264, %c0_245] : memref<376x4xf32, #tpu.memory_space<vmem>>, vector<16x4xf32>
    %365 = arith.truncf %364 : vector<16x4xf32> to vector<16x4xbf16>
    %c0_246 = arith.constant 0 : index
    %c176_247 = arith.constant 176 : index
    %c0_248 = arith.constant 0 : index
    %366 = vector.load %arg5[%c0_246, %c176_247, %c0_248] : memref<1x256x4xbf16, #tpu.memory_space<vmem>>, vector<1x16x4xbf16>
    %367 = vector.shape_cast %366 : vector<1x16x4xbf16> to vector<16x4xbf16>
    %368 = vector.shape_cast %365 : vector<16x4xbf16> to vector<1x16x4xbf16>
    tpu.vector_store %arg5[%c0_246, %c176_247, %c0_248], %368 {strides = array<i32>} : memref<1x256x4xbf16, #tpu.memory_space<vmem>>, vector<1x16x4xbf16>,
    %c288 = arith.constant 288 : index
    %c0_249 = arith.constant 0 : index
    %369 = vector.load %arg8[%c288, %c0_249] : memref<376x4xf32, #tpu.memory_space<vmem>>, vector<16x4xf32>
    %370 = arith.truncf %369 : vector<16x4xf32> to vector<16x4xbf16>
    %c0_250 = arith.constant 0 : index
    %c192_251 = arith.constant 192 : index
    %c0_252 = arith.constant 0 : index
    %371 = vector.load %arg5[%c0_250, %c192_251, %c0_252] : memref<1x256x4xbf16, #tpu.memory_space<vmem>>, vector<1x16x4xbf16>
    %372 = vector.shape_cast %371 : vector<1x16x4xbf16> to vector<16x4xbf16>
    %373 = vector.shape_cast %370 : vector<16x4xbf16> to vector<1x16x4xbf16>
    tpu.vector_store %arg5[%c0_250, %c192_251, %c0_252], %373 {strides = array<i32>} : memref<1x256x4xbf16, #tpu.memory_space<vmem>>, vector<1x16x4xbf16>,
    %c312 = arith.constant 312 : index
    %c0_253 = arith.constant 0 : index
    %374 = vector.load %arg8[%c312, %c0_253] : memref<376x4xf32, #tpu.memory_space<vmem>>, vector<16x4xf32>
    %375 = arith.truncf %374 : vector<16x4xf32> to vector<16x4xbf16>
    %c0_254 = arith.constant 0 : index
    %c208_255 = arith.constant 208 : index
    %c0_256 = arith.constant 0 : index
    %376 = vector.load %arg5[%c0_254, %c208_255, %c0_256] : memref<1x256x4xbf16, #tpu.memory_space<vmem>>, vector<1x16x4xbf16>
    %377 = vector.shape_cast %376 : vector<1x16x4xbf16> to vector<16x4xbf16>
    %378 = vector.shape_cast %375 : vector<16x4xbf16> to vector<1x16x4xbf16>
    tpu.vector_store %arg5[%c0_254, %c208_255, %c0_256], %378 {strides = array<i32>} : memref<1x256x4xbf16, #tpu.memory_space<vmem>>, vector<1x16x4xbf16>,
    %c336 = arith.constant 336 : index
    %c0_257 = arith.constant 0 : index
    %379 = vector.load %arg8[%c336, %c0_257] : memref<376x4xf32, #tpu.memory_space<vmem>>, vector<16x4xf32>
    %380 = arith.truncf %379 : vector<16x4xf32> to vector<16x4xbf16>
    %c0_258 = arith.constant 0 : index
    %c224_259 = arith.constant 224 : index
    %c0_260 = arith.constant 0 : index
    %381 = vector.load %arg5[%c0_258, %c224_259, %c0_260] : memref<1x256x4xbf16, #tpu.memory_space<vmem>>, vector<1x16x4xbf16>
    %382 = vector.shape_cast %381 : vector<1x16x4xbf16> to vector<16x4xbf16>
    %383 = vector.shape_cast %380 : vector<16x4xbf16> to vector<1x16x4xbf16>
    tpu.vector_store %arg5[%c0_258, %c224_259, %c0_260], %383 {strides = array<i32>} : memref<1x256x4xbf16, #tpu.memory_space<vmem>>, vector<1x16x4xbf16>,
    %c360 = arith.constant 360 : index
    %c0_261 = arith.constant 0 : index
    %384 = vector.load %arg8[%c360, %c0_261] : memref<376x4xf32, #tpu.memory_space<vmem>>, vector<16x4xf32>
    %385 = arith.truncf %384 : vector<16x4xf32> to vector<16x4xbf16>
    %c0_262 = arith.constant 0 : index
    %c240_263 = arith.constant 240 : index
    %c0_264 = arith.constant 0 : index
    %386 = vector.load %arg5[%c0_262, %c240_263, %c0_264] : memref<1x256x4xbf16, #tpu.memory_space<vmem>>, vector<1x16x4xbf16>
    %387 = vector.shape_cast %386 : vector<1x16x4xbf16> to vector<16x4xbf16>
    %388 = vector.shape_cast %385 : vector<16x4xbf16> to vector<1x16x4xbf16>
    tpu.vector_store %arg5[%c0_262, %c240_263, %c0_264], %388 {strides = array<i32>} : memref<1x256x4xbf16, #tpu.memory_space<vmem>>, vector<1x16x4xbf16>,
    return
  }
  func.func @transform_0(%arg0: i32) -> (i32, i32, i32) {
    %c0_i32 = arith.constant 0 : i32
    %c0_i32_0 = arith.constant 0 : i32
    %c0_i32_1 = arith.constant 0 : i32
    return %arg0, %c0_i32, %c0_i32_0 : i32, i32, i32
  }
  func.func @transform_1(%arg0: i32) -> (i32, i32) {
    %c0_i32 = arith.constant 0 : i32
    %c0_i32_0 = arith.constant 0 : i32
    %c0_i32_1 = arith.constant 0 : i32
    return %c0_i32, %c0_i32_0 : i32, i32
  }
  func.func @transform_2(%arg0: i32) -> (i32, i32) {
    %c0_i32 = arith.constant 0 : i32
    %c0_i32_0 = arith.constant 0 : i32
    %c0_i32_1 = arith.constant 0 : i32
    return %c0_i32, %c0_i32_0 : i32, i32
  }
  func.func @transform_3(%arg0: i32) -> (i32, i32, i32) {
    %c0_i32 = arith.constant 0 : i32
    %c0_i32_0 = arith.constant 0 : i32
    %c0_i32_1 = arith.constant 0 : i32
    %c0_i32_2 = arith.constant 0 : i32
    return %c0_i32, %c0_i32_0, %c0_i32_1 : i32, i32, i32
  }
  func.func @transform_4(%arg0: i32) -> (i32, i32, i32) {
    %c0_i32 = arith.constant 0 : i32
    %c0_i32_0 = arith.constant 0 : i32
    %c0_i32_1 = arith.constant 0 : i32
    return %arg0, %c0_i32, %c0_i32_0 : i32, i32, i32
  }
  func.func @transform_5(%arg0: i32) -> (i32, i32, i32) {
    %c0_i32 = arith.constant 0 : i32
    %c0_i32_0 = arith.constant 0 : i32
    %c0_i32_1 = arith.constant 0 : i32
    return %arg0, %c0_i32, %c0_i32_0 : i32, i32, i32
  }
}

module attributes {stable_mosaic.version = 11 : i64} {
  func.func @bn_add_relu_kernel(%arg0: i32, %arg1: memref<256x16xbf16, #tpu.memory_space<vmem>>, %arg2: memref<1x16xf32, #tpu.memory_space<vmem>>, %arg3: memref<1x16xf32, #tpu.memory_space<vmem>>, %arg4: memref<256x16xf32, #tpu.memory_space<vmem>>, %arg5: memref<256x16xf32, #tpu.memory_space<vmem>>) attributes {dimension_semantics = [#tpu.dimension_semantics<parallel>], iteration_bounds = array<i64: 2>, scalar_prefetch = 0 : i64, scratch_operands = 0 : i64, tpu.core_type = #tpu.core_type<tc>, window_params = [{transform_indices = @transform_0, window_bounds = array<i64: 256, 16>}, {pipeline_mode = #tpu.pipeline_mode<synchronous>, transform_indices = @transform_1, window_bounds = array<i64: 1, 16>}, {pipeline_mode = #tpu.pipeline_mode<synchronous>, transform_indices = @transform_2, window_bounds = array<i64: 1, 16>}, {transform_indices = @transform_3, window_bounds = array<i64: 256, 16>}, {transform_indices = @transform_4, window_bounds = array<i64: 256, 16>}]} {
    %c0 = arith.constant 0 : index
    %c0_0 = arith.constant 0 : index
    %0 = vector.load %arg1[%c0, %c0_0] : memref<256x16xbf16, #tpu.memory_space<vmem>>, vector<256x16xbf16>
    %1 = arith.extf %0 : vector<256x16xbf16> to vector<256x16xf32>
    %c0_1 = arith.constant 0 : index
    %c0_2 = arith.constant 0 : index
    %2 = vector.load %arg2[%c0_1, %c0_2] : memref<1x16xf32, #tpu.memory_space<vmem>>, vector<1x16xf32>
    %3 = vector.broadcast %2 : vector<1x16xf32> to vector<256x16xf32>
    %4 = arith.mulf %1, %3 : vector<256x16xf32>
    %c0_3 = arith.constant 0 : index
    %c0_4 = arith.constant 0 : index
    %5 = vector.load %arg3[%c0_3, %c0_4] : memref<1x16xf32, #tpu.memory_space<vmem>>, vector<1x16xf32>
    %6 = vector.broadcast %5 : vector<1x16xf32> to vector<256x16xf32>
    %7 = arith.addf %4, %6 : vector<256x16xf32>
    %c0_5 = arith.constant 0 : index
    %c0_6 = arith.constant 0 : index
    %8 = vector.load %arg4[%c0_5, %c0_6] : memref<256x16xf32, #tpu.memory_space<vmem>>, vector<256x16xf32>
    %9 = arith.addf %7, %8 : vector<256x16xf32>
    %cst = arith.constant 0.000000e+00 : f32
    %10 = vector.broadcast %cst : f32 to vector<256x16xf32>
    %11 = arith.maximumf %9, %10 : vector<256x16xf32>
    %c0_7 = arith.constant 0 : index
    %c0_8 = arith.constant 0 : index
    %12 = vector.load %arg5[%c0_7, %c0_8] : memref<256x16xf32, #tpu.memory_space<vmem>>, vector<256x16xf32>
    tpu.vector_store %arg5[%c0_7, %c0_8], %11 {strides = array<i32>} : memref<256x16xf32, #tpu.memory_space<vmem>>, vector<256x16xf32>,
    return
  }
  func.func @transform_0(%arg0: i32) -> (i32, i32) {
    %c0_i32 = arith.constant 0 : i32
    %c0_i32_0 = arith.constant 0 : i32
    return %arg0, %c0_i32 : i32, i32
  }
  func.func @transform_1(%arg0: i32) -> (i32, i32) {
    %c0_i32 = arith.constant 0 : i32
    %c0_i32_0 = arith.constant 0 : i32
    %c0_i32_1 = arith.constant 0 : i32
    return %c0_i32, %c0_i32_0 : i32, i32
  }
  func.func @transform_2(%arg0: i32) -> (i32, i32) {
    %c0_i32 = arith.constant 0 : i32
    %c0_i32_0 = arith.constant 0 : i32
    %c0_i32_1 = arith.constant 0 : i32
    return %c0_i32, %c0_i32_0 : i32, i32
  }
  func.func @transform_3(%arg0: i32) -> (i32, i32) {
    %c0_i32 = arith.constant 0 : i32
    %c0_i32_0 = arith.constant 0 : i32
    return %arg0, %c0_i32 : i32, i32
  }
  func.func @transform_4(%arg0: i32) -> (i32, i32) {
    %c0_i32 = arith.constant 0 : i32
    %c0_i32_0 = arith.constant 0 : i32
    return %arg0, %c0_i32 : i32, i32
  }
}

</mosaic_0001>

<llo_original>
// kernel: block_forward.4
$region0: #{block_forward.4}
  #allocation0 [shape = 'u32[]', space=smem, size = 0x4, offset = 0x4, fixed_abs, tag = 'smem constant byte address 0x4 - core index']
  #allocation1 [shape = 'u32[144,128]{1,0:T(1,128)}', space=vmem, size = 0x12000, scoped, tag = 'internal scratch']
  %s0 = inlined_call_operand.vmem [shape: f32[512,16], index: 0, kind: input, shape index: {}]
  %s1 = inlined_call_operand.vmem [shape: bf16[16,4], index: 1, kind: input, shape index: {}]
  %s2 = inlined_call_operand.vmem [shape: bf16[512,4], index: 2, kind: output, shape index: {0}]
  %s3 = inlined_call_operand.vmem [shape: f32[2,2,4], index: 3, kind: output, shape index: {1}]
  %4 = xla_tuple %s2, %s3
  %s5 = sld [smem:[#allocation0]]
  $region49: #{block_forward.4} parent=0
    _
  %s7 = ssub.s32 1, %s5
  %s8 = scalar_select 0, %s7, %s5
  loop: start=0, step=1, limit=4
  $region2: #{block_forward.4} parent=0 // loop_pre_header
    _
  $region3: #{block_forward.4} parent=0 // loop_header
    %s10 = sphi 0, %s14
    %p11 = scmp.ge.s32.totalorder %s10, 4
    %s20 = sphi 0, %s22
    %s23 = sphi 0, %s20
    %s24 = sphi 0, %s23
    %s40 = sphi 0, %s24
    %s44 = sphi 0, %s44
    %s46 = sphi 0, %s44
    %s47 = sphi 0, %s46
    %s61 = sphi 0, %s47
    %s67 = sphi 0, %s69
    %s70 = sphi 0, %s67
    %s71 = sphi 0, %s70
    %s87 = sphi 0, %s71
    %s93 = sphi 0, %s95
    %s96 = sphi 0, %s93
    %s97 = sphi 0, %s96
    %s113 = sphi 0, %s97
  $region4: #{block_forward.4} parent=0 // loop_header_branch
    %13 = sbr.rel (%p11) target = $region8
  $region5: #{block_forward.4} parent=0 // loop_body
    %s15 = ssub.s32 %s10, 1
    %s16 = ssub.s32 %s10, 2
    %s17 = sadd.s32 %s10, 1
    %s18 = ssub.s32 %s10, %s17
    %p19 = scmp.eq.s32.totalorder %s18, 0
    %s21 = sadd.s32 %s20, 1
    %s22 = scalar_select %p19, %s20, %s21
    %p25 = pneg %p19
    %p26 = scmp.eq.s32.totalorder %s10, 1
    %p27 = por %p25, %p26
    %p28 = scmp.ne.s32.totalorder %s20, %s23
    %p29 = scmp.eq.s32.totalorder %s10, 0
    %p30 = por %p28, %p29
    %p31 = scmp.ne.s32.totalorder %s20, %s23
    %p32 = scmp.eq.s32.totalorder %s15, 1
    %p33 = por %p31, %p32
    %p34 = scmp.ne.s32.totalorder %s23, %s24
    %p35 = scmp.eq.s32.totalorder %s15, 0
    %p36 = por %p34, %p35
    %p37 = scmp.ne.s32.totalorder %s23, %s24
    %p38 = scmp.eq.s32.totalorder %s16, 1
    %p39 = por %p37, %p38
    %p41 = scmp.ne.s32.totalorder %s24, %s40
    %p42 = scmp.eq.s32.totalorder %s16, 0
    %p43 = por %p41, %p42
    %s45 = sadd.s32 %s44, 1
    %p48 = scmp.eq.s32.totalorder %s10, 1
    %p49 = scmp.ne.s32.totalorder %s44, %s46
    %p50 = scmp.eq.s32.totalorder %s10, 0
    %p51 = por %p49, %p50
    %p52 = scmp.ne.s32.totalorder %s44, %s46
    %p53 = scmp.eq.s32.totalorder %s15, 1
    %p54 = por %p52, %p53
    %p55 = scmp.ne.s32.totalorder %s46, %s47
    %p56 = scmp.eq.s32.totalorder %s15, 0
    %p57 = por %p55, %p56
    %p58 = scmp.ne.s32.totalorder %s46, %s47
    %p59 = scmp.eq.s32.totalorder %s16, 1
    %p60 = por %p58, %p59
    %p62 = scmp.ne.s32.totalorder %s47, %s61
    %p63 = scmp.eq.s32.totalorder %s16, 0
    %p64 = por %p62, %p63
    %s65 = ssub.s32 %s10, %s17
    %p66 = scmp.eq.s32.totalorder %s65, 0
    %s68 = sadd.s32 %s67, 1
    %s69 = scalar_select %p66, %s67, %s68
    %p72 = pneg %p66
    %p73 = scmp.eq.s32.totalorder %s10, 1
    %p74 = por %p72, %p73
    %p75 = scmp.ne.s32.totalorder %s67, %s70
    %p76 = scmp.eq.s32.totalorder %s10, 0
    %p77 = por %p75, %p76
    %p78 = scmp.ne.s32.totalorder %s67, %s70
    %p79 = scmp.eq.s32.totalorder %s15, 1
    %p80 = por %p78, %p79
    %p81 = scmp.ne.s32.totalorder %s70, %s71
    %p82 = scmp.eq.s32.totalorder %s15, 0
    %p83 = por %p81, %p82
    %p84 = scmp.ne.s32.totalorder %s70, %s71
    %p85 = scmp.eq.s32.totalorder %s16, 1
    %p86 = por %p84, %p85
    %p88 = scmp.ne.s32.totalorder %s71, %s87
    %p89 = scmp.eq.s32.totalorder %s16, 0
    %p90 = por %p88, %p89
    %s91 = ssub.s32 %s10, %s17
    %p92 = scmp.eq.s32.totalorder %s91, 0
    %s94 = sadd.s32 %s93, 1
    %s95 = scalar_select %p92, %s93, %s94
    %p98 = pneg %p92
    %p99 = scmp.eq.s32.totalorder %s10, 1
    %p100 = por %p98, %p99
    %p101 = scmp.ne.s32.totalorder %s93, %s96
    %p102 = scmp.eq.s32.totalorder %s10, 0
    %p103 = por %p101, %p102
    %p104 = scmp.ne.s32.totalorder %s93, %s96
    %p105 = scmp.eq.s32.totalorder %s15, 1
    %p106 = por %p104, %p105
    %p107 = scmp.ne.s32.totalorder %s96, %s97
    %p108 = scmp.eq.s32.totalorder %s15, 0
    %p109 = por %p107, %p108
    %p110 = scmp.ne.s32.totalorder %s96, %s97
    %p111 = scmp.eq.s32.totalorder %s16, 1
    %p112 = por %p110, %p111
    %p114 = scmp.ne.s32.totalorder %s97, %s113
    %p115 = scmp.eq.s32.totalorder %s16, 0
    %p116 = por %p114, %p115
    %p117 = scmp.le.s32.totalorder 1, %s10
    %p118 = scmp.lt.s32.totalorder %s10, 3
    %p119 = pnand %p117, %p118
    %p120 = pneg %p119
    // Predicated region
    $region9: #{block_forward.4} parent=5 // pred_check
      _
    $region10: #{block_forward.4} parent=5 // pred_check_branch
      %122 = sbr.rel (%p119) target = $region12
    $region11: #{block_forward.4} parent=5 // pred_region
      %s123 = ssub.s32 %s10, 1
      // Predicated region
      $region13: #{block_forward.4} parent=11 // pred_check
        %p124 = pneg %p57
      $region14: #{block_forward.4} parent=11 // pred_check_branch
        %126 = sbr.rel (%p124) target = $region16
      $region15: #{block_forward.4} parent=11 // pred_region
        _
      $region16: #{block_forward.4} parent=11 // pred_fallthru
        _
    $region12: #{block_forward.4} parent=5 // pred_fallthru
      _
    %p127 = scmp.lt.s32.totalorder %s10, 2
    // Predicated region
    $region17: #{block_forward.4} parent=5 // pred_check
      %p128 = pneg %p127
    $region18: #{block_forward.4} parent=5 // pred_check_branch
      %130 = sbr.rel (%p128) target = $region20
    $region19: #{block_forward.4} parent=5 // pred_region
      // Predicated region
      $region21: #{block_forward.4} parent=19 // pred_check
        %p131 = pneg %p30
      $region22: #{block_forward.4} parent=19 // pred_check_branch
        %133 = sbr.rel (%p131) target = $region24
      $region23: #{block_forward.4} parent=19 // pred_region
        %s134 = smul.u32 32, %s10
        %p135 = scmp.lt.s32.totalorder %s134, 63
        %s136 = scalar_select %p135, %s134, 63
        %s137 = smul.addr %s136, 8
        %s138 = scalar_lea.vmem %s0, %s137
        %s139 = smul.u32 32, %s10
      $region24: #{block_forward.4} parent=19 // pred_fallthru
        _
    $region20: #{block_forward.4} parent=5 // pred_fallthru
      _
    %p140 = scmp.le.s32.totalorder 1, %s10
    %p141 = scmp.lt.s32.totalorder %s10, 3
    %p142 = pnand %p140, %p141
    %p143 = pneg %p142
    // Predicated region
    $region25: #{block_forward.4} parent=5 // pred_check
      _
    $region26: #{block_forward.4} parent=5 // pred_check_branch
      %145 = sbr.rel (%p142) target = $region28
    $region27: #{block_forward.4} parent=5 // pred_region
      %s146 = ssub.s32 %s10, 1
      %s147 = smul.u32 32, %s15
      %p148 = scmp.lt.s32.totalorder %s147, 63
      %s149 = scalar_select %p148, %s147, 63
      %s150 = smul.addr %s149, 8
      %s151 = scalar_lea.vmem %s0, %s150
      %p152 = pneg %p36
      %p153 = pneg %p33
      %p154 = pneg %p57
      %p155 = pneg %p54
      %p156 = pneg %p83
      %p157 = pneg %p80
      %s158 = smul.u32 32, %s15
      %p159 = scmp.lt.s32.totalorder %s158, 63
      %s160 = scalar_select %p159, %s158, 63
      %s161 = smul.addr %s160, 4
      %s162 = scalar_lea.vmem %s2, %s161
      %p163 = pneg %p109
      %p164 = pneg %p106
      %p165 = scmp.lt.s32.totalorder %s15, 1
      %s166 = scalar_select %p165, %s15, 1
      %s167 = smul.addr %s166, 2
      %s168 = scalar_lea.vmem %s3, %s167
      %s169 = smul.u32 32, %s15
      %p170 = scmp.lt.s32.totalorder %s169, 63
      %s171 = scalar_select %p170, %s169, 63
      %s172 = smul.addr %s171, 8
      %s173 = scalar_lea.vmem %s0, %s172
      %s174 = smul.u32 32, %s15
      %s175 = smul.u32 32, %s15
      %p176 = scmp.lt.s32.totalorder %s175, 63
      %s177 = scalar_select %p176, %s175, 63
      %s178 = smul.addr %s177, 4
      %s179 = scalar_lea.vmem %s2, %s178
      %s180 = smul.u32 32, %s15
      %p181 = scmp.lt.s32.totalorder %s15, 1
      %s182 = scalar_select %p181, %s15, 1
      %s183 = smul.addr %s182, 2
      %s184 = scalar_lea.vmem %s3, %s183
      %v186 = vld [vmem:[%s173] sm:$0xff]
      %v187 = vld [vmem:[%s173 + $0x8] sm:$0xff]
      %v188 = vld [vmem:[%s173 + $0x10] sm:$0xff]
      %v189 = vld [vmem:[%s173 + $0x18] sm:$0xff]
      %v190 = vld [vmem:[%s173 + $0x20] sm:$0xff]
      %v191 = vld [vmem:[%s173 + $0x28] sm:$0xff]
      %v192 = vld [vmem:[%s173 + $0x30] sm:$0xff]
      %v193 = vld [vmem:[%s173 + $0x38] sm:$0xff]
      %v194 = vld [vmem:[%s173 + $0x40] sm:$0xff]
      %v195 = vld [vmem:[%s173 + $0x48] sm:$0xff]
      %v196 = vld [vmem:[%s173 + $0x50] sm:$0xff]
      %v197 = vld [vmem:[%s173 + $0x58] sm:$0xff]
      %v198 = vld [vmem:[%s173 + $0x60] sm:$0xff]
      %v199 = vld [vmem:[%s173 + $0x68] sm:$0xff]
      %v200 = vld [vmem:[%s173 + $0x70] sm:$0xff]
      %v201 = vld [vmem:[%s173 + $0x78] sm:$0xff]
      %v202 = vld [vmem:[%s173 + $0x80] sm:$0xff]
      %v203 = vld [vmem:[%s173 + $0x88] sm:$0xff]
      %v204 = vld [vmem:[%s173 + $0x90] sm:$0xff]
      %v205 = vld [vmem:[%s173 + $0x98] sm:$0xff]
      %v206 = vld [vmem:[%s173 + $0xa0] sm:$0xff]
      %v207 = vld [vmem:[%s173 + $0xa8] sm:$0xff]
      %v208 = vld [vmem:[%s173 + $0xb0] sm:$0xff]
      %v209 = vld [vmem:[%s173 + $0xb8] sm:$0xff]
      %v210 = vld [vmem:[%s173 + $0xc0] sm:$0xff]
      %v211 = vld [vmem:[%s173 + $0xc8] sm:$0xff]
      %v212 = vld [vmem:[%s173 + $0xd0] sm:$0xff]
      %v213 = vld [vmem:[%s173 + $0xd8] sm:$0xff]
      %v214 = vld [vmem:[%s173 + $0xe0] sm:$0xff]
      %v215 = vld [vmem:[%s173 + $0xe8] sm:$0xff]
      %v216 = vld [vmem:[%s173 + $0xf0] sm:$0xff]
      %v217 = vld [vmem:[%s173 + $0xf8] sm:$0xff]
      %v218 = vpack.c.bf16 %v187, %v186
      %v219 = vpack.c.bf16 %v189, %v188
      %v220 = vpack.c.bf16 %v191, %v190
      %v221 = vpack.c.bf16 %v193, %v192
      %v222 = vpack.c.bf16 %v195, %v194
      %v223 = vpack.c.bf16 %v197, %v196
      %v224 = vpack.c.bf16 %v199, %v198
      %v225 = vpack.c.bf16 %v201, %v200
      %v226 = vpack.c.bf16 %v203, %v202
      %v227 = vpack.c.bf16 %v205, %v204
      %v228 = vpack.c.bf16 %v207, %v206
      %v229 = vpack.c.bf16 %v209, %v208
      %v230 = vpack.c.bf16 %v211, %v210
      %v231 = vpack.c.bf16 %v213, %v212
      %v232 = vpack.c.bf16 %v215, %v214
      %v233 = vpack.c.bf16 %v217, %v216
      %v234 = vld [vmem:[%s1] sm:$0xf]
      %v235 = vld [vmem:[%s1 + $0x4] sm:$0xf]
      %v238 = vunpack.c.l.b16 %v234
      %v239 = vunpack.c.l.b16 %v235
      %v240 = vpack.c.b16 %v239, %v238
      %vm242 = vcmask 130048
      %v244 = vsel %vm242, %v218, 0
      %v247 = vsel %vm242, %v219, 0
      %v250 = vsel %vm242, %v220, 0
      %v253 = vsel %vm242, %v221, 0
      %v256 = vsel %vm242, %v222, 0
      %v259 = vsel %vm242, %v223, 0
      %v262 = vsel %vm242, %v224, 0
      %v265 = vsel %vm242, %v225, 0
      %v268 = vsel %vm242, %v226, 0
      %v271 = vsel %vm242, %v227, 0
      %v274 = vsel %vm242, %v228, 0
      %v277 = vsel %vm242, %v229, 0
      %v280 = vsel %vm242, %v230, 0
      %v283 = vsel %vm242, %v231, 0
      %v286 = vsel %vm242, %v232, 0
      %v289 = vsel %vm242, %v233, 0
      %291 = vmatprep.subr.bf16.mxu0 0
      %292 = vmatpush1.bf16.msra.mxu0 0
      %293 = vmatprep.subr.bf16.mxu0 0
      %294 = vmatpush1.bf16.msra.mxu0 0
      %295 = vmatprep.subr.bf16.mxu0 0
      %296 = vmatpush1.bf16.msra.mxu0 0
      %297 = vmatprep.subr.bf16.mxu0 0
      %298 = vmatpush1.bf16.msra.mxu0 0
      %299 = vmatprep.subr.bf16.mxu0 0
      %300 = vmatpush1.bf16.msra.mxu0 0
      %301 = vmatprep.subr.bf16.mxu0 0
      %302 = vmatpush1.bf16.msra.mxu0 0
      %303 = vmatprep.subr.bf16.mxu0 0
      %304 = vmatpush1.bf16.msra.mxu0 0
      %305 = vmatprep.subr.bf16.mxu0 0
      %306 = vmatpush1.bf16.msra.mxu0 %v240
      %307 = vmatprep.subr.bf16.mxu0 0
      %308 = vmatpush2.bf16.msra.mxu0 0
      %309 = vmatprep.subr.bf16.mxu0 0
      %310 = vmatpush2.bf16.msra.mxu0 0
      %311 = vmatprep.subr.bf16.mxu0 0
      %312 = vmatpush2.bf16.msra.mxu0 0
      %313 = vmatprep.subr.bf16.mxu0 0
      %314 = vmatpush2.bf16.msra.mxu0 0
      %315 = vmatprep.subr.bf16.mxu0 0
      %316 = vmatpush2.bf16.msra.mxu0 0
      %317 = vmatprep.subr.bf16.mxu0 0
      %318 = vmatpush2.bf16.msra.mxu0 0
      %319 = vmatprep.subr.bf16.mxu0 0
      %320 = vmatpush2.bf16.msra.mxu0 0
      %321 = vmatprep.subr.bf16.mxu0 0
      %322 = vmatpush2.bf16.msra.mxu0 0
      %323 = vmatprep.mubr.bf16.mxu0 0
      %324 = vmatmul.mubr.bf16.gmra.mxu0 %v244
      %v325 = vpop.f32.mrf.mxu0
      %v326 = vadd.f32 0.0, %v325
      %v327 = vpop.f32.mrf.mxu0
      %v328 = vpop.f32.mrf.mxu0
      %v329 = vadd.f32 0.0, %v328
      %v330 = vpop.f32.mrf.mxu0
      %331 = vmatprep.mubr.bf16.mxu0 0
      %332 = vmatmul.mubr.bf16.gmra.mxu0 %v247
      %v333 = vpop.f32.mrf.mxu0
      %v334 = vadd.f32 0.0, %v333
      %v335 = vpop.f32.mrf.mxu0
      %v336 = vpop.f32.mrf.mxu0
      %v337 = vadd.f32 0.0, %v336
      %v338 = vpop.f32.mrf.mxu0
      %339 = vmatprep.mubr.bf16.mxu0 0
      %340 = vmatmul.mubr.bf16.gmra.mxu0 %v250
      %v341 = vpop.f32.mrf.mxu0
      %v342 = vadd.f32 0.0, %v341
      %v343 = vpop.f32.mrf.mxu0
      %v344 = vpop.f32.mrf.mxu0
      %v345 = vadd.f32 0.0, %v344
      %v346 = vpop.f32.mrf.mxu0
      %347 = vmatprep.mubr.bf16.mxu0 0
      %348 = vmatmul.mubr.bf16.gmra.mxu0 %v253
      %v349 = vpop.f32.mrf.mxu0
      %v350 = vadd.f32 0.0, %v349
      %v351 = vpop.f32.mrf.mxu0
      %v352 = vpop.f32.mrf.mxu0
      %v353 = vadd.f32 0.0, %v352
      %v354 = vpop.f32.mrf.mxu0
      %355 = vmatprep.mubr.bf16.mxu0 0
      %356 = vmatmul.mubr.bf16.gmra.mxu0 %v256
      %v357 = vpop.f32.mrf.mxu0
      %v358 = vadd.f32 0.0, %v357
      %v359 = vpop.f32.mrf.mxu0
      %v360 = vpop.f32.mrf.mxu0
      %v361 = vadd.f32 0.0, %v360
      %v362 = vpop.f32.mrf.mxu0
      %363 = vmatprep.mubr.bf16.mxu0 0
      %364 = vmatmul.mubr.bf16.gmra.mxu0 %v259
      %v365 = vpop.f32.mrf.mxu0
      %v366 = vadd.f32 0.0, %v365
      %v367 = vpop.f32.mrf.mxu0
      %v368 = vpop.f32.mrf.mxu0
      %v369 = vadd.f32 0.0, %v368
      %v370 = vpop.f32.mrf.mxu0
      %371 = vmatprep.mubr.bf16.mxu0 0
      %372 = vmatmul.mubr.bf16.gmra.mxu0 %v262
      %v373 = vpop.f32.mrf.mxu0
      %v374 = vadd.f32 0.0, %v373
      %v375 = vpop.f32.mrf.mxu0
      %v376 = vpop.f32.mrf.mxu0
      %v377 = vadd.f32 0.0, %v376
      %v378 = vpop.f32.mrf.mxu0
      %379 = vmatprep.mubr.bf16.mxu0 0
      %380 = vmatmul.mubr.bf16.gmra.mxu0 %v265
      %v381 = vpop.f32.mrf.mxu0
      %v382 = vadd.f32 0.0, %v381
      %v383 = vpop.f32.mrf.mxu0
      %v384 = vpop.f32.mrf.mxu0
      %v385 = vadd.f32 0.0, %v384
      %v386 = vpop.f32.mrf.mxu0
      %387 = vmatprep.mubr.bf16.mxu0 0
      %388 = vmatmul.mubr.bf16.gmra.mxu0 %v268
      %v389 = vpop.f32.mrf.mxu0
      %v390 = vadd.f32 0.0, %v389
      %v391 = vpop.f32.mrf.mxu0
      %v392 = vpop.f32.mrf.mxu0
      %v393 = vadd.f32 0.0, %v392
      %v394 = vpop.f32.mrf.mxu0
      %395 = vmatprep.mubr.bf16.mxu0 0
      %396 = vmatmul.mubr.bf16.gmra.mxu0 %v271
      %v397 = vpop.f32.mrf.mxu0
      %v398 = vadd.f32 0.0, %v397
      %v399 = vpop.f32.mrf.mxu0
      %v400 = vpop.f32.mrf.mxu0
      %v401 = vadd.f32 0.0, %v400
      %v402 = vpop.f32.mrf.mxu0
      %403 = vmatprep.mubr.bf16.mxu0 0
      %404 = vmatmul.mubr.bf16.gmra.mxu0 %v274
      %v405 = vpop.f32.mrf.mxu0
      %v406 = vadd.f32 0.0, %v405
      %v407 = vpop.f32.mrf.mxu0
      %v408 = vpop.f32.mrf.mxu0
      %v409 = vadd.f32 0.0, %v408
      %v410 = vpop.f32.mrf.mxu0
      %411 = vmatprep.mubr.bf16.mxu0 0
      %412 = vmatmul.mubr.bf16.gmra.mxu0 %v277
      %v413 = vpop.f32.mrf.mxu0
      %v414 = vadd.f32 0.0, %v413
      %v415 = vpop.f32.mrf.mxu0
      %v416 = vpop.f32.mrf.mxu0
      %v417 = vadd.f32 0.0, %v416
      %v418 = vpop.f32.mrf.mxu0
      %419 = vmatprep.mubr.bf16.mxu0 0
      %420 = vmatmul.mubr.bf16.gmra.mxu0 %v280
      %v421 = vpop.f32.mrf.mxu0
      %v422 = vadd.f32 0.0, %v421
      %v423 = vpop.f32.mrf.mxu0
      %v424 = vpop.f32.mrf.mxu0
      %v425 = vadd.f32 0.0, %v424
      %v426 = vpop.f32.mrf.mxu0
      %427 = vmatprep.mubr.bf16.mxu0 0
      %428 = vmatmul.mubr.bf16.gmra.mxu0 %v283
      %v429 = vpop.f32.mrf.mxu0
      %v430 = vadd.f32 0.0, %v429
      %v431 = vpop.f32.mrf.mxu0
      %v432 = vpop.f32.mrf.mxu0
      %v433 = vadd.f32 0.0, %v432
      %v434 = vpop.f32.mrf.mxu0
      %435 = vmatprep.mubr.bf16.mxu0 0
      %436 = vmatmul.mubr.bf16.gmra.mxu0 %v286
      %v437 = vpop.f32.mrf.mxu0
      %v438 = vadd.f32 0.0, %v437
      %v439 = vpop.f32.mrf.mxu0
      %v440 = vpop.f32.mrf.mxu0
      %v441 = vadd.f32 0.0, %v440
      %v442 = vpop.f32.mrf.mxu0
      %443 = vmatprep.mubr.bf16.mxu0 0
      %444 = vmatmul.mubr.bf16.gmra.mxu0 %v289
      %v445 = vpop.f32.mrf.mxu0
      %v446 = vadd.f32 0.0, %v445
      %v447 = vpop.f32.mrf.mxu0
      %v448 = vpop.f32.mrf.mxu0
      %v449 = vadd.f32 0.0, %v448
      %v450 = vpop.f32.mrf.mxu0
      %451 = vdwg.mxu0
      %v452 = vpack.c.bf16 %v329, %v326
      %v453 = vpack.c.bf16 %v337, %v334
      %v454 = vpack.c.bf16 %v345, %v342
      %v455 = vpack.c.bf16 %v353, %v350
      %v456 = vpack.c.bf16 %v361, %v358
      %v457 = vpack.c.bf16 %v369, %v366
      %v458 = vpack.c.bf16 %v377, %v374
      %v459 = vpack.c.bf16 %v385, %v382
      %v460 = vpack.c.bf16 %v393, %v390
      %v461 = vpack.c.bf16 %v401, %v398
      %v462 = vpack.c.bf16 %v409, %v406
      %v463 = vpack.c.bf16 %v417, %v414
      %v464 = vpack.c.bf16 %v425, %v422
      %v465 = vpack.c.bf16 %v433, %v430
      %v466 = vpack.c.bf16 %v441, %v438
      %v467 = vpack.c.bf16 %v449, %v446
      %v484 = vunpack.c.l.b16 %v452
      %v485 = vunpack.c.h.b16 %v452
      %v486 = vunpack.c.l.b16 %v453
      %v487 = vunpack.c.h.b16 %v453
      %v488 = vunpack.c.l.b16 %v454
      %v489 = vunpack.c.h.b16 %v454
      %v490 = vunpack.c.l.b16 %v455
      %v491 = vunpack.c.h.b16 %v455
      %v492 = vunpack.c.l.b16 %v456
      %v493 = vunpack.c.h.b16 %v456
      %v494 = vunpack.c.l.b16 %v457
      %v495 = vunpack.c.h.b16 %v457
      %v496 = vunpack.c.l.b16 %v458
      %v497 = vunpack.c.h.b16 %v458
      %v498 = vunpack.c.l.b16 %v459
      %v499 = vunpack.c.h.b16 %v459
      %v500 = vunpack.c.l.b16 %v460
      %v501 = vunpack.c.h.b16 %v460
      %v502 = vunpack.c.l.b16 %v461
      %v503 = vunpack.c.h.b16 %v461
      %v504 = vunpack.c.l.b16 %v462
      %v505 = vunpack.c.h.b16 %v462
      %v506 = vunpack.c.l.b16 %v463
      %v507 = vunpack.c.h.b16 %v463
      %v508 = vunpack.c.l.b16 %v464
      %v509 = vunpack.c.h.b16 %v464
      %v510 = vunpack.c.l.b16 %v465
      %v511 = vunpack.c.h.b16 %v465
      %v512 = vunpack.c.l.b16 %v466
      %v513 = vunpack.c.h.b16 %v466
      %v514 = vunpack.c.l.b16 %v467
      %v515 = vunpack.c.h.b16 %v467
      %v516 = vpack.c.b16 %v484, %v484
      %v517 = vpack.c.b16 %v485, %v485
      %v518 = vpack.c.b16 %v486, %v486
      %v519 = vpack.c.b16 %v487, %v487
      %v520 = vpack.c.b16 %v488, %v488
      %v521 = vpack.c.b16 %v489, %v489
      %v522 = vpack.c.b16 %v490, %v490
      %v523 = vpack.c.b16 %v491, %v491
      %v524 = vpack.c.b16 %v492, %v492
      %v525 = vpack.c.b16 %v493, %v493
      %v526 = vpack.c.b16 %v494, %v494
      %v527 = vpack.c.b16 %v495, %v495
      %v528 = vpack.c.b16 %v496, %v496
      %v529 = vpack.c.b16 %v497, %v497
      %v530 = vpack.c.b16 %v498, %v498
      %v531 = vpack.c.b16 %v499, %v499
      %v532 = vpack.c.b16 %v500, %v500
      %v533 = vpack.c.b16 %v501, %v501
      %v534 = vpack.c.b16 %v502, %v502
      %v535 = vpack.c.b16 %v503, %v503
      %v536 = vpack.c.b16 %v504, %v504
      %v537 = vpack.c.b16 %v505, %v505
      %v538 = vpack.c.b16 %v506, %v506
      %v539 = vpack.c.b16 %v507, %v507
      %v540 = vpack.c.b16 %v508, %v508
      %v541 = vpack.c.b16 %v509, %v509
      %v542 = vpack.c.b16 %v510, %v510
      %v543 = vpack.c.b16 %v511, %v511
      %v544 = vpack.c.b16 %v512, %v512
      %v545 = vpack.c.b16 %v513, %v513
      %v546 = vpack.c.b16 %v514, %v514
      %v547 = vpack.c.b16 %v515, %v515
      %vm580 = vcmask 27648
      %581 = vst.msk [vmem:[%s179] sm:$0xf] %vm580, %v516
      %582 = vst.msk [vmem:[%s179 + $0x4] sm:$0xf] %vm580, %v517
      %583 = vst.msk [vmem:[%s179 + $0x8] sm:$0xf] %vm580, %v518
      %584 = vst.msk [vmem:[%s179 + $0xc] sm:$0xf] %vm580, %v519
      %585 = vst.msk [vmem:[%s179 + $0x10] sm:$0xf] %vm580, %v520
      %586 = vst.msk [vmem:[%s179 + $0x14] sm:$0xf] %vm580, %v521
      %587 = vst.msk [vmem:[%s179 + $0x18] sm:$0xf] %vm580, %v522
      %588 = vst.msk [vmem:[%s179 + $0x1c] sm:$0xf] %vm580, %v523
      %589 = vst.msk [vmem:[%s179 + $0x20] sm:$0xf] %vm580, %v524
      %590 = vst.msk [vmem:[%s179 + $0x24] sm:$0xf] %vm580, %v525
      %591 = vst.msk [vmem:[%s179 + $0x28] sm:$0xf] %vm580, %v526
      %592 = vst.msk [vmem:[%s179 + $0x2c] sm:$0xf] %vm580, %v527
      %593 = vst.msk [vmem:[%s179 + $0x30] sm:$0xf] %vm580, %v528
      %594 = vst.msk [vmem:[%s179 + $0x34] sm:$0xf] %vm580, %v529
      %595 = vst.msk [vmem:[%s179 + $0x38] sm:$0xf] %vm580, %v530
      %596 = vst.msk [vmem:[%s179 + $0x3c] sm:$0xf] %vm580, %v531
      %597 = vst.msk [vmem:[%s179 + $0x40] sm:$0xf] %vm580, %v532
      %598 = vst.msk [vmem:[%s179 + $0x44] sm:$0xf] %vm580, %v533
      %599 = vst.msk [vmem:[%s179 + $0x48] sm:$0xf] %vm580, %v534
      %600 = vst.msk [vmem:[%s179 + $0x4c] sm:$0xf] %vm580, %v535
      %601 = vst.msk [vmem:[%s179 + $0x50] sm:$0xf] %vm580, %v536
      %602 = vst.msk [vmem:[%s179 + $0x54] sm:$0xf] %vm580, %v537
      %603 = vst.msk [vmem:[%s179 + $0x58] sm:$0xf] %vm580, %v538
      %604 = vst.msk [vmem:[%s179 + $0x5c] sm:$0xf] %vm580, %v539
      %605 = vst.msk [vmem:[%s179 + $0x60] sm:$0xf] %vm580, %v540
      %606 = vst.msk [vmem:[%s179 + $0x64] sm:$0xf] %vm580, %v541
      %607 = vst.msk [vmem:[%s179 + $0x68] sm:$0xf] %vm580, %v542
      %608 = vst.msk [vmem:[%s179 + $0x6c] sm:$0xf] %vm580, %v543
      %609 = vst.msk [vmem:[%s179 + $0x70] sm:$0xf] %vm580, %v544
      %610 = vst.msk [vmem:[%s179 + $0x74] sm:$0xf] %vm580, %v545
      %611 = vst.msk [vmem:[%s179 + $0x78] sm:$0xf] %vm580, %v546
      %612 = vst.msk [vmem:[%s179 + $0x7c] sm:$0xf] %vm580, %v547
      %vm613 = vcmask 31744
      %v614 = vsel %vm613, %v326, 0.0
      %v615 = vsel %vm613, %v329, 0.0
      %v616 = vadd.f32 %v614, %v615
      %v617 = vsel %vm613, %v334, 0.0
      %v618 = vadd.f32 %v616, %v617
      %v619 = vsel %vm613, %v337, 0.0
      %v620 = vadd.f32 %v618, %v619
      %v621 = vsel %vm613, %v342, 0.0
      %v622 = vadd.f32 %v620, %v621
      %v623 = vsel %vm613, %v345, 0.0
      %v624 = vadd.f32 %v622, %v623
      %v625 = vsel %vm613, %v350, 0.0
      %v626 = vadd.f32 %v624, %v625
      %v627 = vsel %vm613, %v353, 0.0
      %v628 = vadd.f32 %v626, %v627
      %v629 = vsel %vm613, %v358, 0.0
      %v630 = vadd.f32 %v628, %v629
      %v631 = vsel %vm613, %v361, 0.0
      %v632 = vadd.f32 %v630, %v631
      %v633 = vsel %vm613, %v366, 0.0
      %v634 = vadd.f32 %v632, %v633
      %v635 = vsel %vm613, %v369, 0.0
      %v636 = vadd.f32 %v634, %v635
      %v637 = vsel %vm613, %v374, 0.0
      %v638 = vadd.f32 %v636, %v637
      %v639 = vsel %vm613, %v377, 0.0
      %v640 = vadd.f32 %v638, %v639
      %v641 = vsel %vm613, %v382, 0.0
      %v642 = vadd.f32 %v640, %v641
      %v643 = vsel %vm613, %v385, 0.0
      %v644 = vadd.f32 %v642, %v643
      %v645 = vsel %vm613, %v390, 0.0
      %v646 = vadd.f32 %v644, %v645
      %v647 = vsel %vm613, %v393, 0.0
      %v648 = vadd.f32 %v646, %v647
      %v649 = vsel %vm613, %v398, 0.0
      %v650 = vadd.f32 %v648, %v649
      %v651 = vsel %vm613, %v401, 0.0
      %v652 = vadd.f32 %v650, %v651
      %v653 = vsel %vm613, %v406, 0.0
      %v654 = vadd.f32 %v652, %v653
      %v655 = vsel %vm613, %v409, 0.0
      %v656 = vadd.f32 %v654, %v655
      %v657 = vsel %vm613, %v414, 0.0
      %v658 = vadd.f32 %v656, %v657
      %v659 = vsel %vm613, %v417, 0.0
      %v660 = vadd.f32 %v658, %v659
      %v661 = vsel %vm613, %v422, 0.0
      %v662 = vadd.f32 %v660, %v661
      %v663 = vsel %vm613, %v425, 0.0
      %v664 = vadd.f32 %v662, %v663
      %v665 = vsel %vm613, %v430, 0.0
      %v666 = vadd.f32 %v664, %v665
      %v667 = vsel %vm613, %v433, 0.0
      %v668 = vadd.f32 %v666, %v667
      %v669 = vsel %vm613, %v438, 0.0
      %v670 = vadd.f32 %v668, %v669
      %v671 = vsel %vm613, %v441, 0.0
      %v672 = vadd.f32 %v670, %v671
      %v673 = vsel %vm613, %v446, 0.0
      %v674 = vadd.f32 %v672, %v673
      %v675 = vsel %vm613, %v449, 0.0
      %v676 = vadd.f32 %v674, %v675
      %v677 = vrot.slane %v676, 4
      %v678 = vadd.f32 %v676, %v677
      %v679 = vrot.slane %v678, 2
      %v680 = vadd.f32 %v678, %v679
      %v681 = vrot.slane %v680, 1
      %v682 = vadd.f32 %v680, %v681
      %v683 = vmul.f32 %v682, 0.00390625
      %v684 = vsub.f32 %v326, %v683
      %v685 = vsub.f32 %v329, %v683
      %v686 = vsub.f32 %v334, %v683
      %v687 = vsub.f32 %v337, %v683
      %v688 = vsub.f32 %v342, %v683
      %v689 = vsub.f32 %v345, %v683
      %v690 = vsub.f32 %v350, %v683
      %v691 = vsub.f32 %v353, %v683
      %v692 = vsub.f32 %v358, %v683
      %v693 = vsub.f32 %v361, %v683
      %v694 = vsub.f32 %v366, %v683
      %v695 = vsub.f32 %v369, %v683
      %v696 = vsub.f32 %v374, %v683
      %v697 = vsub.f32 %v377, %v683
      %v698 = vsub.f32 %v382, %v683
      %v699 = vsub.f32 %v385, %v683
      %v700 = vsub.f32 %v390, %v683
      %v701 = vsub.f32 %v393, %v683
      %v702 = vsub.f32 %v398, %v683
      %v703 = vsub.f32 %v401, %v683
      %v704 = vsub.f32 %v406, %v683
      %v705 = vsub.f32 %v409, %v683
      %v706 = vsub.f32 %v414, %v683
      %v707 = vsub.f32 %v417, %v683
      %v708 = vsub.f32 %v422, %v683
      %v709 = vsub.f32 %v425, %v683
      %v710 = vsub.f32 %v430, %v683
      %v711 = vsub.f32 %v433, %v683
      %v712 = vsub.f32 %v438, %v683
      %v713 = vsub.f32 %v441, %v683
      %v714 = vsub.f32 %v446, %v683
      %v715 = vsub.f32 %v449, %v683
      %v716 = vmul.f32 %v684, %v684
      %v717 = vmul.f32 %v685, %v685
      %v718 = vmul.f32 %v686, %v686
      %v719 = vmul.f32 %v687, %v687
      %v720 = vmul.f32 %v688, %v688
      %v721 = vmul.f32 %v689, %v689
      %v722 = vmul.f32 %v690, %v690
      %v723 = vmul.f32 %v691, %v691
      %v724 = vmul.f32 %v692, %v692
      %v725 = vmul.f32 %v693, %v693
      %v726 = vmul.f32 %v694, %v694
      %v727 = vmul.f32 %v695, %v695
      %v728 = vmul.f32 %v696, %v696
      %v729 = vmul.f32 %v697, %v697
      %v730 = vmul.f32 %v698, %v698
      %v731 = vmul.f32 %v699, %v699
      %v732 = vmul.f32 %v700, %v700
      %v733 = vmul.f32 %v701, %v701
      %v734 = vmul.f32 %v702, %v702
      %v735 = vmul.f32 %v703, %v703
      %v736 = vmul.f32 %v704, %v704
      %v737 = vmul.f32 %v705, %v705
      %v738 = vmul.f32 %v706, %v706
      %v739 = vmul.f32 %v707, %v707
      %v740 = vmul.f32 %v708, %v708
      %v741 = vmul.f32 %v709, %v709
      %v742 = vmul.f32 %v710, %v710
      %v743 = vmul.f32 %v711, %v711
      %v744 = vmul.f32 %v712, %v712
      %v745 = vmul.f32 %v713, %v713
      %v746 = vmul.f32 %v714, %v714
      %v747 = vmul.f32 %v715, %v715
      %v748 = vsel %vm613, %v716, 0.0
      %v749 = vsel %vm613, %v717, 0.0
      %v750 = vadd.f32 %v748, %v749
      %v751 = vsel %vm613, %v718, 0.0
      %v752 = vadd.f32 %v750, %v751
      %v753 = vsel %vm613, %v719, 0.0
      %v754 = vadd.f32 %v752, %v753
      %v755 = vsel %vm613, %v720, 0.0
      %v756 = vadd.f32 %v754, %v755
      %v757 = vsel %vm613, %v721, 0.0
      %v758 = vadd.f32 %v756, %v757
      %v759 = vsel %vm613, %v722, 0.0
      %v760 = vadd.f32 %v758, %v759
      %v761 = vsel %vm613, %v723, 0.0
      %v762 = vadd.f32 %v760, %v761
      %v763 = vsel %vm613, %v724, 0.0
      %v764 = vadd.f32 %v762, %v763
      %v765 = vsel %vm613, %v725, 0.0
      %v766 = vadd.f32 %v764, %v765
      %v767 = vsel %vm613, %v726, 0.0
      %v768 = vadd.f32 %v766, %v767
      %v769 = vsel %vm613, %v727, 0.0
      %v770 = vadd.f32 %v768, %v769
      %v771 = vsel %vm613, %v728, 0.0
      %v772 = vadd.f32 %v770, %v771
      %v773 = vsel %vm613, %v729, 0.0
      %v774 = vadd.f32 %v772, %v773
      %v775 = vsel %vm613, %v730, 0.0
      %v776 = vadd.f32 %v774, %v775
      %v777 = vsel %vm613, %v731, 0.0
      %v778 = vadd.f32 %v776, %v777
      %v779 = vsel %vm613, %v732, 0.0
      %v780 = vadd.f32 %v778, %v779
      %v781 = vsel %vm613, %v733, 0.0
      %v782 = vadd.f32 %v780, %v781
      %v783 = vsel %vm613, %v734, 0.0
      %v784 = vadd.f32 %v782, %v783
      %v785 = vsel %vm613, %v735, 0.0
      %v786 = vadd.f32 %v784, %v785
      %v787 = vsel %vm613, %v736, 0.0
      %v788 = vadd.f32 %v786, %v787
      %v789 = vsel %vm613, %v737, 0.0
      %v790 = vadd.f32 %v788, %v789
      %v791 = vsel %vm613, %v738, 0.0
      %v792 = vadd.f32 %v790, %v791
      %v793 = vsel %vm613, %v739, 0.0
      %v794 = vadd.f32 %v792, %v793
      %v795 = vsel %vm613, %v740, 0.0
      %v796 = vadd.f32 %v794, %v795
      %v797 = vsel %vm613, %v741, 0.0
      %v798 = vadd.f32 %v796, %v797
      %v799 = vsel %vm613, %v742, 0.0
      %v800 = vadd.f32 %v798, %v799
      %v801 = vsel %vm613, %v743, 0.0
      %v802 = vadd.f32 %v800, %v801
      %v803 = vsel %vm613, %v744, 0.0
      %v804 = vadd.f32 %v802, %v803
      %v805 = vsel %vm613, %v745, 0.0
      %v806 = vadd.f32 %v804, %v805
      %v807 = vsel %vm613, %v746, 0.0
      %v808 = vadd.f32 %v806, %v807
      %v809 = vsel %vm613, %v747, 0.0
      %v810 = vadd.f32 %v808, %v809
      %v811 = vrot.slane %v810, 4
      %v812 = vadd.f32 %v810, %v811
      %v813 = vrot.slane %v812, 2
      %v814 = vadd.f32 %v812, %v813
      %v815 = vrot.slane %v814, 1
      %v816 = vadd.f32 %v814, %v815
      %vm817 = vcmask 1040384
      %v818 = vsel %vm817, %v682, %v816
      %vm819 = vcmask 25600
      %820 = vst.msk [vmem:[%s184] sm:$0x3] %vm819, %v818
      %s821 = smul.u32 32, %s15
      %p822 = scmp.lt.s32.totalorder %s821, 63
      %s823 = scalar_select %p822, %s821, 63
      %s824 = smul.addr %s823, 4
      %s825 = scalar_lea.vmem %s2, %s824
      %p826 = scmp.lt.s32.totalorder %s15, 1
      %s827 = scalar_select %p826, %s15, 1
      %s828 = smul.addr %s827, 2
      %s829 = scalar_lea.vmem %s3, %s828
      // Predicated region
      $region29: #{block_forward.4} parent=27 // pred_check
        %p830 = pneg %p80
      $region30: #{block_forward.4} parent=27 // pred_check_branch
        %832 = sbr.rel (%p830) target = $region32
      $region31: #{block_forward.4} parent=27 // pred_region
        %s833 = smul.u32 32, %s15
      $region32: #{block_forward.4} parent=27 // pred_fallthru
        _
      // Predicated region
      $region33: #{block_forward.4} parent=27 // pred_check
        %p834 = pneg %p106
      $region34: #{block_forward.4} parent=27 // pred_check_branch
        %836 = sbr.rel (%p834) target = $region36
      $region35: #{block_forward.4} parent=27 // pred_region
        _
      $region36: #{block_forward.4} parent=27 // pred_fallthru
        _
    $region28: #{block_forward.4} parent=5 // pred_fallthru
      _
    %p837 = scmp.le.s32.totalorder 2, %s10
    // Predicated region
    $region37: #{block_forward.4} parent=5 // pred_check
      %p838 = pneg %p837
    $region38: #{block_forward.4} parent=5 // pred_check_branch
      %840 = sbr.rel (%p838) target = $region40
    $region39: #{block_forward.4} parent=5 // pred_region
      %s841 = ssub.s32 %s10, 2
      // Predicated region
      $region41: #{block_forward.4} parent=39 // pred_check
        %p842 = pneg %p86
      $region42: #{block_forward.4} parent=39 // pred_check_branch
        %844 = sbr.rel (%p842) target = $region44
      $region43: #{block_forward.4} parent=39 // pred_region
        %s845 = smul.u32 32, %s16
        %p846 = scmp.lt.s32.totalorder %s845, 63
        %s847 = scalar_select %p846, %s845, 63
        %s848 = smul.addr %s847, 4
        %s849 = scalar_lea.vmem %s2, %s848
      $region44: #{block_forward.4} parent=39 // pred_fallthru
        _
      // Predicated region
      $region45: #{block_forward.4} parent=39 // pred_check
        %p850 = pneg %p112
      $region46: #{block_forward.4} parent=39 // pred_check_branch
        %852 = sbr.rel (%p850) target = $region48
      $region47: #{block_forward.4} parent=39 // pred_region
        %p853 = scmp.lt.s32.totalorder %s16, 1
        %s854 = scalar_select %p853, %s16, 1
        %s855 = smul.addr %s854, 2
        %s856 = scalar_lea.vmem %s3, %s855
      $region48: #{block_forward.4} parent=39 // pred_fallthru
        _
    $region40: #{block_forward.4} parent=5 // pred_fallthru
      _
  $region6: #{block_forward.4} parent=0 // loop_footer
    %s14 = sadd.s32 1, %s10
  $region7: #{block_forward.4} parent=0 // loop_footer_branch
    %9 = sbr.rel target = $region3
  $region8: #{block_forward.4} parent=0 // loop_exit
    _

// kernel: block_forward.6
$region0: #{block_forward.6}
  #allocation0 [shape = 'u32[]', space=smem, size = 0x4, offset = 0x4, fixed_abs, tag = 'smem constant byte address 0x4 - core index']
  #allocation1 [shape = 'u32[144,128]{1,0:T(1,128)}', space=vmem, size = 0x12000, scoped, tag = 'internal scratch']
  %s0 = inlined_call_operand.vmem [shape: bf16[512,4], index: 0, kind: input, shape index: {}]
  %s1 = inlined_call_operand.vmem [shape: f32[1,4], index: 1, kind: input, shape index: {}]
  %s2 = inlined_call_operand.vmem [shape: f32[1,4], index: 2, kind: input, shape index: {}]
  %s3 = inlined_call_operand.vmem [shape: bf16[4,16], index: 3, kind: input, shape index: {}]
  %s4 = inlined_call_operand.vmem [shape: bf16[512,16], index: 4, kind: output, shape index: {0}]
  %s5 = inlined_call_operand.vmem [shape: f32[2,2,16], index: 5, kind: output, shape index: {1}]
  %6 = xla_tuple %s4, %s5
  %s7 = sld [smem:[#allocation0]]
  $region57: #{block_forward.6} parent=0
    _
  %s9 = ssub.s32 1, %s7
  %s10 = scalar_select 0, %s9, %s7
  loop: start=0, step=1, limit=4
  $region2: #{block_forward.6} parent=0 // loop_pre_header
    _
  $region3: #{block_forward.6} parent=0 // loop_header
    %s12 = sphi 0, %s16
    %p13 = scmp.ge.s32.totalorder %s12, 4
    %s22 = sphi 0, %s24
    %s25 = sphi 0, %s22
    %s26 = sphi 0, %s25
    %s42 = sphi 0, %s26
    %s46 = sphi 0, %s46
    %s48 = sphi 0, %s46
    %s49 = sphi 0, %s48
    %s63 = sphi 0, %s49
    %s67 = sphi 0, %s67
    %s69 = sphi 0, %s67
    %s70 = sphi 0, %s69
    %s84 = sphi 0, %s70
    %s88 = sphi 0, %s88
    %s90 = sphi 0, %s88
    %s91 = sphi 0, %s90
    %s105 = sphi 0, %s91
    %s111 = sphi 0, %s113
    %s114 = sphi 0, %s111
    %s115 = sphi 0, %s114
    %s131 = sphi 0, %s115
    %s137 = sphi 0, %s139
    %s140 = sphi 0, %s137
    %s141 = sphi 0, %s140
    %s157 = sphi 0, %s141
  $region4: #{block_forward.6} parent=0 // loop_header_branch
    %15 = sbr.rel (%p13) target = $region8
  $region5: #{block_forward.6} parent=0 // loop_body
    %s17 = ssub.s32 %s12, 1
    %s18 = ssub.s32 %s12, 2
    %s19 = sadd.s32 %s12, 1
    %s20 = ssub.s32 %s12, %s19
    %p21 = scmp.eq.s32.totalorder %s20, 0
    %s23 = sadd.s32 %s22, 1
    %s24 = scalar_select %p21, %s22, %s23
    %p27 = pneg %p21
    %p28 = scmp.eq.s32.totalorder %s12, 1
    %p29 = por %p27, %p28
    %p30 = scmp.ne.s32.totalorder %s22, %s25
    %p31 = scmp.eq.s32.totalorder %s12, 0
    %p32 = por %p30, %p31
    %p33 = scmp.ne.s32.totalorder %s22, %s25
    %p34 = scmp.eq.s32.totalorder %s17, 1
    %p35 = por %p33, %p34
    %p36 = scmp.ne.s32.totalorder %s25, %s26
    %p37 = scmp.eq.s32.totalorder %s17, 0
    %p38 = por %p36, %p37
    %p39 = scmp.ne.s32.totalorder %s25, %s26
    %p40 = scmp.eq.s32.totalorder %s18, 1
    %p41 = por %p39, %p40
    %p43 = scmp.ne.s32.totalorder %s26, %s42
    %p44 = scmp.eq.s32.totalorder %s18, 0
    %p45 = por %p43, %p44
    %s47 = sadd.s32 %s46, 1
    %p50 = scmp.eq.s32.totalorder %s12, 1
    %p51 = scmp.ne.s32.totalorder %s46, %s48
    %p52 = scmp.eq.s32.totalorder %s12, 0
    %p53 = por %p51, %p52
    %p54 = scmp.ne.s32.totalorder %s46, %s48
    %p55 = scmp.eq.s32.totalorder %s17, 1
    %p56 = por %p54, %p55
    %p57 = scmp.ne.s32.totalorder %s48, %s49
    %p58 = scmp.eq.s32.totalorder %s17, 0
    %p59 = por %p57, %p58
    %p60 = scmp.ne.s32.totalorder %s48, %s49
    %p61 = scmp.eq.s32.totalorder %s18, 1
    %p62 = por %p60, %p61
    %p64 = scmp.ne.s32.totalorder %s49, %s63
    %p65 = scmp.eq.s32.totalorder %s18, 0
    %p66 = por %p64, %p65
    %s68 = sadd.s32 %s67, 1
    %p71 = scmp.eq.s32.totalorder %s12, 1
    %p72 = scmp.ne.s32.totalorder %s67, %s69
    %p73 = scmp.eq.s32.totalorder %s12, 0
    %p74 = por %p72, %p73
    %p75 = scmp.ne.s32.totalorder %s67, %s69
    %p76 = scmp.eq.s32.totalorder %s17, 1
    %p77 = por %p75, %p76
    %p78 = scmp.ne.s32.totalorder %s69, %s70
    %p79 = scmp.eq.s32.totalorder %s17, 0
    %p80 = por %p78, %p79
    %p81 = scmp.ne.s32.totalorder %s69, %s70
    %p82 = scmp.eq.s32.totalorder %s18, 1
    %p83 = por %p81, %p82
    %p85 = scmp.ne.s32.totalorder %s70, %s84
    %p86 = scmp.eq.s32.totalorder %s18, 0
    %p87 = por %p85, %p86
    %s89 = sadd.s32 %s88, 1
    %p92 = scmp.eq.s32.totalorder %s12, 1
    %p93 = scmp.ne.s32.totalorder %s88, %s90
    %p94 = scmp.eq.s32.totalorder %s12, 0
    %p95 = por %p93, %p94
    %p96 = scmp.ne.s32.totalorder %s88, %s90
    %p97 = scmp.eq.s32.totalorder %s17, 1
    %p98 = por %p96, %p97
    %p99 = scmp.ne.s32.totalorder %s90, %s91
    %p100 = scmp.eq.s32.totalorder %s17, 0
    %p101 = por %p99, %p100
    %p102 = scmp.ne.s32.totalorder %s90, %s91
    %p103 = scmp.eq.s32.totalorder %s18, 1
    %p104 = por %p102, %p103
    %p106 = scmp.ne.s32.totalorder %s91, %s105
    %p107 = scmp.eq.s32.totalorder %s18, 0
    %p108 = por %p106, %p107
    %s109 = ssub.s32 %s12, %s19
    %p110 = scmp.eq.s32.totalorder %s109, 0
    %s112 = sadd.s32 %s111, 1
    %s113 = scalar_select %p110, %s111, %s112
    %p116 = pneg %p110
    %p117 = scmp.eq.s32.totalorder %s12, 1
    %p118 = por %p116, %p117
    %p119 = scmp.ne.s32.totalorder %s111, %s114
    %p120 = scmp.eq.s32.totalorder %s12, 0
    %p121 = por %p119, %p120
    %p122 = scmp.ne.s32.totalorder %s111, %s114
    %p123 = scmp.eq.s32.totalorder %s17, 1
    %p124 = por %p122, %p123
    %p125 = scmp.ne.s32.totalorder %s114, %s115
    %p126 = scmp.eq.s32.totalorder %s17, 0
    %p127 = por %p125, %p126
    %p128 = scmp.ne.s32.totalorder %s114, %s115
    %p129 = scmp.eq.s32.totalorder %s18, 1
    %p130 = por %p128, %p129
    %p132 = scmp.ne.s32.totalorder %s115, %s131
    %p133 = scmp.eq.s32.totalorder %s18, 0
    %p134 = por %p132, %p133
    %s135 = ssub.s32 %s12, %s19
    %p136 = scmp.eq.s32.totalorder %s135, 0
    %s138 = sadd.s32 %s137, 1
    %s139 = scalar_select %p136, %s137, %s138
    %p142 = pneg %p136
    %p143 = scmp.eq.s32.totalorder %s12, 1
    %p144 = por %p142, %p143
    %p145 = scmp.ne.s32.totalorder %s137, %s140
    %p146 = scmp.eq.s32.totalorder %s12, 0
    %p147 = por %p145, %p146
    %p148 = scmp.ne.s32.totalorder %s137, %s140
    %p149 = scmp.eq.s32.totalorder %s17, 1
    %p150 = por %p148, %p149
    %p151 = scmp.ne.s32.totalorder %s140, %s141
    %p152 = scmp.eq.s32.totalorder %s17, 0
    %p153 = por %p151, %p152
    %p154 = scmp.ne.s32.totalorder %s140, %s141
    %p155 = scmp.eq.s32.totalorder %s18, 1
    %p156 = por %p154, %p155
    %p158 = scmp.ne.s32.totalorder %s141, %s157
    %p159 = scmp.eq.s32.totalorder %s18, 0
    %p160 = por %p158, %p159
    %p161 = scmp.le.s32.totalorder 1, %s12
    %p162 = scmp.lt.s32.totalorder %s12, 3
    %p163 = pnand %p161, %p162
    %p164 = pneg %p163
    // Predicated region
    $region9: #{block_forward.6} parent=5 // pred_check
      _
    $region10: #{block_forward.6} parent=5 // pred_check_branch
      %166 = sbr.rel (%p163) target = $region12
    $region11: #{block_forward.6} parent=5 // pred_region
      %s167 = ssub.s32 %s12, 1
      // Predicated region
      $region13: #{block_forward.6} parent=11 // pred_check
        %p168 = pneg %p59
      $region14: #{block_forward.6} parent=11 // pred_check_branch
        %170 = sbr.rel (%p168) target = $region16
      $region15: #{block_forward.6} parent=11 // pred_region
        _
      $region16: #{block_forward.6} parent=11 // pred_fallthru
        _
      // Predicated region
      $region17: #{block_forward.6} parent=11 // pred_check
        %p171 = pneg %p80
      $region18: #{block_forward.6} parent=11 // pred_check_branch
        %173 = sbr.rel (%p171) target = $region20
      $region19: #{block_forward.6} parent=11 // pred_region
        _
      $region20: #{block_forward.6} parent=11 // pred_fallthru
        _
      // Predicated region
      $region21: #{block_forward.6} parent=11 // pred_check
        %p174 = pneg %p101
      $region22: #{block_forward.6} parent=11 // pred_check_branch
        %176 = sbr.rel (%p174) target = $region24
      $region23: #{block_forward.6} parent=11 // pred_region
        _
      $region24: #{block_forward.6} parent=11 // pred_fallthru
        _
    $region12: #{block_forward.6} parent=5 // pred_fallthru
      _
    %p177 = scmp.lt.s32.totalorder %s12, 2
    // Predicated region
    $region25: #{block_forward.6} parent=5 // pred_check
      %p178 = pneg %p177
    $region26: #{block_forward.6} parent=5 // pred_check_branch
      %180 = sbr.rel (%p178) target = $region28
    $region27: #{block_forward.6} parent=5 // pred_region
      // Predicated region
      $region29: #{block_forward.6} parent=27 // pred_check
        %p181 = pneg %p32
      $region30: #{block_forward.6} parent=27 // pred_check_branch
        %183 = sbr.rel (%p181) target = $region32
      $region31: #{block_forward.6} parent=27 // pred_region
        %s184 = smul.u32 32, %s12
        %p185 = scmp.lt.s32.totalorder %s184, 63
        %s186 = scalar_select %p185, %s184, 63
        %s187 = smul.addr %s186, 4
        %s188 = scalar_lea.vmem %s0, %s187
        %s189 = smul.u32 32, %s12
      $region32: #{block_forward.6} parent=27 // pred_fallthru
        _
    $region28: #{block_forward.6} parent=5 // pred_fallthru
      _
    %p190 = scmp.le.s32.totalorder 1, %s12
    %p191 = scmp.lt.s32.totalorder %s12, 3
    %p192 = pnand %p190, %p191
    %p193 = pneg %p192
    // Predicated region
    $region33: #{block_forward.6} parent=5 // pred_check
      _
    $region34: #{block_forward.6} parent=5 // pred_check_branch
      %195 = sbr.rel (%p192) target = $region36
    $region35: #{block_forward.6} parent=5 // pred_region
      %s196 = ssub.s32 %s12, 1
      %s197 = smul.u32 32, %s17
      %p198 = scmp.lt.s32.totalorder %s197, 63
      %s199 = scalar_select %p198, %s197, 63
      %s200 = smul.addr %s199, 4
      %s201 = scalar_lea.vmem %s0, %s200
      %p202 = pneg %p38
      %p203 = pneg %p35
      %p204 = pneg %p59
      %p205 = pneg %p56
      %p206 = pneg %p80
      %p207 = pneg %p77
      %p208 = pneg %p101
      %p209 = pneg %p98
      %p210 = pneg %p127
      %p211 = pneg %p124
      %s212 = smul.u32 32, %s17
      %p213 = scmp.lt.s32.totalorder %s212, 63
      %s214 = scalar_select %p213, %s212, 63
      %s215 = smul.addr %s214, 4
      %s216 = scalar_lea.vmem %s4, %s215
      %p217 = pneg %p153
      %p218 = pneg %p150
      %p219 = scmp.lt.s32.totalorder %s17, 1
      %s220 = scalar_select %p219, %s17, 1
      %s221 = smul.addr %s220, 2
      %s222 = scalar_lea.vmem %s5, %s221
      %s223 = smul.u32 32, %s17
      %p224 = scmp.lt.s32.totalorder %s223, 63
      %s225 = scalar_select %p224, %s223, 63
      %s226 = smul.addr %s225, 4
      %s227 = scalar_lea.vmem %s0, %s226
      %s228 = smul.u32 32, %s17
      %s229 = smul.u32 32, %s17
      %p230 = scmp.lt.s32.totalorder %s229, 63
      %s231 = scalar_select %p230, %s229, 63
      %s232 = smul.addr %s231, 4
      %s233 = scalar_lea.vmem %s4, %s232
      %s234 = smul.u32 32, %s17
      %p235 = scmp.lt.s32.totalorder %s17, 1
      %s236 = scalar_select %p235, %s17, 1
      %s237 = smul.addr %s236, 2
      %s238 = scalar_lea.vmem %s5, %s237
      %v240 = vld [vmem:[%s227] sm:$0xf]
      %v241 = vld [vmem:[%s227 + $0x4] sm:$0xf]
      %v242 = vld [vmem:[%s227 + $0x8] sm:$0xf]
      %v243 = vld [vmem:[%s227 + $0xc] sm:$0xf]
      %v244 = vld [vmem:[%s227 + $0x10] sm:$0xf]
      %v245 = vld [vmem:[%s227 + $0x14] sm:$0xf]
      %v246 = vld [vmem:[%s227 + $0x18] sm:$0xf]
      %v247 = vld [vmem:[%s227 + $0x1c] sm:$0xf]
      %v248 = vld [vmem:[%s227 + $0x20] sm:$0xf]
      %v249 = vld [vmem:[%s227 + $0x24] sm:$0xf]
      %v250 = vld [vmem:[%s227 + $0x28] sm:$0xf]
      %v251 = vld [vmem:[%s227 + $0x2c] sm:$0xf]
      %v252 = vld [vmem:[%s227 + $0x30] sm:$0xf]
      %v253 = vld [vmem:[%s227 + $0x34] sm:$0xf]
      %v254 = vld [vmem:[%s227 + $0x38] sm:$0xf]
      %v255 = vld [vmem:[%s227 + $0x3c] sm:$0xf]
      %v256 = vld [vmem:[%s227 + $0x40] sm:$0xf]
      %v257 = vld [vmem:[%s227 + $0x44] sm:$0xf]
      %v258 = vld [vmem:[%s227 + $0x48] sm:$0xf]
      %v259 = vld [vmem:[%s227 + $0x4c] sm:$0xf]
      %v260 = vld [vmem:[%s227 + $0x50] sm:$0xf]
      %v261 = vld [vmem:[%s227 + $0x54] sm:$0xf]
      %v262 = vld [vmem:[%s227 + $0x58] sm:$0xf]
      %v263 = vld [vmem:[%s227 + $0x5c] sm:$0xf]
      %v264 = vld [vmem:[%s227 + $0x60] sm:$0xf]
      %v265 = vld [vmem:[%s227 + $0x64] sm:$0xf]
      %v266 = vld [vmem:[%s227 + $0x68] sm:$0xf]
      %v267 = vld [vmem:[%s227 + $0x6c] sm:$0xf]
      %v268 = vld [vmem:[%s227 + $0x70] sm:$0xf]
      %v269 = vld [vmem:[%s227 + $0x74] sm:$0xf]
      %v270 = vld [vmem:[%s227 + $0x78] sm:$0xf]
      %v271 = vld [vmem:[%s227 + $0x7c] sm:$0xf]
      %v272 = vunpack.c.l.bf16 %v240
      %v273 = vunpack.c.l.bf16 %v241
      %v274 = vunpack.c.l.bf16 %v242
      %v275 = vunpack.c.l.bf16 %v243
      %v276 = vunpack.c.l.bf16 %v244
      %v277 = vunpack.c.l.bf16 %v245
      %v278 = vunpack.c.l.bf16 %v246
      %v279 = vunpack.c.l.bf16 %v247
      %v280 = vunpack.c.l.bf16 %v248
      %v281 = vunpack.c.l.bf16 %v249
      %v282 = vunpack.c.l.bf16 %v250
      %v283 = vunpack.c.l.bf16 %v251
      %v284 = vunpack.c.l.bf16 %v252
      %v285 = vunpack.c.l.bf16 %v253
      %v286 = vunpack.c.l.bf16 %v254
      %v287 = vunpack.c.l.bf16 %v255
      %v288 = vunpack.c.l.bf16 %v256
      %v289 = vunpack.c.l.bf16 %v257
      %v290 = vunpack.c.l.bf16 %v258
      %v291 = vunpack.c.l.bf16 %v259
      %v292 = vunpack.c.l.bf16 %v260
      %v293 = vunpack.c.l.bf16 %v261
      %v294 = vunpack.c.l.bf16 %v262
      %v295 = vunpack.c.l.bf16 %v263
      %v296 = vunpack.c.l.bf16 %v264
      %v297 = vunpack.c.l.bf16 %v265
      %v298 = vunpack.c.l.bf16 %v266
      %v299 = vunpack.c.l.bf16 %v267
      %v300 = vunpack.c.l.bf16 %v268
      %v301 = vunpack.c.l.bf16 %v269
      %v302 = vunpack.c.l.bf16 %v270
      %v303 = vunpack.c.l.bf16 %v271
      %v304 = vld [vmem:[%s1] sm:$0x1]
      %v306 = vlaneseq
      %v307 = vshrl.u32 %v306, 7
      %v308 = vsub.s32 0, %v307
      %v309 = vrot.slane %v304, %v308
      %v311 = vmul.f32 %v272, %v309
      %v312 = vmul.f32 %v273, %v309
      %v313 = vmul.f32 %v274, %v309
      %v314 = vmul.f32 %v275, %v309
      %v315 = vmul.f32 %v276, %v309
      %v316 = vmul.f32 %v277, %v309
      %v317 = vmul.f32 %v278, %v309
      %v318 = vmul.f32 %v279, %v309
      %v319 = vmul.f32 %v280, %v309
      %v320 = vmul.f32 %v281, %v309
      %v321 = vmul.f32 %v282, %v309
      %v322 = vmul.f32 %v283, %v309
      %v323 = vmul.f32 %v284, %v309
      %v324 = vmul.f32 %v285, %v309
      %v325 = vmul.f32 %v286, %v309
      %v326 = vmul.f32 %v287, %v309
      %v327 = vmul.f32 %v288, %v309
      %v328 = vmul.f32 %v289, %v309
      %v329 = vmul.f32 %v290, %v309
      %v330 = vmul.f32 %v291, %v309
      %v331 = vmul.f32 %v292, %v309
      %v332 = vmul.f32 %v293, %v309
      %v333 = vmul.f32 %v294, %v309
      %v334 = vmul.f32 %v295, %v309
      %v335 = vmul.f32 %v296, %v309
      %v336 = vmul.f32 %v297, %v309
      %v337 = vmul.f32 %v298, %v309
      %v338 = vmul.f32 %v299, %v309
      %v339 = vmul.f32 %v300, %v309
      %v340 = vmul.f32 %v301, %v309
      %v341 = vmul.f32 %v302, %v309
      %v342 = vmul.f32 %v303, %v309
      %v343 = vld [vmem:[%s2] sm:$0x1]
      %v345 = vlaneseq
      %v346 = vshrl.u32 %v345, 7
      %v347 = vsub.s32 0, %v346
      %v348 = vrot.slane %v343, %v347
      %v350 = vadd.f32 %v311, %v348
      %v351 = vadd.f32 %v312, %v348
      %v352 = vadd.f32 %v313, %v348
      %v353 = vadd.f32 %v314, %v348
      %v354 = vadd.f32 %v315, %v348
      %v355 = vadd.f32 %v316, %v348
      %v356 = vadd.f32 %v317, %v348
      %v357 = vadd.f32 %v318, %v348
      %v358 = vadd.f32 %v319, %v348
      %v359 = vadd.f32 %v320, %v348
      %v360 = vadd.f32 %v321, %v348
      %v361 = vadd.f32 %v322, %v348
      %v362 = vadd.f32 %v323, %v348
      %v363 = vadd.f32 %v324, %v348
      %v364 = vadd.f32 %v325, %v348
      %v365 = vadd.f32 %v326, %v348
      %v366 = vadd.f32 %v327, %v348
      %v367 = vadd.f32 %v328, %v348
      %v368 = vadd.f32 %v329, %v348
      %v369 = vadd.f32 %v330, %v348
      %v370 = vadd.f32 %v331, %v348
      %v371 = vadd.f32 %v332, %v348
      %v372 = vadd.f32 %v333, %v348
      %v373 = vadd.f32 %v334, %v348
      %v374 = vadd.f32 %v335, %v348
      %v375 = vadd.f32 %v336, %v348
      %v376 = vadd.f32 %v337, %v348
      %v377 = vadd.f32 %v338, %v348
      %v378 = vadd.f32 %v339, %v348
      %v379 = vadd.f32 %v340, %v348
      %v380 = vadd.f32 %v341, %v348
      %v381 = vadd.f32 %v342, %v348
      %v382 = vmax.f32 %v350, 0.0
      %v383 = vmax.f32 %v351, 0.0
      %v384 = vmax.f32 %v352, 0.0
      %v385 = vmax.f32 %v353, 0.0
      %v386 = vmax.f32 %v354, 0.0
      %v387 = vmax.f32 %v355, 0.0
      %v388 = vmax.f32 %v356, 0.0
      %v389 = vmax.f32 %v357, 0.0
      %v390 = vmax.f32 %v358, 0.0
      %v391 = vmax.f32 %v359, 0.0
      %v392 = vmax.f32 %v360, 0.0
      %v393 = vmax.f32 %v361, 0.0
      %v394 = vmax.f32 %v362, 0.0
      %v395 = vmax.f32 %v363, 0.0
      %v396 = vmax.f32 %v364, 0.0
      %v397 = vmax.f32 %v365, 0.0
      %v398 = vmax.f32 %v366, 0.0
      %v399 = vmax.f32 %v367, 0.0
      %v400 = vmax.f32 %v368, 0.0
      %v401 = vmax.f32 %v369, 0.0
      %v402 = vmax.f32 %v370, 0.0
      %v403 = vmax.f32 %v371, 0.0
      %v404 = vmax.f32 %v372, 0.0
      %v405 = vmax.f32 %v373, 0.0
      %v406 = vmax.f32 %v374, 0.0
      %v407 = vmax.f32 %v375, 0.0
      %v408 = vmax.f32 %v376, 0.0
      %v409 = vmax.f32 %v377, 0.0
      %v410 = vmax.f32 %v378, 0.0
      %v411 = vmax.f32 %v379, 0.0
      %v412 = vmax.f32 %v380, 0.0
      %v413 = vmax.f32 %v381, 0.0
      %v414 = vpack.c.bf16 %v383, %v382
      %v415 = vpack.c.bf16 %v385, %v384
      %v416 = vpack.c.bf16 %v387, %v386
      %v417 = vpack.c.bf16 %v389, %v388
      %v418 = vpack.c.bf16 %v391, %v390
      %v419 = vpack.c.bf16 %v393, %v392
      %v420 = vpack.c.bf16 %v395, %v394
      %v421 = vpack.c.bf16 %v397, %v396
      %v422 = vpack.c.bf16 %v399, %v398
      %v423 = vpack.c.bf16 %v401, %v400
      %v424 = vpack.c.bf16 %v403, %v402
      %v425 = vpack.c.bf16 %v405, %v404
      %v426 = vpack.c.bf16 %v407, %v406
      %v427 = vpack.c.bf16 %v409, %v408
      %v428 = vpack.c.bf16 %v411, %v410
      %v429 = vpack.c.bf16 %v413, %v412
      %v430 = vld [vmem:[%s3] sm:$0x3]
      %vm431 = vcmask 31744
      %v433 = vsel %vm431, %v414, 0
      %v436 = vsel %vm431, %v415, 0
      %v439 = vsel %vm431, %v416, 0
      %v442 = vsel %vm431, %v417, 0
      %v445 = vsel %vm431, %v418, 0
      %v448 = vsel %vm431, %v419, 0
      %v451 = vsel %vm431, %v420, 0
      %v454 = vsel %vm431, %v421, 0
      %v457 = vsel %vm431, %v422, 0
      %v460 = vsel %vm431, %v423, 0
      %v463 = vsel %vm431, %v424, 0
      %v466 = vsel %vm431, %v425, 0
      %v469 = vsel %vm431, %v426, 0
      %v472 = vsel %vm431, %v427, 0
      %v475 = vsel %vm431, %v428, 0
      %v478 = vsel %vm431, %v429, 0
      %vm480 = vcmask 1041408
      %v482 = vsel %vm480, %v430, 0
      %484 = vmatprep.subr.bf16.mxu0 0
      %485 = vmatpush1.bf16.msra.mxu0 0
      %486 = vmatprep.subr.bf16.mxu0 0
      %487 = vmatpush1.bf16.msra.mxu0 0
      %488 = vmatprep.subr.bf16.mxu0 0
      %489 = vmatpush1.bf16.msra.mxu0 0
      %490 = vmatprep.subr.bf16.mxu0 0
      %491 = vmatpush1.bf16.msra.mxu0 0
      %492 = vmatprep.subr.bf16.mxu0 0
      %493 = vmatpush1.bf16.msra.mxu0 0
      %494 = vmatprep.subr.bf16.mxu0 0
      %495 = vmatpush1.bf16.msra.mxu0 0
      %496 = vmatprep.subr.bf16.mxu0 0
      %497 = vmatpush1.bf16.msra.mxu0 0
      %498 = vmatprep.subr.bf16.mxu0 0
      %499 = vmatpush1.bf16.msra.mxu0 %v482
      %500 = vmatprep.subr.bf16.mxu0 0
      %501 = vmatpush2.bf16.msra.mxu0 0
      %502 = vmatprep.subr.bf16.mxu0 0
      %503 = vmatpush2.bf16.msra.mxu0 0
      %504 = vmatprep.subr.bf16.mxu0 0
      %505 = vmatpush2.bf16.msra.mxu0 0
      %506 = vmatprep.subr.bf16.mxu0 0
      %507 = vmatpush2.bf16.msra.mxu0 0
      %508 = vmatprep.subr.bf16.mxu0 0
      %509 = vmatpush2.bf16.msra.mxu0 0
      %510 = vmatprep.subr.bf16.mxu0 0
      %511 = vmatpush2.bf16.msra.mxu0 0
      %512 = vmatprep.subr.bf16.mxu0 0
      %513 = vmatpush2.bf16.msra.mxu0 0
      %514 = vmatprep.subr.bf16.mxu0 0
      %515 = vmatpush2.bf16.msra.mxu0 0
      %516 = vmatprep.mubr.bf16.mxu0 0
      %517 = vmatmul.mubr.bf16.gmra.mxu0 %v433
      %v518 = vpop.f32.mrf.mxu0
      %v519 = vadd.f32 0.0, %v518
      %v520 = vpop.f32.mrf.mxu0
      %v521 = vpop.f32.mrf.mxu0
      %v522 = vadd.f32 0.0, %v521
      %v523 = vpop.f32.mrf.mxu0
      %524 = vmatprep.mubr.bf16.mxu0 0
      %525 = vmatmul.mubr.bf16.gmra.mxu0 %v436
      %v526 = vpop.f32.mrf.mxu0
      %v527 = vadd.f32 0.0, %v526
      %v528 = vpop.f32.mrf.mxu0
      %v529 = vpop.f32.mrf.mxu0
      %v530 = vadd.f32 0.0, %v529
      %v531 = vpop.f32.mrf.mxu0
      %532 = vmatprep.mubr.bf16.mxu0 0
      %533 = vmatmul.mubr.bf16.gmra.mxu0 %v439
      %v534 = vpop.f32.mrf.mxu0
      %v535 = vadd.f32 0.0, %v534
      %v536 = vpop.f32.mrf.mxu0
      %v537 = vpop.f32.mrf.mxu0
      %v538 = vadd.f32 0.0, %v537
      %v539 = vpop.f32.mrf.mxu0
      %540 = vmatprep.mubr.bf16.mxu0 0
      %541 = vmatmul.mubr.bf16.gmra.mxu0 %v442
      %v542 = vpop.f32.mrf.mxu0
      %v543 = vadd.f32 0.0, %v542
      %v544 = vpop.f32.mrf.mxu0
      %v545 = vpop.f32.mrf.mxu0
      %v546 = vadd.f32 0.0, %v545
      %v547 = vpop.f32.mrf.mxu0
      %548 = vmatprep.mubr.bf16.mxu0 0
      %549 = vmatmul.mubr.bf16.gmra.mxu0 %v445
      %v550 = vpop.f32.mrf.mxu0
      %v551 = vadd.f32 0.0, %v550
      %v552 = vpop.f32.mrf.mxu0
      %v553 = vpop.f32.mrf.mxu0
      %v554 = vadd.f32 0.0, %v553
      %v555 = vpop.f32.mrf.mxu0
      %556 = vmatprep.mubr.bf16.mxu0 0
      %557 = vmatmul.mubr.bf16.gmra.mxu0 %v448
      %v558 = vpop.f32.mrf.mxu0
      %v559 = vadd.f32 0.0, %v558
      %v560 = vpop.f32.mrf.mxu0
      %v561 = vpop.f32.mrf.mxu0
      %v562 = vadd.f32 0.0, %v561
      %v563 = vpop.f32.mrf.mxu0
      %564 = vmatprep.mubr.bf16.mxu0 0
      %565 = vmatmul.mubr.bf16.gmra.mxu0 %v451
      %v566 = vpop.f32.mrf.mxu0
      %v567 = vadd.f32 0.0, %v566
      %v568 = vpop.f32.mrf.mxu0
      %v569 = vpop.f32.mrf.mxu0
      %v570 = vadd.f32 0.0, %v569
      %v571 = vpop.f32.mrf.mxu0
      %572 = vmatprep.mubr.bf16.mxu0 0
      %573 = vmatmul.mubr.bf16.gmra.mxu0 %v454
      %v574 = vpop.f32.mrf.mxu0
      %v575 = vadd.f32 0.0, %v574
      %v576 = vpop.f32.mrf.mxu0
      %v577 = vpop.f32.mrf.mxu0
      %v578 = vadd.f32 0.0, %v577
      %v579 = vpop.f32.mrf.mxu0
      %580 = vmatprep.mubr.bf16.mxu0 0
      %581 = vmatmul.mubr.bf16.gmra.mxu0 %v457
      %v582 = vpop.f32.mrf.mxu0
      %v583 = vadd.f32 0.0, %v582
      %v584 = vpop.f32.mrf.mxu0
      %v585 = vpop.f32.mrf.mxu0
      %v586 = vadd.f32 0.0, %v585
      %v587 = vpop.f32.mrf.mxu0
      %588 = vmatprep.mubr.bf16.mxu0 0
      %589 = vmatmul.mubr.bf16.gmra.mxu0 %v460
      %v590 = vpop.f32.mrf.mxu0
      %v591 = vadd.f32 0.0, %v590
      %v592 = vpop.f32.mrf.mxu0
      %v593 = vpop.f32.mrf.mxu0
      %v594 = vadd.f32 0.0, %v593
      %v595 = vpop.f32.mrf.mxu0
      %596 = vmatprep.mubr.bf16.mxu0 0
      %597 = vmatmul.mubr.bf16.gmra.mxu0 %v463
      %v598 = vpop.f32.mrf.mxu0
      %v599 = vadd.f32 0.0, %v598
      %v600 = vpop.f32.mrf.mxu0
      %v601 = vpop.f32.mrf.mxu0
      %v602 = vadd.f32 0.0, %v601
      %v603 = vpop.f32.mrf.mxu0
      %604 = vmatprep.mubr.bf16.mxu0 0
      %605 = vmatmul.mubr.bf16.gmra.mxu0 %v466
      %v606 = vpop.f32.mrf.mxu0
      %v607 = vadd.f32 0.0, %v606
      %v608 = vpop.f32.mrf.mxu0
      %v609 = vpop.f32.mrf.mxu0
      %v610 = vadd.f32 0.0, %v609
      %v611 = vpop.f32.mrf.mxu0
      %612 = vmatprep.mubr.bf16.mxu0 0
      %613 = vmatmul.mubr.bf16.gmra.mxu0 %v469
      %v614 = vpop.f32.mrf.mxu0
      %v615 = vadd.f32 0.0, %v614
      %v616 = vpop.f32.mrf.mxu0
      %v617 = vpop.f32.mrf.mxu0
      %v618 = vadd.f32 0.0, %v617
      %v619 = vpop.f32.mrf.mxu0
      %620 = vmatprep.mubr.bf16.mxu0 0
      %621 = vmatmul.mubr.bf16.gmra.mxu0 %v472
      %v622 = vpop.f32.mrf.mxu0
      %v623 = vadd.f32 0.0, %v622
      %v624 = vpop.f32.mrf.mxu0
      %v625 = vpop.f32.mrf.mxu0
      %v626 = vadd.f32 0.0, %v625
      %v627 = vpop.f32.mrf.mxu0
      %628 = vmatprep.mubr.bf16.mxu0 0
      %629 = vmatmul.mubr.bf16.gmra.mxu0 %v475
      %v630 = vpop.f32.mrf.mxu0
      %v631 = vadd.f32 0.0, %v630
      %v632 = vpop.f32.mrf.mxu0
      %v633 = vpop.f32.mrf.mxu0
      %v634 = vadd.f32 0.0, %v633
      %v635 = vpop.f32.mrf.mxu0
      %636 = vmatprep.mubr.bf16.mxu0 0
      %637 = vmatmul.mubr.bf16.gmra.mxu0 %v478
      %v638 = vpop.f32.mrf.mxu0
      %v639 = vadd.f32 0.0, %v638
      %v640 = vpop.f32.mrf.mxu0
      %v641 = vpop.f32.mrf.mxu0
      %v642 = vadd.f32 0.0, %v641
      %v643 = vpop.f32.mrf.mxu0
      %644 = vdwg.mxu0
      %v645 = vpack.c.bf16 %v522, %v519
      %v646 = vpack.c.bf16 %v530, %v527
      %v647 = vpack.c.bf16 %v538, %v535
      %v648 = vpack.c.bf16 %v546, %v543
      %v649 = vpack.c.bf16 %v554, %v551
      %v650 = vpack.c.bf16 %v562, %v559
      %v651 = vpack.c.bf16 %v570, %v567
      %v652 = vpack.c.bf16 %v578, %v575
      %v653 = vpack.c.bf16 %v586, %v583
      %v654 = vpack.c.bf16 %v594, %v591
      %v655 = vpack.c.bf16 %v602, %v599
      %v656 = vpack.c.bf16 %v610, %v607
      %v657 = vpack.c.bf16 %v618, %v615
      %v658 = vpack.c.bf16 %v626, %v623
      %v659 = vpack.c.bf16 %v634, %v631
      %v660 = vpack.c.bf16 %v642, %v639
      %v677 = vunpack.c.l.b16 %v645
      %v678 = vunpack.c.h.b16 %v645
      %v679 = vunpack.c.l.b16 %v646
      %v680 = vunpack.c.h.b16 %v646
      %v681 = vunpack.c.l.b16 %v647
      %v682 = vunpack.c.h.b16 %v647
      %v683 = vunpack.c.l.b16 %v648
      %v684 = vunpack.c.h.b16 %v648
      %v685 = vunpack.c.l.b16 %v649
      %v686 = vunpack.c.h.b16 %v649
      %v687 = vunpack.c.l.b16 %v650
      %v688 = vunpack.c.h.b16 %v650
      %v689 = vunpack.c.l.b16 %v651
      %v690 = vunpack.c.h.b16 %v651
      %v691 = vunpack.c.l.b16 %v652
      %v692 = vunpack.c.h.b16 %v652
      %v693 = vunpack.c.l.b16 %v653
      %v694 = vunpack.c.h.b16 %v653
      %v695 = vunpack.c.l.b16 %v654
      %v696 = vunpack.c.h.b16 %v654
      %v697 = vunpack.c.l.b16 %v655
      %v698 = vunpack.c.h.b16 %v655
      %v699 = vunpack.c.l.b16 %v656
      %v700 = vunpack.c.h.b16 %v656
      %v701 = vunpack.c.l.b16 %v657
      %v702 = vunpack.c.h.b16 %v657
      %v703 = vunpack.c.l.b16 %v658
      %v704 = vunpack.c.h.b16 %v658
      %v705 = vunpack.c.l.b16 %v659
      %v706 = vunpack.c.h.b16 %v659
      %v707 = vunpack.c.l.b16 %v660
      %v708 = vunpack.c.h.b16 %v660
      %v709 = vpack.c.b16 %v677, %v677
      %v710 = vpack.c.b16 %v678, %v678
      %v711 = vpack.c.b16 %v679, %v679
      %v712 = vpack.c.b16 %v680, %v680
      %v713 = vpack.c.b16 %v681, %v681
      %v714 = vpack.c.b16 %v682, %v682
      %v715 = vpack.c.b16 %v683, %v683
      %v716 = vpack.c.b16 %v684, %v684
      %v717 = vpack.c.b16 %v685, %v685
      %v718 = vpack.c.b16 %v686, %v686
      %v719 = vpack.c.b16 %v687, %v687
      %v720 = vpack.c.b16 %v688, %v688
      %v721 = vpack.c.b16 %v689, %v689
      %v722 = vpack.c.b16 %v690, %v690
      %v723 = vpack.c.b16 %v691, %v691
      %v724 = vpack.c.b16 %v692, %v692
      %v725 = vpack.c.b16 %v693, %v693
      %v726 = vpack.c.b16 %v694, %v694
      %v727 = vpack.c.b16 %v695, %v695
      %v728 = vpack.c.b16 %v696, %v696
      %v729 = vpack.c.b16 %v697, %v697
      %v730 = vpack.c.b16 %v698, %v698
      %v731 = vpack.c.b16 %v699, %v699
      %v732 = vpack.c.b16 %v700, %v700
      %v733 = vpack.c.b16 %v701, %v701
      %v734 = vpack.c.b16 %v702, %v702
      %v735 = vpack.c.b16 %v703, %v703
      %v736 = vpack.c.b16 %v704, %v704
      %v737 = vpack.c.b16 %v705, %v705
      %v738 = vpack.c.b16 %v706, %v706
      %v739 = vpack.c.b16 %v707, %v707
      %v740 = vpack.c.b16 %v708, %v708
      %vm773 = vcmask 125952
      %774 = vst.msk [vmem:[%s233] sm:$0xf] %vm773, %v709
      %775 = vst.msk [vmem:[%s233 + $0x4] sm:$0xf] %vm773, %v710
      %776 = vst.msk [vmem:[%s233 + $0x8] sm:$0xf] %vm773, %v711
      %777 = vst.msk [vmem:[%s233 + $0xc] sm:$0xf] %vm773, %v712
      %778 = vst.msk [vmem:[%s233 + $0x10] sm:$0xf] %vm773, %v713
      %779 = vst.msk [vmem:[%s233 + $0x14] sm:$0xf] %vm773, %v714
      %780 = vst.msk [vmem:[%s233 + $0x18] sm:$0xf] %vm773, %v715
      %781 = vst.msk [vmem:[%s233 + $0x1c] sm:$0xf] %vm773, %v716
      %782 = vst.msk [vmem:[%s233 + $0x20] sm:$0xf] %vm773, %v717
      %783 = vst.msk [vmem:[%s233 + $0x24] sm:$0xf] %vm773, %v718
      %784 = vst.msk [vmem:[%s233 + $0x28] sm:$0xf] %vm773, %v719
      %785 = vst.msk [vmem:[%s233 + $0x2c] sm:$0xf] %vm773, %v720
      %786 = vst.msk [vmem:[%s233 + $0x30] sm:$0xf] %vm773, %v721
      %787 = vst.msk [vmem:[%s233 + $0x34] sm:$0xf] %vm773, %v722
      %788 = vst.msk [vmem:[%s233 + $0x38] sm:$0xf] %vm773, %v723
      %789 = vst.msk [vmem:[%s233 + $0x3c] sm:$0xf] %vm773, %v724
      %790 = vst.msk [vmem:[%s233 + $0x40] sm:$0xf] %vm773, %v725
      %791 = vst.msk [vmem:[%s233 + $0x44] sm:$0xf] %vm773, %v726
      %792 = vst.msk [vmem:[%s233 + $0x48] sm:$0xf] %vm773, %v727
      %793 = vst.msk [vmem:[%s233 + $0x4c] sm:$0xf] %vm773, %v728
      %794 = vst.msk [vmem:[%s233 + $0x50] sm:$0xf] %vm773, %v729
      %795 = vst.msk [vmem:[%s233 + $0x54] sm:$0xf] %vm773, %v730
      %796 = vst.msk [vmem:[%s233 + $0x58] sm:$0xf] %vm773, %v731
      %797 = vst.msk [vmem:[%s233 + $0x5c] sm:$0xf] %vm773, %v732
      %798 = vst.msk [vmem:[%s233 + $0x60] sm:$0xf] %vm773, %v733
      %799 = vst.msk [vmem:[%s233 + $0x64] sm:$0xf] %vm773, %v734
      %800 = vst.msk [vmem:[%s233 + $0x68] sm:$0xf] %vm773, %v735
      %801 = vst.msk [vmem:[%s233 + $0x6c] sm:$0xf] %vm773, %v736
      %802 = vst.msk [vmem:[%s233 + $0x70] sm:$0xf] %vm773, %v737
      %803 = vst.msk [vmem:[%s233 + $0x74] sm:$0xf] %vm773, %v738
      %804 = vst.msk [vmem:[%s233 + $0x78] sm:$0xf] %vm773, %v739
      %805 = vst.msk [vmem:[%s233 + $0x7c] sm:$0xf] %vm773, %v740
      %vm806 = vcmask 130048
      %v807 = vsel %vm806, %v519, 0.0
      %v808 = vsel %vm806, %v522, 0.0
      %v809 = vadd.f32 %v807, %v808
      %v810 = vsel %vm806, %v527, 0.0
      %v811 = vadd.f32 %v809, %v810
      %v812 = vsel %vm806, %v530, 0.0
      %v813 = vadd.f32 %v811, %v812
      %v814 = vsel %vm806, %v535, 0.0
      %v815 = vadd.f32 %v813, %v814
      %v816 = vsel %vm806, %v538, 0.0
      %v817 = vadd.f32 %v815, %v816
      %v818 = vsel %vm806, %v543, 0.0
      %v819 = vadd.f32 %v817, %v818
      %v820 = vsel %vm806, %v546, 0.0
      %v821 = vadd.f32 %v819, %v820
      %v822 = vsel %vm806, %v551, 0.0
      %v823 = vadd.f32 %v821, %v822
      %v824 = vsel %vm806, %v554, 0.0
      %v825 = vadd.f32 %v823, %v824
      %v826 = vsel %vm806, %v559, 0.0
      %v827 = vadd.f32 %v825, %v826
      %v828 = vsel %vm806, %v562, 0.0
      %v829 = vadd.f32 %v827, %v828
      %v830 = vsel %vm806, %v567, 0.0
      %v831 = vadd.f32 %v829, %v830
      %v832 = vsel %vm806, %v570, 0.0
      %v833 = vadd.f32 %v831, %v832
      %v834 = vsel %vm806, %v575, 0.0
      %v835 = vadd.f32 %v833, %v834
      %v836 = vsel %vm806, %v578, 0.0
      %v837 = vadd.f32 %v835, %v836
      %v838 = vsel %vm806, %v583, 0.0
      %v839 = vadd.f32 %v837, %v838
      %v840 = vsel %vm806, %v586, 0.0
      %v841 = vadd.f32 %v839, %v840
      %v842 = vsel %vm806, %v591, 0.0
      %v843 = vadd.f32 %v841, %v842
      %v844 = vsel %vm806, %v594, 0.0
      %v845 = vadd.f32 %v843, %v844
      %v846 = vsel %vm806, %v599, 0.0
      %v847 = vadd.f32 %v845, %v846
      %v848 = vsel %vm806, %v602, 0.0
      %v849 = vadd.f32 %v847, %v848
      %v850 = vsel %vm806, %v607, 0.0
      %v851 = vadd.f32 %v849, %v850
      %v852 = vsel %vm806, %v610, 0.0
      %v853 = vadd.f32 %v851, %v852
      %v854 = vsel %vm806, %v615, 0.0
      %v855 = vadd.f32 %v853, %v854
      %v856 = vsel %vm806, %v618, 0.0
      %v857 = vadd.f32 %v855, %v856
      %v858 = vsel %vm806, %v623, 0.0
      %v859 = vadd.f32 %v857, %v858
      %v860 = vsel %vm806, %v626, 0.0
      %v861 = vadd.f32 %v859, %v860
      %v862 = vsel %vm806, %v631, 0.0
      %v863 = vadd.f32 %v861, %v862
      %v864 = vsel %vm806, %v634, 0.0
      %v865 = vadd.f32 %v863, %v864
      %v866 = vsel %vm806, %v639, 0.0
      %v867 = vadd.f32 %v865, %v866
      %v868 = vsel %vm806, %v642, 0.0
      %v869 = vadd.f32 %v867, %v868
      %v870 = vrot.slane %v869, 4
      %v871 = vadd.f32 %v869, %v870
      %v872 = vrot.slane %v871, 2
      %v873 = vadd.f32 %v871, %v872
      %v874 = vrot.slane %v873, 1
      %v875 = vadd.f32 %v873, %v874
      %v876 = vmul.f32 %v875, 0.00390625
      %v877 = vsub.f32 %v519, %v876
      %v878 = vsub.f32 %v522, %v876
      %v879 = vsub.f32 %v527, %v876
      %v880 = vsub.f32 %v530, %v876
      %v881 = vsub.f32 %v535, %v876
      %v882 = vsub.f32 %v538, %v876
      %v883 = vsub.f32 %v543, %v876
      %v884 = vsub.f32 %v546, %v876
      %v885 = vsub.f32 %v551, %v876
      %v886 = vsub.f32 %v554, %v876
      %v887 = vsub.f32 %v559, %v876
      %v888 = vsub.f32 %v562, %v876
      %v889 = vsub.f32 %v567, %v876
      %v890 = vsub.f32 %v570, %v876
      %v891 = vsub.f32 %v575, %v876
      %v892 = vsub.f32 %v578, %v876
      %v893 = vsub.f32 %v583, %v876
      %v894 = vsub.f32 %v586, %v876
      %v895 = vsub.f32 %v591, %v876
      %v896 = vsub.f32 %v594, %v876
      %v897 = vsub.f32 %v599, %v876
      %v898 = vsub.f32 %v602, %v876
      %v899 = vsub.f32 %v607, %v876
      %v900 = vsub.f32 %v610, %v876
      %v901 = vsub.f32 %v615, %v876
      %v902 = vsub.f32 %v618, %v876
      %v903 = vsub.f32 %v623, %v876
      %v904 = vsub.f32 %v626, %v876
      %v905 = vsub.f32 %v631, %v876
      %v906 = vsub.f32 %v634, %v876
      %v907 = vsub.f32 %v639, %v876
      %v908 = vsub.f32 %v642, %v876
      %v909 = vmul.f32 %v877, %v877
      %v910 = vmul.f32 %v878, %v878
      %v911 = vmul.f32 %v879, %v879
      %v912 = vmul.f32 %v880, %v880
      %v913 = vmul.f32 %v881, %v881
      %v914 = vmul.f32 %v882, %v882
      %v915 = vmul.f32 %v883, %v883
      %v916 = vmul.f32 %v884, %v884
      %v917 = vmul.f32 %v885, %v885
      %v918 = vmul.f32 %v886, %v886
      %v919 = vmul.f32 %v887, %v887
      %v920 = vmul.f32 %v888, %v888
      %v921 = vmul.f32 %v889, %v889
      %v922 = vmul.f32 %v890, %v890
      %v923 = vmul.f32 %v891, %v891
      %v924 = vmul.f32 %v892, %v892
      %v925 = vmul.f32 %v893, %v893
      %v926 = vmul.f32 %v894, %v894
      %v927 = vmul.f32 %v895, %v895
      %v928 = vmul.f32 %v896, %v896
      %v929 = vmul.f32 %v897, %v897
      %v930 = vmul.f32 %v898, %v898
      %v931 = vmul.f32 %v899, %v899
      %v932 = vmul.f32 %v900, %v900
      %v933 = vmul.f32 %v901, %v901
      %v934 = vmul.f32 %v902, %v902
      %v935 = vmul.f32 %v903, %v903
      %v936 = vmul.f32 %v904, %v904
      %v937 = vmul.f32 %v905, %v905
      %v938 = vmul.f32 %v906, %v906
      %v939 = vmul.f32 %v907, %v907
      %v940 = vmul.f32 %v908, %v908
      %v941 = vsel %vm806, %v909, 0.0
      %v942 = vsel %vm806, %v910, 0.0
      %v943 = vadd.f32 %v941, %v942
      %v944 = vsel %vm806, %v911, 0.0
      %v945 = vadd.f32 %v943, %v944
      %v946 = vsel %vm806, %v912, 0.0
      %v947 = vadd.f32 %v945, %v946
      %v948 = vsel %vm806, %v913, 0.0
      %v949 = vadd.f32 %v947, %v948
      %v950 = vsel %vm806, %v914, 0.0
      %v951 = vadd.f32 %v949, %v950
      %v952 = vsel %vm806, %v915, 0.0
      %v953 = vadd.f32 %v951, %v952
      %v954 = vsel %vm806, %v916, 0.0
      %v955 = vadd.f32 %v953, %v954
      %v956 = vsel %vm806, %v917, 0.0
      %v957 = vadd.f32 %v955, %v956
      %v958 = vsel %vm806, %v918, 0.0
      %v959 = vadd.f32 %v957, %v958
      %v960 = vsel %vm806, %v919, 0.0
      %v961 = vadd.f32 %v959, %v960
      %v962 = vsel %vm806, %v920, 0.0
      %v963 = vadd.f32 %v961, %v962
      %v964 = vsel %vm806, %v921, 0.0
      %v965 = vadd.f32 %v963, %v964
      %v966 = vsel %vm806, %v922, 0.0
      %v967 = vadd.f32 %v965, %v966
      %v968 = vsel %vm806, %v923, 0.0
      %v969 = vadd.f32 %v967, %v968
      %v970 = vsel %vm806, %v924, 0.0
      %v971 = vadd.f32 %v969, %v970
      %v972 = vsel %vm806, %v925, 0.0
      %v973 = vadd.f32 %v971, %v972
      %v974 = vsel %vm806, %v926, 0.0
      %v975 = vadd.f32 %v973, %v974
      %v976 = vsel %vm806, %v927, 0.0
      %v977 = vadd.f32 %v975, %v976
      %v978 = vsel %vm806, %v928, 0.0
      %v979 = vadd.f32 %v977, %v978
      %v980 = vsel %vm806, %v929, 0.0
      %v981 = vadd.f32 %v979, %v980
      %v982 = vsel %vm806, %v930, 0.0
      %v983 = vadd.f32 %v981, %v982
      %v984 = vsel %vm806, %v931, 0.0
      %v985 = vadd.f32 %v983, %v984
      %v986 = vsel %vm806, %v932, 0.0
      %v987 = vadd.f32 %v985, %v986
      %v988 = vsel %vm806, %v933, 0.0
      %v989 = vadd.f32 %v987, %v988
      %v990 = vsel %vm806, %v934, 0.0
      %v991 = vadd.f32 %v989, %v990
      %v992 = vsel %vm806, %v935, 0.0
      %v993 = vadd.f32 %v991, %v992
      %v994 = vsel %vm806, %v936, 0.0
      %v995 = vadd.f32 %v993, %v994
      %v996 = vsel %vm806, %v937, 0.0
      %v997 = vadd.f32 %v995, %v996
      %v998 = vsel %vm806, %v938, 0.0
      %v999 = vadd.f32 %v997, %v998
      %v1000 = vsel %vm806, %v939, 0.0
      %v1001 = vadd.f32 %v999, %v1000
      %v1002 = vsel %vm806, %v940, 0.0
      %v1003 = vadd.f32 %v1001, %v1002
      %v1004 = vrot.slane %v1003, 4
      %v1005 = vadd.f32 %v1003, %v1004
      %v1006 = vrot.slane %v1005, 2
      %v1007 = vadd.f32 %v1005, %v1006
      %v1008 = vrot.slane %v1007, 1
      %v1009 = vadd.f32 %v1007, %v1008
      %vm1010 = vcmask 1040384
      %v1011 = vsel %vm1010, %v875, %v1009
      %vm1012 = vcmask 123904
      %1013 = vst.msk [vmem:[%s238] sm:$0x3] %vm1012, %v1011
      %s1014 = smul.u32 32, %s17
      %p1015 = scmp.lt.s32.totalorder %s1014, 63
      %s1016 = scalar_select %p1015, %s1014, 63
      %s1017 = smul.addr %s1016, 4
      %s1018 = scalar_lea.vmem %s4, %s1017
      %p1019 = scmp.lt.s32.totalorder %s17, 1
      %s1020 = scalar_select %p1019, %s17, 1
      %s1021 = smul.addr %s1020, 2
      %s1022 = scalar_lea.vmem %s5, %s1021
      // Predicated region
      $region37: #{block_forward.6} parent=35 // pred_check
        %p1023 = pneg %p124
      $region38: #{block_forward.6} parent=35 // pred_check_branch
        %1025 = sbr.rel (%p1023) target = $region40
      $region39: #{block_forward.6} parent=35 // pred_region
        %s1026 = smul.u32 32, %s17
      $region40: #{block_forward.6} parent=35 // pred_fallthru
        _
      // Predicated region
      $region41: #{block_forward.6} parent=35 // pred_check
        %p1027 = pneg %p150
      $region42: #{block_forward.6} parent=35 // pred_check_branch
        %1029 = sbr.rel (%p1027) target = $region44
      $region43: #{block_forward.6} parent=35 // pred_region
        _
      $region44: #{block_forward.6} parent=35 // pred_fallthru
        _
    $region36: #{block_forward.6} parent=5 // pred_fallthru
      _
    %p1030 = scmp.le.s32.totalorder 2, %s12
    // Predicated region
    $region45: #{block_forward.6} parent=5 // pred_check
      %p1031 = pneg %p1030
    $region46: #{block_forward.6} parent=5 // pred_check_branch
      %1033 = sbr.rel (%p1031) target = $region48
    $region47: #{block_forward.6} parent=5 // pred_region
      %s1034 = ssub.s32 %s12, 2
      // Predicated region
      $region49: #{block_forward.6} parent=47 // pred_check
        %p1035 = pneg %p130
      $region50: #{block_forward.6} parent=47 // pred_check_branch
        %1037 = sbr.rel (%p1035) target = $region52
      $region51: #{block_forward.6} parent=47 // pred_region
        %s1038 = smul.u32 32, %s18
        %p1039 = scmp.lt.s32.totalorder %s1038, 63
        %s1040 = scalar_select %p1039, %s1038, 63
        %s1041 = smul.addr %s1040, 4
        %s1042 = scalar_lea.vmem %s4, %s1041
      $region52: #{block_forward.6} parent=47 // pred_fallthru
        _
      // Predicated region
      $region53: #{block_forward.6} parent=47 // pred_check
        %p1043 = pneg %p156
      $region54: #{block_forward.6} parent=47 // pred_check_branch
        %1045 = sbr.rel (%p1043) target = $region56
      $region55: #{block_forward.6} parent=47 // pred_region
        %p1046 = scmp.lt.s32.totalorder %s18, 1
        %s1047 = scalar_select %p1046, %s18, 1
        %s1048 = smul.addr %s1047, 2
        %s1049 = scalar_lea.vmem %s5, %s1048
      $region56: #{block_forward.6} parent=47 // pred_fallthru
        _
    $region48: #{block_forward.6} parent=5 // pred_fallthru
      _
  $region6: #{block_forward.6} parent=0 // loop_footer
    %s16 = sadd.s32 1, %s12
  $region7: #{block_forward.6} parent=0 // loop_footer_branch
    %11 = sbr.rel target = $region3
  $region8: #{block_forward.6} parent=0 // loop_exit
    _

// kernel: block_forward.7
$region0: #{block_forward.7}
  #allocation0 [shape = 'u32[]', space=smem, size = 0x4, offset = 0x4, fixed_abs, tag = 'smem constant byte address 0x4 - core index']
  #allocation1 [shape = 'u32[144,128]{1,0:T(1,128)}', space=vmem, size = 0x12000, scoped, tag = 'internal scratch']
  %s0 = inlined_call_operand.vmem [shape: bf16[512,16], index: 0, kind: input, shape index: {}]
  %s1 = inlined_call_operand.vmem [shape: f32[1,16], index: 1, kind: input, shape index: {}]
  %s2 = inlined_call_operand.vmem [shape: f32[1,16], index: 2, kind: input, shape index: {}]
  %s3 = inlined_call_operand.vmem [shape: f32[512,16], index: 3, kind: input, shape index: {}]
  %s4 = inlined_call_operand.vmem [shape: f32[512,16], index: 4, kind: output, shape index: {}]
  %s5 = sld [smem:[#allocation0]]
  $region49: #{block_forward.7} parent=0
    _
  %s7 = ssub.s32 1, %s5
  %s8 = scalar_select 0, %s7, %s5
  loop: start=0, step=1, limit=4
  $region2: #{block_forward.7} parent=0 // loop_pre_header
    _
  $region3: #{block_forward.7} parent=0 // loop_header
    %s10 = sphi 0, %s14
    %p11 = scmp.ge.s32.totalorder %s10, 4
    %s20 = sphi 0, %s22
    %s23 = sphi 0, %s20
    %s24 = sphi 0, %s23
    %s40 = sphi 0, %s24
    %s44 = sphi 0, %s44
    %s46 = sphi 0, %s44
    %s47 = sphi 0, %s46
    %s61 = sphi 0, %s47
    %s65 = sphi 0, %s65
    %s67 = sphi 0, %s65
    %s68 = sphi 0, %s67
    %s82 = sphi 0, %s68
    %s88 = sphi 0, %s90
    %s91 = sphi 0, %s88
    %s92 = sphi 0, %s91
    %s108 = sphi 0, %s92
    %s114 = sphi 0, %s116
    %s117 = sphi 0, %s114
    %s118 = sphi 0, %s117
    %s134 = sphi 0, %s118
  $region4: #{block_forward.7} parent=0 // loop_header_branch
    %13 = sbr.rel (%p11) target = $region8
  $region5: #{block_forward.7} parent=0 // loop_body
    %s15 = ssub.s32 %s10, 1
    %s16 = ssub.s32 %s10, 2
    %s17 = sadd.s32 %s10, 1
    %s18 = ssub.s32 %s10, %s17
    %p19 = scmp.eq.s32.totalorder %s18, 0
    %s21 = sadd.s32 %s20, 1
    %s22 = scalar_select %p19, %s20, %s21
    %p25 = pneg %p19
    %p26 = scmp.eq.s32.totalorder %s10, 1
    %p27 = por %p25, %p26
    %p28 = scmp.ne.s32.totalorder %s20, %s23
    %p29 = scmp.eq.s32.totalorder %s10, 0
    %p30 = por %p28, %p29
    %p31 = scmp.ne.s32.totalorder %s20, %s23
    %p32 = scmp.eq.s32.totalorder %s15, 1
    %p33 = por %p31, %p32
    %p34 = scmp.ne.s32.totalorder %s23, %s24
    %p35 = scmp.eq.s32.totalorder %s15, 0
    %p36 = por %p34, %p35
    %p37 = scmp.ne.s32.totalorder %s23, %s24
    %p38 = scmp.eq.s32.totalorder %s16, 1
    %p39 = por %p37, %p38
    %p41 = scmp.ne.s32.totalorder %s24, %s40
    %p42 = scmp.eq.s32.totalorder %s16, 0
    %p43 = por %p41, %p42
    %s45 = sadd.s32 %s44, 1
    %p48 = scmp.eq.s32.totalorder %s10, 1
    %p49 = scmp.ne.s32.totalorder %s44, %s46
    %p50 = scmp.eq.s32.totalorder %s10, 0
    %p51 = por %p49, %p50
    %p52 = scmp.ne.s32.totalorder %s44, %s46
    %p53 = scmp.eq.s32.totalorder %s15, 1
    %p54 = por %p52, %p53
    %p55 = scmp.ne.s32.totalorder %s46, %s47
    %p56 = scmp.eq.s32.totalorder %s15, 0
    %p57 = por %p55, %p56
    %p58 = scmp.ne.s32.totalorder %s46, %s47
    %p59 = scmp.eq.s32.totalorder %s16, 1
    %p60 = por %p58, %p59
    %p62 = scmp.ne.s32.totalorder %s47, %s61
    %p63 = scmp.eq.s32.totalorder %s16, 0
    %p64 = por %p62, %p63
    %s66 = sadd.s32 %s65, 1
    %p69 = scmp.eq.s32.totalorder %s10, 1
    %p70 = scmp.ne.s32.totalorder %s65, %s67
    %p71 = scmp.eq.s32.totalorder %s10, 0
    %p72 = por %p70, %p71
    %p73 = scmp.ne.s32.totalorder %s65, %s67
    %p74 = scmp.eq.s32.totalorder %s15, 1
    %p75 = por %p73, %p74
    %p76 = scmp.ne.s32.totalorder %s67, %s68
    %p77 = scmp.eq.s32.totalorder %s15, 0
    %p78 = por %p76, %p77
    %p79 = scmp.ne.s32.totalorder %s67, %s68
    %p80 = scmp.eq.s32.totalorder %s16, 1
    %p81 = por %p79, %p80
    %p83 = scmp.ne.s32.totalorder %s68, %s82
    %p84 = scmp.eq.s32.totalorder %s16, 0
    %p85 = por %p83, %p84
    %s86 = ssub.s32 %s10, %s17
    %p87 = scmp.eq.s32.totalorder %s86, 0
    %s89 = sadd.s32 %s88, 1
    %s90 = scalar_select %p87, %s88, %s89
    %p93 = pneg %p87
    %p94 = scmp.eq.s32.totalorder %s10, 1
    %p95 = por %p93, %p94
    %p96 = scmp.ne.s32.totalorder %s88, %s91
    %p97 = scmp.eq.s32.totalorder %s10, 0
    %p98 = por %p96, %p97
    %p99 = scmp.ne.s32.totalorder %s88, %s91
    %p100 = scmp.eq.s32.totalorder %s15, 1
    %p101 = por %p99, %p100
    %p102 = scmp.ne.s32.totalorder %s91, %s92
    %p103 = scmp.eq.s32.totalorder %s15, 0
    %p104 = por %p102, %p103
    %p105 = scmp.ne.s32.totalorder %s91, %s92
    %p106 = scmp.eq.s32.totalorder %s16, 1
    %p107 = por %p105, %p106
    %p109 = scmp.ne.s32.totalorder %s92, %s108
    %p110 = scmp.eq.s32.totalorder %s16, 0
    %p111 = por %p109, %p110
    %s112 = ssub.s32 %s10, %s17
    %p113 = scmp.eq.s32.totalorder %s112, 0
    %s115 = sadd.s32 %s114, 1
    %s116 = scalar_select %p113, %s114, %s115
    %p119 = pneg %p113
    %p120 = scmp.eq.s32.totalorder %s10, 1
    %p121 = por %p119, %p120
    %p122 = scmp.ne.s32.totalorder %s114, %s117
    %p123 = scmp.eq.s32.totalorder %s10, 0
    %p124 = por %p122, %p123
    %p125 = scmp.ne.s32.totalorder %s114, %s117
    %p126 = scmp.eq.s32.totalorder %s15, 1
    %p127 = por %p125, %p126
    %p128 = scmp.ne.s32.totalorder %s117, %s118
    %p129 = scmp.eq.s32.totalorder %s15, 0
    %p130 = por %p128, %p129
    %p131 = scmp.ne.s32.totalorder %s117, %s118
    %p132 = scmp.eq.s32.totalorder %s16, 1
    %p133 = por %p131, %p132
    %p135 = scmp.ne.s32.totalorder %s118, %s134
    %p136 = scmp.eq.s32.totalorder %s16, 0
    %p137 = por %p135, %p136
    %p138 = scmp.le.s32.totalorder 1, %s10
    %p139 = scmp.lt.s32.totalorder %s10, 3
    %p140 = pnand %p138, %p139
    %p141 = pneg %p140
    // Predicated region
    $region9: #{block_forward.7} parent=5 // pred_check
      _
    $region10: #{block_forward.7} parent=5 // pred_check_branch
      %143 = sbr.rel (%p140) target = $region12
    $region11: #{block_forward.7} parent=5 // pred_region
      %s144 = ssub.s32 %s10, 1
      // Predicated region
      $region13: #{block_forward.7} parent=11 // pred_check
        %p145 = pneg %p57
      $region14: #{block_forward.7} parent=11 // pred_check_branch
        %147 = sbr.rel (%p145) target = $region16
      $region15: #{block_forward.7} parent=11 // pred_region
        _
      $region16: #{block_forward.7} parent=11 // pred_fallthru
        _
      // Predicated region
      $region17: #{block_forward.7} parent=11 // pred_check
        %p148 = pneg %p78
      $region18: #{block_forward.7} parent=11 // pred_check_branch
        %150 = sbr.rel (%p148) target = $region20
      $region19: #{block_forward.7} parent=11 // pred_region
        _
      $region20: #{block_forward.7} parent=11 // pred_fallthru
        _
    $region12: #{block_forward.7} parent=5 // pred_fallthru
      _
    %p151 = scmp.lt.s32.totalorder %s10, 2
    // Predicated region
    $region21: #{block_forward.7} parent=5 // pred_check
      %p152 = pneg %p151
    $region22: #{block_forward.7} parent=5 // pred_check_branch
      %154 = sbr.rel (%p152) target = $region24
    $region23: #{block_forward.7} parent=5 // pred_region
      // Predicated region
      $region25: #{block_forward.7} parent=23 // pred_check
        %p155 = pneg %p30
      $region26: #{block_forward.7} parent=23 // pred_check_branch
        %157 = sbr.rel (%p155) target = $region28
      $region27: #{block_forward.7} parent=23 // pred_region
        %s158 = smul.u32 32, %s10
        %p159 = scmp.lt.s32.totalorder %s158, 63
        %s160 = scalar_select %p159, %s158, 63
        %s161 = smul.addr %s160, 4
        %s162 = scalar_lea.vmem %s0, %s161
        %s163 = smul.u32 32, %s10
      $region28: #{block_forward.7} parent=23 // pred_fallthru
        _
      // Predicated region
      $region29: #{block_forward.7} parent=23 // pred_check
        %p164 = pneg %p98
      $region30: #{block_forward.7} parent=23 // pred_check_branch
        %166 = sbr.rel (%p164) target = $region32
      $region31: #{block_forward.7} parent=23 // pred_region
        %s167 = smul.u32 32, %s10
        %p168 = scmp.lt.s32.totalorder %s167, 63
        %s169 = scalar_select %p168, %s167, 63
        %s170 = smul.addr %s169, 8
        %s171 = scalar_lea.vmem %s3, %s170
        %s172 = smul.u32 32, %s10
      $region32: #{block_forward.7} parent=23 // pred_fallthru
        _
    $region24: #{block_forward.7} parent=5 // pred_fallthru
      _
    %p173 = scmp.le.s32.totalorder 1, %s10
    %p174 = scmp.lt.s32.totalorder %s10, 3
    %p175 = pnand %p173, %p174
    %p176 = pneg %p175
    // Predicated region
    $region33: #{block_forward.7} parent=5 // pred_check
      _
    $region34: #{block_forward.7} parent=5 // pred_check_branch
      %178 = sbr.rel (%p175) target = $region36
    $region35: #{block_forward.7} parent=5 // pred_region
      %s179 = ssub.s32 %s10, 1
      %s180 = smul.u32 32, %s15
      %p181 = scmp.lt.s32.totalorder %s180, 63
      %s182 = scalar_select %p181, %s180, 63
      %s183 = smul.addr %s182, 4
      %s184 = scalar_lea.vmem %s0, %s183
      %p185 = pneg %p36
      %p186 = pneg %p33
      %p187 = pneg %p57
      %p188 = pneg %p54
      %p189 = pneg %p78
      %p190 = pneg %p75
      %s191 = smul.u32 32, %s15
      %p192 = scmp.lt.s32.totalorder %s191, 63
      %s193 = scalar_select %p192, %s191, 63
      %s194 = smul.addr %s193, 8
      %s195 = scalar_lea.vmem %s3, %s194
      %p196 = pneg %p104
      %p197 = pneg %p101
      %p198 = pneg %p130
      %p199 = pneg %p127
      %s200 = smul.u32 32, %s15
      %p201 = scmp.lt.s32.totalorder %s200, 63
      %s202 = scalar_select %p201, %s200, 63
      %s203 = smul.addr %s202, 8
      %s204 = scalar_lea.vmem %s4, %s203
      %s205 = smul.u32 32, %s15
      %p206 = scmp.lt.s32.totalorder %s205, 63
      %s207 = scalar_select %p206, %s205, 63
      %s208 = smul.addr %s207, 4
      %s209 = scalar_lea.vmem %s0, %s208
      %s210 = smul.u32 32, %s15
      %s211 = smul.u32 32, %s15
      %p212 = scmp.lt.s32.totalorder %s211, 63
      %s213 = scalar_select %p212, %s211, 63
      %s214 = smul.addr %s213, 8
      %s215 = scalar_lea.vmem %s3, %s214
      %s216 = smul.u32 32, %s15
      %s217 = smul.u32 32, %s15
      %p218 = scmp.lt.s32.totalorder %s217, 63
      %s219 = scalar_select %p218, %s217, 63
      %s220 = smul.addr %s219, 8
      %s221 = scalar_lea.vmem %s4, %s220
      %s222 = smul.u32 32, %s15
      %v223 = vld [vmem:[%s209] sm:$0xf]
      %v224 = vld [vmem:[%s209 + $0x4] sm:$0xf]
      %v225 = vld [vmem:[%s209 + $0x8] sm:$0xf]
      %v226 = vld [vmem:[%s209 + $0xc] sm:$0xf]
      %v227 = vld [vmem:[%s209 + $0x10] sm:$0xf]
      %v228 = vld [vmem:[%s209 + $0x14] sm:$0xf]
      %v229 = vld [vmem:[%s209 + $0x18] sm:$0xf]
      %v230 = vld [vmem:[%s209 + $0x1c] sm:$0xf]
      %v231 = vld [vmem:[%s209 + $0x20] sm:$0xf]
      %v232 = vld [vmem:[%s209 + $0x24] sm:$0xf]
      %v233 = vld [vmem:[%s209 + $0x28] sm:$0xf]
      %v234 = vld [vmem:[%s209 + $0x2c] sm:$0xf]
      %v235 = vld [vmem:[%s209 + $0x30] sm:$0xf]
      %v236 = vld [vmem:[%s209 + $0x34] sm:$0xf]
      %v237 = vld [vmem:[%s209 + $0x38] sm:$0xf]
      %v238 = vld [vmem:[%s209 + $0x3c] sm:$0xf]
      %v239 = vld [vmem:[%s209 + $0x40] sm:$0xf]
      %v240 = vld [vmem:[%s209 + $0x44] sm:$0xf]
      %v241 = vld [vmem:[%s209 + $0x48] sm:$0xf]
      %v242 = vld [vmem:[%s209 + $0x4c] sm:$0xf]
      %v243 = vld [vmem:[%s209 + $0x50] sm:$0xf]
      %v244 = vld [vmem:[%s209 + $0x54] sm:$0xf]
      %v245 = vld [vmem:[%s209 + $0x58] sm:$0xf]
      %v246 = vld [vmem:[%s209 + $0x5c] sm:$0xf]
      %v247 = vld [vmem:[%s209 + $0x60] sm:$0xf]
      %v248 = vld [vmem:[%s209 + $0x64] sm:$0xf]
      %v249 = vld [vmem:[%s209 + $0x68] sm:$0xf]
      %v250 = vld [vmem:[%s209 + $0x6c] sm:$0xf]
      %v251 = vld [vmem:[%s209 + $0x70] sm:$0xf]
      %v252 = vld [vmem:[%s209 + $0x74] sm:$0xf]
      %v253 = vld [vmem:[%s209 + $0x78] sm:$0xf]
      %v254 = vld [vmem:[%s209 + $0x7c] sm:$0xf]
      %v255 = vunpack.c.l.bf16 %v223
      %v256 = vunpack.c.l.bf16 %v224
      %v257 = vunpack.c.l.bf16 %v225
      %v258 = vunpack.c.l.bf16 %v226
      %v259 = vunpack.c.l.bf16 %v227
      %v260 = vunpack.c.l.bf16 %v228
      %v261 = vunpack.c.l.bf16 %v229
      %v262 = vunpack.c.l.bf16 %v230
      %v263 = vunpack.c.l.bf16 %v231
      %v264 = vunpack.c.l.bf16 %v232
      %v265 = vunpack.c.l.bf16 %v233
      %v266 = vunpack.c.l.bf16 %v234
      %v267 = vunpack.c.l.bf16 %v235
      %v268 = vunpack.c.l.bf16 %v236
      %v269 = vunpack.c.l.bf16 %v237
      %v270 = vunpack.c.l.bf16 %v238
      %v271 = vunpack.c.l.bf16 %v239
      %v272 = vunpack.c.l.bf16 %v240
      %v273 = vunpack.c.l.bf16 %v241
      %v274 = vunpack.c.l.bf16 %v242
      %v275 = vunpack.c.l.bf16 %v243
      %v276 = vunpack.c.l.bf16 %v244
      %v277 = vunpack.c.l.bf16 %v245
      %v278 = vunpack.c.l.bf16 %v246
      %v279 = vunpack.c.l.bf16 %v247
      %v280 = vunpack.c.l.bf16 %v248
      %v281 = vunpack.c.l.bf16 %v249
      %v282 = vunpack.c.l.bf16 %v250
      %v283 = vunpack.c.l.bf16 %v251
      %v284 = vunpack.c.l.bf16 %v252
      %v285 = vunpack.c.l.bf16 %v253
      %v286 = vunpack.c.l.bf16 %v254
      %v287 = vld [vmem:[%s1] sm:$0x1]
      %v289 = vlaneseq
      %v290 = vshrl.u32 %v289, 7
      %v291 = vsub.s32 0, %v290
      %v292 = vrot.slane %v287, %v291
      %v294 = vmul.f32 %v255, %v292
      %v295 = vmul.f32 %v256, %v292
      %v296 = vmul.f32 %v257, %v292
      %v297 = vmul.f32 %v258, %v292
      %v298 = vmul.f32 %v259, %v292
      %v299 = vmul.f32 %v260, %v292
      %v300 = vmul.f32 %v261, %v292
      %v301 = vmul.f32 %v262, %v292
      %v302 = vmul.f32 %v263, %v292
      %v303 = vmul.f32 %v264, %v292
      %v304 = vmul.f32 %v265, %v292
      %v305 = vmul.f32 %v266, %v292
      %v306 = vmul.f32 %v267, %v292
      %v307 = vmul.f32 %v268, %v292
      %v308 = vmul.f32 %v269, %v292
      %v309 = vmul.f32 %v270, %v292
      %v310 = vmul.f32 %v271, %v292
      %v311 = vmul.f32 %v272, %v292
      %v312 = vmul.f32 %v273, %v292
      %v313 = vmul.f32 %v274, %v292
      %v314 = vmul.f32 %v275, %v292
      %v315 = vmul.f32 %v276, %v292
      %v316 = vmul.f32 %v277, %v292
      %v317 = vmul.f32 %v278, %v292
      %v318 = vmul.f32 %v279, %v292
      %v319 = vmul.f32 %v280, %v292
      %v320 = vmul.f32 %v281, %v292
      %v321 = vmul.f32 %v282, %v292
      %v322 = vmul.f32 %v283, %v292
      %v323 = vmul.f32 %v284, %v292
      %v324 = vmul.f32 %v285, %v292
      %v325 = vmul.f32 %v286, %v292
      %v326 = vld [vmem:[%s2] sm:$0x1]
      %v328 = vlaneseq
      %v329 = vshrl.u32 %v328, 7
      %v330 = vsub.s32 0, %v329
      %v331 = vrot.slane %v326, %v330
      %v333 = vadd.f32 %v294, %v331
      %v334 = vadd.f32 %v295, %v331
      %v335 = vadd.f32 %v296, %v331
      %v336 = vadd.f32 %v297, %v331
      %v337 = vadd.f32 %v298, %v331
      %v338 = vadd.f32 %v299, %v331
      %v339 = vadd.f32 %v300, %v331
      %v340 = vadd.f32 %v301, %v331
      %v341 = vadd.f32 %v302, %v331
      %v342 = vadd.f32 %v303, %v331
      %v343 = vadd.f32 %v304, %v331
      %v344 = vadd.f32 %v305, %v331
      %v345 = vadd.f32 %v306, %v331
      %v346 = vadd.f32 %v307, %v331
      %v347 = vadd.f32 %v308, %v331
      %v348 = vadd.f32 %v309, %v331
      %v349 = vadd.f32 %v310, %v331
      %v350 = vadd.f32 %v311, %v331
      %v351 = vadd.f32 %v312, %v331
      %v352 = vadd.f32 %v313, %v331
      %v353 = vadd.f32 %v314, %v331
      %v354 = vadd.f32 %v315, %v331
      %v355 = vadd.f32 %v316, %v331
      %v356 = vadd.f32 %v317, %v331
      %v357 = vadd.f32 %v318, %v331
      %v358 = vadd.f32 %v319, %v331
      %v359 = vadd.f32 %v320, %v331
      %v360 = vadd.f32 %v321, %v331
      %v361 = vadd.f32 %v322, %v331
      %v362 = vadd.f32 %v323, %v331
      %v363 = vadd.f32 %v324, %v331
      %v364 = vadd.f32 %v325, %v331
      %v365 = vld [vmem:[%s215] sm:$0xff]
      %v366 = vld [vmem:[%s215 + $0x8] sm:$0xff]
      %v367 = vld [vmem:[%s215 + $0x10] sm:$0xff]
      %v368 = vld [vmem:[%s215 + $0x18] sm:$0xff]
      %v369 = vld [vmem:[%s215 + $0x20] sm:$0xff]
      %v370 = vld [vmem:[%s215 + $0x28] sm:$0xff]
      %v371 = vld [vmem:[%s215 + $0x30] sm:$0xff]
      %v372 = vld [vmem:[%s215 + $0x38] sm:$0xff]
      %v373 = vld [vmem:[%s215 + $0x40] sm:$0xff]
      %v374 = vld [vmem:[%s215 + $0x48] sm:$0xff]
      %v375 = vld [vmem:[%s215 + $0x50] sm:$0xff]
      %v376 = vld [vmem:[%s215 + $0x58] sm:$0xff]
      %v377 = vld [vmem:[%s215 + $0x60] sm:$0xff]
      %v378 = vld [vmem:[%s215 + $0x68] sm:$0xff]
      %v379 = vld [vmem:[%s215 + $0x70] sm:$0xff]
      %v380 = vld [vmem:[%s215 + $0x78] sm:$0xff]
      %v381 = vld [vmem:[%s215 + $0x80] sm:$0xff]
      %v382 = vld [vmem:[%s215 + $0x88] sm:$0xff]
      %v383 = vld [vmem:[%s215 + $0x90] sm:$0xff]
      %v384 = vld [vmem:[%s215 + $0x98] sm:$0xff]
      %v385 = vld [vmem:[%s215 + $0xa0] sm:$0xff]
      %v386 = vld [vmem:[%s215 + $0xa8] sm:$0xff]
      %v387 = vld [vmem:[%s215 + $0xb0] sm:$0xff]
      %v388 = vld [vmem:[%s215 + $0xb8] sm:$0xff]
      %v389 = vld [vmem:[%s215 + $0xc0] sm:$0xff]
      %v390 = vld [vmem:[%s215 + $0xc8] sm:$0xff]
      %v391 = vld [vmem:[%s215 + $0xd0] sm:$0xff]
      %v392 = vld [vmem:[%s215 + $0xd8] sm:$0xff]
      %v393 = vld [vmem:[%s215 + $0xe0] sm:$0xff]
      %v394 = vld [vmem:[%s215 + $0xe8] sm:$0xff]
      %v395 = vld [vmem:[%s215 + $0xf0] sm:$0xff]
      %v396 = vld [vmem:[%s215 + $0xf8] sm:$0xff]
      %v397 = vadd.f32 %v333, %v365
      %v398 = vadd.f32 %v334, %v366
      %v399 = vadd.f32 %v335, %v367
      %v400 = vadd.f32 %v336, %v368
      %v401 = vadd.f32 %v337, %v369
      %v402 = vadd.f32 %v338, %v370
      %v403 = vadd.f32 %v339, %v371
      %v404 = vadd.f32 %v340, %v372
      %v405 = vadd.f32 %v341, %v373
      %v406 = vadd.f32 %v342, %v374
      %v407 = vadd.f32 %v343, %v375
      %v408 = vadd.f32 %v344, %v376
      %v409 = vadd.f32 %v345, %v377
      %v410 = vadd.f32 %v346, %v378
      %v411 = vadd.f32 %v347, %v379
      %v412 = vadd.f32 %v348, %v380
      %v413 = vadd.f32 %v349, %v381
      %v414 = vadd.f32 %v350, %v382
      %v415 = vadd.f32 %v351, %v383
      %v416 = vadd.f32 %v352, %v384
      %v417 = vadd.f32 %v353, %v385
      %v418 = vadd.f32 %v354, %v386
      %v419 = vadd.f32 %v355, %v387
      %v420 = vadd.f32 %v356, %v388
      %v421 = vadd.f32 %v357, %v389
      %v422 = vadd.f32 %v358, %v390
      %v423 = vadd.f32 %v359, %v391
      %v424 = vadd.f32 %v360, %v392
      %v425 = vadd.f32 %v361, %v393
      %v426 = vadd.f32 %v362, %v394
      %v427 = vadd.f32 %v363, %v395
      %v428 = vadd.f32 %v364, %v396
      %v429 = vmax.f32 %v397, 0.0
      %v430 = vmax.f32 %v398, 0.0
      %v431 = vmax.f32 %v399, 0.0
      %v432 = vmax.f32 %v400, 0.0
      %v433 = vmax.f32 %v401, 0.0
      %v434 = vmax.f32 %v402, 0.0
      %v435 = vmax.f32 %v403, 0.0
      %v436 = vmax.f32 %v404, 0.0
      %v437 = vmax.f32 %v405, 0.0
      %v438 = vmax.f32 %v406, 0.0
      %v439 = vmax.f32 %v407, 0.0
      %v440 = vmax.f32 %v408, 0.0
      %v441 = vmax.f32 %v409, 0.0
      %v442 = vmax.f32 %v410, 0.0
      %v443 = vmax.f32 %v411, 0.0
      %v444 = vmax.f32 %v412, 0.0
      %v445 = vmax.f32 %v413, 0.0
      %v446 = vmax.f32 %v414, 0.0
      %v447 = vmax.f32 %v415, 0.0
      %v448 = vmax.f32 %v416, 0.0
      %v449 = vmax.f32 %v417, 0.0
      %v450 = vmax.f32 %v418, 0.0
      %v451 = vmax.f32 %v419, 0.0
      %v452 = vmax.f32 %v420, 0.0
      %v453 = vmax.f32 %v421, 0.0
      %v454 = vmax.f32 %v422, 0.0
      %v455 = vmax.f32 %v423, 0.0
      %v456 = vmax.f32 %v424, 0.0
      %v457 = vmax.f32 %v425, 0.0
      %v458 = vmax.f32 %v426, 0.0
      %v459 = vmax.f32 %v427, 0.0
      %v460 = vmax.f32 %v428, 0.0
      %vm461 = vcmask 130048
      %462 = vst.msk [vmem:[%s221] sm:$0xff] %vm461, %v429
      %463 = vst.msk [vmem:[%s221 + $0x8] sm:$0xff] %vm461, %v430
      %464 = vst.msk [vmem:[%s221 + $0x10] sm:$0xff] %vm461, %v431
      %465 = vst.msk [vmem:[%s221 + $0x18] sm:$0xff] %vm461, %v432
      %466 = vst.msk [vmem:[%s221 + $0x20] sm:$0xff] %vm461, %v433
      %467 = vst.msk [vmem:[%s221 + $0x28] sm:$0xff] %vm461, %v434
      %468 = vst.msk [vmem:[%s221 + $0x30] sm:$0xff] %vm461, %v435
      %469 = vst.msk [vmem:[%s221 + $0x38] sm:$0xff] %vm461, %v436
      %470 = vst.msk [vmem:[%s221 + $0x40] sm:$0xff] %vm461, %v437
      %471 = vst.msk [vmem:[%s221 + $0x48] sm:$0xff] %vm461, %v438
      %472 = vst.msk [vmem:[%s221 + $0x50] sm:$0xff] %vm461, %v439
      %473 = vst.msk [vmem:[%s221 + $0x58] sm:$0xff] %vm461, %v440
      %474 = vst.msk [vmem:[%s221 + $0x60] sm:$0xff] %vm461, %v441
      %475 = vst.msk [vmem:[%s221 + $0x68] sm:$0xff] %vm461, %v442
      %476 = vst.msk [vmem:[%s221 + $0x70] sm:$0xff] %vm461, %v443
      %477 = vst.msk [vmem:[%s221 + $0x78] sm:$0xff] %vm461, %v444
      %478 = vst.msk [vmem:[%s221 + $0x80] sm:$0xff] %vm461, %v445
      %479 = vst.msk [vmem:[%s221 + $0x88] sm:$0xff] %vm461, %v446
      %480 = vst.msk [vmem:[%s221 + $0x90] sm:$0xff] %vm461, %v447
      %481 = vst.msk [vmem:[%s221 + $0x98] sm:$0xff] %vm461, %v448
      %482 = vst.msk [vmem:[%s221 + $0xa0] sm:$0xff] %vm461, %v449
      %483 = vst.msk [vmem:[%s221 + $0xa8] sm:$0xff] %vm461, %v450
      %484 = vst.msk [vmem:[%s221 + $0xb0] sm:$0xff] %vm461, %v451
      %485 = vst.msk [vmem:[%s221 + $0xb8] sm:$0xff] %vm461, %v452
      %486 = vst.msk [vmem:[%s221 + $0xc0] sm:$0xff] %vm461, %v453
      %487 = vst.msk [vmem:[%s221 + $0xc8] sm:$0xff] %vm461, %v454
      %488 = vst.msk [vmem:[%s221 + $0xd0] sm:$0xff] %vm461, %v455
      %489 = vst.msk [vmem:[%s221 + $0xd8] sm:$0xff] %vm461, %v456
      %490 = vst.msk [vmem:[%s221 + $0xe0] sm:$0xff] %vm461, %v457
      %491 = vst.msk [vmem:[%s221 + $0xe8] sm:$0xff] %vm461, %v458
      %492 = vst.msk [vmem:[%s221 + $0xf0] sm:$0xff] %vm461, %v459
      %493 = vst.msk [vmem:[%s221 + $0xf8] sm:$0xff] %vm461, %v460
      %s494 = smul.u32 32, %s15
      %p495 = scmp.lt.s32.totalorder %s494, 63
      %s496 = scalar_select %p495, %s494, 63
      %s497 = smul.addr %s496, 8
      %s498 = scalar_lea.vmem %s4, %s497
      // Predicated region
      $region37: #{block_forward.7} parent=35 // pred_check
        %p499 = pneg %p127
      $region38: #{block_forward.7} parent=35 // pred_check_branch
        %501 = sbr.rel (%p499) target = $region40
      $region39: #{block_forward.7} parent=35 // pred_region
        %s502 = smul.u32 32, %s15
      $region40: #{block_forward.7} parent=35 // pred_fallthru
        _
    $region36: #{block_forward.7} parent=5 // pred_fallthru
      _
    %p503 = scmp.le.s32.totalorder 2, %s10
    // Predicated region
    $region41: #{block_forward.7} parent=5 // pred_check
      %p504 = pneg %p503
    $region42: #{block_forward.7} parent=5 // pred_check_branch
      %506 = sbr.rel (%p504) target = $region44
    $region43: #{block_forward.7} parent=5 // pred_region
      %s507 = ssub.s32 %s10, 2
      // Predicated region
      $region45: #{block_forward.7} parent=43 // pred_check
        %p508 = pneg %p133
      $region46: #{block_forward.7} parent=43 // pred_check_branch
        %510 = sbr.rel (%p508) target = $region48
      $region47: #{block_forward.7} parent=43 // pred_region
        %s511 = smul.u32 32, %s16
        %p512 = scmp.lt.s32.totalorder %s511, 63
        %s513 = scalar_select %p512, %s511, 63
        %s514 = smul.addr %s513, 8
        %s515 = scalar_lea.vmem %s4, %s514
      $region48: #{block_forward.7} parent=43 // pred_fallthru
        _
    $region44: #{block_forward.7} parent=5 // pred_fallthru
      _
  $region6: #{block_forward.7} parent=0 // loop_footer
    %s14 = sadd.s32 1, %s10
  $region7: #{block_forward.7} parent=0 // loop_footer_branch
    %9 = sbr.rel target = $region3
  $region8: #{block_forward.7} parent=0 // loop_exit
    _

// kernel: block_forward.5
$region0: #{block_forward.5}
  #allocation0 [shape = 'u32[]', space=smem, size = 0x4, offset = 0x4, fixed_abs, tag = 'smem constant byte address 0x4 - core index']
  #allocation1 [shape = 'u32[144,128]{1,0:T(1,128)}', space=vmem, size = 0x12000, scoped, tag = 'internal scratch']
  #allocation2 [shape = 'f32[432,4]{1,0:T(8,128)}', space=vmem, size = 0x36000, scoped, tag = 'scratch operand']
  #allocation3 [shape = 'f32[376,4]{1,0:T(8,128)}', space=vmem, size = 0x2f000, scoped, tag = 'scratch operand']
  %s0 = inlined_call_operand.vmem [shape: bf16[2,256,4], index: 0, kind: input, shape index: {}]
  %s1 = inlined_call_operand.vmem [shape: f32[1,4], index: 1, kind: input, shape index: {}]
  %s2 = inlined_call_operand.vmem [shape: f32[1,4], index: 2, kind: input, shape index: {}]
  %s3 = inlined_call_operand.vmem [shape: bf16[9,4,4], index: 3, kind: input, shape index: {}]
  %s4 = inlined_call_operand.vmem [shape: bf16[2,256,4], index: 4, kind: output, shape index: {0}]
  %s5 = inlined_call_operand.vmem [shape: f32[2,2,4], index: 5, kind: output, shape index: {1}]
  %6 = xla_tuple %s4, %s5
  %s7 = sld [smem:[#allocation0]]
  $region57: #{block_forward.5} parent=0
    _
  %s9 = ssub.s32 1, %s7
  %s10 = scalar_select 0, %s9, %s7
  loop: start=0, step=1, limit=4
  $region2: #{block_forward.5} parent=0 // loop_pre_header
    _
  $region3: #{block_forward.5} parent=0 // loop_header
    %s12 = sphi 0, %s16
    %p13 = scmp.ge.s32.totalorder %s12, 4
    %s22 = sphi 0, %s24
    %s25 = sphi 0, %s22
    %s26 = sphi 0, %s25
    %s42 = sphi 0, %s26
    %s46 = sphi 0, %s46
    %s48 = sphi 0, %s46
    %s49 = sphi 0, %s48
    %s63 = sphi 0, %s49
    %s67 = sphi 0, %s67
    %s69 = sphi 0, %s67
    %s70 = sphi 0, %s69
    %s84 = sphi 0, %s70
    %s88 = sphi 0, %s88
    %s90 = sphi 0, %s88
    %s91 = sphi 0, %s90
    %s105 = sphi 0, %s91
    %s111 = sphi 0, %s113
    %s114 = sphi 0, %s111
    %s115 = sphi 0, %s114
    %s131 = sphi 0, %s115
    %s137 = sphi 0, %s139
    %s140 = sphi 0, %s137
    %s141 = sphi 0, %s140
    %s157 = sphi 0, %s141
  $region4: #{block_forward.5} parent=0 // loop_header_branch
    %15 = sbr.rel (%p13) target = $region8
  $region5: #{block_forward.5} parent=0 // loop_body
    %s17 = ssub.s32 %s12, 1
    %s18 = ssub.s32 %s12, 2
    %s19 = sadd.s32 %s12, 1
    %s20 = ssub.s32 %s12, %s19
    %p21 = scmp.eq.s32.totalorder %s20, 0
    %s23 = sadd.s32 %s22, 1
    %s24 = scalar_select %p21, %s22, %s23
    %p27 = pneg %p21
    %p28 = scmp.eq.s32.totalorder %s12, 1
    %p29 = por %p27, %p28
    %p30 = scmp.ne.s32.totalorder %s22, %s25
    %p31 = scmp.eq.s32.totalorder %s12, 0
    %p32 = por %p30, %p31
    %p33 = scmp.ne.s32.totalorder %s22, %s25
    %p34 = scmp.eq.s32.totalorder %s17, 1
    %p35 = por %p33, %p34
    %p36 = scmp.ne.s32.totalorder %s25, %s26
    %p37 = scmp.eq.s32.totalorder %s17, 0
    %p38 = por %p36, %p37
    %p39 = scmp.ne.s32.totalorder %s25, %s26
    %p40 = scmp.eq.s32.totalorder %s18, 1
    %p41 = por %p39, %p40
    %p43 = scmp.ne.s32.totalorder %s26, %s42
    %p44 = scmp.eq.s32.totalorder %s18, 0
    %p45 = por %p43, %p44
    %s47 = sadd.s32 %s46, 1
    %p50 = scmp.eq.s32.totalorder %s12, 1
    %p51 = scmp.ne.s32.totalorder %s46, %s48
    %p52 = scmp.eq.s32.totalorder %s12, 0
    %p53 = por %p51, %p52
    %p54 = scmp.ne.s32.totalorder %s46, %s48
    %p55 = scmp.eq.s32.totalorder %s17, 1
    %p56 = por %p54, %p55
    %p57 = scmp.ne.s32.totalorder %s48, %s49
    %p58 = scmp.eq.s32.totalorder %s17, 0
    %p59 = por %p57, %p58
    %p60 = scmp.ne.s32.totalorder %s48, %s49
    %p61 = scmp.eq.s32.totalorder %s18, 1
    %p62 = por %p60, %p61
    %p64 = scmp.ne.s32.totalorder %s49, %s63
    %p65 = scmp.eq.s32.totalorder %s18, 0
    %p66 = por %p64, %p65
    %s68 = sadd.s32 %s67, 1
    %p71 = scmp.eq.s32.totalorder %s12, 1
    %p72 = scmp.ne.s32.totalorder %s67, %s69
    %p73 = scmp.eq.s32.totalorder %s12, 0
    %p74 = por %p72, %p73
    %p75 = scmp.ne.s32.totalorder %s67, %s69
    %p76 = scmp.eq.s32.totalorder %s17, 1
    %p77 = por %p75, %p76
    %p78 = scmp.ne.s32.totalorder %s69, %s70
    %p79 = scmp.eq.s32.totalorder %s17, 0
    %p80 = por %p78, %p79
    %p81 = scmp.ne.s32.totalorder %s69, %s70
    %p82 = scmp.eq.s32.totalorder %s18, 1
    %p83 = por %p81, %p82
    %p85 = scmp.ne.s32.totalorder %s70, %s84
    %p86 = scmp.eq.s32.totalorder %s18, 0
    %p87 = por %p85, %p86
    %s89 = sadd.s32 %s88, 1
    %p92 = scmp.eq.s32.totalorder %s12, 1
    %p93 = scmp.ne.s32.totalorder %s88, %s90
    %p94 = scmp.eq.s32.totalorder %s12, 0
    %p95 = por %p93, %p94
    %p96 = scmp.ne.s32.totalorder %s88, %s90
    %p97 = scmp.eq.s32.totalorder %s17, 1
    %p98 = por %p96, %p97
    %p99 = scmp.ne.s32.totalorder %s90, %s91
    %p100 = scmp.eq.s32.totalorder %s17, 0
    %p101 = por %p99, %p100
    %p102 = scmp.ne.s32.totalorder %s90, %s91
    %p103 = scmp.eq.s32.totalorder %s18, 1
    %p104 = por %p102, %p103
    %p106 = scmp.ne.s32.totalorder %s91, %s105
    %p107 = scmp.eq.s32.totalorder %s18, 0
    %p108 = por %p106, %p107
    %s109 = ssub.s32 %s12, %s19
    %p110 = scmp.eq.s32.totalorder %s109, 0
    %s112 = sadd.s32 %s111, 1
    %s113 = scalar_select %p110, %s111, %s112
    %p116 = pneg %p110
    %p117 = scmp.eq.s32.totalorder %s12, 1
    %p118 = por %p116, %p117
    %p119 = scmp.ne.s32.totalorder %s111, %s114
    %p120 = scmp.eq.s32.totalorder %s12, 0
    %p121 = por %p119, %p120
    %p122 = scmp.ne.s32.totalorder %s111, %s114
    %p123 = scmp.eq.s32.totalorder %s17, 1
    %p124 = por %p122, %p123
    %p125 = scmp.ne.s32.totalorder %s114, %s115
    %p126 = scmp.eq.s32.totalorder %s17, 0
    %p127 = por %p125, %p126
    %p128 = scmp.ne.s32.totalorder %s114, %s115
    %p129 = scmp.eq.s32.totalorder %s18, 1
    %p130 = por %p128, %p129
    %p132 = scmp.ne.s32.totalorder %s115, %s131
    %p133 = scmp.eq.s32.totalorder %s18, 0
    %p134 = por %p132, %p133
    %s135 = ssub.s32 %s12, %s19
    %p136 = scmp.eq.s32.totalorder %s135, 0
    %s138 = sadd.s32 %s137, 1
    %s139 = scalar_select %p136, %s137, %s138
    %p142 = pneg %p136
    %p143 = scmp.eq.s32.totalorder %s12, 1
    %p144 = por %p142, %p143
    %p145 = scmp.ne.s32.totalorder %s137, %s140
    %p146 = scmp.eq.s32.totalorder %s12, 0
    %p147 = por %p145, %p146
    %p148 = scmp.ne.s32.totalorder %s137, %s140
    %p149 = scmp.eq.s32.totalorder %s17, 1
    %p150 = por %p148, %p149
    %p151 = scmp.ne.s32.totalorder %s140, %s141
    %p152 = scmp.eq.s32.totalorder %s17, 0
    %p153 = por %p151, %p152
    %p154 = scmp.ne.s32.totalorder %s140, %s141
    %p155 = scmp.eq.s32.totalorder %s18, 1
    %p156 = por %p154, %p155
    %p158 = scmp.ne.s32.totalorder %s141, %s157
    %p159 = scmp.eq.s32.totalorder %s18, 0
    %p160 = por %p158, %p159
    %p161 = scmp.le.s32.totalorder 1, %s12
    %p162 = scmp.lt.s32.totalorder %s12, 3
    %p163 = pnand %p161, %p162
    %p164 = pneg %p163
    // Predicated region
    $region9: #{block_forward.5} parent=5 // pred_check
      _
    $region10: #{block_forward.5} parent=5 // pred_check_branch
      %166 = sbr.rel (%p163) target = $region12
    $region11: #{block_forward.5} parent=5 // pred_region
      %s167 = ssub.s32 %s12, 1
      // Predicated region
      $region13: #{block_forward.5} parent=11 // pred_check
        %p168 = pneg %p59
      $region14: #{block_forward.5} parent=11 // pred_check_branch
        %170 = sbr.rel (%p168) target = $region16
      $region15: #{block_forward.5} parent=11 // pred_region
        _
      $region16: #{block_forward.5} parent=11 // pred_fallthru
        _
      // Predicated region
      $region17: #{block_forward.5} parent=11 // pred_check
        %p171 = pneg %p80
      $region18: #{block_forward.5} parent=11 // pred_check_branch
        %173 = sbr.rel (%p171) target = $region20
      $region19: #{block_forward.5} parent=11 // pred_region
        _
      $region20: #{block_forward.5} parent=11 // pred_fallthru
        _
      // Predicated region
      $region21: #{block_forward.5} parent=11 // pred_check
        %p174 = pneg %p101
      $region22: #{block_forward.5} parent=11 // pred_check_branch
        %176 = sbr.rel (%p174) target = $region24
      $region23: #{block_forward.5} parent=11 // pred_region
        _
      $region24: #{block_forward.5} parent=11 // pred_fallthru
        _
    $region12: #{block_forward.5} parent=5 // pred_fallthru
      _
    %p177 = scmp.lt.s32.totalorder %s12, 2
    // Predicated region
    $region25: #{block_forward.5} parent=5 // pred_check
      %p178 = pneg %p177
    $region26: #{block_forward.5} parent=5 // pred_check_branch
      %180 = sbr.rel (%p178) target = $region28
    $region27: #{block_forward.5} parent=5 // pred_region
      // Predicated region
      $region29: #{block_forward.5} parent=27 // pred_check
        %p181 = pneg %p32
      $region30: #{block_forward.5} parent=27 // pred_check_branch
        %183 = sbr.rel (%p181) target = $region32
      $region31: #{block_forward.5} parent=27 // pred_region
        %p184 = scmp.lt.s32.totalorder %s12, 1
        %s185 = scalar_select %p184, %s12, 1
        %s186 = smul.addr %s185, 32
        %s187 = smul.addr %s186, 4
        %s188 = scalar_lea.vmem %s0, %s187
      $region32: #{block_forward.5} parent=27 // pred_fallthru
        _
    $region28: #{block_forward.5} parent=5 // pred_fallthru
      _
    %p189 = scmp.le.s32.totalorder 1, %s12
    %p190 = scmp.lt.s32.totalorder %s12, 3
    %p191 = pnand %p189, %p190
    %p192 = pneg %p191
    // Predicated region
    $region33: #{block_forward.5} parent=5 // pred_check
      _
    $region34: #{block_forward.5} parent=5 // pred_check_branch
      %194 = sbr.rel (%p191) target = $region36
    $region35: #{block_forward.5} parent=5 // pred_region
      %s195 = ssub.s32 %s12, 1
      %p196 = scmp.lt.s32.totalorder %s17, 1
      %s197 = scalar_select %p196, %s17, 1
      %s198 = smul.addr %s197, 32
      %s199 = smul.addr %s198, 4
      %s200 = scalar_lea.vmem %s0, %s199
      %p201 = pneg %p38
      %p202 = pneg %p35
      %p203 = pneg %p59
      %p204 = pneg %p56
      %p205 = pneg %p80
      %p206 = pneg %p77
      %p207 = pneg %p101
      %p208 = pneg %p98
      %p209 = pneg %p127
      %p210 = pneg %p124
      %p211 = scmp.lt.s32.totalorder %s17, 1
      %s212 = scalar_select %p211, %s17, 1
      %s213 = smul.addr %s212, 32
      %s214 = smul.addr %s213, 4
      %s215 = scalar_lea.vmem %s4, %s214
      %p216 = pneg %p153
      %p217 = pneg %p150
      %p218 = scmp.lt.s32.totalorder %s17, 1
      %s219 = scalar_select %p218, %s17, 1
      %s220 = smul.addr %s219, 2
      %s221 = scalar_lea.vmem %s5, %s220
      %p222 = scmp.lt.s32.totalorder %s17, 1
      %s223 = scalar_select %p222, %s17, 1
      %s224 = smul.addr %s223, 32
      %s225 = smul.addr %s224, 4
      %s226 = scalar_lea.vmem %s0, %s225
      %p227 = scmp.lt.s32.totalorder %s17, 1
      %s228 = scalar_select %p227, %s17, 1
      %s229 = smul.addr %s228, 32
      %s230 = smul.addr %s229, 4
      %s231 = scalar_lea.vmem %s4, %s230
      %p232 = scmp.lt.s32.totalorder %s17, 1
      %s233 = scalar_select %p232, %s17, 1
      %s234 = smul.addr %s233, 2
      %s235 = scalar_lea.vmem %s5, %s234
      %v237 = vld [vmem:[%s1] sm:$0x1]
      %v238 = vld [vmem:[%s2] sm:$0x1]
      %vm239 = vcmask 31744
      %240 = vst.msk [vmem:[#allocation2] sm:$0xff] %vm239, 0.0
      %241 = vst.msk [vmem:[#allocation2 + $0x8] sm:$0xff] %vm239, 0.0
      %242 = vst.msk [vmem:[#allocation2 + $0x10] sm:$0xff] %vm239, 0.0
      %vm243 = vcmask 24576
      %244 = vst.msk [vmem:[#allocation2 + $0x18] sm:$0x1] %vm243, 0.0
      %245 = vst.msk [vmem:[#allocation2 + $0x198] sm:$0xff] %vm239, 0.0
      %246 = vst.msk [vmem:[#allocation2 + $0x1a0] sm:$0xff] %vm239, 0.0
      %247 = vst.msk [vmem:[#allocation2 + $0x1a8] sm:$0xff] %vm239, 0.0
      %v248 = vld [vmem:[%s226] sm:$0xf]
      %v249 = vld [vmem:[%s226 + $0x4] sm:$0xf]
      %v250 = vunpack.c.l.bf16 %v248
      %v251 = vunpack.c.l.bf16 %v249
      %v253 = vlaneseq
      %v254 = vshrl.u32 %v253, 7
      %v255 = vsub.s32 0, %v254
      %v256 = vrot.slane %v237, %v255
      %v258 = vmul.f32 %v250, %v256
      %v259 = vmul.f32 %v251, %v256
      %v261 = vlaneseq
      %v262 = vshrl.u32 %v261, 7
      %v263 = vsub.s32 0, %v262
      %v264 = vrot.slane %v238, %v263
      %v266 = vadd.f32 %v258, %v264
      %v267 = vadd.f32 %v259, %v264
      %v268 = vmax.f32 %v266, 0.0
      %v269 = vmax.f32 %v267, 0.0
      %270 = vst.msk [vmem:[#allocation2 + $0x19] sm:$0xff] %vm239, %v268
      %271 = vst.msk [vmem:[#allocation2 + $0x21] sm:$0xff] %vm239, %v269
      %272 = vst.msk [vmem:[#allocation2 + $0x29] sm:$0xff] %vm239, 0.0
      %v273 = vld [vmem:[%s226 + $0x8] sm:$0xf]
      %v274 = vld [vmem:[%s226 + $0xc] sm:$0xf]
      %v275 = vunpack.c.l.bf16 %v273
      %v276 = vunpack.c.l.bf16 %v274
      %v277 = vmul.f32 %v275, %v256
      %v278 = vmul.f32 %v276, %v256
      %v279 = vadd.f32 %v277, %v264
      %v280 = vadd.f32 %v278, %v264
      %v281 = vmax.f32 %v279, 0.0
      %v282 = vmax.f32 %v280, 0.0
      %283 = vst.msk [vmem:[#allocation2 + $0x31] sm:$0xff] %vm239, %v281
      %284 = vst.msk [vmem:[#allocation2 + $0x39] sm:$0xff] %vm239, %v282
      %285 = vst.msk [vmem:[#allocation2 + $0x41] sm:$0xff] %vm239, 0.0
      %v286 = vld [vmem:[%s226 + $0x10] sm:$0xf]
      %v287 = vld [vmem:[%s226 + $0x14] sm:$0xf]
      %v288 = vunpack.c.l.bf16 %v286
      %v289 = vunpack.c.l.bf16 %v287
      %v290 = vmul.f32 %v288, %v256
      %v291 = vmul.f32 %v289, %v256
      %v292 = vadd.f32 %v290, %v264
      %v293 = vadd.f32 %v291, %v264
      %v294 = vmax.f32 %v292, 0.0
      %v295 = vmax.f32 %v293, 0.0
      %296 = vst.msk [vmem:[#allocation2 + $0x49] sm:$0xff] %vm239, %v294
      %297 = vst.msk [vmem:[#allocation2 + $0x51] sm:$0xff] %vm239, %v295
      %298 = vst.msk [vmem:[#allocation2 + $0x59] sm:$0xff] %vm239, 0.0
      %v299 = vld [vmem:[%s226 + $0x18] sm:$0xf]
      %v300 = vld [vmem:[%s226 + $0x1c] sm:$0xf]
      %v301 = vunpack.c.l.bf16 %v299
      %v302 = vunpack.c.l.bf16 %v300
      %v303 = vmul.f32 %v301, %v256
      %v304 = vmul.f32 %v302, %v256
      %v305 = vadd.f32 %v303, %v264
      %v306 = vadd.f32 %v304, %v264
      %v307 = vmax.f32 %v305, 0.0
      %v308 = vmax.f32 %v306, 0.0
      %309 = vst.msk [vmem:[#allocation2 + $0x61] sm:$0xff] %vm239, %v307
      %310 = vst.msk [vmem:[#allocation2 + $0x69] sm:$0xff] %vm239, %v308
      %311 = vst.msk [vmem:[#allocation2 + $0x71] sm:$0xff] %vm239, 0.0
      %v312 = vld [vmem:[%s226 + $0x20] sm:$0xf]
      %v313 = vld [vmem:[%s226 + $0x24] sm:$0xf]
      %v314 = vunpack.c.l.bf16 %v312
      %v315 = vunpack.c.l.bf16 %v313
      %v316 = vmul.f32 %v314, %v256
      %v317 = vmul.f32 %v315, %v256
      %v318 = vadd.f32 %v316, %v264
      %v319 = vadd.f32 %v317, %v264
      %v320 = vmax.f32 %v318, 0.0
      %v321 = vmax.f32 %v319, 0.0
      %322 = vst.msk [vmem:[#allocation2 + $0x79] sm:$0xff] %vm239, %v320
      %323 = vst.msk [vmem:[#allocation2 + $0x81] sm:$0xff] %vm239, %v321
      %324 = vst.msk [vmem:[#allocation2 + $0x89] sm:$0xff] %vm239, 0.0
      %v325 = vld [vmem:[%s226 + $0x28] sm:$0xf]
      %v326 = vld [vmem:[%s226 + $0x2c] sm:$0xf]
      %v327 = vunpack.c.l.bf16 %v325
      %v328 = vunpack.c.l.bf16 %v326
      %v329 = vmul.f32 %v327, %v256
      %v330 = vmul.f32 %v328, %v256
      %v331 = vadd.f32 %v329, %v264
      %v332 = vadd.f32 %v330, %v264
      %v333 = vmax.f32 %v331, 0.0
      %v334 = vmax.f32 %v332, 0.0
      %335 = vst.msk [vmem:[#allocation2 + $0x91] sm:$0xff] %vm239, %v333
      %336 = vst.msk [vmem:[#allocation2 + $0x99] sm:$0xff] %vm239, %v334
      %337 = vst.msk [vmem:[#allocation2 + $0xa1] sm:$0xff] %vm239, 0.0
      %v338 = vld [vmem:[%s226 + $0x30] sm:$0xf]
      %v339 = vld [vmem:[%s226 + $0x34] sm:$0xf]
      %v340 = vunpack.c.l.bf16 %v338
      %v341 = vunpack.c.l.bf16 %v339
      %v342 = vmul.f32 %v340, %v256
      %v343 = vmul.f32 %v341, %v256
      %v344 = vadd.f32 %v342, %v264
      %v345 = vadd.f32 %v343, %v264
      %v346 = vmax.f32 %v344, 0.0
      %v347 = vmax.f32 %v345, 0.0
      %348 = vst.msk [vmem:[#allocation2 + $0xa9] sm:$0xff] %vm239, %v346
      %349 = vst.msk [vmem:[#allocation2 + $0xb1] sm:$0xff] %vm239, %v347
      %350 = vst.msk [vmem:[#allocation2 + $0xb9] sm:$0xff] %vm239, 0.0
      %v351 = vld [vmem:[%s226 + $0x38] sm:$0xf]
      %v352 = vld [vmem:[%s226 + $0x3c] sm:$0xf]
      %v353 = vunpack.c.l.bf16 %v351
      %v354 = vunpack.c.l.bf16 %v352
      %v355 = vmul.f32 %v353, %v256
      %v356 = vmul.f32 %v354, %v256
      %v357 = vadd.f32 %v355, %v264
      %v358 = vadd.f32 %v356, %v264
      %v359 = vmax.f32 %v357, 0.0
      %v360 = vmax.f32 %v358, 0.0
      %361 = vst.msk [vmem:[#allocation2 + $0xc1] sm:$0xff] %vm239, %v359
      %362 = vst.msk [vmem:[#allocation2 + $0xc9] sm:$0xff] %vm239, %v360
      %363 = vst.msk [vmem:[#allocation2 + $0xd1] sm:$0xff] %vm239, 0.0
      %v364 = vld [vmem:[%s226 + $0x40] sm:$0xf]
      %v365 = vld [vmem:[%s226 + $0x44] sm:$0xf]
      %v366 = vunpack.c.l.bf16 %v364
      %v367 = vunpack.c.l.bf16 %v365
      %v368 = vmul.f32 %v366, %v256
      %v369 = vmul.f32 %v367, %v256
      %v370 = vadd.f32 %v368, %v264
      %v371 = vadd.f32 %v369, %v264
      %v372 = vmax.f32 %v370, 0.0
      %v373 = vmax.f32 %v371, 0.0
      %374 = vst.msk [vmem:[#allocation2 + $0xd9] sm:$0xff] %vm239, %v372
      %375 = vst.msk [vmem:[#allocation2 + $0xe1] sm:$0xff] %vm239, %v373
      %376 = vst.msk [vmem:[#allocation2 + $0xe9] sm:$0xff] %vm239, 0.0
      %v377 = vld [vmem:[%s226 + $0x48] sm:$0xf]
      %v378 = vld [vmem:[%s226 + $0x4c] sm:$0xf]
      %v379 = vunpack.c.l.bf16 %v377
      %v380 = vunpack.c.l.bf16 %v378
      %v381 = vmul.f32 %v379, %v256
      %v382 = vmul.f32 %v380, %v256
      %v383 = vadd.f32 %v381, %v264
      %v384 = vadd.f32 %v382, %v264
      %v385 = vmax.f32 %v383, 0.0
      %v386 = vmax.f32 %v384, 0.0
      %387 = vst.msk [vmem:[#allocation2 + $0xf1] sm:$0xff] %vm239, %v385
      %388 = vst.msk [vmem:[#allocation2 + $0xf9] sm:$0xff] %vm239, %v386
      %389 = vst.msk [vmem:[#allocation2 + $0x101] sm:$0xff] %vm239, 0.0
      %v390 = vld [vmem:[%s226 + $0x50] sm:$0xf]
      %v391 = vld [vmem:[%s226 + $0x54] sm:$0xf]
      %v392 = vunpack.c.l.bf16 %v390
      %v393 = vunpack.c.l.bf16 %v391
      %v394 = vmul.f32 %v392, %v256
      %v395 = vmul.f32 %v393, %v256
      %v396 = vadd.f32 %v394, %v264
      %v397 = vadd.f32 %v395, %v264
      %v398 = vmax.f32 %v396, 0.0
      %v399 = vmax.f32 %v397, 0.0
      %400 = vst.msk [vmem:[#allocation2 + $0x109] sm:$0xff] %vm239, %v398
      %401 = vst.msk [vmem:[#allocation2 + $0x111] sm:$0xff] %vm239, %v399
      %402 = vst.msk [vmem:[#allocation2 + $0x119] sm:$0xff] %vm239, 0.0
      %v403 = vld [vmem:[%s226 + $0x58] sm:$0xf]
      %v404 = vld [vmem:[%s226 + $0x5c] sm:$0xf]
      %v405 = vunpack.c.l.bf16 %v403
      %v406 = vunpack.c.l.bf16 %v404
      %v407 = vmul.f32 %v405, %v256
      %v408 = vmul.f32 %v406, %v256
      %v409 = vadd.f32 %v407, %v264
      %v410 = vadd.f32 %v408, %v264
      %v411 = vmax.f32 %v409, 0.0
      %v412 = vmax.f32 %v410, 0.0
      %413 = vst.msk [vmem:[#allocation2 + $0x121] sm:$0xff] %vm239, %v411
      %414 = vst.msk [vmem:[#allocation2 + $0x129] sm:$0xff] %vm239, %v412
      %415 = vst.msk [vmem:[#allocation2 + $0x131] sm:$0xff] %vm239, 0.0
      %v416 = vld [vmem:[%s226 + $0x60] sm:$0xf]
      %v417 = vld [vmem:[%s226 + $0x64] sm:$0xf]
      %v418 = vunpack.c.l.bf16 %v416
      %v419 = vunpack.c.l.bf16 %v417
      %v420 = vmul.f32 %v418, %v256
      %v421 = vmul.f32 %v419, %v256
      %v422 = vadd.f32 %v420, %v264
      %v423 = vadd.f32 %v421, %v264
      %v424 = vmax.f32 %v422, 0.0
      %v425 = vmax.f32 %v423, 0.0
      %426 = vst.msk [vmem:[#allocation2 + $0x139] sm:$0xff] %vm239, %v424
      %427 = vst.msk [vmem:[#allocation2 + $0x141] sm:$0xff] %vm239, %v425
      %428 = vst.msk [vmem:[#allocation2 + $0x149] sm:$0xff] %vm239, 0.0
      %v429 = vld [vmem:[%s226 + $0x68] sm:$0xf]
      %v430 = vld [vmem:[%s226 + $0x6c] sm:$0xf]
      %v431 = vunpack.c.l.bf16 %v429
      %v432 = vunpack.c.l.bf16 %v430
      %v433 = vmul.f32 %v431, %v256
      %v434 = vmul.f32 %v432, %v256
      %v435 = vadd.f32 %v433, %v264
      %v436 = vadd.f32 %v434, %v264
      %v437 = vmax.f32 %v435, 0.0
      %v438 = vmax.f32 %v436, 0.0
      %439 = vst.msk [vmem:[#allocation2 + $0x151] sm:$0xff] %vm239, %v437
      %440 = vst.msk [vmem:[#allocation2 + $0x159] sm:$0xff] %vm239, %v438
      %441 = vst.msk [vmem:[#allocation2 + $0x161] sm:$0xff] %vm239, 0.0
      %v442 = vld [vmem:[%s226 + $0x70] sm:$0xf]
      %v443 = vld [vmem:[%s226 + $0x74] sm:$0xf]
      %v444 = vunpack.c.l.bf16 %v442
      %v445 = vunpack.c.l.bf16 %v443
      %v446 = vmul.f32 %v444, %v256
      %v447 = vmul.f32 %v445, %v256
      %v448 = vadd.f32 %v446, %v264
      %v449 = vadd.f32 %v447, %v264
      %v450 = vmax.f32 %v448, 0.0
      %v451 = vmax.f32 %v449, 0.0
      %452 = vst.msk [vmem:[#allocation2 + $0x169] sm:$0xff] %vm239, %v450
      %453 = vst.msk [vmem:[#allocation2 + $0x171] sm:$0xff] %vm239, %v451
      %454 = vst.msk [vmem:[#allocation2 + $0x179] sm:$0xff] %vm239, 0.0
      %v455 = vld [vmem:[%s226 + $0x78] sm:$0xf]
      %v456 = vld [vmem:[%s226 + $0x7c] sm:$0xf]
      %v457 = vunpack.c.l.bf16 %v455
      %v458 = vunpack.c.l.bf16 %v456
      %v459 = vmul.f32 %v457, %v256
      %v460 = vmul.f32 %v458, %v256
      %v461 = vadd.f32 %v459, %v264
      %v462 = vadd.f32 %v460, %v264
      %v463 = vmax.f32 %v461, 0.0
      %v464 = vmax.f32 %v462, 0.0
      %465 = vst.msk [vmem:[#allocation2 + $0x181] sm:$0xff] %vm239, %v463
      %466 = vst.msk [vmem:[#allocation2 + $0x189] sm:$0xff] %vm239, %v464
      %467 = vst.msk [vmem:[#allocation2 + $0x191] sm:$0xff] %vm239, 0.0
      %v468 = vld [vmem:[#allocation2] sm:$0xff]
      %v469 = vld [vmem:[#allocation2 + $0x8] sm:$0xff]
      %v470 = vld [vmem:[#allocation2 + $0x10] sm:$0xff]
      %v471 = vld [vmem:[#allocation2 + $0x18] sm:$0xff]
      %v472 = vld [vmem:[#allocation2 + $0x20] sm:$0xff]
      %v473 = vld [vmem:[#allocation2 + $0x28] sm:$0xff]
      %v474 = vld [vmem:[#allocation2 + $0x30] sm:$0xff]
      %v475 = vld [vmem:[#allocation2 + $0x38] sm:$0xff]
      %v476 = vld [vmem:[#allocation2 + $0x40] sm:$0xff]
      %v477 = vld [vmem:[#allocation2 + $0x48] sm:$0xff]
      %v478 = vld [vmem:[#allocation2 + $0x50] sm:$0xff]
      %v479 = vld [vmem:[#allocation2 + $0x58] sm:$0xff]
      %v480 = vld [vmem:[#allocation2 + $0x60] sm:$0xff]
      %v481 = vld [vmem:[#allocation2 + $0x68] sm:$0xff]
      %v482 = vld [vmem:[#allocation2 + $0x70] sm:$0xff]
      %v483 = vld [vmem:[#allocation2 + $0x78] sm:$0xff]
      %v484 = vld [vmem:[#allocation2 + $0x80] sm:$0xff]
      %v485 = vld [vmem:[#allocation2 + $0x88] sm:$0xff]
      %v486 = vld [vmem:[#allocation2 + $0x90] sm:$0xff]
      %v487 = vld [vmem:[#allocation2 + $0x98] sm:$0xff]
      %v488 = vld [vmem:[#allocation2 + $0xa0] sm:$0xff]
      %v489 = vld [vmem:[#allocation2 + $0xa8] sm:$0xff]
      %v490 = vld [vmem:[#allocation2 + $0xb0] sm:$0xff]
      %v491 = vld [vmem:[#allocation2 + $0xb8] sm:$0xff]
      %v492 = vld [vmem:[#allocation2 + $0xc0] sm:$0xff]
      %v493 = vld [vmem:[#allocation2 + $0xc8] sm:$0xff]
      %v494 = vld [vmem:[#allocation2 + $0xd0] sm:$0xff]
      %v495 = vld [vmem:[#allocation2 + $0xd8] sm:$0xff]
      %v496 = vld [vmem:[#allocation2 + $0xe0] sm:$0xff]
      %v497 = vld [vmem:[#allocation2 + $0xe8] sm:$0xff]
      %v498 = vld [vmem:[#allocation2 + $0xf0] sm:$0xff]
      %v499 = vld [vmem:[#allocation2 + $0xf8] sm:$0xff]
      %v500 = vld [vmem:[#allocation2 + $0x100] sm:$0xff]
      %v501 = vld [vmem:[#allocation2 + $0x108] sm:$0xff]
      %v502 = vld [vmem:[#allocation2 + $0x110] sm:$0xff]
      %v503 = vld [vmem:[#allocation2 + $0x118] sm:$0xff]
      %v504 = vld [vmem:[#allocation2 + $0x120] sm:$0xff]
      %v505 = vld [vmem:[#allocation2 + $0x128] sm:$0xff]
      %v506 = vld [vmem:[#allocation2 + $0x130] sm:$0xff]
      %v507 = vld [vmem:[#allocation2 + $0x138] sm:$0xff]
      %v508 = vld [vmem:[#allocation2 + $0x140] sm:$0xff]
      %v509 = vld [vmem:[#allocation2 + $0x148] sm:$0xff]
      %v510 = vld [vmem:[#allocation2 + $0x150] sm:$0xff]
      %v511 = vld [vmem:[#allocation2 + $0x158] sm:$0xff]
      %v512 = vld [vmem:[#allocation2 + $0x160] sm:$0xff]
      %v513 = vld [vmem:[#allocation2 + $0x168] sm:$0xff]
      %v514 = vld [vmem:[#allocation2 + $0x170] sm:$0xff]
      %v515 = vpack.c.bf16 %v469, %v468
      %v516 = vpack.c.bf16 %v471, %v470
      %v517 = vpack.c.bf16 %v473, %v472
      %v518 = vpack.c.bf16 %v475, %v474
      %v519 = vpack.c.bf16 %v477, %v476
      %v520 = vpack.c.bf16 %v479, %v478
      %v521 = vpack.c.bf16 %v481, %v480
      %v522 = vpack.c.bf16 %v483, %v482
      %v523 = vpack.c.bf16 %v485, %v484
      %v524 = vpack.c.bf16 %v487, %v486
      %v525 = vpack.c.bf16 %v489, %v488
      %v526 = vpack.c.bf16 %v491, %v490
      %v527 = vpack.c.bf16 %v493, %v492
      %v528 = vpack.c.bf16 %v495, %v494
      %v529 = vpack.c.bf16 %v497, %v496
      %v530 = vpack.c.bf16 %v499, %v498
      %v531 = vpack.c.bf16 %v501, %v500
      %v532 = vpack.c.bf16 %v503, %v502
      %v533 = vpack.c.bf16 %v505, %v504
      %v534 = vpack.c.bf16 %v507, %v506
      %v535 = vpack.c.bf16 %v509, %v508
      %v536 = vpack.c.bf16 %v511, %v510
      %v537 = vpack.c.bf16 %v513, %v512
      %v538 = vpack.c.bf16 %v514, %v514
      %v539 = vld [vmem:[%s3] sm:$0x3]
      %v541 = vsel %vm239, %v515, 0
      %v544 = vsel %vm239, %v516, 0
      %v547 = vsel %vm239, %v517, 0
      %v550 = vsel %vm239, %v518, 0
      %v553 = vsel %vm239, %v519, 0
      %v556 = vsel %vm239, %v520, 0
      %v559 = vsel %vm239, %v521, 0
      %v562 = vsel %vm239, %v522, 0
      %v565 = vsel %vm239, %v523, 0
      %v568 = vsel %vm239, %v524, 0
      %v571 = vsel %vm239, %v525, 0
      %v574 = vsel %vm239, %v526, 0
      %v577 = vsel %vm239, %v527, 0
      %v580 = vsel %vm239, %v528, 0
      %v583 = vsel %vm239, %v529, 0
      %v586 = vsel %vm239, %v530, 0
      %v589 = vsel %vm239, %v531, 0
      %v592 = vsel %vm239, %v532, 0
      %v595 = vsel %vm239, %v533, 0
      %v598 = vsel %vm239, %v534, 0
      %v601 = vsel %vm239, %v535, 0
      %v604 = vsel %vm239, %v536, 0
      %v607 = vsel %vm239, %v537, 0
      %v610 = vsel %vm239, %v538, 0
      %vm612 = vcmask 1041408
      %v614 = vsel %vm612, %v539, 0
      %616 = vmatprep.subr.bf16.mxu0 0
      %617 = vmatpush1.bf16.msra.mxu0 0
      %618 = vmatprep.subr.bf16.mxu0 0
      %619 = vmatpush1.bf16.msra.mxu0 0
      %620 = vmatprep.subr.bf16.mxu0 0
      %621 = vmatpush1.bf16.msra.mxu0 0
      %622 = vmatprep.subr.bf16.mxu0 0
      %623 = vmatpush1.bf16.msra.mxu0 0
      %624 = vmatprep.subr.bf16.mxu0 0
      %625 = vmatpush1.bf16.msra.mxu0 0
      %626 = vmatprep.subr.bf16.mxu0 0
      %627 = vmatpush1.bf16.msra.mxu0 0
      %628 = vmatprep.subr.bf16.mxu0 0
      %629 = vmatpush1.bf16.msra.mxu0 0
      %630 = vmatprep.subr.bf16.mxu0 0
      %631 = vmatpush1.bf16.msra.mxu0 %v614
      %632 = vmatprep.subr.bf16.mxu0 0
      %633 = vmatpush2.bf16.msra.mxu0 0
      %634 = vmatprep.subr.bf16.mxu0 0
      %635 = vmatpush2.bf16.msra.mxu0 0
      %636 = vmatprep.subr.bf16.mxu0 0
      %637 = vmatpush2.bf16.msra.mxu0 0
      %638 = vmatprep.subr.bf16.mxu0 0
      %639 = vmatpush2.bf16.msra.mxu0 0
      %640 = vmatprep.subr.bf16.mxu0 0
      %641 = vmatpush2.bf16.msra.mxu0 0
      %642 = vmatprep.subr.bf16.mxu0 0
      %643 = vmatpush2.bf16.msra.mxu0 0
      %644 = vmatprep.subr.bf16.mxu0 0
      %645 = vmatpush2.bf16.msra.mxu0 0
      %646 = vmatprep.subr.bf16.mxu0 0
      %647 = vmatpush2.bf16.msra.mxu0 0
      %648 = vmatprep.mubr.bf16.mxu0 0
      %649 = vmatmul.mubr.bf16.gmra.mxu0 %v541
      %v650 = vpop.f32.mrf.mxu0
      %v651 = vadd.f32 0.0, %v650
      %v652 = vpop.f32.mrf.mxu0
      %v653 = vpop.f32.mrf.mxu0
      %v654 = vadd.f32 0.0, %v653
      %v655 = vpop.f32.mrf.mxu0
      %656 = vmatprep.mubr.bf16.mxu0 0
      %657 = vmatmul.mubr.bf16.gmra.mxu0 %v544
      %v658 = vpop.f32.mrf.mxu0
      %v659 = vadd.f32 0.0, %v658
      %v660 = vpop.f32.mrf.mxu0
      %v661 = vpop.f32.mrf.mxu0
      %v662 = vadd.f32 0.0, %v661
      %v663 = vpop.f32.mrf.mxu0
      %664 = vmatprep.mubr.bf16.mxu0 0
      %665 = vmatmul.mubr.bf16.gmra.mxu0 %v547
      %v666 = vpop.f32.mrf.mxu0
      %v667 = vadd.f32 0.0, %v666
      %v668 = vpop.f32.mrf.mxu0
      %v669 = vpop.f32.mrf.mxu0
      %v670 = vadd.f32 0.0, %v669
      %v671 = vpop.f32.mrf.mxu0
      %672 = vmatprep.mubr.bf16.mxu0 0
      %673 = vmatmul.mubr.bf16.gmra.mxu0 %v550
      %v674 = vpop.f32.mrf.mxu0
      %v675 = vadd.f32 0.0, %v674
      %v676 = vpop.f32.mrf.mxu0
      %v677 = vpop.f32.mrf.mxu0
      %v678 = vadd.f32 0.0, %v677
      %v679 = vpop.f32.mrf.mxu0
      %680 = vmatprep.mubr.bf16.mxu0 0
      %681 = vmatmul.mubr.bf16.gmra.mxu0 %v553
      %v682 = vpop.f32.mrf.mxu0
      %v683 = vadd.f32 0.0, %v682
      %v684 = vpop.f32.mrf.mxu0
      %v685 = vpop.f32.mrf.mxu0
      %v686 = vadd.f32 0.0, %v685
      %v687 = vpop.f32.mrf.mxu0
      %688 = vmatprep.mubr.bf16.mxu0 0
      %689 = vmatmul.mubr.bf16.gmra.mxu0 %v556
      %v690 = vpop.f32.mrf.mxu0
      %v691 = vadd.f32 0.0, %v690
      %v692 = vpop.f32.mrf.mxu0
      %v693 = vpop.f32.mrf.mxu0
      %v694 = vadd.f32 0.0, %v693
      %v695 = vpop.f32.mrf.mxu0
      %696 = vmatprep.mubr.bf16.mxu0 0
      %697 = vmatmul.mubr.bf16.gmra.mxu0 %v559
      %v698 = vpop.f32.mrf.mxu0
      %v699 = vadd.f32 0.0, %v698
      %v700 = vpop.f32.mrf.mxu0
      %v701 = vpop.f32.mrf.mxu0
      %v702 = vadd.f32 0.0, %v701
      %v703 = vpop.f32.mrf.mxu0
      %704 = vmatprep.mubr.bf16.mxu0 0
      %705 = vmatmul.mubr.bf16.gmra.mxu0 %v562
      %v706 = vpop.f32.mrf.mxu0
      %v707 = vadd.f32 0.0, %v706
      %v708 = vpop.f32.mrf.mxu0
      %v709 = vpop.f32.mrf.mxu0
      %v710 = vadd.f32 0.0, %v709
      %v711 = vpop.f32.mrf.mxu0
      %712 = vmatprep.mubr.bf16.mxu0 0
      %713 = vmatmul.mubr.bf16.gmra.mxu0 %v565
      %v714 = vpop.f32.mrf.mxu0
      %v715 = vadd.f32 0.0, %v714
      %v716 = vpop.f32.mrf.mxu0
      %v717 = vpop.f32.mrf.mxu0
      %v718 = vadd.f32 0.0, %v717
      %v719 = vpop.f32.mrf.mxu0
      %720 = vmatprep.mubr.bf16.mxu0 0
      %721 = vmatmul.mubr.bf16.gmra.mxu0 %v568
      %v722 = vpop.f32.mrf.mxu0
      %v723 = vadd.f32 0.0, %v722
      %v724 = vpop.f32.mrf.mxu0
      %v725 = vpop.f32.mrf.mxu0
      %v726 = vadd.f32 0.0, %v725
      %v727 = vpop.f32.mrf.mxu0
      %728 = vmatprep.mubr.bf16.mxu0 0
      %729 = vmatmul.mubr.bf16.gmra.mxu0 %v571
      %v730 = vpop.f32.mrf.mxu0
      %v731 = vadd.f32 0.0, %v730
      %v732 = vpop.f32.mrf.mxu0
      %v733 = vpop.f32.mrf.mxu0
      %v734 = vadd.f32 0.0, %v733
      %v735 = vpop.f32.mrf.mxu0
      %736 = vmatprep.mubr.bf16.mxu0 0
      %737 = vmatmul.mubr.bf16.gmra.mxu0 %v574
      %v738 = vpop.f32.mrf.mxu0
      %v739 = vadd.f32 0.0, %v738
      %v740 = vpop.f32.mrf.mxu0
      %v741 = vpop.f32.mrf.mxu0
      %v742 = vadd.f32 0.0, %v741
      %v743 = vpop.f32.mrf.mxu0
      %744 = vmatprep.mubr.bf16.mxu0 0
      %745 = vmatmul.mubr.bf16.gmra.mxu0 %v577
      %v746 = vpop.f32.mrf.mxu0
      %v747 = vadd.f32 0.0, %v746
      %v748 = vpop.f32.mrf.mxu0
      %v749 = vpop.f32.mrf.mxu0
      %v750 = vadd.f32 0.0, %v749
      %v751 = vpop.f32.mrf.mxu0
      %752 = vmatprep.mubr.bf16.mxu0 0
      %753 = vmatmul.mubr.bf16.gmra.mxu0 %v580
      %v754 = vpop.f32.mrf.mxu0
      %v755 = vadd.f32 0.0, %v754
      %v756 = vpop.f32.mrf.mxu0
      %v757 = vpop.f32.mrf.mxu0
      %v758 = vadd.f32 0.0, %v757
      %v759 = vpop.f32.mrf.mxu0
      %760 = vmatprep.mubr.bf16.mxu0 0
      %761 = vmatmul.mubr.bf16.gmra.mxu0 %v583
      %v762 = vpop.f32.mrf.mxu0
      %v763 = vadd.f32 0.0, %v762
      %v764 = vpop.f32.mrf.mxu0
      %v765 = vpop.f32.mrf.mxu0
      %v766 = vadd.f32 0.0, %v765
      %v767 = vpop.f32.mrf.mxu0
      %768 = vmatprep.mubr.bf16.mxu0 0
      %769 = vmatmul.mubr.bf16.gmra.mxu0 %v586
      %v770 = vpop.f32.mrf.mxu0
      %v771 = vadd.f32 0.0, %v770
      %v772 = vpop.f32.mrf.mxu0
      %v773 = vpop.f32.mrf.mxu0
      %v774 = vadd.f32 0.0, %v773
      %v775 = vpop.f32.mrf.mxu0
      %776 = vmatprep.mubr.bf16.mxu0 0
      %777 = vmatmul.mubr.bf16.gmra.mxu0 %v589
      %v778 = vpop.f32.mrf.mxu0
      %v779 = vadd.f32 0.0, %v778
      %v780 = vpop.f32.mrf.mxu0
      %v781 = vpop.f32.mrf.mxu0
      %v782 = vadd.f32 0.0, %v781
      %v783 = vpop.f32.mrf.mxu0
      %784 = vmatprep.mubr.bf16.mxu0 0
      %785 = vmatmul.mubr.bf16.gmra.mxu0 %v592
      %v786 = vpop.f32.mrf.mxu0
      %v787 = vadd.f32 0.0, %v786
      %v788 = vpop.f32.mrf.mxu0
      %v789 = vpop.f32.mrf.mxu0
      %v790 = vadd.f32 0.0, %v789
      %v791 = vpop.f32.mrf.mxu0
      %792 = vmatprep.mubr.bf16.mxu0 0
      %793 = vmatmul.mubr.bf16.gmra.mxu0 %v595
      %v794 = vpop.f32.mrf.mxu0
      %v795 = vadd.f32 0.0, %v794
      %v796 = vpop.f32.mrf.mxu0
      %v797 = vpop.f32.mrf.mxu0
      %v798 = vadd.f32 0.0, %v797
      %v799 = vpop.f32.mrf.mxu0
      %800 = vmatprep.mubr.bf16.mxu0 0
      %801 = vmatmul.mubr.bf16.gmra.mxu0 %v598
      %v802 = vpop.f32.mrf.mxu0
      %v803 = vadd.f32 0.0, %v802
      %v804 = vpop.f32.mrf.mxu0
      %v805 = vpop.f32.mrf.mxu0
      %v806 = vadd.f32 0.0, %v805
      %v807 = vpop.f32.mrf.mxu0
      %808 = vmatprep.mubr.bf16.mxu0 0
      %809 = vmatmul.mubr.bf16.gmra.mxu0 %v601
      %v810 = vpop.f32.mrf.mxu0
      %v811 = vadd.f32 0.0, %v810
      %v812 = vpop.f32.mrf.mxu0
      %v813 = vpop.f32.mrf.mxu0
      %v814 = vadd.f32 0.0, %v813
      %v815 = vpop.f32.mrf.mxu0
      %816 = vmatprep.mubr.bf16.mxu0 0
      %817 = vmatmul.mubr.bf16.gmra.mxu0 %v604
      %v818 = vpop.f32.mrf.mxu0
      %v819 = vadd.f32 0.0, %v818
      %v820 = vpop.f32.mrf.mxu0
      %v821 = vpop.f32.mrf.mxu0
      %v822 = vadd.f32 0.0, %v821
      %v823 = vpop.f32.mrf.mxu0
      %824 = vmatprep.mubr.bf16.mxu0 0
      %825 = vmatmul.mubr.bf16.gmra.mxu0 %v607
      %v826 = vpop.f32.mrf.mxu0
      %v827 = vadd.f32 0.0, %v826
      %v828 = vpop.f32.mrf.mxu0
      %v829 = vpop.f32.mrf.mxu0
      %v830 = vadd.f32 0.0, %v829
      %v831 = vpop.f32.mrf.mxu0
      %832 = vmatprep.mubr.bf16.mxu0 0
      %833 = vmatmul.mubr.bf16.gmra.mxu0 %v610
      %v834 = vpop.f32.mrf.mxu0
      %v835 = vadd.f32 0.0, %v834
      %v836 = vpop.f32.mrf.mxu0
      %v837 = vpop.f32.mrf.mxu0
      %v838 = vpop.f32.mrf.mxu0
      %839 = vdwg.mxu0
      %840 = vst.msk [vmem:[#allocation3] sm:$0xff] %vm239, %v651
      %841 = vst.msk [vmem:[#allocation3 + $0x8] sm:$0xff] %vm239, %v654
      %842 = vst.msk [vmem:[#allocation3 + $0x10] sm:$0xff] %vm239, %v659
      %843 = vst.msk [vmem:[#allocation3 + $0x18] sm:$0xff] %vm239, %v662
      %844 = vst.msk [vmem:[#allocation3 + $0x20] sm:$0xff] %vm239, %v667
      %845 = vst.msk [vmem:[#allocation3 + $0x28] sm:$0xff] %vm239, %v670
      %846 = vst.msk [vmem:[#allocation3 + $0x30] sm:$0xff] %vm239, %v675
      %847 = vst.msk [vmem:[#allocation3 + $0x38] sm:$0xff] %vm239, %v678
      %848 = vst.msk [vmem:[#allocation3 + $0x40] sm:$0xff] %vm239, %v683
      %849 = vst.msk [vmem:[#allocation3 + $0x48] sm:$0xff] %vm239, %v686
      %850 = vst.msk [vmem:[#allocation3 + $0x50] sm:$0xff] %vm239, %v691
      %851 = vst.msk [vmem:[#allocation3 + $0x58] sm:$0xff] %vm239, %v694
      %852 = vst.msk [vmem:[#allocation3 + $0x60] sm:$0xff] %vm239, %v699
      %853 = vst.msk [vmem:[#allocation3 + $0x68] sm:$0xff] %vm239, %v702
      %854 = vst.msk [vmem:[#allocation3 + $0x70] sm:$0xff] %vm239, %v707
      %855 = vst.msk [vmem:[#allocation3 + $0x78] sm:$0xff] %vm239, %v710
      %856 = vst.msk [vmem:[#allocation3 + $0x80] sm:$0xff] %vm239, %v715
      %857 = vst.msk [vmem:[#allocation3 + $0x88] sm:$0xff] %vm239, %v718
      %858 = vst.msk [vmem:[#allocation3 + $0x90] sm:$0xff] %vm239, %v723
      %859 = vst.msk [vmem:[#allocation3 + $0x98] sm:$0xff] %vm239, %v726
      %860 = vst.msk [vmem:[#allocation3 + $0xa0] sm:$0xff] %vm239, %v731
      %861 = vst.msk [vmem:[#allocation3 + $0xa8] sm:$0xff] %vm239, %v734
      %862 = vst.msk [vmem:[#allocation3 + $0xb0] sm:$0xff] %vm239, %v739
      %863 = vst.msk [vmem:[#allocation3 + $0xb8] sm:$0xff] %vm239, %v742
      %864 = vst.msk [vmem:[#allocation3 + $0xc0] sm:$0xff] %vm239, %v747
      %865 = vst.msk [vmem:[#allocation3 + $0xc8] sm:$0xff] %vm239, %v750
      %866 = vst.msk [vmem:[#allocation3 + $0xd0] sm:$0xff] %vm239, %v755
      %867 = vst.msk [vmem:[#allocation3 + $0xd8] sm:$0xff] %vm239, %v758
      %868 = vst.msk [vmem:[#allocation3 + $0xe0] sm:$0xff] %vm239, %v763
      %869 = vst.msk [vmem:[#allocation3 + $0xe8] sm:$0xff] %vm239, %v766
      %870 = vst.msk [vmem:[#allocation3 + $0xf0] sm:$0xff] %vm239, %v771
      %871 = vst.msk [vmem:[#allocation3 + $0xf8] sm:$0xff] %vm239, %v774
      %872 = vst.msk [vmem:[#allocation3 + $0x100] sm:$0xff] %vm239, %v779
      %873 = vst.msk [vmem:[#allocation3 + $0x108] sm:$0xff] %vm239, %v782
      %874 = vst.msk [vmem:[#allocation3 + $0x110] sm:$0xff] %vm239, %v787
      %875 = vst.msk [vmem:[#allocation3 + $0x118] sm:$0xff] %vm239, %v790
      %876 = vst.msk [vmem:[#allocation3 + $0x120] sm:$0xff] %vm239, %v795
      %877 = vst.msk [vmem:[#allocation3 + $0x128] sm:$0xff] %vm239, %v798
      %878 = vst.msk [vmem:[#allocation3 + $0x130] sm:$0xff] %vm239, %v803
      %879 = vst.msk [vmem:[#allocation3 + $0x138] sm:$0xff] %vm239, %v806
      %880 = vst.msk [vmem:[#allocation3 + $0x140] sm:$0xff] %vm239, %v811
      %881 = vst.msk [vmem:[#allocation3 + $0x148] sm:$0xff] %vm239, %v814
      %882 = vst.msk [vmem:[#allocation3 + $0x150] sm:$0xff] %vm239, %v819
      %883 = vst.msk [vmem:[#allocation3 + $0x158] sm:$0xff] %vm239, %v822
      %884 = vst.msk [vmem:[#allocation3 + $0x160] sm:$0xff] %vm239, %v827
      %885 = vst.msk [vmem:[#allocation3 + $0x168] sm:$0xff] %vm239, %v830
      %886 = vst.msk [vmem:[#allocation3 + $0x170] sm:$0xff] %vm239, %v835
      %v887 = vld [vmem:[#allocation2 + $0x1] sm:$0xff]
      %v888 = vld [vmem:[#allocation2 + $0x9] sm:$0xff]
      %v889 = vld [vmem:[#allocation2 + $0x11] sm:$0xff]
      %v890 = vld [vmem:[#allocation2 + $0x19] sm:$0xff]
      %v891 = vld [vmem:[#allocation2 + $0x21] sm:$0xff]
      %v892 = vld [vmem:[#allocation2 + $0x29] sm:$0xff]
      %v893 = vld [vmem:[#allocation2 + $0x31] sm:$0xff]
      %v894 = vld [vmem:[#allocation2 + $0x39] sm:$0xff]
      %v895 = vld [vmem:[#allocation2 + $0x41] sm:$0xff]
      %v896 = vld [vmem:[#allocation2 + $0x49] sm:$0xff]
      %v897 = vld [vmem:[#allocation2 + $0x51] sm:$0xff]
      %v898 = vld [vmem:[#allocation2 + $0x59] sm:$0xff]
      %v899 = vld [vmem:[#allocation2 + $0x61] sm:$0xff]
      %v900 = vld [vmem:[#allocation2 + $0x69] sm:$0xff]
      %v901 = vld [vmem:[#allocation2 + $0x71] sm:$0xff]
      %v902 = vld [vmem:[#allocation2 + $0x79] sm:$0xff]
      %v903 = vld [vmem:[#allocation2 + $0x81] sm:$0xff]
      %v904 = vld [vmem:[#allocation2 + $0x89] sm:$0xff]
      %v905 = vld [vmem:[#allocation2 + $0x91] sm:$0xff]
      %v906 = vld [vmem:[#allocation2 + $0x99] sm:$0xff]
      %v907 = vld [vmem:[#allocation2 + $0xa1] sm:$0xff]
      %v908 = vld [vmem:[#allocation2 + $0xa9] sm:$0xff]
      %v909 = vld [vmem:[#allocation2 + $0xb1] sm:$0xff]
      %v910 = vld [vmem:[#allocation2 + $0xb9] sm:$0xff]
      %v911 = vld [vmem:[#allocation2 + $0xc1] sm:$0xff]
      %v912 = vld [vmem:[#allocation2 + $0xc9] sm:$0xff]
      %v913 = vld [vmem:[#allocation2 + $0xd1] sm:$0xff]
      %v914 = vld [vmem:[#allocation2 + $0xd9] sm:$0xff]
      %v915 = vld [vmem:[#allocation2 + $0xe1] sm:$0xff]
      %v916 = vld [vmem:[#allocation2 + $0xe9] sm:$0xff]
      %v917 = vld [vmem:[#allocation2 + $0xf1] sm:$0xff]
      %v918 = vld [vmem:[#allocation2 + $0xf9] sm:$0xff]
      %v919 = vld [vmem:[#allocation2 + $0x101] sm:$0xff]
      %v920 = vld [vmem:[#allocation2 + $0x109] sm:$0xff]
      %v921 = vld [vmem:[#allocation2 + $0x111] sm:$0xff]
      %v922 = vld [vmem:[#allocation2 + $0x119] sm:$0xff]
      %v923 = vld [vmem:[#allocation2 + $0x121] sm:$0xff]
      %v924 = vld [vmem:[#allocation2 + $0x129] sm:$0xff]
      %v925 = vld [vmem:[#allocation2 + $0x131] sm:$0xff]
      %v926 = vld [vmem:[#allocation2 + $0x139] sm:$0xff]
      %v927 = vld [vmem:[#allocation2 + $0x141] sm:$0xff]
      %v928 = vld [vmem:[#allocation2 + $0x149] sm:$0xff]
      %v929 = vld [vmem:[#allocation2 + $0x151] sm:$0xff]
      %v930 = vld [vmem:[#allocation2 + $0x159] sm:$0xff]
      %v931 = vld [vmem:[#allocation2 + $0x161] sm:$0xff]
      %v932 = vld [vmem:[#allocation2 + $0x169] sm:$0xff]
      %v933 = vld [vmem:[#allocation2 + $0x171] sm:$0xff]
      %v934 = vpack.c.bf16 %v888, %v887
      %v935 = vpack.c.bf16 %v890, %v889
      %v936 = vpack.c.bf16 %v892, %v891
      %v937 = vpack.c.bf16 %v894, %v893
      %v938 = vpack.c.bf16 %v896, %v895
      %v939 = vpack.c.bf16 %v898, %v897
      %v940 = vpack.c.bf16 %v900, %v899
      %v941 = vpack.c.bf16 %v902, %v901
      %v942 = vpack.c.bf16 %v904, %v903
      %v943 = vpack.c.bf16 %v906, %v905
      %v944 = vpack.c.bf16 %v908, %v907
      %v945 = vpack.c.bf16 %v910, %v909
      %v946 = vpack.c.bf16 %v912, %v911
      %v947 = vpack.c.bf16 %v914, %v913
      %v948 = vpack.c.bf16 %v916, %v915
      %v949 = vpack.c.bf16 %v918, %v917
      %v950 = vpack.c.bf16 %v920, %v919
      %v951 = vpack.c.bf16 %v922, %v921
      %v952 = vpack.c.bf16 %v924, %v923
      %v953 = vpack.c.bf16 %v926, %v925
      %v954 = vpack.c.bf16 %v928, %v927
      %v955 = vpack.c.bf16 %v930, %v929
      %v956 = vpack.c.bf16 %v932, %v931
      %v957 = vpack.c.bf16 %v933, %v933
      %s958 = scalar_lea.vmem %s3, 2
      %v959 = vld [vmem:[%s958] sm:$0x3]
      %v961 = vsel %vm239, %v934, 0
      %v964 = vsel %vm239, %v935, 0
      %v967 = vsel %vm239, %v936, 0
      %v970 = vsel %vm239, %v937, 0
      %v973 = vsel %vm239, %v938, 0
      %v976 = vsel %vm239, %v939, 0
      %v979 = vsel %vm239, %v940, 0
      %v982 = vsel %vm239, %v941, 0
      %v985 = vsel %vm239, %v942, 0
      %v988 = vsel %vm239, %v943, 0
      %v991 = vsel %vm239, %v944, 0
      %v994 = vsel %vm239, %v945, 0
      %v997 = vsel %vm239, %v946, 0
      %v1000 = vsel %vm239, %v947, 0
      %v1003 = vsel %vm239, %v948, 0
      %v1006 = vsel %vm239, %v949, 0
      %v1009 = vsel %vm239, %v950, 0
      %v1012 = vsel %vm239, %v951, 0
      %v1015 = vsel %vm239, %v952, 0
      %v1018 = vsel %vm239, %v953, 0
      %v1021 = vsel %vm239, %v954, 0
      %v1024 = vsel %vm239, %v955, 0
      %v1027 = vsel %vm239, %v956, 0
      %v1030 = vsel %vm239, %v957, 0
      %v1033 = vsel %vm612, %v959, 0
      %1035 = vmatprep.subr.bf16.mxu0 0
      %1036 = vmatpush1.bf16.msra.mxu0 0
      %1037 = vmatprep.subr.bf16.mxu0 0
      %1038 = vmatpush1.bf16.msra.mxu0 0
      %1039 = vmatprep.subr.bf16.mxu0 0
      %1040 = vmatpush1.bf16.msra.mxu0 0
      %1041 = vmatprep.subr.bf16.mxu0 0
      %1042 = vmatpush1.bf16.msra.mxu0 0
      %1043 = vmatprep.subr.bf16.mxu0 0
      %1044 = vmatpush1.bf16.msra.mxu0 0
      %1045 = vmatprep.subr.bf16.mxu0 0
      %1046 = vmatpush1.bf16.msra.mxu0 0
      %1047 = vmatprep.subr.bf16.mxu0 0
      %1048 = vmatpush1.bf16.msra.mxu0 0
      %1049 = vmatprep.subr.bf16.mxu0 0
      %1050 = vmatpush1.bf16.msra.mxu0 %v1033
      %1051 = vmatprep.subr.bf16.mxu0 0
      %1052 = vmatpush2.bf16.msra.mxu0 0
      %1053 = vmatprep.subr.bf16.mxu0 0
      %1054 = vmatpush2.bf16.msra.mxu0 0
      %1055 = vmatprep.subr.bf16.mxu0 0
      %1056 = vmatpush2.bf16.msra.mxu0 0
      %1057 = vmatprep.subr.bf16.mxu0 0
      %1058 = vmatpush2.bf16.msra.mxu0 0
      %1059 = vmatprep.subr.bf16.mxu0 0
      %1060 = vmatpush2.bf16.msra.mxu0 0
      %1061 = vmatprep.subr.bf16.mxu0 0
      %1062 = vmatpush2.bf16.msra.mxu0 0
      %1063 = vmatprep.subr.bf16.mxu0 0
      %1064 = vmatpush2.bf16.msra.mxu0 0
      %1065 = vmatprep.subr.bf16.mxu0 0
      %1066 = vmatpush2.bf16.msra.mxu0 0
      %1067 = vmatprep.mubr.bf16.mxu0 0
      %1068 = vmatmul.mubr.bf16.gmra.mxu0 %v961
      %v1069 = vpop.f32.mrf.mxu0
      %v1070 = vadd.f32 0.0, %v1069
      %v1071 = vpop.f32.mrf.mxu0
      %v1072 = vpop.f32.mrf.mxu0
      %v1073 = vadd.f32 0.0, %v1072
      %v1074 = vpop.f32.mrf.mxu0
      %1075 = vmatprep.mubr.bf16.mxu0 0
      %1076 = vmatmul.mubr.bf16.gmra.mxu0 %v964
      %v1077 = vpop.f32.mrf.mxu0
      %v1078 = vadd.f32 0.0, %v1077
      %v1079 = vpop.f32.mrf.mxu0
      %v1080 = vpop.f32.mrf.mxu0
      %v1081 = vadd.f32 0.0, %v1080
      %v1082 = vpop.f32.mrf.mxu0
      %1083 = vmatprep.mubr.bf16.mxu0 0
      %1084 = vmatmul.mubr.bf16.gmra.mxu0 %v967
      %v1085 = vpop.f32.mrf.mxu0
      %v1086 = vadd.f32 0.0, %v1085
      %v1087 = vpop.f32.mrf.mxu0
      %v1088 = vpop.f32.mrf.mxu0
      %v1089 = vadd.f32 0.0, %v1088
      %v1090 = vpop.f32.mrf.mxu0
      %1091 = vmatprep.mubr.bf16.mxu0 0
      %1092 = vmatmul.mubr.bf16.gmra.mxu0 %v970
      %v1093 = vpop.f32.mrf.mxu0
      %v1094 = vadd.f32 0.0, %v1093
      %v1095 = vpop.f32.mrf.mxu0
      %v1096 = vpop.f32.mrf.mxu0
      %v1097 = vadd.f32 0.0, %v1096
      %v1098 = vpop.f32.mrf.mxu0
      %1099 = vmatprep.mubr.bf16.mxu0 0
      %1100 = vmatmul.mubr.bf16.gmra.mxu0 %v973
      %v1101 = vpop.f32.mrf.mxu0
      %v1102 = vadd.f32 0.0, %v1101
      %v1103 = vpop.f32.mrf.mxu0
      %v1104 = vpop.f32.mrf.mxu0
      %v1105 = vadd.f32 0.0, %v1104
      %v1106 = vpop.f32.mrf.mxu0
      %1107 = vmatprep.mubr.bf16.mxu0 0
      %1108 = vmatmul.mubr.bf16.gmra.mxu0 %v976
      %v1109 = vpop.f32.mrf.mxu0
      %v1110 = vadd.f32 0.0, %v1109
      %v1111 = vpop.f32.mrf.mxu0
      %v1112 = vpop.f32.mrf.mxu0
      %v1113 = vadd.f32 0.0, %v1112
      %v1114 = vpop.f32.mrf.mxu0
      %1115 = vmatprep.mubr.bf16.mxu0 0
      %1116 = vmatmul.mubr.bf16.gmra.mxu0 %v979
      %v1117 = vpop.f32.mrf.mxu0
      %v1118 = vadd.f32 0.0, %v1117
      %v1119 = vpop.f32.mrf.mxu0
      %v1120 = vpop.f32.mrf.mxu0
      %v1121 = vadd.f32 0.0, %v1120
      %v1122 = vpop.f32.mrf.mxu0
      %1123 = vmatprep.mubr.bf16.mxu0 0
      %1124 = vmatmul.mubr.bf16.gmra.mxu0 %v982
      %v1125 = vpop.f32.mrf.mxu0
      %v1126 = vadd.f32 0.0, %v1125
      %v1127 = vpop.f32.mrf.mxu0
      %v1128 = vpop.f32.mrf.mxu0
      %v1129 = vadd.f32 0.0, %v1128
      %v1130 = vpop.f32.mrf.mxu0
      %1131 = vmatprep.mubr.bf16.mxu0 0
      %1132 = vmatmul.mubr.bf16.gmra.mxu0 %v985
      %v1133 = vpop.f32.mrf.mxu0
      %v1134 = vadd.f32 0.0, %v1133
      %v1135 = vpop.f32.mrf.mxu0
      %v1136 = vpop.f32.mrf.mxu0
      %v1137 = vadd.f32 0.0, %v1136
      %v1138 = vpop.f32.mrf.mxu0
      %1139 = vmatprep.mubr.bf16.mxu0 0
      %1140 = vmatmul.mubr.bf16.gmra.mxu0 %v988
      %v1141 = vpop.f32.mrf.mxu0
      %v1142 = vadd.f32 0.0, %v1141
      %v1143 = vpop.f32.mrf.mxu0
      %v1144 = vpop.f32.mrf.mxu0
      %v1145 = vadd.f32 0.0, %v1144
      %v1146 = vpop.f32.mrf.mxu0
      %1147 = vmatprep.mubr.bf16.mxu0 0
      %1148 = vmatmul.mubr.bf16.gmra.mxu0 %v991
      %v1149 = vpop.f32.mrf.mxu0
      %v1150 = vadd.f32 0.0, %v1149
      %v1151 = vpop.f32.mrf.mxu0
      %v1152 = vpop.f32.mrf.mxu0
      %v1153 = vadd.f32 0.0, %v1152
      %v1154 = vpop.f32.mrf.mxu0
      %1155 = vmatprep.mubr.bf16.mxu0 0
      %1156 = vmatmul.mubr.bf16.gmra.mxu0 %v994
      %v1157 = vpop.f32.mrf.mxu0
      %v1158 = vadd.f32 0.0, %v1157
      %v1159 = vpop.f32.mrf.mxu0
      %v1160 = vpop.f32.mrf.mxu0
      %v1161 = vadd.f32 0.0, %v1160
      %v1162 = vpop.f32.mrf.mxu0
      %1163 = vmatprep.mubr.bf16.mxu0 0
      %1164 = vmatmul.mubr.bf16.gmra.mxu0 %v997
      %v1165 = vpop.f32.mrf.mxu0
      %v1166 = vadd.f32 0.0, %v1165
      %v1167 = vpop.f32.mrf.mxu0
      %v1168 = vpop.f32.mrf.mxu0
      %v1169 = vadd.f32 0.0, %v1168
      %v1170 = vpop.f32.mrf.mxu0
      %1171 = vmatprep.mubr.bf16.mxu0 0
      %1172 = vmatmul.mubr.bf16.gmra.mxu0 %v1000
      %v1173 = vpop.f32.mrf.mxu0
      %v1174 = vadd.f32 0.0, %v1173
      %v1175 = vpop.f32.mrf.mxu0
      %v1176 = vpop.f32.mrf.mxu0
      %v1177 = vadd.f32 0.0, %v1176
      %v1178 = vpop.f32.mrf.mxu0
      %1179 = vmatprep.mubr.bf16.mxu0 0
      %1180 = vmatmul.mubr.bf16.gmra.mxu0 %v1003
      %v1181 = vpop.f32.mrf.mxu0
      %v1182 = vadd.f32 0.0, %v1181
      %v1183 = vpop.f32.mrf.mxu0
      %v1184 = vpop.f32.mrf.mxu0
      %v1185 = vadd.f32 0.0, %v1184
      %v1186 = vpop.f32.mrf.mxu0
      %1187 = vmatprep.mubr.bf16.mxu0 0
      %1188 = vmatmul.mubr.bf16.gmra.mxu0 %v1006
      %v1189 = vpop.f32.mrf.mxu0
      %v1190 = vadd.f32 0.0, %v1189
      %v1191 = vpop.f32.mrf.mxu0
      %v1192 = vpop.f32.mrf.mxu0
      %v1193 = vadd.f32 0.0, %v1192
      %v1194 = vpop.f32.mrf.mxu0
      %1195 = vmatprep.mubr.bf16.mxu0 0
      %1196 = vmatmul.mubr.bf16.gmra.mxu0 %v1009
      %v1197 = vpop.f32.mrf.mxu0
      %v1198 = vadd.f32 0.0, %v1197
      %v1199 = vpop.f32.mrf.mxu0
      %v1200 = vpop.f32.mrf.mxu0
      %v1201 = vadd.f32 0.0, %v1200
      %v1202 = vpop.f32.mrf.mxu0
      %1203 = vmatprep.mubr.bf16.mxu0 0
      %1204 = vmatmul.mubr.bf16.gmra.mxu0 %v1012
      %v1205 = vpop.f32.mrf.mxu0
      %v1206 = vadd.f32 0.0, %v1205
      %v1207 = vpop.f32.mrf.mxu0
      %v1208 = vpop.f32.mrf.mxu0
      %v1209 = vadd.f32 0.0, %v1208
      %v1210 = vpop.f32.mrf.mxu0
      %1211 = vmatprep.mubr.bf16.mxu0 0
      %1212 = vmatmul.mubr.bf16.gmra.mxu0 %v1015
      %v1213 = vpop.f32.mrf.mxu0
      %v1214 = vadd.f32 0.0, %v1213
      %v1215 = vpop.f32.mrf.mxu0
      %v1216 = vpop.f32.mrf.mxu0
      %v1217 = vadd.f32 0.0, %v1216
      %v1218 = vpop.f32.mrf.mxu0
      %1219 = vmatprep.mubr.bf16.mxu0 0
      %1220 = vmatmul.mubr.bf16.gmra.mxu0 %v1018
      %v1221 = vpop.f32.mrf.mxu0
      %v1222 = vadd.f32 0.0, %v1221
      %v1223 = vpop.f32.mrf.mxu0
      %v1224 = vpop.f32.mrf.mxu0
      %v1225 = vadd.f32 0.0, %v1224
      %v1226 = vpop.f32.mrf.mxu0
      %1227 = vmatprep.mubr.bf16.mxu0 0
      %1228 = vmatmul.mubr.bf16.gmra.mxu0 %v1021
      %v1229 = vpop.f32.mrf.mxu0
      %v1230 = vadd.f32 0.0, %v1229
      %v1231 = vpop.f32.mrf.mxu0
      %v1232 = vpop.f32.mrf.mxu0
      %v1233 = vadd.f32 0.0, %v1232
      %v1234 = vpop.f32.mrf.mxu0
      %1235 = vmatprep.mubr.bf16.mxu0 0
      %1236 = vmatmul.mubr.bf16.gmra.mxu0 %v1024
      %v1237 = vpop.f32.mrf.mxu0
      %v1238 = vadd.f32 0.0, %v1237
      %v1239 = vpop.f32.mrf.mxu0
      %v1240 = vpop.f32.mrf.mxu0
      %v1241 = vadd.f32 0.0, %v1240
      %v1242 = vpop.f32.mrf.mxu0
      %1243 = vmatprep.mubr.bf16.mxu0 0
      %1244 = vmatmul.mubr.bf16.gmra.mxu0 %v1027
      %v1245 = vpop.f32.mrf.mxu0
      %v1246 = vadd.f32 0.0, %v1245
      %v1247 = vpop.f32.mrf.mxu0
      %v1248 = vpop.f32.mrf.mxu0
      %v1249 = vadd.f32 0.0, %v1248
      %v1250 = vpop.f32.mrf.mxu0
      %1251 = vmatprep.mubr.bf16.mxu0 0
      %1252 = vmatmul.mubr.bf16.gmra.mxu0 %v1030
      %v1253 = vpop.f32.mrf.mxu0
      %v1254 = vadd.f32 0.0, %v1253
      %v1255 = vpop.f32.mrf.mxu0
      %v1256 = vpop.f32.mrf.mxu0
      %v1257 = vpop.f32.mrf.mxu0
      %1258 = vdwg.mxu0
      %v1259 = vld [vmem:[#allocation3] sm:$0xff]
      %v1260 = vld [vmem:[#allocation3 + $0x8] sm:$0xff]
      %v1261 = vld [vmem:[#allocation3 + $0x10] sm:$0xff]
      %v1262 = vld [vmem:[#allocation3 + $0x18] sm:$0xff]
      %v1263 = vld [vmem:[#allocation3 + $0x20] sm:$0xff]
      %v1264 = vld [vmem:[#allocation3 + $0x28] sm:$0xff]
      %v1265 = vld [vmem:[#allocation3 + $0x30] sm:$0xff]
      %v1266 = vld [vmem:[#allocation3 + $0x38] sm:$0xff]
      %v1267 = vld [vmem:[#allocation3 + $0x40] sm:$0xff]
      %v1268 = vld [vmem:[#allocation3 + $0x48] sm:$0xff]
      %v1269 = vld [vmem:[#allocation3 + $0x50] sm:$0xff]
      %v1270 = vld [vmem:[#allocation3 + $0x58] sm:$0xff]
      %v1271 = vld [vmem:[#allocation3 + $0x60] sm:$0xff]
      %v1272 = vld [vmem:[#allocation3 + $0x68] sm:$0xff]
      %v1273 = vld [vmem:[#allocation3 + $0x70] sm:$0xff]
      %v1274 = vld [vmem:[#allocation3 + $0x78] sm:$0xff]
      %v1275 = vld [vmem:[#allocation3 + $0x80] sm:$0xff]
      %v1276 = vld [vmem:[#allocation3 + $0x88] sm:$0xff]
      %v1277 = vld [vmem:[#allocation3 + $0x90] sm:$0xff]
      %v1278 = vld [vmem:[#allocation3 + $0x98] sm:$0xff]
      %v1279 = vld [vmem:[#allocation3 + $0xa0] sm:$0xff]
      %v1280 = vld [vmem:[#allocation3 + $0xa8] sm:$0xff]
      %v1281 = vld [vmem:[#allocation3 + $0xb0] sm:$0xff]
      %v1282 = vld [vmem:[#allocation3 + $0xb8] sm:$0xff]
      %v1283 = vld [vmem:[#allocation3 + $0xc0] sm:$0xff]
      %v1284 = vld [vmem:[#allocation3 + $0xc8] sm:$0xff]
      %v1285 = vld [vmem:[#allocation3 + $0xd0] sm:$0xff]
      %v1286 = vld [vmem:[#allocation3 + $0xd8] sm:$0xff]
      %v1287 = vld [vmem:[#allocation3 + $0xe0] sm:$0xff]
      %v1288 = vld [vmem:[#allocation3 + $0xe8] sm:$0xff]
      %v1289 = vld [vmem:[#allocation3 + $0xf0] sm:$0xff]
      %v1290 = vld [vmem:[#allocation3 + $0xf8] sm:$0xff]
      %v1291 = vld [vmem:[#allocation3 + $0x100] sm:$0xff]
      %v1292 = vld [vmem:[#allocation3 + $0x108] sm:$0xff]
      %v1293 = vld [vmem:[#allocation3 + $0x110] sm:$0xff]
      %v1294 = vld [vmem:[#allocation3 + $0x118] sm:$0xff]
      %v1295 = vld [vmem:[#allocation3 + $0x120] sm:$0xff]
      %v1296 = vld [vmem:[#allocation3 + $0x128] sm:$0xff]
      %v1297 = vld [vmem:[#allocation3 + $0x130] sm:$0xff]
      %v1298 = vld [vmem:[#allocation3 + $0x138] sm:$0xff]
      %v1299 = vld [vmem:[#allocation3 + $0x140] sm:$0xff]
      %v1300 = vld [vmem:[#allocation3 + $0x148] sm:$0xff]
      %v1301 = vld [vmem:[#allocation3 + $0x150] sm:$0xff]
      %v1302 = vld [vmem:[#allocation3 + $0x158] sm:$0xff]
      %v1303 = vld [vmem:[#allocation3 + $0x160] sm:$0xff]
      %v1304 = vld [vmem:[#allocation3 + $0x168] sm:$0xff]
      %v1305 = vld [vmem:[#allocation3 + $0x170] sm:$0xff]
      %v1306 = vadd.f32 %v1259, %v1070
      %v1307 = vadd.f32 %v1260, %v1073
      %v1308 = vadd.f32 %v1261, %v1078
      %v1309 = vadd.f32 %v1262, %v1081
      %v1310 = vadd.f32 %v1263, %v1086
      %v1311 = vadd.f32 %v1264, %v1089
      %v1312 = vadd.f32 %v1265, %v1094
      %v1313 = vadd.f32 %v1266, %v1097
      %v1314 = vadd.f32 %v1267, %v1102
      %v1315 = vadd.f32 %v1268, %v1105
      %v1316 = vadd.f32 %v1269, %v1110
      %v1317 = vadd.f32 %v1270, %v1113
      %v1318 = vadd.f32 %v1271, %v1118
      %v1319 = vadd.f32 %v1272, %v1121
      %v1320 = vadd.f32 %v1273, %v1126
      %v1321 = vadd.f32 %v1274, %v1129
      %v1322 = vadd.f32 %v1275, %v1134
      %v1323 = vadd.f32 %v1276, %v1137
      %v1324 = vadd.f32 %v1277, %v1142
      %v1325 = vadd.f32 %v1278, %v1145
      %v1326 = vadd.f32 %v1279, %v1150
      %v1327 = vadd.f32 %v1280, %v1153
      %v1328 = vadd.f32 %v1281, %v1158
      %v1329 = vadd.f32 %v1282, %v1161
      %v1330 = vadd.f32 %v1283, %v1166
      %v1331 = vadd.f32 %v1284, %v1169
      %v1332 = vadd.f32 %v1285, %v1174
      %v1333 = vadd.f32 %v1286, %v1177
      %v1334 = vadd.f32 %v1287, %v1182
      %v1335 = vadd.f32 %v1288, %v1185
      %v1336 = vadd.f32 %v1289, %v1190
      %v1337 = vadd.f32 %v1290, %v1193
      %v1338 = vadd.f32 %v1291, %v1198
      %v1339 = vadd.f32 %v1292, %v1201
      %v1340 = vadd.f32 %v1293, %v1206
      %v1341 = vadd.f32 %v1294, %v1209
      %v1342 = vadd.f32 %v1295, %v1214
      %v1343 = vadd.f32 %v1296, %v1217
      %v1344 = vadd.f32 %v1297, %v1222
      %v1345 = vadd.f32 %v1298, %v1225
      %v1346 = vadd.f32 %v1299, %v1230
      %v1347 = vadd.f32 %v1300, %v1233
      %v1348 = vadd.f32 %v1301, %v1238
      %v1349 = vadd.f32 %v1302, %v1241
      %v1350 = vadd.f32 %v1303, %v1246
      %v1351 = vadd.f32 %v1304, %v1249
      %v1352 = vadd.f32 %v1305, %v1254
      %1353 = vst.msk [vmem:[#allocation3] sm:$0xff] %vm239, %v1306
      %1354 = vst.msk [vmem:[#allocation3 + $0x8] sm:$0xff] %vm239, %v1307
      %1355 = vst.msk [vmem:[#allocation3 + $0x10] sm:$0xff] %vm239, %v1308
      %1356 = vst.msk [vmem:[#allocation3 + $0x18] sm:$0xff] %vm239, %v1309
      %1357 = vst.msk [vmem:[#allocation3 + $0x20] sm:$0xff] %vm239, %v1310
      %1358 = vst.msk [vmem:[#allocation3 + $0x28] sm:$0xff] %vm239, %v1311
      %1359 = vst.msk [vmem:[#allocation3 + $0x30] sm:$0xff] %vm239, %v1312
      %1360 = vst.msk [vmem:[#allocation3 + $0x38] sm:$0xff] %vm239, %v1313
      %1361 = vst.msk [vmem:[#allocation3 + $0x40] sm:$0xff] %vm239, %v1314
      %1362 = vst.msk [vmem:[#allocation3 + $0x48] sm:$0xff] %vm239, %v1315
      %1363 = vst.msk [vmem:[#allocation3 + $0x50] sm:$0xff] %vm239, %v1316
      %1364 = vst.msk [vmem:[#allocation3 + $0x58] sm:$0xff] %vm239, %v1317
      %1365 = vst.msk [vmem:[#allocation3 + $0x60] sm:$0xff] %vm239, %v1318
      %1366 = vst.msk [vmem:[#allocation3 + $0x68] sm:$0xff] %vm239, %v1319
      %1367 = vst.msk [vmem:[#allocation3 + $0x70] sm:$0xff] %vm239, %v1320
      %1368 = vst.msk [vmem:[#allocation3 + $0x78] sm:$0xff] %vm239, %v1321
      %1369 = vst.msk [vmem:[#allocation3 + $0x80] sm:$0xff] %vm239, %v1322
      %1370 = vst.msk [vmem:[#allocation3 + $0x88] sm:$0xff] %vm239, %v1323
      %1371 = vst.msk [vmem:[#allocation3 + $0x90] sm:$0xff] %vm239, %v1324
      %1372 = vst.msk [vmem:[#allocation3 + $0x98] sm:$0xff] %vm239, %v1325
      %1373 = vst.msk [vmem:[#allocation3 + $0xa0] sm:$0xff] %vm239, %v1326
      %1374 = vst.msk [vmem:[#allocation3 + $0xa8] sm:$0xff] %vm239, %v1327
      %1375 = vst.msk [vmem:[#allocation3 + $0xb0] sm:$0xff] %vm239, %v1328
      %1376 = vst.msk [vmem:[#allocation3 + $0xb8] sm:$0xff] %vm239, %v1329
      %1377 = vst.msk [vmem:[#allocation3 + $0xc0] sm:$0xff] %vm239, %v1330
      %1378 = vst.msk [vmem:[#allocation3 + $0xc8] sm:$0xff] %vm239, %v1331
      %1379 = vst.msk [vmem:[#allocation3 + $0xd0] sm:$0xff] %vm239, %v1332
      %1380 = vst.msk [vmem:[#allocation3 + $0xd8] sm:$0xff] %vm239, %v1333
      %1381 = vst.msk [vmem:[#allocation3 + $0xe0] sm:$0xff] %vm239, %v1334
      %1382 = vst.msk [vmem:[#allocation3 + $0xe8] sm:$0xff] %vm239, %v1335
      %1383 = vst.msk [vmem:[#allocation3 + $0xf0] sm:$0xff] %vm239, %v1336
      %1384 = vst.msk [vmem:[#allocation3 + $0xf8] sm:$0xff] %vm239, %v1337
      %1385 = vst.msk [vmem:[#allocation3 + $0x100] sm:$0xff] %vm239, %v1338
      %1386 = vst.msk [vmem:[#allocation3 + $0x108] sm:$0xff] %vm239, %v1339
      %1387 = vst.msk [vmem:[#allocation3 + $0x110] sm:$0xff] %vm239, %v1340
      %1388 = vst.msk [vmem:[#allocation3 + $0x118] sm:$0xff] %vm239, %v1341
      %1389 = vst.msk [vmem:[#allocation3 + $0x120] sm:$0xff] %vm239, %v1342
      %1390 = vst.msk [vmem:[#allocation3 + $0x128] sm:$0xff] %vm239, %v1343
      %1391 = vst.msk [vmem:[#allocation3 + $0x130] sm:$0xff] %vm239, %v1344
      %1392 = vst.msk [vmem:[#allocation3 + $0x138] sm:$0xff] %vm239, %v1345
      %1393 = vst.msk [vmem:[#allocation3 + $0x140] sm:$0xff] %vm239, %v1346
      %1394 = vst.msk [vmem:[#allocation3 + $0x148] sm:$0xff] %vm239, %v1347
      %1395 = vst.msk [vmem:[#allocation3 + $0x150] sm:$0xff] %vm239, %v1348
      %1396 = vst.msk [vmem:[#allocation3 + $0x158] sm:$0xff] %vm239, %v1349
      %1397 = vst.msk [vmem:[#allocation3 + $0x160] sm:$0xff] %vm239, %v1350
      %1398 = vst.msk [vmem:[#allocation3 + $0x168] sm:$0xff] %vm239, %v1351
      %1399 = vst.msk [vmem:[#allocation3 + $0x170] sm:$0xff] %vm239, %v1352
      %v1400 = vld [vmem:[#allocation2 + $0x2] sm:$0xff]
      %v1401 = vld [vmem:[#allocation2 + $0xa] sm:$0xff]
      %v1402 = vld [vmem:[#allocation2 + $0x12] sm:$0xff]
      %v1403 = vld [vmem:[#allocation2 + $0x1a] sm:$0xff]
      %v1404 = vld [vmem:[#allocation2 + $0x22] sm:$0xff]
      %v1405 = vld [vmem:[#allocation2 + $0x2a] sm:$0xff]
      %v1406 = vld [vmem:[#allocation2 + $0x32] sm:$0xff]
      %v1407 = vld [vmem:[#allocation2 + $0x3a] sm:$0xff]
      %v1408 = vld [vmem:[#allocation2 + $0x42] sm:$0xff]
      %v1409 = vld [vmem:[#allocation2 + $0x4a] sm:$0xff]
      %v1410 = vld [vmem:[#allocation2 + $0x52] sm:$0xff]
      %v1411 = vld [vmem:[#allocation2 + $0x5a] sm:$0xff]
      %v1412 = vld [vmem:[#allocation2 + $0x62] sm:$0xff]
      %v1413 = vld [vmem:[#allocation2 + $0x6a] sm:$0xff]
      %v1414 = vld [vmem:[#allocation2 + $0x72] sm:$0xff]
      %v1415 = vld [vmem:[#allocation2 + $0x7a] sm:$0xff]
      %v1416 = vld [vmem:[#allocation2 + $0x82] sm:$0xff]
      %v1417 = vld [vmem:[#allocation2 + $0x8a] sm:$0xff]
      %v1418 = vld [vmem:[#allocation2 + $0x92] sm:$0xff]
      %v1419 = vld [vmem:[#allocation2 + $0x9a] sm:$0xff]
      %v1420 = vld [vmem:[#allocation2 + $0xa2] sm:$0xff]
      %v1421 = vld [vmem:[#allocation2 + $0xaa] sm:$0xff]
      %v1422 = vld [vmem:[#allocation2 + $0xb2] sm:$0xff]
      %v1423 = vld [vmem:[#allocation2 + $0xba] sm:$0xff]
      %v1424 = vld [vmem:[#allocation2 + $0xc2] sm:$0xff]
      %v1425 = vld [vmem:[#allocation2 + $0xca] sm:$0xff]
      %v1426 = vld [vmem:[#allocation2 + $0xd2] sm:$0xff]
      %v1427 = vld [vmem:[#allocation2 + $0xda] sm:$0xff]
      %v1428 = vld [vmem:[#allocation2 + $0xe2] sm:$0xff]
      %v1429 = vld [vmem:[#allocation2 + $0xea] sm:$0xff]
      %v1430 = vld [vmem:[#allocation2 + $0xf2] sm:$0xff]
      %v1431 = vld [vmem:[#allocation2 + $0xfa] sm:$0xff]
      %v1432 = vld [vmem:[#allocation2 + $0x102] sm:$0xff]
      %v1433 = vld [vmem:[#allocation2 + $0x10a] sm:$0xff]
      %v1434 = vld [vmem:[#allocation2 + $0x112] sm:$0xff]
      %v1435 = vld [vmem:[#allocation2 + $0x11a] sm:$0xff]
      %v1436 = vld [vmem:[#allocation2 + $0x122] sm:$0xff]
      %v1437 = vld [vmem:[#allocation2 + $0x12a] sm:$0xff]
      %v1438 = vld [vmem:[#allocation2 + $0x132] sm:$0xff]
      %v1439 = vld [vmem:[#allocation2 + $0x13a] sm:$0xff]
      %v1440 = vld [vmem:[#allocation2 + $0x142] sm:$0xff]
      %v1441 = vld [vmem:[#allocation2 + $0x14a] sm:$0xff]
      %v1442 = vld [vmem:[#allocation2 + $0x152] sm:$0xff]
      %v1443 = vld [vmem:[#allocation2 + $0x15a] sm:$0xff]
      %v1444 = vld [vmem:[#allocation2 + $0x162] sm:$0xff]
      %v1445 = vld [vmem:[#allocation2 + $0x16a] sm:$0xff]
      %v1446 = vld [vmem:[#allocation2 + $0x172] sm:$0xff]
      %v1447 = vpack.c.bf16 %v1401, %v1400
      %v1448 = vpack.c.bf16 %v1403, %v1402
      %v1449 = vpack.c.bf16 %v1405, %v1404
      %v1450 = vpack.c.bf16 %v1407, %v1406
      %v1451 = vpack.c.bf16 %v1409, %v1408
      %v1452 = vpack.c.bf16 %v1411, %v1410
      %v1453 = vpack.c.bf16 %v1413, %v1412
      %v1454 = vpack.c.bf16 %v1415, %v1414
      %v1455 = vpack.c.bf16 %v1417, %v1416
      %v1456 = vpack.c.bf16 %v1419, %v1418
      %v1457 = vpack.c.bf16 %v1421, %v1420
      %v1458 = vpack.c.bf16 %v1423, %v1422
      %v1459 = vpack.c.bf16 %v1425, %v1424
      %v1460 = vpack.c.bf16 %v1427, %v1426
      %v1461 = vpack.c.bf16 %v1429, %v1428
      %v1462 = vpack.c.bf16 %v1431, %v1430
      %v1463 = vpack.c.bf16 %v1433, %v1432
      %v1464 = vpack.c.bf16 %v1435, %v1434
      %v1465 = vpack.c.bf16 %v1437, %v1436
      %v1466 = vpack.c.bf16 %v1439, %v1438
      %v1467 = vpack.c.bf16 %v1441, %v1440
      %v1468 = vpack.c.bf16 %v1443, %v1442
      %v1469 = vpack.c.bf16 %v1445, %v1444
      %v1470 = vpack.c.bf16 %v1446, %v1446
      %s1471 = scalar_lea.vmem %s3, 4
      %v1472 = vld [vmem:[%s1471] sm:$0x3]
      %v1474 = vsel %vm239, %v1447, 0
      %v1477 = vsel %vm239, %v1448, 0
      %v1480 = vsel %vm239, %v1449, 0
      %v1483 = vsel %vm239, %v1450, 0
      %v1486 = vsel %vm239, %v1451, 0
      %v1489 = vsel %vm239, %v1452, 0
      %v1492 = vsel %vm239, %v1453, 0
      %v1495 = vsel %vm239, %v1454, 0
      %v1498 = vsel %vm239, %v1455, 0
      %v1501 = vsel %vm239, %v1456, 0
      %v1504 = vsel %vm239, %v1457, 0
      %v1507 = vsel %vm239, %v1458, 0
      %v1510 = vsel %vm239, %v1459, 0
      %v1513 = vsel %vm239, %v1460, 0
      %v1516 = vsel %vm239, %v1461, 0
      %v1519 = vsel %vm239, %v1462, 0
      %v1522 = vsel %vm239, %v1463, 0
      %v1525 = vsel %vm239, %v1464, 0
      %v1528 = vsel %vm239, %v1465, 0
      %v1531 = vsel %vm239, %v1466, 0
      %v1534 = vsel %vm239, %v1467, 0
      %v1537 = vsel %vm239, %v1468, 0
      %v1540 = vsel %vm239, %v1469, 0
      %v1543 = vsel %vm239, %v1470, 0
      %v1546 = vsel %vm612, %v1472, 0
      %1548 = vmatprep.subr.bf16.mxu0 0
      %1549 = vmatpush1.bf16.msra.mxu0 0
      %1550 = vmatprep.subr.bf16.mxu0 0
      %1551 = vmatpush1.bf16.msra.mxu0 0
      %1552 = vmatprep.subr.bf16.mxu0 0
      %1553 = vmatpush1.bf16.msra.mxu0 0
      %1554 = vmatprep.subr.bf16.mxu0 0
      %1555 = vmatpush1.bf16.msra.mxu0 0
      %1556 = vmatprep.subr.bf16.mxu0 0
      %1557 = vmatpush1.bf16.msra.mxu0 0
      %1558 = vmatprep.subr.bf16.mxu0 0
      %1559 = vmatpush1.bf16.msra.mxu0 0
      %1560 = vmatprep.subr.bf16.mxu0 0
      %1561 = vmatpush1.bf16.msra.mxu0 0
      %1562 = vmatprep.subr.bf16.mxu0 0
      %1563 = vmatpush1.bf16.msra.mxu0 %v1546
      %1564 = vmatprep.subr.bf16.mxu0 0
      %1565 = vmatpush2.bf16.msra.mxu0 0
      %1566 = vmatprep.subr.bf16.mxu0 0
      %1567 = vmatpush2.bf16.msra.mxu0 0
      %1568 = vmatprep.subr.bf16.mxu0 0
      %1569 = vmatpush2.bf16.msra.mxu0 0
      %1570 = vmatprep.subr.bf16.mxu0 0
      %1571 = vmatpush2.bf16.msra.mxu0 0
      %1572 = vmatprep.subr.bf16.mxu0 0
      %1573 = vmatpush2.bf16.msra.mxu0 0
      %1574 = vmatprep.subr.bf16.mxu0 0
      %1575 = vmatpush2.bf16.msra.mxu0 0
      %1576 = vmatprep.subr.bf16.mxu0 0
      %1577 = vmatpush2.bf16.msra.mxu0 0
      %1578 = vmatprep.subr.bf16.mxu0 0
      %1579 = vmatpush2.bf16.msra.mxu0 0
      %1580 = vmatprep.mubr.bf16.mxu0 0
      %1581 = vmatmul.mubr.bf16.gmra.mxu0 %v1474
      %v1582 = vpop.f32.mrf.mxu0
      %v1583 = vadd.f32 0.0, %v1582
      %v1584 = vpop.f32.mrf.mxu0
      %v1585 = vpop.f32.mrf.mxu0
      %v1586 = vadd.f32 0.0, %v1585
      %v1587 = vpop.f32.mrf.mxu0
      %1588 = vmatprep.mubr.bf16.mxu0 0
      %1589 = vmatmul.mubr.bf16.gmra.mxu0 %v1477
      %v1590 = vpop.f32.mrf.mxu0
      %v1591 = vadd.f32 0.0, %v1590
      %v1592 = vpop.f32.mrf.mxu0
      %v1593 = vpop.f32.mrf.mxu0
      %v1594 = vadd.f32 0.0, %v1593
      %v1595 = vpop.f32.mrf.mxu0
      %1596 = vmatprep.mubr.bf16.mxu0 0
      %1597 = vmatmul.mubr.bf16.gmra.mxu0 %v1480
      %v1598 = vpop.f32.mrf.mxu0
      %v1599 = vadd.f32 0.0, %v1598
      %v1600 = vpop.f32.mrf.mxu0
      %v1601 = vpop.f32.mrf.mxu0
      %v1602 = vadd.f32 0.0, %v1601
      %v1603 = vpop.f32.mrf.mxu0
      %1604 = vmatprep.mubr.bf16.mxu0 0
      %1605 = vmatmul.mubr.bf16.gmra.mxu0 %v1483
      %v1606 = vpop.f32.mrf.mxu0
      %v1607 = vadd.f32 0.0, %v1606
      %v1608 = vpop.f32.mrf.mxu0
      %v1609 = vpop.f32.mrf.mxu0
      %v1610 = vadd.f32 0.0, %v1609
      %v1611 = vpop.f32.mrf.mxu0
      %1612 = vmatprep.mubr.bf16.mxu0 0
      %1613 = vmatmul.mubr.bf16.gmra.mxu0 %v1486
      %v1614 = vpop.f32.mrf.mxu0
      %v1615 = vadd.f32 0.0, %v1614
      %v1616 = vpop.f32.mrf.mxu0
      %v1617 = vpop.f32.mrf.mxu0
      %v1618 = vadd.f32 0.0, %v1617
      %v1619 = vpop.f32.mrf.mxu0
      %1620 = vmatprep.mubr.bf16.mxu0 0
      %1621 = vmatmul.mubr.bf16.gmra.mxu0 %v1489
      %v1622 = vpop.f32.mrf.mxu0
      %v1623 = vadd.f32 0.0, %v1622
      %v1624 = vpop.f32.mrf.mxu0
      %v1625 = vpop.f32.mrf.mxu0
      %v1626 = vadd.f32 0.0, %v1625
      %v1627 = vpop.f32.mrf.mxu0
      %1628 = vmatprep.mubr.bf16.mxu0 0
      %1629 = vmatmul.mubr.bf16.gmra.mxu0 %v1492
      %v1630 = vpop.f32.mrf.mxu0
      %v1631 = vadd.f32 0.0, %v1630
      %v1632 = vpop.f32.mrf.mxu0
      %v1633 = vpop.f32.mrf.mxu0
      %v1634 = vadd.f32 0.0, %v1633
      %v1635 = vpop.f32.mrf.mxu0
      %1636 = vmatprep.mubr.bf16.mxu0 0
      %1637 = vmatmul.mubr.bf16.gmra.mxu0 %v1495
      %v1638 = vpop.f32.mrf.mxu0
      %v1639 = vadd.f32 0.0, %v1638
      %v1640 = vpop.f32.mrf.mxu0
      %v1641 = vpop.f32.mrf.mxu0
      %v1642 = vadd.f32 0.0, %v1641
      %v1643 = vpop.f32.mrf.mxu0
      %1644 = vmatprep.mubr.bf16.mxu0 0
      %1645 = vmatmul.mubr.bf16.gmra.mxu0 %v1498
      %v1646 = vpop.f32.mrf.mxu0
      %v1647 = vadd.f32 0.0, %v1646
      %v1648 = vpop.f32.mrf.mxu0
      %v1649 = vpop.f32.mrf.mxu0
      %v1650 = vadd.f32 0.0, %v1649
      %v1651 = vpop.f32.mrf.mxu0
      %1652 = vmatprep.mubr.bf16.mxu0 0
      %1653 = vmatmul.mubr.bf16.gmra.mxu0 %v1501
      %v1654 = vpop.f32.mrf.mxu0
      %v1655 = vadd.f32 0.0, %v1654
      %v1656 = vpop.f32.mrf.mxu0
      %v1657 = vpop.f32.mrf.mxu0
      %v1658 = vadd.f32 0.0, %v1657
      %v1659 = vpop.f32.mrf.mxu0
      %1660 = vmatprep.mubr.bf16.mxu0 0
      %1661 = vmatmul.mubr.bf16.gmra.mxu0 %v1504
      %v1662 = vpop.f32.mrf.mxu0
      %v1663 = vadd.f32 0.0, %v1662
      %v1664 = vpop.f32.mrf.mxu0
      %v1665 = vpop.f32.mrf.mxu0
      %v1666 = vadd.f32 0.0, %v1665
      %v1667 = vpop.f32.mrf.mxu0
      %1668 = vmatprep.mubr.bf16.mxu0 0
      %1669 = vmatmul.mubr.bf16.gmra.mxu0 %v1507
      %v1670 = vpop.f32.mrf.mxu0
      %v1671 = vadd.f32 0.0, %v1670
      %v1672 = vpop.f32.mrf.mxu0
      %v1673 = vpop.f32.mrf.mxu0
      %v1674 = vadd.f32 0.0, %v1673
      %v1675 = vpop.f32.mrf.mxu0
      %1676 = vmatprep.mubr.bf16.mxu0 0
      %1677 = vmatmul.mubr.bf16.gmra.mxu0 %v1510
      %v1678 = vpop.f32.mrf.mxu0
      %v1679 = vadd.f32 0.0, %v1678
      %v1680 = vpop.f32.mrf.mxu0
      %v1681 = vpop.f32.mrf.mxu0
      %v1682 = vadd.f32 0.0, %v1681
      %v1683 = vpop.f32.mrf.mxu0
      %1684 = vmatprep.mubr.bf16.mxu0 0
      %1685 = vmatmul.mubr.bf16.gmra.mxu0 %v1513
      %v1686 = vpop.f32.mrf.mxu0
      %v1687 = vadd.f32 0.0, %v1686
      %v1688 = vpop.f32.mrf.mxu0
      %v1689 = vpop.f32.mrf.mxu0
      %v1690 = vadd.f32 0.0, %v1689
      %v1691 = vpop.f32.mrf.mxu0
      %1692 = vmatprep.mubr.bf16.mxu0 0
      %1693 = vmatmul.mubr.bf16.gmra.mxu0 %v1516
      %v1694 = vpop.f32.mrf.mxu0
      %v1695 = vadd.f32 0.0, %v1694
      %v1696 = vpop.f32.mrf.mxu0
      %v1697 = vpop.f32.mrf.mxu0
      %v1698 = vadd.f32 0.0, %v1697
      %v1699 = vpop.f32.mrf.mxu0
      %1700 = vmatprep.mubr.bf16.mxu0 0
      %1701 = vmatmul.mubr.bf16.gmra.mxu0 %v1519
      %v1702 = vpop.f32.mrf.mxu0
      %v1703 = vadd.f32 0.0, %v1702
      %v1704 = vpop.f32.mrf.mxu0
      %v1705 = vpop.f32.mrf.mxu0
      %v1706 = vadd.f32 0.0, %v1705
      %v1707 = vpop.f32.mrf.mxu0
      %1708 = vmatprep.mubr.bf16.mxu0 0
      %1709 = vmatmul.mubr.bf16.gmra.mxu0 %v1522
      %v1710 = vpop.f32.mrf.mxu0
      %v1711 = vadd.f32 0.0, %v1710
      %v1712 = vpop.f32.mrf.mxu0
      %v1713 = vpop.f32.mrf.mxu0
      %v1714 = vadd.f32 0.0, %v1713
      %v1715 = vpop.f32.mrf.mxu0
      %1716 = vmatprep.mubr.bf16.mxu0 0
      %1717 = vmatmul.mubr.bf16.gmra.mxu0 %v1525
      %v1718 = vpop.f32.mrf.mxu0
      %v1719 = vadd.f32 0.0, %v1718
      %v1720 = vpop.f32.mrf.mxu0
      %v1721 = vpop.f32.mrf.mxu0
      %v1722 = vadd.f32 0.0, %v1721
      %v1723 = vpop.f32.mrf.mxu0
      %1724 = vmatprep.mubr.bf16.mxu0 0
      %1725 = vmatmul.mubr.bf16.gmra.mxu0 %v1528
      %v1726 = vpop.f32.mrf.mxu0
      %v1727 = vadd.f32 0.0, %v1726
      %v1728 = vpop.f32.mrf.mxu0
      %v1729 = vpop.f32.mrf.mxu0
      %v1730 = vadd.f32 0.0, %v1729
      %v1731 = vpop.f32.mrf.mxu0
      %1732 = vmatprep.mubr.bf16.mxu0 0
      %1733 = vmatmul.mubr.bf16.gmra.mxu0 %v1531
      %v1734 = vpop.f32.mrf.mxu0
      %v1735 = vadd.f32 0.0, %v1734
      %v1736 = vpop.f32.mrf.mxu0
      %v1737 = vpop.f32.mrf.mxu0
      %v1738 = vadd.f32 0.0, %v1737
      %v1739 = vpop.f32.mrf.mxu0
      %1740 = vmatprep.mubr.bf16.mxu0 0
      %1741 = vmatmul.mubr.bf16.gmra.mxu0 %v1534
      %v1742 = vpop.f32.mrf.mxu0
      %v1743 = vadd.f32 0.0, %v1742
      %v1744 = vpop.f32.mrf.mxu0
      %v1745 = vpop.f32.mrf.mxu0
      %v1746 = vadd.f32 0.0, %v1745
      %v1747 = vpop.f32.mrf.mxu0
      %1748 = vmatprep.mubr.bf16.mxu0 0
      %1749 = vmatmul.mubr.bf16.gmra.mxu0 %v1537
      %v1750 = vpop.f32.mrf.mxu0
      %v1751 = vadd.f32 0.0, %v1750
      %v1752 = vpop.f32.mrf.mxu0
      %v1753 = vpop.f32.mrf.mxu0
      %v1754 = vadd.f32 0.0, %v1753
      %v1755 = vpop.f32.mrf.mxu0
      %1756 = vmatprep.mubr.bf16.mxu0 0
      %1757 = vmatmul.mubr.bf16.gmra.mxu0 %v1540
      %v1758 = vpop.f32.mrf.mxu0
      %v1759 = vadd.f32 0.0, %v1758
      %v1760 = vpop.f32.mrf.mxu0
      %v1761 = vpop.f32.mrf.mxu0
      %v1762 = vadd.f32 0.0, %v1761
      %v1763 = vpop.f32.mrf.mxu0
      %1764 = vmatprep.mubr.bf16.mxu0 0
      %1765 = vmatmul.mubr.bf16.gmra.mxu0 %v1543
      %v1766 = vpop.f32.mrf.mxu0
      %v1767 = vadd.f32 0.0, %v1766
      %v1768 = vpop.f32.mrf.mxu0
      %v1769 = vpop.f32.mrf.mxu0
      %v1770 = vpop.f32.mrf.mxu0
      %1771 = vdwg.mxu0
      %v1772 = vld [vmem:[#allocation3] sm:$0xff]
      %v1773 = vld [vmem:[#allocation3 + $0x8] sm:$0xff]
      %v1774 = vld [vmem:[#allocation3 + $0x10] sm:$0xff]
      %v1775 = vld [vmem:[#allocation3 + $0x18] sm:$0xff]
      %v1776 = vld [vmem:[#allocation3 + $0x20] sm:$0xff]
      %v1777 = vld [vmem:[#allocation3 + $0x28] sm:$0xff]
      %v1778 = vld [vmem:[#allocation3 + $0x30] sm:$0xff]
      %v1779 = vld [vmem:[#allocation3 + $0x38] sm:$0xff]
      %v1780 = vld [vmem:[#allocation3 + $0x40] sm:$0xff]
      %v1781 = vld [vmem:[#allocation3 + $0x48] sm:$0xff]
      %v1782 = vld [vmem:[#allocation3 + $0x50] sm:$0xff]
      %v1783 = vld [vmem:[#allocation3 + $0x58] sm:$0xff]
      %v1784 = vld [vmem:[#allocation3 + $0x60] sm:$0xff]
      %v1785 = vld [vmem:[#allocation3 + $0x68] sm:$0xff]
      %v1786 = vld [vmem:[#allocation3 + $0x70] sm:$0xff]
      %v1787 = vld [vmem:[#allocation3 + $0x78] sm:$0xff]
      %v1788 = vld [vmem:[#allocation3 + $0x80] sm:$0xff]
      %v1789 = vld [vmem:[#allocation3 + $0x88] sm:$0xff]
      %v1790 = vld [vmem:[#allocation3 + $0x90] sm:$0xff]
      %v1791 = vld [vmem:[#allocation3 + $0x98] sm:$0xff]
      %v1792 = vld [vmem:[#allocation3 + $0xa0] sm:$0xff]
      %v1793 = vld [vmem:[#allocation3 + $0xa8] sm:$0xff]
      %v1794 = vld [vmem:[#allocation3 + $0xb0] sm:$0xff]
      %v1795 = vld [vmem:[#allocation3 + $0xb8] sm:$0xff]
      %v1796 = vld [vmem:[#allocation3 + $0xc0] sm:$0xff]
      %v1797 = vld [vmem:[#allocation3 + $0xc8] sm:$0xff]
      %v1798 = vld [vmem:[#allocation3 + $0xd0] sm:$0xff]
      %v1799 = vld [vmem:[#allocation3 + $0xd8] sm:$0xff]
      %v1800 = vld [vmem:[#allocation3 + $0xe0] sm:$0xff]
      %v1801 = vld [vmem:[#allocation3 + $0xe8] sm:$0xff]
      %v1802 = vld [vmem:[#allocation3 + $0xf0] sm:$0xff]
      %v1803 = vld [vmem:[#allocation3 + $0xf8] sm:$0xff]
      %v1804 = vld [vmem:[#allocation3 + $0x100] sm:$0xff]
      %v1805 = vld [vmem:[#allocation3 + $0x108] sm:$0xff]
      %v1806 = vld [vmem:[#allocation3 + $0x110] sm:$0xff]
      %v1807 = vld [vmem:[#allocation3 + $0x118] sm:$0xff]
      %v1808 = vld [vmem:[#allocation3 + $0x120] sm:$0xff]
      %v1809 = vld [vmem:[#allocation3 + $0x128] sm:$0xff]
      %v1810 = vld [vmem:[#allocation3 + $0x130] sm:$0xff]
      %v1811 = vld [vmem:[#allocation3 + $0x138] sm:$0xff]
      %v1812 = vld [vmem:[#allocation3 + $0x140] sm:$0xff]
      %v1813 = vld [vmem:[#allocation3 + $0x148] sm:$0xff]
      %v1814 = vld [vmem:[#allocation3 + $0x150] sm:$0xff]
      %v1815 = vld [vmem:[#allocation3 + $0x158] sm:$0xff]
      %v1816 = vld [vmem:[#allocation3 + $0x160] sm:$0xff]
      %v1817 = vld [vmem:[#allocation3 + $0x168] sm:$0xff]
      %v1818 = vld [vmem:[#allocation3 + $0x170] sm:$0xff]
      %v1819 = vadd.f32 %v1772, %v1583
      %v1820 = vadd.f32 %v1773, %v1586
      %v1821 = vadd.f32 %v1774, %v1591
      %v1822 = vadd.f32 %v1775, %v1594
      %v1823 = vadd.f32 %v1776, %v1599
      %v1824 = vadd.f32 %v1777, %v1602
      %v1825 = vadd.f32 %v1778, %v1607
      %v1826 = vadd.f32 %v1779, %v1610
      %v1827 = vadd.f32 %v1780, %v1615
      %v1828 = vadd.f32 %v1781, %v1618
      %v1829 = vadd.f32 %v1782, %v1623
      %v1830 = vadd.f32 %v1783, %v1626
      %v1831 = vadd.f32 %v1784, %v1631
      %v1832 = vadd.f32 %v1785, %v1634
      %v1833 = vadd.f32 %v1786, %v1639
      %v1834 = vadd.f32 %v1787, %v1642
      %v1835 = vadd.f32 %v1788, %v1647
      %v1836 = vadd.f32 %v1789, %v1650
      %v1837 = vadd.f32 %v1790, %v1655
      %v1838 = vadd.f32 %v1791, %v1658
      %v1839 = vadd.f32 %v1792, %v1663
      %v1840 = vadd.f32 %v1793, %v1666
      %v1841 = vadd.f32 %v1794, %v1671
      %v1842 = vadd.f32 %v1795, %v1674
      %v1843 = vadd.f32 %v1796, %v1679
      %v1844 = vadd.f32 %v1797, %v1682
      %v1845 = vadd.f32 %v1798, %v1687
      %v1846 = vadd.f32 %v1799, %v1690
      %v1847 = vadd.f32 %v1800, %v1695
      %v1848 = vadd.f32 %v1801, %v1698
      %v1849 = vadd.f32 %v1802, %v1703
      %v1850 = vadd.f32 %v1803, %v1706
      %v1851 = vadd.f32 %v1804, %v1711
      %v1852 = vadd.f32 %v1805, %v1714
      %v1853 = vadd.f32 %v1806, %v1719
      %v1854 = vadd.f32 %v1807, %v1722
      %v1855 = vadd.f32 %v1808, %v1727
      %v1856 = vadd.f32 %v1809, %v1730
      %v1857 = vadd.f32 %v1810, %v1735
      %v1858 = vadd.f32 %v1811, %v1738
      %v1859 = vadd.f32 %v1812, %v1743
      %v1860 = vadd.f32 %v1813, %v1746
      %v1861 = vadd.f32 %v1814, %v1751
      %v1862 = vadd.f32 %v1815, %v1754
      %v1863 = vadd.f32 %v1816, %v1759
      %v1864 = vadd.f32 %v1817, %v1762
      %v1865 = vadd.f32 %v1818, %v1767
      %1866 = vst.msk [vmem:[#allocation3] sm:$0xff] %vm239, %v1819
      %1867 = vst.msk [vmem:[#allocation3 + $0x8] sm:$0xff] %vm239, %v1820
      %1868 = vst.msk [vmem:[#allocation3 + $0x10] sm:$0xff] %vm239, %v1821
      %1869 = vst.msk [vmem:[#allocation3 + $0x18] sm:$0xff] %vm239, %v1822
      %1870 = vst.msk [vmem:[#allocation3 + $0x20] sm:$0xff] %vm239, %v1823
      %1871 = vst.msk [vmem:[#allocation3 + $0x28] sm:$0xff] %vm239, %v1824
      %1872 = vst.msk [vmem:[#allocation3 + $0x30] sm:$0xff] %vm239, %v1825
      %1873 = vst.msk [vmem:[#allocation3 + $0x38] sm:$0xff] %vm239, %v1826
      %1874 = vst.msk [vmem:[#allocation3 + $0x40] sm:$0xff] %vm239, %v1827
      %1875 = vst.msk [vmem:[#allocation3 + $0x48] sm:$0xff] %vm239, %v1828
      %1876 = vst.msk [vmem:[#allocation3 + $0x50] sm:$0xff] %vm239, %v1829
      %1877 = vst.msk [vmem:[#allocation3 + $0x58] sm:$0xff] %vm239, %v1830
      %1878 = vst.msk [vmem:[#allocation3 + $0x60] sm:$0xff] %vm239, %v1831
      %1879 = vst.msk [vmem:[#allocation3 + $0x68] sm:$0xff] %vm239, %v1832
      %1880 = vst.msk [vmem:[#allocation3 + $0x70] sm:$0xff] %vm239, %v1833
      %1881 = vst.msk [vmem:[#allocation3 + $0x78] sm:$0xff] %vm239, %v1834
      %1882 = vst.msk [vmem:[#allocation3 + $0x80] sm:$0xff] %vm239, %v1835
      %1883 = vst.msk [vmem:[#allocation3 + $0x88] sm:$0xff] %vm239, %v1836
      %1884 = vst.msk [vmem:[#allocation3 + $0x90] sm:$0xff] %vm239, %v1837
      %1885 = vst.msk [vmem:[#allocation3 + $0x98] sm:$0xff] %vm239, %v1838
      %1886 = vst.msk [vmem:[#allocation3 + $0xa0] sm:$0xff] %vm239, %v1839
      %1887 = vst.msk [vmem:[#allocation3 + $0xa8] sm:$0xff] %vm239, %v1840
      %1888 = vst.msk [vmem:[#allocation3 + $0xb0] sm:$0xff] %vm239, %v1841
      %1889 = vst.msk [vmem:[#allocation3 + $0xb8] sm:$0xff] %vm239, %v1842
      %1890 = vst.msk [vmem:[#allocation3 + $0xc0] sm:$0xff] %vm239, %v1843
      %1891 = vst.msk [vmem:[#allocation3 + $0xc8] sm:$0xff] %vm239, %v1844
      %1892 = vst.msk [vmem:[#allocation3 + $0xd0] sm:$0xff] %vm239, %v1845
      %1893 = vst.msk [vmem:[#allocation3 + $0xd8] sm:$0xff] %vm239, %v1846
      %1894 = vst.msk [vmem:[#allocation3 + $0xe0] sm:$0xff] %vm239, %v1847
      %1895 = vst.msk [vmem:[#allocation3 + $0xe8] sm:$0xff] %vm239, %v1848
      %1896 = vst.msk [vmem:[#allocation3 + $0xf0] sm:$0xff] %vm239, %v1849
      %1897 = vst.msk [vmem:[#allocation3 + $0xf8] sm:$0xff] %vm239, %v1850
      %1898 = vst.msk [vmem:[#allocation3 + $0x100] sm:$0xff] %vm239, %v1851
      %1899 = vst.msk [vmem:[#allocation3 + $0x108] sm:$0xff] %vm239, %v1852
      %1900 = vst.msk [vmem:[#allocation3 + $0x110] sm:$0xff] %vm239, %v1853
      %1901 = vst.msk [vmem:[#allocation3 + $0x118] sm:$0xff] %vm239, %v1854
      %1902 = vst.msk [vmem:[#allocation3 + $0x120] sm:$0xff] %vm239, %v1855
      %1903 = vst.msk [vmem:[#allocation3 + $0x128] sm:$0xff] %vm239, %v1856
      %1904 = vst.msk [vmem:[#allocation3 + $0x130] sm:$0xff] %vm239, %v1857
      %1905 = vst.msk [vmem:[#allocation3 + $0x138] sm:$0xff] %vm239, %v1858
      %1906 = vst.msk [vmem:[#allocation3 + $0x140] sm:$0xff] %vm239, %v1859
      %1907 = vst.msk [vmem:[#allocation3 + $0x148] sm:$0xff] %vm239, %v1860
      %1908 = vst.msk [vmem:[#allocation3 + $0x150] sm:$0xff] %vm239, %v1861
      %1909 = vst.msk [vmem:[#allocation3 + $0x158] sm:$0xff] %vm239, %v1862
      %1910 = vst.msk [vmem:[#allocation3 + $0x160] sm:$0xff] %vm239, %v1863
      %1911 = vst.msk [vmem:[#allocation3 + $0x168] sm:$0xff] %vm239, %v1864
      %1912 = vst.msk [vmem:[#allocation3 + $0x170] sm:$0xff] %vm239, %v1865
      %v1913 = vld [vmem:[#allocation2 + $0x18] sm:$0xff]
      %v1914 = vld [vmem:[#allocation2 + $0x20] sm:$0xff]
      %v1915 = vld [vmem:[#allocation2 + $0x28] sm:$0xff]
      %v1916 = vld [vmem:[#allocation2 + $0x30] sm:$0xff]
      %v1917 = vld [vmem:[#allocation2 + $0x38] sm:$0xff]
      %v1918 = vld [vmem:[#allocation2 + $0x40] sm:$0xff]
      %v1919 = vld [vmem:[#allocation2 + $0x48] sm:$0xff]
      %v1920 = vld [vmem:[#allocation2 + $0x50] sm:$0xff]
      %v1921 = vld [vmem:[#allocation2 + $0x58] sm:$0xff]
      %v1922 = vld [vmem:[#allocation2 + $0x60] sm:$0xff]
      %v1923 = vld [vmem:[#allocation2 + $0x68] sm:$0xff]
      %v1924 = vld [vmem:[#allocation2 + $0x70] sm:$0xff]
      %v1925 = vld [vmem:[#allocation2 + $0x78] sm:$0xff]
      %v1926 = vld [vmem:[#allocation2 + $0x80] sm:$0xff]
      %v1927 = vld [vmem:[#allocation2 + $0x88] sm:$0xff]
      %v1928 = vld [vmem:[#allocation2 + $0x90] sm:$0xff]
      %v1929 = vld [vmem:[#allocation2 + $0x98] sm:$0xff]
      %v1930 = vld [vmem:[#allocation2 + $0xa0] sm:$0xff]
      %v1931 = vld [vmem:[#allocation2 + $0xa8] sm:$0xff]
      %v1932 = vld [vmem:[#allocation2 + $0xb0] sm:$0xff]
      %v1933 = vld [vmem:[#allocation2 + $0xb8] sm:$0xff]
      %v1934 = vld [vmem:[#allocation2 + $0xc0] sm:$0xff]
      %v1935 = vld [vmem:[#allocation2 + $0xc8] sm:$0xff]
      %v1936 = vld [vmem:[#allocation2 + $0xd0] sm:$0xff]
      %v1937 = vld [vmem:[#allocation2 + $0xd8] sm:$0xff]
      %v1938 = vld [vmem:[#allocation2 + $0xe0] sm:$0xff]
      %v1939 = vld [vmem:[#allocation2 + $0xe8] sm:$0xff]
      %v1940 = vld [vmem:[#allocation2 + $0xf0] sm:$0xff]
      %v1941 = vld [vmem:[#allocation2 + $0xf8] sm:$0xff]
      %v1942 = vld [vmem:[#allocation2 + $0x100] sm:$0xff]
      %v1943 = vld [vmem:[#allocation2 + $0x108] sm:$0xff]
      %v1944 = vld [vmem:[#allocation2 + $0x110] sm:$0xff]
      %v1945 = vld [vmem:[#allocation2 + $0x118] sm:$0xff]
      %v1946 = vld [vmem:[#allocation2 + $0x120] sm:$0xff]
      %v1947 = vld [vmem:[#allocation2 + $0x128] sm:$0xff]
      %v1948 = vld [vmem:[#allocation2 + $0x130] sm:$0xff]
      %v1949 = vld [vmem:[#allocation2 + $0x138] sm:$0xff]
      %v1950 = vld [vmem:[#allocation2 + $0x140] sm:$0xff]
      %v1951 = vld [vmem:[#allocation2 + $0x148] sm:$0xff]
      %v1952 = vld [vmem:[#allocation2 + $0x150] sm:$0xff]
      %v1953 = vld [vmem:[#allocation2 + $0x158] sm:$0xff]
      %v1954 = vld [vmem:[#allocation2 + $0x160] sm:$0xff]
      %v1955 = vld [vmem:[#allocation2 + $0x168] sm:$0xff]
      %v1956 = vld [vmem:[#allocation2 + $0x170] sm:$0xff]
      %v1957 = vld [vmem:[#allocation2 + $0x178] sm:$0xff]
      %v1958 = vld [vmem:[#allocation2 + $0x180] sm:$0xff]
      %v1959 = vld [vmem:[#allocation2 + $0x188] sm:$0xff]
      %v1960 = vpack.c.bf16 %v1914, %v1913
      %v1961 = vpack.c.bf16 %v1916, %v1915
      %v1962 = vpack.c.bf16 %v1918, %v1917
      %v1963 = vpack.c.bf16 %v1920, %v1919
      %v1964 = vpack.c.bf16 %v1922, %v1921
      %v1965 = vpack.c.bf16 %v1924, %v1923
      %v1966 = vpack.c.bf16 %v1926, %v1925
      %v1967 = vpack.c.bf16 %v1928, %v1927
      %v1968 = vpack.c.bf16 %v1930, %v1929
      %v1969 = vpack.c.bf16 %v1932, %v1931
      %v1970 = vpack.c.bf16 %v1934, %v1933
      %v1971 = vpack.c.bf16 %v1936, %v1935
      %v1972 = vpack.c.bf16 %v1938, %v1937
      %v1973 = vpack.c.bf16 %v1940, %v1939
      %v1974 = vpack.c.bf16 %v1942, %v1941
      %v1975 = vpack.c.bf16 %v1944, %v1943
      %v1976 = vpack.c.bf16 %v1946, %v1945
      %v1977 = vpack.c.bf16 %v1948, %v1947
      %v1978 = vpack.c.bf16 %v1950, %v1949
      %v1979 = vpack.c.bf16 %v1952, %v1951
      %v1980 = vpack.c.bf16 %v1954, %v1953
      %v1981 = vpack.c.bf16 %v1956, %v1955
      %v1982 = vpack.c.bf16 %v1958, %v1957
      %v1983 = vpack.c.bf16 %v1959, %v1959
      %s1984 = scalar_lea.vmem %s3, 6
      %v1985 = vld [vmem:[%s1984] sm:$0x3]
      %v1987 = vsel %vm239, %v1960, 0
      %v1990 = vsel %vm239, %v1961, 0
      %v1993 = vsel %vm239, %v1962, 0
      %v1996 = vsel %vm239, %v1963, 0
      %v1999 = vsel %vm239, %v1964, 0
      %v2002 = vsel %vm239, %v1965, 0
      %v2005 = vsel %vm239, %v1966, 0
      %v2008 = vsel %vm239, %v1967, 0
      %v2011 = vsel %vm239, %v1968, 0
      %v2014 = vsel %vm239, %v1969, 0
      %v2017 = vsel %vm239, %v1970, 0
      %v2020 = vsel %vm239, %v1971, 0
      %v2023 = vsel %vm239, %v1972, 0
      %v2026 = vsel %vm239, %v1973, 0
      %v2029 = vsel %vm239, %v1974, 0
      %v2032 = vsel %vm239, %v1975, 0
      %v2035 = vsel %vm239, %v1976, 0
      %v2038 = vsel %vm239, %v1977, 0
      %v2041 = vsel %vm239, %v1978, 0
      %v2044 = vsel %vm239, %v1979, 0
      %v2047 = vsel %vm239, %v1980, 0
      %v2050 = vsel %vm239, %v1981, 0
      %v2053 = vsel %vm239, %v1982, 0
      %v2056 = vsel %vm239, %v1983, 0
      %v2059 = vsel %vm612, %v1985, 0
      %2061 = vmatprep.subr.bf16.mxu0 0
      %2062 = vmatpush1.bf16.msra.mxu0 0
      %2063 = vmatprep.subr.bf16.mxu0 0
      %2064 = vmatpush1.bf16.msra.mxu0 0
      %2065 = vmatprep.subr.bf16.mxu0 0
      %2066 = vmatpush1.bf16.msra.mxu0 0
      %2067 = vmatprep.subr.bf16.mxu0 0
      %2068 = vmatpush1.bf16.msra.mxu0 0
      %2069 = vmatprep.subr.bf16.mxu0 0
      %2070 = vmatpush1.bf16.msra.mxu0 0
      %2071 = vmatprep.subr.bf16.mxu0 0
      %2072 = vmatpush1.bf16.msra.mxu0 0
      %2073 = vmatprep.subr.bf16.mxu0 0
      %2074 = vmatpush1.bf16.msra.mxu0 0
      %2075 = vmatprep.subr.bf16.mxu0 0
      %2076 = vmatpush1.bf16.msra.mxu0 %v2059
      %2077 = vmatprep.subr.bf16.mxu0 0
      %2078 = vmatpush2.bf16.msra.mxu0 0
      %2079 = vmatprep.subr.bf16.mxu0 0
      %2080 = vmatpush2.bf16.msra.mxu0 0
      %2081 = vmatprep.subr.bf16.mxu0 0
      %2082 = vmatpush2.bf16.msra.mxu0 0
      %2083 = vmatprep.subr.bf16.mxu0 0
      %2084 = vmatpush2.bf16.msra.mxu0 0
      %2085 = vmatprep.subr.bf16.mxu0 0
      %2086 = vmatpush2.bf16.msra.mxu0 0
      %2087 = vmatprep.subr.bf16.mxu0 0
      %2088 = vmatpush2.bf16.msra.mxu0 0
      %2089 = vmatprep.subr.bf16.mxu0 0
      %2090 = vmatpush2.bf16.msra.mxu0 0
      %2091 = vmatprep.subr.bf16.mxu0 0
      %2092 = vmatpush2.bf16.msra.mxu0 0
      %2093 = vmatprep.mubr.bf16.mxu0 0
      %2094 = vmatmul.mubr.bf16.gmra.mxu0 %v1987
      %v2095 = vpop.f32.mrf.mxu0
      %v2096 = vadd.f32 0.0, %v2095
      %v2097 = vpop.f32.mrf.mxu0
      %v2098 = vpop.f32.mrf.mxu0
      %v2099 = vadd.f32 0.0, %v2098
      %v2100 = vpop.f32.mrf.mxu0
      %2101 = vmatprep.mubr.bf16.mxu0 0
      %2102 = vmatmul.mubr.bf16.gmra.mxu0 %v1990
      %v2103 = vpop.f32.mrf.mxu0
      %v2104 = vadd.f32 0.0, %v2103
      %v2105 = vpop.f32.mrf.mxu0
      %v2106 = vpop.f32.mrf.mxu0
      %v2107 = vadd.f32 0.0, %v2106
      %v2108 = vpop.f32.mrf.mxu0
      %2109 = vmatprep.mubr.bf16.mxu0 0
      %2110 = vmatmul.mubr.bf16.gmra.mxu0 %v1993
      %v2111 = vpop.f32.mrf.mxu0
      %v2112 = vadd.f32 0.0, %v2111
      %v2113 = vpop.f32.mrf.mxu0
      %v2114 = vpop.f32.mrf.mxu0
      %v2115 = vadd.f32 0.0, %v2114
      %v2116 = vpop.f32.mrf.mxu0
      %2117 = vmatprep.mubr.bf16.mxu0 0
      %2118 = vmatmul.mubr.bf16.gmra.mxu0 %v1996
      %v2119 = vpop.f32.mrf.mxu0
      %v2120 = vadd.f32 0.0, %v2119
      %v2121 = vpop.f32.mrf.mxu0
      %v2122 = vpop.f32.mrf.mxu0
      %v2123 = vadd.f32 0.0, %v2122
      %v2124 = vpop.f32.mrf.mxu0
      %2125 = vmatprep.mubr.bf16.mxu0 0
      %2126 = vmatmul.mubr.bf16.gmra.mxu0 %v1999
      %v2127 = vpop.f32.mrf.mxu0
      %v2128 = vadd.f32 0.0, %v2127
      %v2129 = vpop.f32.mrf.mxu0
      %v2130 = vpop.f32.mrf.mxu0
      %v2131 = vadd.f32 0.0, %v2130
      %v2132 = vpop.f32.mrf.mxu0
      %2133 = vmatprep.mubr.bf16.mxu0 0
      %2134 = vmatmul.mubr.bf16.gmra.mxu0 %v2002
      %v2135 = vpop.f32.mrf.mxu0
      %v2136 = vadd.f32 0.0, %v2135
      %v2137 = vpop.f32.mrf.mxu0
      %v2138 = vpop.f32.mrf.mxu0
      %v2139 = vadd.f32 0.0, %v2138
      %v2140 = vpop.f32.mrf.mxu0
      %2141 = vmatprep.mubr.bf16.mxu0 0
      %2142 = vmatmul.mubr.bf16.gmra.mxu0 %v2005
      %v2143 = vpop.f32.mrf.mxu0
      %v2144 = vadd.f32 0.0, %v2143
      %v2145 = vpop.f32.mrf.mxu0
      %v2146 = vpop.f32.mrf.mxu0
      %v2147 = vadd.f32 0.0, %v2146
      %v2148 = vpop.f32.mrf.mxu0
      %2149 = vmatprep.mubr.bf16.mxu0 0
      %2150 = vmatmul.mubr.bf16.gmra.mxu0 %v2008
      %v2151 = vpop.f32.mrf.mxu0
      %v2152 = vadd.f32 0.0, %v2151
      %v2153 = vpop.f32.mrf.mxu0
      %v2154 = vpop.f32.mrf.mxu0
      %v2155 = vadd.f32 0.0, %v2154
      %v2156 = vpop.f32.mrf.mxu0
      %2157 = vmatprep.mubr.bf16.mxu0 0
      %2158 = vmatmul.mubr.bf16.gmra.mxu0 %v2011
      %v2159 = vpop.f32.mrf.mxu0
      %v2160 = vadd.f32 0.0, %v2159
      %v2161 = vpop.f32.mrf.mxu0
      %v2162 = vpop.f32.mrf.mxu0
      %v2163 = vadd.f32 0.0, %v2162
      %v2164 = vpop.f32.mrf.mxu0
      %2165 = vmatprep.mubr.bf16.mxu0 0
      %2166 = vmatmul.mubr.bf16.gmra.mxu0 %v2014
      %v2167 = vpop.f32.mrf.mxu0
      %v2168 = vadd.f32 0.0, %v2167
      %v2169 = vpop.f32.mrf.mxu0
      %v2170 = vpop.f32.mrf.mxu0
      %v2171 = vadd.f32 0.0, %v2170
      %v2172 = vpop.f32.mrf.mxu0
      %2173 = vmatprep.mubr.bf16.mxu0 0
      %2174 = vmatmul.mubr.bf16.gmra.mxu0 %v2017
      %v2175 = vpop.f32.mrf.mxu0
      %v2176 = vadd.f32 0.0, %v2175
      %v2177 = vpop.f32.mrf.mxu0
      %v2178 = vpop.f32.mrf.mxu0
      %v2179 = vadd.f32 0.0, %v2178
      %v2180 = vpop.f32.mrf.mxu0
      %2181 = vmatprep.mubr.bf16.mxu0 0
      %2182 = vmatmul.mubr.bf16.gmra.mxu0 %v2020
      %v2183 = vpop.f32.mrf.mxu0
      %v2184 = vadd.f32 0.0, %v2183
      %v2185 = vpop.f32.mrf.mxu0
      %v2186 = vpop.f32.mrf.mxu0
      %v2187 = vadd.f32 0.0, %v2186
      %v2188 = vpop.f32.mrf.mxu0
      %2189 = vmatprep.mubr.bf16.mxu0 0
      %2190 = vmatmul.mubr.bf16.gmra.mxu0 %v2023
      %v2191 = vpop.f32.mrf.mxu0
      %v2192 = vadd.f32 0.0, %v2191
      %v2193 = vpop.f32.mrf.mxu0
      %v2194 = vpop.f32.mrf.mxu0
      %v2195 = vadd.f32 0.0, %v2194
      %v2196 = vpop.f32.mrf.mxu0
      %2197 = vmatprep.mubr.bf16.mxu0 0
      %2198 = vmatmul.mubr.bf16.gmra.mxu0 %v2026
      %v2199 = vpop.f32.mrf.mxu0
      %v2200 = vadd.f32 0.0, %v2199
      %v2201 = vpop.f32.mrf.mxu0
      %v2202 = vpop.f32.mrf.mxu0
      %v2203 = vadd.f32 0.0, %v2202
      %v2204 = vpop.f32.mrf.mxu0
      %2205 = vmatprep.mubr.bf16.mxu0 0
      %2206 = vmatmul.mubr.bf16.gmra.mxu0 %v2029
      %v2207 = vpop.f32.mrf.mxu0
      %v2208 = vadd.f32 0.0, %v2207
      %v2209 = vpop.f32.mrf.mxu0
      %v2210 = vpop.f32.mrf.mxu0
      %v2211 = vadd.f32 0.0, %v2210
      %v2212 = vpop.f32.mrf.mxu0
      %2213 = vmatprep.mubr.bf16.mxu0 0
      %2214 = vmatmul.mubr.bf16.gmra.mxu0 %v2032
      %v2215 = vpop.f32.mrf.mxu0
      %v2216 = vadd.f32 0.0, %v2215
      %v2217 = vpop.f32.mrf.mxu0
      %v2218 = vpop.f32.mrf.mxu0
      %v2219 = vadd.f32 0.0, %v2218
      %v2220 = vpop.f32.mrf.mxu0
      %2221 = vmatprep.mubr.bf16.mxu0 0
      %2222 = vmatmul.mubr.bf16.gmra.mxu0 %v2035
      %v2223 = vpop.f32.mrf.mxu0
      %v2224 = vadd.f32 0.0, %v2223
      %v2225 = vpop.f32.mrf.mxu0
      %v2226 = vpop.f32.mrf.mxu0
      %v2227 = vadd.f32 0.0, %v2226
      %v2228 = vpop.f32.mrf.mxu0
      %2229 = vmatprep.mubr.bf16.mxu0 0
      %2230 = vmatmul.mubr.bf16.gmra.mxu0 %v2038
      %v2231 = vpop.f32.mrf.mxu0
      %v2232 = vadd.f32 0.0, %v2231
      %v2233 = vpop.f32.mrf.mxu0
      %v2234 = vpop.f32.mrf.mxu0
      %v2235 = vadd.f32 0.0, %v2234
      %v2236 = vpop.f32.mrf.mxu0
      %2237 = vmatprep.mubr.bf16.mxu0 0
      %2238 = vmatmul.mubr.bf16.gmra.mxu0 %v2041
      %v2239 = vpop.f32.mrf.mxu0
      %v2240 = vadd.f32 0.0, %v2239
      %v2241 = vpop.f32.mrf.mxu0
      %v2242 = vpop.f32.mrf.mxu0
      %v2243 = vadd.f32 0.0, %v2242
      %v2244 = vpop.f32.mrf.mxu0
      %2245 = vmatprep.mubr.bf16.mxu0 0
      %2246 = vmatmul.mubr.bf16.gmra.mxu0 %v2044
      %v2247 = vpop.f32.mrf.mxu0
      %v2248 = vadd.f32 0.0, %v2247
      %v2249 = vpop.f32.mrf.mxu0
      %v2250 = vpop.f32.mrf.mxu0
      %v2251 = vadd.f32 0.0, %v2250
      %v2252 = vpop.f32.mrf.mxu0
      %2253 = vmatprep.mubr.bf16.mxu0 0
      %2254 = vmatmul.mubr.bf16.gmra.mxu0 %v2047
      %v2255 = vpop.f32.mrf.mxu0
      %v2256 = vadd.f32 0.0, %v2255
      %v2257 = vpop.f32.mrf.mxu0
      %v2258 = vpop.f32.mrf.mxu0
      %v2259 = vadd.f32 0.0, %v2258
      %v2260 = vpop.f32.mrf.mxu0
      %2261 = vmatprep.mubr.bf16.mxu0 0
      %2262 = vmatmul.mubr.bf16.gmra.mxu0 %v2050
      %v2263 = vpop.f32.mrf.mxu0
      %v2264 = vadd.f32 0.0, %v2263
      %v2265 = vpop.f32.mrf.mxu0
      %v2266 = vpop.f32.mrf.mxu0
      %v2267 = vadd.f32 0.0, %v2266
      %v2268 = vpop.f32.mrf.mxu0
      %2269 = vmatprep.mubr.bf16.mxu0 0
      %2270 = vmatmul.mubr.bf16.gmra.mxu0 %v2053
      %v2271 = vpop.f32.mrf.mxu0
      %v2272 = vadd.f32 0.0, %v2271
      %v2273 = vpop.f32.mrf.mxu0
      %v2274 = vpop.f32.mrf.mxu0
      %v2275 = vadd.f32 0.0, %v2274
      %v2276 = vpop.f32.mrf.mxu0
      %2277 = vmatprep.mubr.bf16.mxu0 0
      %2278 = vmatmul.mubr.bf16.gmra.mxu0 %v2056
      %v2279 = vpop.f32.mrf.mxu0
      %v2280 = vadd.f32 0.0, %v2279
      %v2281 = vpop.f32.mrf.mxu0
      %v2282 = vpop.f32.mrf.mxu0
      %v2283 = vpop.f32.mrf.mxu0
      %2284 = vdwg.mxu0
      %v2285 = vld [vmem:[#allocation3] sm:$0xff]
      %v2286 = vld [vmem:[#allocation3 + $0x8] sm:$0xff]
      %v2287 = vld [vmem:[#allocation3 + $0x10] sm:$0xff]
      %v2288 = vld [vmem:[#allocation3 + $0x18] sm:$0xff]
      %v2289 = vld [vmem:[#allocation3 + $0x20] sm:$0xff]
      %v2290 = vld [vmem:[#allocation3 + $0x28] sm:$0xff]
      %v2291 = vld [vmem:[#allocation3 + $0x30] sm:$0xff]
      %v2292 = vld [vmem:[#allocation3 + $0x38] sm:$0xff]
      %v2293 = vld [vmem:[#allocation3 + $0x40] sm:$0xff]
      %v2294 = vld [vmem:[#allocation3 + $0x48] sm:$0xff]
      %v2295 = vld [vmem:[#allocation3 + $0x50] sm:$0xff]
      %v2296 = vld [vmem:[#allocation3 + $0x58] sm:$0xff]
      %v2297 = vld [vmem:[#allocation3 + $0x60] sm:$0xff]
      %v2298 = vld [vmem:[#allocation3 + $0x68] sm:$0xff]
      %v2299 = vld [vmem:[#allocation3 + $0x70] sm:$0xff]
      %v2300 = vld [vmem:[#allocation3 + $0x78] sm:$0xff]
      %v2301 = vld [vmem:[#allocation3 + $0x80] sm:$0xff]
      %v2302 = vld [vmem:[#allocation3 + $0x88] sm:$0xff]
      %v2303 = vld [vmem:[#allocation3 + $0x90] sm:$0xff]
      %v2304 = vld [vmem:[#allocation3 + $0x98] sm:$0xff]
      %v2305 = vld [vmem:[#allocation3 + $0xa0] sm:$0xff]
      %v2306 = vld [vmem:[#allocation3 + $0xa8] sm:$0xff]
      %v2307 = vld [vmem:[#allocation3 + $0xb0] sm:$0xff]
      %v2308 = vld [vmem:[#allocation3 + $0xb8] sm:$0xff]
      %v2309 = vld [vmem:[#allocation3 + $0xc0] sm:$0xff]
      %v2310 = vld [vmem:[#allocation3 + $0xc8] sm:$0xff]
      %v2311 = vld [vmem:[#allocation3 + $0xd0] sm:$0xff]
      %v2312 = vld [vmem:[#allocation3 + $0xd8] sm:$0xff]
      %v2313 = vld [vmem:[#allocation3 + $0xe0] sm:$0xff]
      %v2314 = vld [vmem:[#allocation3 + $0xe8] sm:$0xff]
      %v2315 = vld [vmem:[#allocation3 + $0xf0] sm:$0xff]
      %v2316 = vld [vmem:[#allocation3 + $0xf8] sm:$0xff]
      %v2317 = vld [vmem:[#allocation3 + $0x100] sm:$0xff]
      %v2318 = vld [vmem:[#allocation3 + $0x108] sm:$0xff]
      %v2319 = vld [vmem:[#allocation3 + $0x110] sm:$0xff]
      %v2320 = vld [vmem:[#allocation3 + $0x118] sm:$0xff]
      %v2321 = vld [vmem:[#allocation3 + $0x120] sm:$0xff]
      %v2322 = vld [vmem:[#allocation3 + $0x128] sm:$0xff]
      %v2323 = vld [vmem:[#allocation3 + $0x130] sm:$0xff]
      %v2324 = vld [vmem:[#allocation3 + $0x138] sm:$0xff]
      %v2325 = vld [vmem:[#allocation3 + $0x140] sm:$0xff]
      %v2326 = vld [vmem:[#allocation3 + $0x148] sm:$0xff]
      %v2327 = vld [vmem:[#allocation3 + $0x150] sm:$0xff]
      %v2328 = vld [vmem:[#allocation3 + $0x158] sm:$0xff]
      %v2329 = vld [vmem:[#allocation3 + $0x160] sm:$0xff]
      %v2330 = vld [vmem:[#allocation3 + $0x168] sm:$0xff]
      %v2331 = vld [vmem:[#allocation3 + $0x170] sm:$0xff]
      %v2332 = vadd.f32 %v2285, %v2096
      %v2333 = vadd.f32 %v2286, %v2099
      %v2334 = vadd.f32 %v2287, %v2104
      %v2335 = vadd.f32 %v2288, %v2107
      %v2336 = vadd.f32 %v2289, %v2112
      %v2337 = vadd.f32 %v2290, %v2115
      %v2338 = vadd.f32 %v2291, %v2120
      %v2339 = vadd.f32 %v2292, %v2123
      %v2340 = vadd.f32 %v2293, %v2128
      %v2341 = vadd.f32 %v2294, %v2131
      %v2342 = vadd.f32 %v2295, %v2136
      %v2343 = vadd.f32 %v2296, %v2139
      %v2344 = vadd.f32 %v2297, %v2144
      %v2345 = vadd.f32 %v2298, %v2147
      %v2346 = vadd.f32 %v2299, %v2152
      %v2347 = vadd.f32 %v2300, %v2155
      %v2348 = vadd.f32 %v2301, %v2160
      %v2349 = vadd.f32 %v2302, %v2163
      %v2350 = vadd.f32 %v2303, %v2168
      %v2351 = vadd.f32 %v2304, %v2171
      %v2352 = vadd.f32 %v2305, %v2176
      %v2353 = vadd.f32 %v2306, %v2179
      %v2354 = vadd.f32 %v2307, %v2184
      %v2355 = vadd.f32 %v2308, %v2187
      %v2356 = vadd.f32 %v2309, %v2192
      %v2357 = vadd.f32 %v2310, %v2195
      %v2358 = vadd.f32 %v2311, %v2200
      %v2359 = vadd.f32 %v2312, %v2203
      %v2360 = vadd.f32 %v2313, %v2208
      %v2361 = vadd.f32 %v2314, %v2211
      %v2362 = vadd.f32 %v2315, %v2216
      %v2363 = vadd.f32 %v2316, %v2219
      %v2364 = vadd.f32 %v2317, %v2224
      %v2365 = vadd.f32 %v2318, %v2227
      %v2366 = vadd.f32 %v2319, %v2232
      %v2367 = vadd.f32 %v2320, %v2235
      %v2368 = vadd.f32 %v2321, %v2240
      %v2369 = vadd.f32 %v2322, %v2243
      %v2370 = vadd.f32 %v2323, %v2248
      %v2371 = vadd.f32 %v2324, %v2251
      %v2372 = vadd.f32 %v2325, %v2256
      %v2373 = vadd.f32 %v2326, %v2259
      %v2374 = vadd.f32 %v2327, %v2264
      %v2375 = vadd.f32 %v2328, %v2267
      %v2376 = vadd.f32 %v2329, %v2272
      %v2377 = vadd.f32 %v2330, %v2275
      %v2378 = vadd.f32 %v2331, %v2280
      %2379 = vst.msk [vmem:[#allocation3] sm:$0xff] %vm239, %v2332
      %2380 = vst.msk [vmem:[#allocation3 + $0x8] sm:$0xff] %vm239, %v2333
      %2381 = vst.msk [vmem:[#allocation3 + $0x10] sm:$0xff] %vm239, %v2334
      %2382 = vst.msk [vmem:[#allocation3 + $0x18] sm:$0xff] %vm239, %v2335
      %2383 = vst.msk [vmem:[#allocation3 + $0x20] sm:$0xff] %vm239, %v2336
      %2384 = vst.msk [vmem:[#allocation3 + $0x28] sm:$0xff] %vm239, %v2337
      %2385 = vst.msk [vmem:[#allocation3 + $0x30] sm:$0xff] %vm239, %v2338
      %2386 = vst.msk [vmem:[#allocation3 + $0x38] sm:$0xff] %vm239, %v2339
      %2387 = vst.msk [vmem:[#allocation3 + $0x40] sm:$0xff] %vm239, %v2340
      %2388 = vst.msk [vmem:[#allocation3 + $0x48] sm:$0xff] %vm239, %v2341
      %2389 = vst.msk [vmem:[#allocation3 + $0x50] sm:$0xff] %vm239, %v2342
      %2390 = vst.msk [vmem:[#allocation3 + $0x58] sm:$0xff] %vm239, %v2343
      %2391 = vst.msk [vmem:[#allocation3 + $0x60] sm:$0xff] %vm239, %v2344
      %2392 = vst.msk [vmem:[#allocation3 + $0x68] sm:$0xff] %vm239, %v2345
      %2393 = vst.msk [vmem:[#allocation3 + $0x70] sm:$0xff] %vm239, %v2346
      %2394 = vst.msk [vmem:[#allocation3 + $0x78] sm:$0xff] %vm239, %v2347
      %2395 = vst.msk [vmem:[#allocation3 + $0x80] sm:$0xff] %vm239, %v2348
      %2396 = vst.msk [vmem:[#allocation3 + $0x88] sm:$0xff] %vm239, %v2349
      %2397 = vst.msk [vmem:[#allocation3 + $0x90] sm:$0xff] %vm239, %v2350
      %2398 = vst.msk [vmem:[#allocation3 + $0x98] sm:$0xff] %vm239, %v2351
      %2399 = vst.msk [vmem:[#allocation3 + $0xa0] sm:$0xff] %vm239, %v2352
      %2400 = vst.msk [vmem:[#allocation3 + $0xa8] sm:$0xff] %vm239, %v2353
      %2401 = vst.msk [vmem:[#allocation3 + $0xb0] sm:$0xff] %vm239, %v2354
      %2402 = vst.msk [vmem:[#allocation3 + $0xb8] sm:$0xff] %vm239, %v2355
      %2403 = vst.msk [vmem:[#allocation3 + $0xc0] sm:$0xff] %vm239, %v2356
      %2404 = vst.msk [vmem:[#allocation3 + $0xc8] sm:$0xff] %vm239, %v2357
      %2405 = vst.msk [vmem:[#allocation3 + $0xd0] sm:$0xff] %vm239, %v2358
      %2406 = vst.msk [vmem:[#allocation3 + $0xd8] sm:$0xff] %vm239, %v2359
      %2407 = vst.msk [vmem:[#allocation3 + $0xe0] sm:$0xff] %vm239, %v2360
      %2408 = vst.msk [vmem:[#allocation3 + $0xe8] sm:$0xff] %vm239, %v2361
      %2409 = vst.msk [vmem:[#allocation3 + $0xf0] sm:$0xff] %vm239, %v2362
      %2410 = vst.msk [vmem:[#allocation3 + $0xf8] sm:$0xff] %vm239, %v2363
      %2411 = vst.msk [vmem:[#allocation3 + $0x100] sm:$0xff] %vm239, %v2364
      %2412 = vst.msk [vmem:[#allocation3 + $0x108] sm:$0xff] %vm239, %v2365
      %2413 = vst.msk [vmem:[#allocation3 + $0x110] sm:$0xff] %vm239, %v2366
      %2414 = vst.msk [vmem:[#allocation3 + $0x118] sm:$0xff] %vm239, %v2367
      %2415 = vst.msk [vmem:[#allocation3 + $0x120] sm:$0xff] %vm239, %v2368
      %2416 = vst.msk [vmem:[#allocation3 + $0x128] sm:$0xff] %vm239, %v2369
      %2417 = vst.msk [vmem:[#allocation3 + $0x130] sm:$0xff] %vm239, %v2370
      %2418 = vst.msk [vmem:[#allocation3 + $0x138] sm:$0xff] %vm239, %v2371
      %2419 = vst.msk [vmem:[#allocation3 + $0x140] sm:$0xff] %vm239, %v2372
      %2420 = vst.msk [vmem:[#allocation3 + $0x148] sm:$0xff] %vm239, %v2373
      %2421 = vst.msk [vmem:[#allocation3 + $0x150] sm:$0xff] %vm239, %v2374
      %2422 = vst.msk [vmem:[#allocation3 + $0x158] sm:$0xff] %vm239, %v2375
      %2423 = vst.msk [vmem:[#allocation3 + $0x160] sm:$0xff] %vm239, %v2376
      %2424 = vst.msk [vmem:[#allocation3 + $0x168] sm:$0xff] %vm239, %v2377
      %2425 = vst.msk [vmem:[#allocation3 + $0x170] sm:$0xff] %vm239, %v2378
      %v2426 = vld [vmem:[#allocation2 + $0x19] sm:$0xff]
      %v2427 = vld [vmem:[#allocation2 + $0x21] sm:$0xff]
      %v2428 = vld [vmem:[#allocation2 + $0x29] sm:$0xff]
      %v2429 = vld [vmem:[#allocation2 + $0x31] sm:$0xff]
      %v2430 = vld [vmem:[#allocation2 + $0x39] sm:$0xff]
      %v2431 = vld [vmem:[#allocation2 + $0x41] sm:$0xff]
      %v2432 = vld [vmem:[#allocation2 + $0x49] sm:$0xff]
      %v2433 = vld [vmem:[#allocation2 + $0x51] sm:$0xff]
      %v2434 = vld [vmem:[#allocation2 + $0x59] sm:$0xff]
      %v2435 = vld [vmem:[#allocation2 + $0x61] sm:$0xff]
      %v2436 = vld [vmem:[#allocation2 + $0x69] sm:$0xff]
      %v2437 = vld [vmem:[#allocation2 + $0x71] sm:$0xff]
      %v2438 = vld [vmem:[#allocation2 + $0x79] sm:$0xff]
      %v2439 = vld [vmem:[#allocation2 + $0x81] sm:$0xff]
      %v2440 = vld [vmem:[#allocation2 + $0x89] sm:$0xff]
      %v2441 = vld [vmem:[#allocation2 + $0x91] sm:$0xff]
      %v2442 = vld [vmem:[#allocation2 + $0x99] sm:$0xff]
      %v2443 = vld [vmem:[#allocation2 + $0xa1] sm:$0xff]
      %v2444 = vld [vmem:[#allocation2 + $0xa9] sm:$0xff]
      %v2445 = vld [vmem:[#allocation2 + $0xb1] sm:$0xff]
      %v2446 = vld [vmem:[#allocation2 + $0xb9] sm:$0xff]
      %v2447 = vld [vmem:[#allocation2 + $0xc1] sm:$0xff]
      %v2448 = vld [vmem:[#allocation2 + $0xc9] sm:$0xff]
      %v2449 = vld [vmem:[#allocation2 + $0xd1] sm:$0xff]
      %v2450 = vld [vmem:[#allocation2 + $0xd9] sm:$0xff]
      %v2451 = vld [vmem:[#allocation2 + $0xe1] sm:$0xff]
      %v2452 = vld [vmem:[#allocation2 + $0xe9] sm:$0xff]
      %v2453 = vld [vmem:[#allocation2 + $0xf1] sm:$0xff]
      %v2454 = vld [vmem:[#allocation2 + $0xf9] sm:$0xff]
      %v2455 = vld [vmem:[#allocation2 + $0x101] sm:$0xff]
      %v2456 = vld [vmem:[#allocation2 + $0x109] sm:$0xff]
      %v2457 = vld [vmem:[#allocation2 + $0x111] sm:$0xff]
      %v2458 = vld [vmem:[#allocation2 + $0x119] sm:$0xff]
      %v2459 = vld [vmem:[#allocation2 + $0x121] sm:$0xff]
      %v2460 = vld [vmem:[#allocation2 + $0x129] sm:$0xff]
      %v2461 = vld [vmem:[#allocation2 + $0x131] sm:$0xff]
      %v2462 = vld [vmem:[#allocation2 + $0x139] sm:$0xff]
      %v2463 = vld [vmem:[#allocation2 + $0x141] sm:$0xff]
      %v2464 = vld [vmem:[#allocation2 + $0x149] sm:$0xff]
      %v2465 = vld [vmem:[#allocation2 + $0x151] sm:$0xff]
      %v2466 = vld [vmem:[#allocation2 + $0x159] sm:$0xff]
      %v2467 = vld [vmem:[#allocation2 + $0x161] sm:$0xff]
      %v2468 = vld [vmem:[#allocation2 + $0x169] sm:$0xff]
      %v2469 = vld [vmem:[#allocation2 + $0x171] sm:$0xff]
      %v2470 = vld [vmem:[#allocation2 + $0x179] sm:$0xff]
      %v2471 = vld [vmem:[#allocation2 + $0x181] sm:$0xff]
      %v2472 = vld [vmem:[#allocation2 + $0x189] sm:$0xff]
      %v2473 = vpack.c.bf16 %v2427, %v2426
      %v2474 = vpack.c.bf16 %v2429, %v2428
      %v2475 = vpack.c.bf16 %v2431, %v2430
      %v2476 = vpack.c.bf16 %v2433, %v2432
      %v2477 = vpack.c.bf16 %v2435, %v2434
      %v2478 = vpack.c.bf16 %v2437, %v2436
      %v2479 = vpack.c.bf16 %v2439, %v2438
      %v2480 = vpack.c.bf16 %v2441, %v2440
      %v2481 = vpack.c.bf16 %v2443, %v2442
      %v2482 = vpack.c.bf16 %v2445, %v2444
      %v2483 = vpack.c.bf16 %v2447, %v2446
      %v2484 = vpack.c.bf16 %v2449, %v2448
      %v2485 = vpack.c.bf16 %v2451, %v2450
      %v2486 = vpack.c.bf16 %v2453, %v2452
      %v2487 = vpack.c.bf16 %v2455, %v2454
      %v2488 = vpack.c.bf16 %v2457, %v2456
      %v2489 = vpack.c.bf16 %v2459, %v2458
      %v2490 = vpack.c.bf16 %v2461, %v2460
      %v2491 = vpack.c.bf16 %v2463, %v2462
      %v2492 = vpack.c.bf16 %v2465, %v2464
      %v2493 = vpack.c.bf16 %v2467, %v2466
      %v2494 = vpack.c.bf16 %v2469, %v2468
      %v2495 = vpack.c.bf16 %v2471, %v2470
      %v2496 = vpack.c.bf16 %v2472, %v2472
      %s2497 = scalar_lea.vmem %s3, 8
      %v2498 = vld [vmem:[%s2497] sm:$0x3]
      %v2500 = vsel %vm239, %v2473, 0
      %v2503 = vsel %vm239, %v2474, 0
      %v2506 = vsel %vm239, %v2475, 0
      %v2509 = vsel %vm239, %v2476, 0
      %v2512 = vsel %vm239, %v2477, 0
      %v2515 = vsel %vm239, %v2478, 0
      %v2518 = vsel %vm239, %v2479, 0
      %v2521 = vsel %vm239, %v2480, 0
      %v2524 = vsel %vm239, %v2481, 0
      %v2527 = vsel %vm239, %v2482, 0
      %v2530 = vsel %vm239, %v2483, 0
      %v2533 = vsel %vm239, %v2484, 0
      %v2536 = vsel %vm239, %v2485, 0
      %v2539 = vsel %vm239, %v2486, 0
      %v2542 = vsel %vm239, %v2487, 0
      %v2545 = vsel %vm239, %v2488, 0
      %v2548 = vsel %vm239, %v2489, 0
      %v2551 = vsel %vm239, %v2490, 0
      %v2554 = vsel %vm239, %v2491, 0
      %v2557 = vsel %vm239, %v2492, 0
      %v2560 = vsel %vm239, %v2493, 0
      %v2563 = vsel %vm239, %v2494, 0
      %v2566 = vsel %vm239, %v2495, 0
      %v2569 = vsel %vm239, %v2496, 0
      %v2572 = vsel %vm612, %v2498, 0
      %2574 = vmatprep.subr.bf16.mxu0 0
      %2575 = vmatpush1.bf16.msra.mxu0 0
      %2576 = vmatprep.subr.bf16.mxu0 0
      %2577 = vmatpush1.bf16.msra.mxu0 0
      %2578 = vmatprep.subr.bf16.mxu0 0
      %2579 = vmatpush1.bf16.msra.mxu0 0
      %2580 = vmatprep.subr.bf16.mxu0 0
      %2581 = vmatpush1.bf16.msra.mxu0 0
      %2582 = vmatprep.subr.bf16.mxu0 0
      %2583 = vmatpush1.bf16.msra.mxu0 0
      %2584 = vmatprep.subr.bf16.mxu0 0
      %2585 = vmatpush1.bf16.msra.mxu0 0
      %2586 = vmatprep.subr.bf16.mxu0 0
      %2587 = vmatpush1.bf16.msra.mxu0 0
      %2588 = vmatprep.subr.bf16.mxu0 0
      %2589 = vmatpush1.bf16.msra.mxu0 %v2572
      %2590 = vmatprep.subr.bf16.mxu0 0
      %2591 = vmatpush2.bf16.msra.mxu0 0
      %2592 = vmatprep.subr.bf16.mxu0 0
      %2593 = vmatpush2.bf16.msra.mxu0 0
      %2594 = vmatprep.subr.bf16.mxu0 0
      %2595 = vmatpush2.bf16.msra.mxu0 0
      %2596 = vmatprep.subr.bf16.mxu0 0
      %2597 = vmatpush2.bf16.msra.mxu0 0
      %2598 = vmatprep.subr.bf16.mxu0 0
      %2599 = vmatpush2.bf16.msra.mxu0 0
      %2600 = vmatprep.subr.bf16.mxu0 0
      %2601 = vmatpush2.bf16.msra.mxu0 0
      %2602 = vmatprep.subr.bf16.mxu0 0
      %2603 = vmatpush2.bf16.msra.mxu0 0
      %2604 = vmatprep.subr.bf16.mxu0 0
      %2605 = vmatpush2.bf16.msra.mxu0 0
      %2606 = vmatprep.mubr.bf16.mxu0 0
      %2607 = vmatmul.mubr.bf16.gmra.mxu0 %v2500
      %v2608 = vpop.f32.mrf.mxu0
      %v2609 = vadd.f32 0.0, %v2608
      %v2610 = vpop.f32.mrf.mxu0
      %v2611 = vpop.f32.mrf.mxu0
      %v2612 = vadd.f32 0.0, %v2611
      %v2613 = vpop.f32.mrf.mxu0
      %2614 = vmatprep.mubr.bf16.mxu0 0
      %2615 = vmatmul.mubr.bf16.gmra.mxu0 %v2503
      %v2616 = vpop.f32.mrf.mxu0
      %v2617 = vadd.f32 0.0, %v2616
      %v2618 = vpop.f32.mrf.mxu0
      %v2619 = vpop.f32.mrf.mxu0
      %v2620 = vadd.f32 0.0, %v2619
      %v2621 = vpop.f32.mrf.mxu0
      %2622 = vmatprep.mubr.bf16.mxu0 0
      %2623 = vmatmul.mubr.bf16.gmra.mxu0 %v2506
      %v2624 = vpop.f32.mrf.mxu0
      %v2625 = vadd.f32 0.0, %v2624
      %v2626 = vpop.f32.mrf.mxu0
      %v2627 = vpop.f32.mrf.mxu0
      %v2628 = vadd.f32 0.0, %v2627
      %v2629 = vpop.f32.mrf.mxu0
      %2630 = vmatprep.mubr.bf16.mxu0 0
      %2631 = vmatmul.mubr.bf16.gmra.mxu0 %v2509
      %v2632 = vpop.f32.mrf.mxu0
      %v2633 = vadd.f32 0.0, %v2632
      %v2634 = vpop.f32.mrf.mxu0
      %v2635 = vpop.f32.mrf.mxu0
      %v2636 = vadd.f32 0.0, %v2635
      %v2637 = vpop.f32.mrf.mxu0
      %2638 = vmatprep.mubr.bf16.mxu0 0
      %2639 = vmatmul.mubr.bf16.gmra.mxu0 %v2512
      %v2640 = vpop.f32.mrf.mxu0
      %v2641 = vadd.f32 0.0, %v2640
      %v2642 = vpop.f32.mrf.mxu0
      %v2643 = vpop.f32.mrf.mxu0
      %v2644 = vadd.f32 0.0, %v2643
      %v2645 = vpop.f32.mrf.mxu0
      %2646 = vmatprep.mubr.bf16.mxu0 0
      %2647 = vmatmul.mubr.bf16.gmra.mxu0 %v2515
      %v2648 = vpop.f32.mrf.mxu0
      %v2649 = vadd.f32 0.0, %v2648
      %v2650 = vpop.f32.mrf.mxu0
      %v2651 = vpop.f32.mrf.mxu0
      %v2652 = vadd.f32 0.0, %v2651
      %v2653 = vpop.f32.mrf.mxu0
      %2654 = vmatprep.mubr.bf16.mxu0 0
      %2655 = vmatmul.mubr.bf16.gmra.mxu0 %v2518
      %v2656 = vpop.f32.mrf.mxu0
      %v2657 = vadd.f32 0.0, %v2656
      %v2658 = vpop.f32.mrf.mxu0
      %v2659 = vpop.f32.mrf.mxu0
      %v2660 = vadd.f32 0.0, %v2659
      %v2661 = vpop.f32.mrf.mxu0
      %2662 = vmatprep.mubr.bf16.mxu0 0
      %2663 = vmatmul.mubr.bf16.gmra.mxu0 %v2521
      %v2664 = vpop.f32.mrf.mxu0
      %v2665 = vadd.f32 0.0, %v2664
      %v2666 = vpop.f32.mrf.mxu0
      %v2667 = vpop.f32.mrf.mxu0
      %v2668 = vadd.f32 0.0, %v2667
      %v2669 = vpop.f32.mrf.mxu0
      %2670 = vmatprep.mubr.bf16.mxu0 0
      %2671 = vmatmul.mubr.bf16.gmra.mxu0 %v2524
      %v2672 = vpop.f32.mrf.mxu0
      %v2673 = vadd.f32 0.0, %v2672
      %v2674 = vpop.f32.mrf.mxu0
      %v2675 = vpop.f32.mrf.mxu0
      %v2676 = vadd.f32 0.0, %v2675
      %v2677 = vpop.f32.mrf.mxu0
      %2678 = vmatprep.mubr.bf16.mxu0 0
      %2679 = vmatmul.mubr.bf16.gmra.mxu0 %v2527
      %v2680 = vpop.f32.mrf.mxu0
      %v2681 = vadd.f32 0.0, %v2680
      %v2682 = vpop.f32.mrf.mxu0
      %v2683 = vpop.f32.mrf.mxu0
      %v2684 = vadd.f32 0.0, %v2683
      %v2685 = vpop.f32.mrf.mxu0
      %2686 = vmatprep.mubr.bf16.mxu0 0
      %2687 = vmatmul.mubr.bf16.gmra.mxu0 %v2530
      %v2688 = vpop.f32.mrf.mxu0
      %v2689 = vadd.f32 0.0, %v2688
      %v2690 = vpop.f32.mrf.mxu0
      %v2691 = vpop.f32.mrf.mxu0
      %v2692 = vadd.f32 0.0, %v2691
      %v2693 = vpop.f32.mrf.mxu0
      %2694 = vmatprep.mubr.bf16.mxu0 0
      %2695 = vmatmul.mubr.bf16.gmra.mxu0 %v2533
      %v2696 = vpop.f32.mrf.mxu0
      %v2697 = vadd.f32 0.0, %v2696
      %v2698 = vpop.f32.mrf.mxu0
      %v2699 = vpop.f32.mrf.mxu0
      %v2700 = vadd.f32 0.0, %v2699
      %v2701 = vpop.f32.mrf.mxu0
      %2702 = vmatprep.mubr.bf16.mxu0 0
      %2703 = vmatmul.mubr.bf16.gmra.mxu0 %v2536
      %v2704 = vpop.f32.mrf.mxu0
      %v2705 = vadd.f32 0.0, %v2704
      %v2706 = vpop.f32.mrf.mxu0
      %v2707 = vpop.f32.mrf.mxu0
      %v2708 = vadd.f32 0.0, %v2707
      %v2709 = vpop.f32.mrf.mxu0
      %2710 = vmatprep.mubr.bf16.mxu0 0
      %2711 = vmatmul.mubr.bf16.gmra.mxu0 %v2539
      %v2712 = vpop.f32.mrf.mxu0
      %v2713 = vadd.f32 0.0, %v2712
      %v2714 = vpop.f32.mrf.mxu0
      %v2715 = vpop.f32.mrf.mxu0
      %v2716 = vadd.f32 0.0, %v2715
      %v2717 = vpop.f32.mrf.mxu0
      %2718 = vmatprep.mubr.bf16.mxu0 0
      %2719 = vmatmul.mubr.bf16.gmra.mxu0 %v2542
      %v2720 = vpop.f32.mrf.mxu0
      %v2721 = vadd.f32 0.0, %v2720
      %v2722 = vpop.f32.mrf.mxu0
      %v2723 = vpop.f32.mrf.mxu0
      %v2724 = vadd.f32 0.0, %v2723
      %v2725 = vpop.f32.mrf.mxu0
      %2726 = vmatprep.mubr.bf16.mxu0 0
      %2727 = vmatmul.mubr.bf16.gmra.mxu0 %v2545
      %v2728 = vpop.f32.mrf.mxu0
      %v2729 = vadd.f32 0.0, %v2728
      %v2730 = vpop.f32.mrf.mxu0
      %v2731 = vpop.f32.mrf.mxu0
      %v2732 = vadd.f32 0.0, %v2731
      %v2733 = vpop.f32.mrf.mxu0
      %2734 = vmatprep.mubr.bf16.mxu0 0
      %2735 = vmatmul.mubr.bf16.gmra.mxu0 %v2548
      %v2736 = vpop.f32.mrf.mxu0
      %v2737 = vadd.f32 0.0, %v2736
      %v2738 = vpop.f32.mrf.mxu0
      %v2739 = vpop.f32.mrf.mxu0
      %v2740 = vadd.f32 0.0, %v2739
      %v2741 = vpop.f32.mrf.mxu0
      %2742 = vmatprep.mubr.bf16.mxu0 0
      %2743 = vmatmul.mubr.bf16.gmra.mxu0 %v2551
      %v2744 = vpop.f32.mrf.mxu0
      %v2745 = vadd.f32 0.0, %v2744
      %v2746 = vpop.f32.mrf.mxu0
      %v2747 = vpop.f32.mrf.mxu0
      %v2748 = vadd.f32 0.0, %v2747
      %v2749 = vpop.f32.mrf.mxu0
      %2750 = vmatprep.mubr.bf16.mxu0 0
      %2751 = vmatmul.mubr.bf16.gmra.mxu0 %v2554
      %v2752 = vpop.f32.mrf.mxu0
      %v2753 = vadd.f32 0.0, %v2752
      %v2754 = vpop.f32.mrf.mxu0
      %v2755 = vpop.f32.mrf.mxu0
      %v2756 = vadd.f32 0.0, %v2755
      %v2757 = vpop.f32.mrf.mxu0
      %2758 = vmatprep.mubr.bf16.mxu0 0
      %2759 = vmatmul.mubr.bf16.gmra.mxu0 %v2557
      %v2760 = vpop.f32.mrf.mxu0
      %v2761 = vadd.f32 0.0, %v2760
      %v2762 = vpop.f32.mrf.mxu0
      %v2763 = vpop.f32.mrf.mxu0
      %v2764 = vadd.f32 0.0, %v2763
      %v2765 = vpop.f32.mrf.mxu0
      %2766 = vmatprep.mubr.bf16.mxu0 0
      %2767 = vmatmul.mubr.bf16.gmra.mxu0 %v2560
      %v2768 = vpop.f32.mrf.mxu0
      %v2769 = vadd.f32 0.0, %v2768
      %v2770 = vpop.f32.mrf.mxu0
      %v2771 = vpop.f32.mrf.mxu0
      %v2772 = vadd.f32 0.0, %v2771
      %v2773 = vpop.f32.mrf.mxu0
      %2774 = vmatprep.mubr.bf16.mxu0 0
      %2775 = vmatmul.mubr.bf16.gmra.mxu0 %v2563
      %v2776 = vpop.f32.mrf.mxu0
      %v2777 = vadd.f32 0.0, %v2776
      %v2778 = vpop.f32.mrf.mxu0
      %v2779 = vpop.f32.mrf.mxu0
      %v2780 = vadd.f32 0.0, %v2779
      %v2781 = vpop.f32.mrf.mxu0
      %2782 = vmatprep.mubr.bf16.mxu0 0
      %2783 = vmatmul.mubr.bf16.gmra.mxu0 %v2566
      %v2784 = vpop.f32.mrf.mxu0
      %v2785 = vadd.f32 0.0, %v2784
      %v2786 = vpop.f32.mrf.mxu0
      %v2787 = vpop.f32.mrf.mxu0
      %v2788 = vadd.f32 0.0, %v2787
      %v2789 = vpop.f32.mrf.mxu0
      %2790 = vmatprep.mubr.bf16.mxu0 0
      %2791 = vmatmul.mubr.bf16.gmra.mxu0 %v2569
      %v2792 = vpop.f32.mrf.mxu0
      %v2793 = vadd.f32 0.0, %v2792
      %v2794 = vpop.f32.mrf.mxu0
      %v2795 = vpop.f32.mrf.mxu0
      %v2796 = vpop.f32.mrf.mxu0
      %2797 = vdwg.mxu0
      %v2798 = vld [vmem:[#allocation3] sm:$0xff]
      %v2799 = vld [vmem:[#allocation3 + $0x8] sm:$0xff]
      %v2800 = vld [vmem:[#allocation3 + $0x10] sm:$0xff]
      %v2801 = vld [vmem:[#allocation3 + $0x18] sm:$0xff]
      %v2802 = vld [vmem:[#allocation3 + $0x20] sm:$0xff]
      %v2803 = vld [vmem:[#allocation3 + $0x28] sm:$0xff]
      %v2804 = vld [vmem:[#allocation3 + $0x30] sm:$0xff]
      %v2805 = vld [vmem:[#allocation3 + $0x38] sm:$0xff]
      %v2806 = vld [vmem:[#allocation3 + $0x40] sm:$0xff]
      %v2807 = vld [vmem:[#allocation3 + $0x48] sm:$0xff]
      %v2808 = vld [vmem:[#allocation3 + $0x50] sm:$0xff]
      %v2809 = vld [vmem:[#allocation3 + $0x58] sm:$0xff]
      %v2810 = vld [vmem:[#allocation3 + $0x60] sm:$0xff]
      %v2811 = vld [vmem:[#allocation3 + $0x68] sm:$0xff]
      %v2812 = vld [vmem:[#allocation3 + $0x70] sm:$0xff]
      %v2813 = vld [vmem:[#allocation3 + $0x78] sm:$0xff]
      %v2814 = vld [vmem:[#allocation3 + $0x80] sm:$0xff]
      %v2815 = vld [vmem:[#allocation3 + $0x88] sm:$0xff]
      %v2816 = vld [vmem:[#allocation3 + $0x90] sm:$0xff]
      %v2817 = vld [vmem:[#allocation3 + $0x98] sm:$0xff]
      %v2818 = vld [vmem:[#allocation3 + $0xa0] sm:$0xff]
      %v2819 = vld [vmem:[#allocation3 + $0xa8] sm:$0xff]
      %v2820 = vld [vmem:[#allocation3 + $0xb0] sm:$0xff]
      %v2821 = vld [vmem:[#allocation3 + $0xb8] sm:$0xff]
      %v2822 = vld [vmem:[#allocation3 + $0xc0] sm:$0xff]
      %v2823 = vld [vmem:[#allocation3 + $0xc8] sm:$0xff]
      %v2824 = vld [vmem:[#allocation3 + $0xd0] sm:$0xff]
      %v2825 = vld [vmem:[#allocation3 + $0xd8] sm:$0xff]
      %v2826 = vld [vmem:[#allocation3 + $0xe0] sm:$0xff]
      %v2827 = vld [vmem:[#allocation3 + $0xe8] sm:$0xff]
      %v2828 = vld [vmem:[#allocation3 + $0xf0] sm:$0xff]
      %v2829 = vld [vmem:[#allocation3 + $0xf8] sm:$0xff]
      %v2830 = vld [vmem:[#allocation3 + $0x100] sm:$0xff]
      %v2831 = vld [vmem:[#allocation3 + $0x108] sm:$0xff]
      %v2832 = vld [vmem:[#allocation3 + $0x110] sm:$0xff]
      %v2833 = vld [vmem:[#allocation3 + $0x118] sm:$0xff]
      %v2834 = vld [vmem:[#allocation3 + $0x120] sm:$0xff]
      %v2835 = vld [vmem:[#allocation3 + $0x128] sm:$0xff]
      %v2836 = vld [vmem:[#allocation3 + $0x130] sm:$0xff]
      %v2837 = vld [vmem:[#allocation3 + $0x138] sm:$0xff]
      %v2838 = vld [vmem:[#allocation3 + $0x140] sm:$0xff]
      %v2839 = vld [vmem:[#allocation3 + $0x148] sm:$0xff]
      %v2840 = vld [vmem:[#allocation3 + $0x150] sm:$0xff]
      %v2841 = vld [vmem:[#allocation3 + $0x158] sm:$0xff]
      %v2842 = vld [vmem:[#allocation3 + $0x160] sm:$0xff]
      %v2843 = vld [vmem:[#allocation3 + $0x168] sm:$0xff]
      %v2844 = vld [vmem:[#allocation3 + $0x170] sm:$0xff]
      %v2845 = vadd.f32 %v2798, %v2609
      %v2846 = vadd.f32 %v2799, %v2612
      %v2847 = vadd.f32 %v2800, %v2617
      %v2848 = vadd.f32 %v2801, %v2620
      %v2849 = vadd.f32 %v2802, %v2625
      %v2850 = vadd.f32 %v2803, %v2628
      %v2851 = vadd.f32 %v2804, %v2633
      %v2852 = vadd.f32 %v2805, %v2636
      %v2853 = vadd.f32 %v2806, %v2641
      %v2854 = vadd.f32 %v2807, %v2644
      %v2855 = vadd.f32 %v2808, %v2649
      %v2856 = vadd.f32 %v2809, %v2652
      %v2857 = vadd.f32 %v2810, %v2657
      %v2858 = vadd.f32 %v2811, %v2660
      %v2859 = vadd.f32 %v2812, %v2665
      %v2860 = vadd.f32 %v2813, %v2668
      %v2861 = vadd.f32 %v2814, %v2673
      %v2862 = vadd.f32 %v2815, %v2676
      %v2863 = vadd.f32 %v2816, %v2681
      %v2864 = vadd.f32 %v2817, %v2684
      %v2865 = vadd.f32 %v2818, %v2689
      %v2866 = vadd.f32 %v2819, %v2692
      %v2867 = vadd.f32 %v2820, %v2697
      %v2868 = vadd.f32 %v2821, %v2700
      %v2869 = vadd.f32 %v2822, %v2705
      %v2870 = vadd.f32 %v2823, %v2708
      %v2871 = vadd.f32 %v2824, %v2713
      %v2872 = vadd.f32 %v2825, %v2716
      %v2873 = vadd.f32 %v2826, %v2721
      %v2874 = vadd.f32 %v2827, %v2724
      %v2875 = vadd.f32 %v2828, %v2729
      %v2876 = vadd.f32 %v2829, %v2732
      %v2877 = vadd.f32 %v2830, %v2737
      %v2878 = vadd.f32 %v2831, %v2740
      %v2879 = vadd.f32 %v2832, %v2745
      %v2880 = vadd.f32 %v2833, %v2748
      %v2881 = vadd.f32 %v2834, %v2753
      %v2882 = vadd.f32 %v2835, %v2756
      %v2883 = vadd.f32 %v2836, %v2761
      %v2884 = vadd.f32 %v2837, %v2764
      %v2885 = vadd.f32 %v2838, %v2769
      %v2886 = vadd.f32 %v2839, %v2772
      %v2887 = vadd.f32 %v2840, %v2777
      %v2888 = vadd.f32 %v2841, %v2780
      %v2889 = vadd.f32 %v2842, %v2785
      %v2890 = vadd.f32 %v2843, %v2788
      %v2891 = vadd.f32 %v2844, %v2793
      %2892 = vst.msk [vmem:[#allocation3] sm:$0xff] %vm239, %v2845
      %2893 = vst.msk [vmem:[#allocation3 + $0x8] sm:$0xff] %vm239, %v2846
      %2894 = vst.msk [vmem:[#allocation3 + $0x10] sm:$0xff] %vm239, %v2847
      %2895 = vst.msk [vmem:[#allocation3 + $0x18] sm:$0xff] %vm239, %v2848
      %2896 = vst.msk [vmem:[#allocation3 + $0x20] sm:$0xff] %vm239, %v2849
      %2897 = vst.msk [vmem:[#allocation3 + $0x28] sm:$0xff] %vm239, %v2850
      %2898 = vst.msk [vmem:[#allocation3 + $0x30] sm:$0xff] %vm239, %v2851
      %2899 = vst.msk [vmem:[#allocation3 + $0x38] sm:$0xff] %vm239, %v2852
      %2900 = vst.msk [vmem:[#allocation3 + $0x40] sm:$0xff] %vm239, %v2853
      %2901 = vst.msk [vmem:[#allocation3 + $0x48] sm:$0xff] %vm239, %v2854
      %2902 = vst.msk [vmem:[#allocation3 + $0x50] sm:$0xff] %vm239, %v2855
      %2903 = vst.msk [vmem:[#allocation3 + $0x58] sm:$0xff] %vm239, %v2856
      %2904 = vst.msk [vmem:[#allocation3 + $0x60] sm:$0xff] %vm239, %v2857
      %2905 = vst.msk [vmem:[#allocation3 + $0x68] sm:$0xff] %vm239, %v2858
      %2906 = vst.msk [vmem:[#allocation3 + $0x70] sm:$0xff] %vm239, %v2859
      %2907 = vst.msk [vmem:[#allocation3 + $0x78] sm:$0xff] %vm239, %v2860
      %2908 = vst.msk [vmem:[#allocation3 + $0x80] sm:$0xff] %vm239, %v2861
      %2909 = vst.msk [vmem:[#allocation3 + $0x88] sm:$0xff] %vm239, %v2862
      %2910 = vst.msk [vmem:[#allocation3 + $0x90] sm:$0xff] %vm239, %v2863
      %2911 = vst.msk [vmem:[#allocation3 + $0x98] sm:$0xff] %vm239, %v2864
      %2912 = vst.msk [vmem:[#allocation3 + $0xa0] sm:$0xff] %vm239, %v2865
      %2913 = vst.msk [vmem:[#allocation3 + $0xa8] sm:$0xff] %vm239, %v2866
      %2914 = vst.msk [vmem:[#allocation3 + $0xb0] sm:$0xff] %vm239, %v2867
      %2915 = vst.msk [vmem:[#allocation3 + $0xb8] sm:$0xff] %vm239, %v2868
      %2916 = vst.msk [vmem:[#allocation3 + $0xc0] sm:$0xff] %vm239, %v2869
      %2917 = vst.msk [vmem:[#allocation3 + $0xc8] sm:$0xff] %vm239, %v2870
      %2918 = vst.msk [vmem:[#allocation3 + $0xd0] sm:$0xff] %vm239, %v2871
      %2919 = vst.msk [vmem:[#allocation3 + $0xd8] sm:$0xff] %vm239, %v2872
      %2920 = vst.msk [vmem:[#allocation3 + $0xe0] sm:$0xff] %vm239, %v2873
      %2921 = vst.msk [vmem:[#allocation3 + $0xe8] sm:$0xff] %vm239, %v2874
      %2922 = vst.msk [vmem:[#allocation3 + $0xf0] sm:$0xff] %vm239, %v2875
      %2923 = vst.msk [vmem:[#allocation3 + $0xf8] sm:$0xff] %vm239, %v2876
      %2924 = vst.msk [vmem:[#allocation3 + $0x100] sm:$0xff] %vm239, %v2877
      %2925 = vst.msk [vmem:[#allocation3 + $0x108] sm:$0xff] %vm239, %v2878
      %2926 = vst.msk [vmem:[#allocation3 + $0x110] sm:$0xff] %vm239, %v2879
      %2927 = vst.msk [vmem:[#allocation3 + $0x118] sm:$0xff] %vm239, %v2880
      %2928 = vst.msk [vmem:[#allocation3 + $0x120] sm:$0xff] %vm239, %v2881
      %2929 = vst.msk [vmem:[#allocation3 + $0x128] sm:$0xff] %vm239, %v2882
      %2930 = vst.msk [vmem:[#allocation3 + $0x130] sm:$0xff] %vm239, %v2883
      %2931 = vst.msk [vmem:[#allocation3 + $0x138] sm:$0xff] %vm239, %v2884
      %2932 = vst.msk [vmem:[#allocation3 + $0x140] sm:$0xff] %vm239, %v2885
      %2933 = vst.msk [vmem:[#allocation3 + $0x148] sm:$0xff] %vm239, %v2886
      %2934 = vst.msk [vmem:[#allocation3 + $0x150] sm:$0xff] %vm239, %v2887
      %2935 = vst.msk [vmem:[#allocation3 + $0x158] sm:$0xff] %vm239, %v2888
      %2936 = vst.msk [vmem:[#allocation3 + $0x160] sm:$0xff] %vm239, %v2889
      %2937 = vst.msk [vmem:[#allocation3 + $0x168] sm:$0xff] %vm239, %v2890
      %2938 = vst.msk [vmem:[#allocation3 + $0x170] sm:$0xff] %vm239, %v2891
      %v2939 = vld [vmem:[#allocation2 + $0x1a] sm:$0xff]
      %v2940 = vld [vmem:[#allocation2 + $0x22] sm:$0xff]
      %v2941 = vld [vmem:[#allocation2 + $0x2a] sm:$0xff]
      %v2942 = vld [vmem:[#allocation2 + $0x32] sm:$0xff]
      %v2943 = vld [vmem:[#allocation2 + $0x3a] sm:$0xff]
      %v2944 = vld [vmem:[#allocation2 + $0x42] sm:$0xff]
      %v2945 = vld [vmem:[#allocation2 + $0x4a] sm:$0xff]
      %v2946 = vld [vmem:[#allocation2 + $0x52] sm:$0xff]
      %v2947 = vld [vmem:[#allocation2 + $0x5a] sm:$0xff]
      %v2948 = vld [vmem:[#allocation2 + $0x62] sm:$0xff]
      %v2949 = vld [vmem:[#allocation2 + $0x6a] sm:$0xff]
      %v2950 = vld [vmem:[#allocation2 + $0x72] sm:$0xff]
      %v2951 = vld [vmem:[#allocation2 + $0x7a] sm:$0xff]
      %v2952 = vld [vmem:[#allocation2 + $0x82] sm:$0xff]
      %v2953 = vld [vmem:[#allocation2 + $0x8a] sm:$0xff]
      %v2954 = vld [vmem:[#allocation2 + $0x92] sm:$0xff]
      %v2955 = vld [vmem:[#allocation2 + $0x9a] sm:$0xff]
      %v2956 = vld [vmem:[#allocation2 + $0xa2] sm:$0xff]
      %v2957 = vld [vmem:[#allocation2 + $0xaa] sm:$0xff]
      %v2958 = vld [vmem:[#allocation2 + $0xb2] sm:$0xff]
      %v2959 = vld [vmem:[#allocation2 + $0xba] sm:$0xff]
      %v2960 = vld [vmem:[#allocation2 + $0xc2] sm:$0xff]
      %v2961 = vld [vmem:[#allocation2 + $0xca] sm:$0xff]
      %v2962 = vld [vmem:[#allocation2 + $0xd2] sm:$0xff]
      %v2963 = vld [vmem:[#allocation2 + $0xda] sm:$0xff]
      %v2964 = vld [vmem:[#allocation2 + $0xe2] sm:$0xff]
      %v2965 = vld [vmem:[#allocation2 + $0xea] sm:$0xff]
      %v2966 = vld [vmem:[#allocation2 + $0xf2] sm:$0xff]
      %v2967 = vld [vmem:[#allocation2 + $0xfa] sm:$0xff]
      %v2968 = vld [vmem:[#allocation2 + $0x102] sm:$0xff]
      %v2969 = vld [vmem:[#allocation2 + $0x10a] sm:$0xff]
      %v2970 = vld [vmem:[#allocation2 + $0x112] sm:$0xff]
      %v2971 = vld [vmem:[#allocation2 + $0x11a] sm:$0xff]
      %v2972 = vld [vmem:[#allocation2 + $0x122] sm:$0xff]
      %v2973 = vld [vmem:[#allocation2 + $0x12a] sm:$0xff]
      %v2974 = vld [vmem:[#allocation2 + $0x132] sm:$0xff]
      %v2975 = vld [vmem:[#allocation2 + $0x13a] sm:$0xff]
      %v2976 = vld [vmem:[#allocation2 + $0x142] sm:$0xff]
      %v2977 = vld [vmem:[#allocation2 + $0x14a] sm:$0xff]
      %v2978 = vld [vmem:[#allocation2 + $0x152] sm:$0xff]
      %v2979 = vld [vmem:[#allocation2 + $0x15a] sm:$0xff]
      %v2980 = vld [vmem:[#allocation2 + $0x162] sm:$0xff]
      %v2981 = vld [vmem:[#allocation2 + $0x16a] sm:$0xff]
      %v2982 = vld [vmem:[#allocation2 + $0x172] sm:$0xff]
      %v2983 = vld [vmem:[#allocation2 + $0x17a] sm:$0xff]
      %v2984 = vld [vmem:[#allocation2 + $0x182] sm:$0xff]
      %v2985 = vld [vmem:[#allocation2 + $0x18a] sm:$0xff]
      %v2986 = vpack.c.bf16 %v2940, %v2939
      %v2987 = vpack.c.bf16 %v2942, %v2941
      %v2988 = vpack.c.bf16 %v2944, %v2943
      %v2989 = vpack.c.bf16 %v2946, %v2945
      %v2990 = vpack.c.bf16 %v2948, %v2947
      %v2991 = vpack.c.bf16 %v2950, %v2949
      %v2992 = vpack.c.bf16 %v2952, %v2951
      %v2993 = vpack.c.bf16 %v2954, %v2953
      %v2994 = vpack.c.bf16 %v2956, %v2955
      %v2995 = vpack.c.bf16 %v2958, %v2957
      %v2996 = vpack.c.bf16 %v2960, %v2959
      %v2997 = vpack.c.bf16 %v2962, %v2961
      %v2998 = vpack.c.bf16 %v2964, %v2963
      %v2999 = vpack.c.bf16 %v2966, %v2965
      %v3000 = vpack.c.bf16 %v2968, %v2967
      %v3001 = vpack.c.bf16 %v2970, %v2969
      %v3002 = vpack.c.bf16 %v2972, %v2971
      %v3003 = vpack.c.bf16 %v2974, %v2973
      %v3004 = vpack.c.bf16 %v2976, %v2975
      %v3005 = vpack.c.bf16 %v2978, %v2977
      %v3006 = vpack.c.bf16 %v2980, %v2979
      %v3007 = vpack.c.bf16 %v2982, %v2981
      %v3008 = vpack.c.bf16 %v2984, %v2983
      %v3009 = vpack.c.bf16 %v2985, %v2985
      %s3010 = scalar_lea.vmem %s3, 10
      %v3011 = vld [vmem:[%s3010] sm:$0x3]
      %v3013 = vsel %vm239, %v2986, 0
      %v3016 = vsel %vm239, %v2987, 0
      %v3019 = vsel %vm239, %v2988, 0
      %v3022 = vsel %vm239, %v2989, 0
      %v3025 = vsel %vm239, %v2990, 0
      %v3028 = vsel %vm239, %v2991, 0
      %v3031 = vsel %vm239, %v2992, 0
      %v3034 = vsel %vm239, %v2993, 0
      %v3037 = vsel %vm239, %v2994, 0
      %v3040 = vsel %vm239, %v2995, 0
      %v3043 = vsel %vm239, %v2996, 0
      %v3046 = vsel %vm239, %v2997, 0
      %v3049 = vsel %vm239, %v2998, 0
      %v3052 = vsel %vm239, %v2999, 0
      %v3055 = vsel %vm239, %v3000, 0
      %v3058 = vsel %vm239, %v3001, 0
      %v3061 = vsel %vm239, %v3002, 0
      %v3064 = vsel %vm239, %v3003, 0
      %v3067 = vsel %vm239, %v3004, 0
      %v3070 = vsel %vm239, %v3005, 0
      %v3073 = vsel %vm239, %v3006, 0
      %v3076 = vsel %vm239, %v3007, 0
      %v3079 = vsel %vm239, %v3008, 0
      %v3082 = vsel %vm239, %v3009, 0
      %v3085 = vsel %vm612, %v3011, 0
      %3087 = vmatprep.subr.bf16.mxu0 0
      %3088 = vmatpush1.bf16.msra.mxu0 0
      %3089 = vmatprep.subr.bf16.mxu0 0
      %3090 = vmatpush1.bf16.msra.mxu0 0
      %3091 = vmatprep.subr.bf16.mxu0 0
      %3092 = vmatpush1.bf16.msra.mxu0 0
      %3093 = vmatprep.subr.bf16.mxu0 0
      %3094 = vmatpush1.bf16.msra.mxu0 0
      %3095 = vmatprep.subr.bf16.mxu0 0
      %3096 = vmatpush1.bf16.msra.mxu0 0
      %3097 = vmatprep.subr.bf16.mxu0 0
      %3098 = vmatpush1.bf16.msra.mxu0 0
      %3099 = vmatprep.subr.bf16.mxu0 0
      %3100 = vmatpush1.bf16.msra.mxu0 0
      %3101 = vmatprep.subr.bf16.mxu0 0
      %3102 = vmatpush1.bf16.msra.mxu0 %v3085
      %3103 = vmatprep.subr.bf16.mxu0 0
      %3104 = vmatpush2.bf16.msra.mxu0 0
      %3105 = vmatprep.subr.bf16.mxu0 0
      %3106 = vmatpush2.bf16.msra.mxu0 0
      %3107 = vmatprep.subr.bf16.mxu0 0
      %3108 = vmatpush2.bf16.msra.mxu0 0
      %3109 = vmatprep.subr.bf16.mxu0 0
      %3110 = vmatpush2.bf16.msra.mxu0 0
      %3111 = vmatprep.subr.bf16.mxu0 0
      %3112 = vmatpush2.bf16.msra.mxu0 0
      %3113 = vmatprep.subr.bf16.mxu0 0
      %3114 = vmatpush2.bf16.msra.mxu0 0
      %3115 = vmatprep.subr.bf16.mxu0 0
      %3116 = vmatpush2.bf16.msra.mxu0 0
      %3117 = vmatprep.subr.bf16.mxu0 0
      %3118 = vmatpush2.bf16.msra.mxu0 0
      %3119 = vmatprep.mubr.bf16.mxu0 0
      %3120 = vmatmul.mubr.bf16.gmra.mxu0 %v3013
      %v3121 = vpop.f32.mrf.mxu0
      %v3122 = vadd.f32 0.0, %v3121
      %v3123 = vpop.f32.mrf.mxu0
      %v3124 = vpop.f32.mrf.mxu0
      %v3125 = vadd.f32 0.0, %v3124
      %v3126 = vpop.f32.mrf.mxu0
      %3127 = vmatprep.mubr.bf16.mxu0 0
      %3128 = vmatmul.mubr.bf16.gmra.mxu0 %v3016
      %v3129 = vpop.f32.mrf.mxu0
      %v3130 = vadd.f32 0.0, %v3129
      %v3131 = vpop.f32.mrf.mxu0
      %v3132 = vpop.f32.mrf.mxu0
      %v3133 = vadd.f32 0.0, %v3132
      %v3134 = vpop.f32.mrf.mxu0
      %3135 = vmatprep.mubr.bf16.mxu0 0
      %3136 = vmatmul.mubr.bf16.gmra.mxu0 %v3019
      %v3137 = vpop.f32.mrf.mxu0
      %v3138 = vadd.f32 0.0, %v3137
      %v3139 = vpop.f32.mrf.mxu0
      %v3140 = vpop.f32.mrf.mxu0
      %v3141 = vadd.f32 0.0, %v3140
      %v3142 = vpop.f32.mrf.mxu0
      %3143 = vmatprep.mubr.bf16.mxu0 0
      %3144 = vmatmul.mubr.bf16.gmra.mxu0 %v3022
      %v3145 = vpop.f32.mrf.mxu0
      %v3146 = vadd.f32 0.0, %v3145
      %v3147 = vpop.f32.mrf.mxu0
      %v3148 = vpop.f32.mrf.mxu0
      %v3149 = vadd.f32 0.0, %v3148
      %v3150 = vpop.f32.mrf.mxu0
      %3151 = vmatprep.mubr.bf16.mxu0 0
      %3152 = vmatmul.mubr.bf16.gmra.mxu0 %v3025
      %v3153 = vpop.f32.mrf.mxu0
      %v3154 = vadd.f32 0.0, %v3153
      %v3155 = vpop.f32.mrf.mxu0
      %v3156 = vpop.f32.mrf.mxu0
      %v3157 = vadd.f32 0.0, %v3156
      %v3158 = vpop.f32.mrf.mxu0
      %3159 = vmatprep.mubr.bf16.mxu0 0
      %3160 = vmatmul.mubr.bf16.gmra.mxu0 %v3028
      %v3161 = vpop.f32.mrf.mxu0
      %v3162 = vadd.f32 0.0, %v3161
      %v3163 = vpop.f32.mrf.mxu0
      %v3164 = vpop.f32.mrf.mxu0
      %v3165 = vadd.f32 0.0, %v3164
      %v3166 = vpop.f32.mrf.mxu0
      %3167 = vmatprep.mubr.bf16.mxu0 0
      %3168 = vmatmul.mubr.bf16.gmra.mxu0 %v3031
      %v3169 = vpop.f32.mrf.mxu0
      %v3170 = vadd.f32 0.0, %v3169
      %v3171 = vpop.f32.mrf.mxu0
      %v3172 = vpop.f32.mrf.mxu0
      %v3173 = vadd.f32 0.0, %v3172
      %v3174 = vpop.f32.mrf.mxu0
      %3175 = vmatprep.mubr.bf16.mxu0 0
      %3176 = vmatmul.mubr.bf16.gmra.mxu0 %v3034
      %v3177 = vpop.f32.mrf.mxu0
      %v3178 = vadd.f32 0.0, %v3177
      %v3179 = vpop.f32.mrf.mxu0
      %v3180 = vpop.f32.mrf.mxu0
      %v3181 = vadd.f32 0.0, %v3180
      %v3182 = vpop.f32.mrf.mxu0
      %3183 = vmatprep.mubr.bf16.mxu0 0
      %3184 = vmatmul.mubr.bf16.gmra.mxu0 %v3037
      %v3185 = vpop.f32.mrf.mxu0
      %v3186 = vadd.f32 0.0, %v3185
      %v3187 = vpop.f32.mrf.mxu0
      %v3188 = vpop.f32.mrf.mxu0
      %v3189 = vadd.f32 0.0, %v3188
      %v3190 = vpop.f32.mrf.mxu0
      %3191 = vmatprep.mubr.bf16.mxu0 0
      %3192 = vmatmul.mubr.bf16.gmra.mxu0 %v3040
      %v3193 = vpop.f32.mrf.mxu0
      %v3194 = vadd.f32 0.0, %v3193
      %v3195 = vpop.f32.mrf.mxu0
      %v3196 = vpop.f32.mrf.mxu0
      %v3197 = vadd.f32 0.0, %v3196
      %v3198 = vpop.f32.mrf.mxu0
      %3199 = vmatprep.mubr.bf16.mxu0 0
      %3200 = vmatmul.mubr.bf16.gmra.mxu0 %v3043
      %v3201 = vpop.f32.mrf.mxu0
      %v3202 = vadd.f32 0.0, %v3201
      %v3203 = vpop.f32.mrf.mxu0
      %v3204 = vpop.f32.mrf.mxu0
      %v3205 = vadd.f32 0.0, %v3204
      %v3206 = vpop.f32.mrf.mxu0
      %3207 = vmatprep.mubr.bf16.mxu0 0
      %3208 = vmatmul.mubr.bf16.gmra.mxu0 %v3046
      %v3209 = vpop.f32.mrf.mxu0
      %v3210 = vadd.f32 0.0, %v3209
      %v3211 = vpop.f32.mrf.mxu0
      %v3212 = vpop.f32.mrf.mxu0
      %v3213 = vadd.f32 0.0, %v3212
      %v3214 = vpop.f32.mrf.mxu0
      %3215 = vmatprep.mubr.bf16.mxu0 0
      %3216 = vmatmul.mubr.bf16.gmra.mxu0 %v3049
      %v3217 = vpop.f32.mrf.mxu0
      %v3218 = vadd.f32 0.0, %v3217
      %v3219 = vpop.f32.mrf.mxu0
      %v3220 = vpop.f32.mrf.mxu0
      %v3221 = vadd.f32 0.0, %v3220
      %v3222 = vpop.f32.mrf.mxu0
      %3223 = vmatprep.mubr.bf16.mxu0 0
      %3224 = vmatmul.mubr.bf16.gmra.mxu0 %v3052
      %v3225 = vpop.f32.mrf.mxu0
      %v3226 = vadd.f32 0.0, %v3225
      %v3227 = vpop.f32.mrf.mxu0
      %v3228 = vpop.f32.mrf.mxu0
      %v3229 = vadd.f32 0.0, %v3228
      %v3230 = vpop.f32.mrf.mxu0
      %3231 = vmatprep.mubr.bf16.mxu0 0
      %3232 = vmatmul.mubr.bf16.gmra.mxu0 %v3055
      %v3233 = vpop.f32.mrf.mxu0
      %v3234 = vadd.f32 0.0, %v3233
      %v3235 = vpop.f32.mrf.mxu0
      %v3236 = vpop.f32.mrf.mxu0
      %v3237 = vadd.f32 0.0, %v3236
      %v3238 = vpop.f32.mrf.mxu0
      %3239 = vmatprep.mubr.bf16.mxu0 0
      %3240 = vmatmul.mubr.bf16.gmra.mxu0 %v3058
      %v3241 = vpop.f32.mrf.mxu0
      %v3242 = vadd.f32 0.0, %v3241
      %v3243 = vpop.f32.mrf.mxu0
      %v3244 = vpop.f32.mrf.mxu0
      %v3245 = vadd.f32 0.0, %v3244
      %v3246 = vpop.f32.mrf.mxu0
      %3247 = vmatprep.mubr.bf16.mxu0 0
      %3248 = vmatmul.mubr.bf16.gmra.mxu0 %v3061
      %v3249 = vpop.f32.mrf.mxu0
      %v3250 = vadd.f32 0.0, %v3249
      %v3251 = vpop.f32.mrf.mxu0
      %v3252 = vpop.f32.mrf.mxu0
      %v3253 = vadd.f32 0.0, %v3252
      %v3254 = vpop.f32.mrf.mxu0
      %3255 = vmatprep.mubr.bf16.mxu0 0
      %3256 = vmatmul.mubr.bf16.gmra.mxu0 %v3064
      %v3257 = vpop.f32.mrf.mxu0
      %v3258 = vadd.f32 0.0, %v3257
      %v3259 = vpop.f32.mrf.mxu0
      %v3260 = vpop.f32.mrf.mxu0
      %v3261 = vadd.f32 0.0, %v3260
      %v3262 = vpop.f32.mrf.mxu0
      %3263 = vmatprep.mubr.bf16.mxu0 0
      %3264 = vmatmul.mubr.bf16.gmra.mxu0 %v3067
      %v3265 = vpop.f32.mrf.mxu0
      %v3266 = vadd.f32 0.0, %v3265
      %v3267 = vpop.f32.mrf.mxu0
      %v3268 = vpop.f32.mrf.mxu0
      %v3269 = vadd.f32 0.0, %v3268
      %v3270 = vpop.f32.mrf.mxu0
      %3271 = vmatprep.mubr.bf16.mxu0 0
      %3272 = vmatmul.mubr.bf16.gmra.mxu0 %v3070
      %v3273 = vpop.f32.mrf.mxu0
      %v3274 = vadd.f32 0.0, %v3273
      %v3275 = vpop.f32.mrf.mxu0
      %v3276 = vpop.f32.mrf.mxu0
      %v3277 = vadd.f32 0.0, %v3276
      %v3278 = vpop.f32.mrf.mxu0
      %3279 = vmatprep.mubr.bf16.mxu0 0
      %3280 = vmatmul.mubr.bf16.gmra.mxu0 %v3073
      %v3281 = vpop.f32.mrf.mxu0
      %v3282 = vadd.f32 0.0, %v3281
      %v3283 = vpop.f32.mrf.mxu0
      %v3284 = vpop.f32.mrf.mxu0
      %v3285 = vadd.f32 0.0, %v3284
      %v3286 = vpop.f32.mrf.mxu0
      %3287 = vmatprep.mubr.bf16.mxu0 0
      %3288 = vmatmul.mubr.bf16.gmra.mxu0 %v3076
      %v3289 = vpop.f32.mrf.mxu0
      %v3290 = vadd.f32 0.0, %v3289
      %v3291 = vpop.f32.mrf.mxu0
      %v3292 = vpop.f32.mrf.mxu0
      %v3293 = vadd.f32 0.0, %v3292
      %v3294 = vpop.f32.mrf.mxu0
      %3295 = vmatprep.mubr.bf16.mxu0 0
      %3296 = vmatmul.mubr.bf16.gmra.mxu0 %v3079
      %v3297 = vpop.f32.mrf.mxu0
      %v3298 = vadd.f32 0.0, %v3297
      %v3299 = vpop.f32.mrf.mxu0
      %v3300 = vpop.f32.mrf.mxu0
      %v3301 = vadd.f32 0.0, %v3300
      %v3302 = vpop.f32.mrf.mxu0
      %3303 = vmatprep.mubr.bf16.mxu0 0
      %3304 = vmatmul.mubr.bf16.gmra.mxu0 %v3082
      %v3305 = vpop.f32.mrf.mxu0
      %v3306 = vadd.f32 0.0, %v3305
      %v3307 = vpop.f32.mrf.mxu0
      %v3308 = vpop.f32.mrf.mxu0
      %v3309 = vpop.f32.mrf.mxu0
      %3310 = vdwg.mxu0
      %v3311 = vld [vmem:[#allocation3] sm:$0xff]
      %v3312 = vld [vmem:[#allocation3 + $0x8] sm:$0xff]
      %v3313 = vld [vmem:[#allocation3 + $0x10] sm:$0xff]
      %v3314 = vld [vmem:[#allocation3 + $0x18] sm:$0xff]
      %v3315 = vld [vmem:[#allocation3 + $0x20] sm:$0xff]
      %v3316 = vld [vmem:[#allocation3 + $0x28] sm:$0xff]
      %v3317 = vld [vmem:[#allocation3 + $0x30] sm:$0xff]
      %v3318 = vld [vmem:[#allocation3 + $0x38] sm:$0xff]
      %v3319 = vld [vmem:[#allocation3 + $0x40] sm:$0xff]
      %v3320 = vld [vmem:[#allocation3 + $0x48] sm:$0xff]
      %v3321 = vld [vmem:[#allocation3 + $0x50] sm:$0xff]
      %v3322 = vld [vmem:[#allocation3 + $0x58] sm:$0xff]
      %v3323 = vld [vmem:[#allocation3 + $0x60] sm:$0xff]
      %v3324 = vld [vmem:[#allocation3 + $0x68] sm:$0xff]
      %v3325 = vld [vmem:[#allocation3 + $0x70] sm:$0xff]
      %v3326 = vld [vmem:[#allocation3 + $0x78] sm:$0xff]
      %v3327 = vld [vmem:[#allocation3 + $0x80] sm:$0xff]
      %v3328 = vld [vmem:[#allocation3 + $0x88] sm:$0xff]
      %v3329 = vld [vmem:[#allocation3 + $0x90] sm:$0xff]
      %v3330 = vld [vmem:[#allocation3 + $0x98] sm:$0xff]
      %v3331 = vld [vmem:[#allocation3 + $0xa0] sm:$0xff]
      %v3332 = vld [vmem:[#allocation3 + $0xa8] sm:$0xff]
      %v3333 = vld [vmem:[#allocation3 + $0xb0] sm:$0xff]
      %v3334 = vld [vmem:[#allocation3 + $0xb8] sm:$0xff]
      %v3335 = vld [vmem:[#allocation3 + $0xc0] sm:$0xff]
      %v3336 = vld [vmem:[#allocation3 + $0xc8] sm:$0xff]
      %v3337 = vld [vmem:[#allocation3 + $0xd0] sm:$0xff]
      %v3338 = vld [vmem:[#allocation3 + $0xd8] sm:$0xff]
      %v3339 = vld [vmem:[#allocation3 + $0xe0] sm:$0xff]
      %v3340 = vld [vmem:[#allocation3 + $0xe8] sm:$0xff]
      %v3341 = vld [vmem:[#allocation3 + $0xf0] sm:$0xff]
      %v3342 = vld [vmem:[#allocation3 + $0xf8] sm:$0xff]
      %v3343 = vld [vmem:[#allocation3 + $0x100] sm:$0xff]
      %v3344 = vld [vmem:[#allocation3 + $0x108] sm:$0xff]
      %v3345 = vld [vmem:[#allocation3 + $0x110] sm:$0xff]
      %v3346 = vld [vmem:[#allocation3 + $0x118] sm:$0xff]
      %v3347 = vld [vmem:[#allocation3 + $0x120] sm:$0xff]
      %v3348 = vld [vmem:[#allocation3 + $0x128] sm:$0xff]
      %v3349 = vld [vmem:[#allocation3 + $0x130] sm:$0xff]
      %v3350 = vld [vmem:[#allocation3 + $0x138] sm:$0xff]
      %v3351 = vld [vmem:[#allocation3 + $0x140] sm:$0xff]
      %v3352 = vld [vmem:[#allocation3 + $0x148] sm:$0xff]
      %v3353 = vld [vmem:[#allocation3 + $0x150] sm:$0xff]
      %v3354 = vld [vmem:[#allocation3 + $0x158] sm:$0xff]
      %v3355 = vld [vmem:[#allocation3 + $0x160] sm:$0xff]
      %v3356 = vld [vmem:[#allocation3 + $0x168] sm:$0xff]
      %v3357 = vld [vmem:[#allocation3 + $0x170] sm:$0xff]
      %v3358 = vadd.f32 %v3311, %v3122
      %v3359 = vadd.f32 %v3312, %v3125
      %v3360 = vadd.f32 %v3313, %v3130
      %v3361 = vadd.f32 %v3314, %v3133
      %v3362 = vadd.f32 %v3315, %v3138
      %v3363 = vadd.f32 %v3316, %v3141
      %v3364 = vadd.f32 %v3317, %v3146
      %v3365 = vadd.f32 %v3318, %v3149
      %v3366 = vadd.f32 %v3319, %v3154
      %v3367 = vadd.f32 %v3320, %v3157
      %v3368 = vadd.f32 %v3321, %v3162
      %v3369 = vadd.f32 %v3322, %v3165
      %v3370 = vadd.f32 %v3323, %v3170
      %v3371 = vadd.f32 %v3324, %v3173
      %v3372 = vadd.f32 %v3325, %v3178
      %v3373 = vadd.f32 %v3326, %v3181
      %v3374 = vadd.f32 %v3327, %v3186
      %v3375 = vadd.f32 %v3328, %v3189
      %v3376 = vadd.f32 %v3329, %v3194
      %v3377 = vadd.f32 %v3330, %v3197
      %v3378 = vadd.f32 %v3331, %v3202
      %v3379 = vadd.f32 %v3332, %v3205
      %v3380 = vadd.f32 %v3333, %v3210
      %v3381 = vadd.f32 %v3334, %v3213
      %v3382 = vadd.f32 %v3335, %v3218
      %v3383 = vadd.f32 %v3336, %v3221
      %v3384 = vadd.f32 %v3337, %v3226
      %v3385 = vadd.f32 %v3338, %v3229
      %v3386 = vadd.f32 %v3339, %v3234
      %v3387 = vadd.f32 %v3340, %v3237
      %v3388 = vadd.f32 %v3341, %v3242
      %v3389 = vadd.f32 %v3342, %v3245
      %v3390 = vadd.f32 %v3343, %v3250
      %v3391 = vadd.f32 %v3344, %v3253
      %v3392 = vadd.f32 %v3345, %v3258
      %v3393 = vadd.f32 %v3346, %v3261
      %v3394 = vadd.f32 %v3347, %v3266
      %v3395 = vadd.f32 %v3348, %v3269
      %v3396 = vadd.f32 %v3349, %v3274
      %v3397 = vadd.f32 %v3350, %v3277
      %v3398 = vadd.f32 %v3351, %v3282
      %v3399 = vadd.f32 %v3352, %v3285
      %v3400 = vadd.f32 %v3353, %v3290
      %v3401 = vadd.f32 %v3354, %v3293
      %v3402 = vadd.f32 %v3355, %v3298
      %v3403 = vadd.f32 %v3356, %v3301
      %v3404 = vadd.f32 %v3357, %v3306
      %3405 = vst.msk [vmem:[#allocation3] sm:$0xff] %vm239, %v3358
      %3406 = vst.msk [vmem:[#allocation3 + $0x8] sm:$0xff] %vm239, %v3359
      %3407 = vst.msk [vmem:[#allocation3 + $0x10] sm:$0xff] %vm239, %v3360
      %3408 = vst.msk [vmem:[#allocation3 + $0x18] sm:$0xff] %vm239, %v3361
      %3409 = vst.msk [vmem:[#allocation3 + $0x20] sm:$0xff] %vm239, %v3362
      %3410 = vst.msk [vmem:[#allocation3 + $0x28] sm:$0xff] %vm239, %v3363
      %3411 = vst.msk [vmem:[#allocation3 + $0x30] sm:$0xff] %vm239, %v3364
      %3412 = vst.msk [vmem:[#allocation3 + $0x38] sm:$0xff] %vm239, %v3365
      %3413 = vst.msk [vmem:[#allocation3 + $0x40] sm:$0xff] %vm239, %v3366
      %3414 = vst.msk [vmem:[#allocation3 + $0x48] sm:$0xff] %vm239, %v3367
      %3415 = vst.msk [vmem:[#allocation3 + $0x50] sm:$0xff] %vm239, %v3368
      %3416 = vst.msk [vmem:[#allocation3 + $0x58] sm:$0xff] %vm239, %v3369
      %3417 = vst.msk [vmem:[#allocation3 + $0x60] sm:$0xff] %vm239, %v3370
      %3418 = vst.msk [vmem:[#allocation3 + $0x68] sm:$0xff] %vm239, %v3371
      %3419 = vst.msk [vmem:[#allocation3 + $0x70] sm:$0xff] %vm239, %v3372
      %3420 = vst.msk [vmem:[#allocation3 + $0x78] sm:$0xff] %vm239, %v3373
      %3421 = vst.msk [vmem:[#allocation3 + $0x80] sm:$0xff] %vm239, %v3374
      %3422 = vst.msk [vmem:[#allocation3 + $0x88] sm:$0xff] %vm239, %v3375
      %3423 = vst.msk [vmem:[#allocation3 + $0x90] sm:$0xff] %vm239, %v3376
      %3424 = vst.msk [vmem:[#allocation3 + $0x98] sm:$0xff] %vm239, %v3377
      %3425 = vst.msk [vmem:[#allocation3 + $0xa0] sm:$0xff] %vm239, %v3378
      %3426 = vst.msk [vmem:[#allocation3 + $0xa8] sm:$0xff] %vm239, %v3379
      %3427 = vst.msk [vmem:[#allocation3 + $0xb0] sm:$0xff] %vm239, %v3380
      %3428 = vst.msk [vmem:[#allocation3 + $0xb8] sm:$0xff] %vm239, %v3381
      %3429 = vst.msk [vmem:[#allocation3 + $0xc0] sm:$0xff] %vm239, %v3382
      %3430 = vst.msk [vmem:[#allocation3 + $0xc8] sm:$0xff] %vm239, %v3383
      %3431 = vst.msk [vmem:[#allocation3 + $0xd0] sm:$0xff] %vm239, %v3384
      %3432 = vst.msk [vmem:[#allocation3 + $0xd8] sm:$0xff] %vm239, %v3385
      %3433 = vst.msk [vmem:[#allocation3 + $0xe0] sm:$0xff] %vm239, %v3386
      %3434 = vst.msk [vmem:[#allocation3 + $0xe8] sm:$0xff] %vm239, %v3387
      %3435 = vst.msk [vmem:[#allocation3 + $0xf0] sm:$0xff] %vm239, %v3388
      %3436 = vst.msk [vmem:[#allocation3 + $0xf8] sm:$0xff] %vm239, %v3389
      %3437 = vst.msk [vmem:[#allocation3 + $0x100] sm:$0xff] %vm239, %v3390
      %3438 = vst.msk [vmem:[#allocation3 + $0x108] sm:$0xff] %vm239, %v3391
      %3439 = vst.msk [vmem:[#allocation3 + $0x110] sm:$0xff] %vm239, %v3392
      %3440 = vst.msk [vmem:[#allocation3 + $0x118] sm:$0xff] %vm239, %v3393
      %3441 = vst.msk [vmem:[#allocation3 + $0x120] sm:$0xff] %vm239, %v3394
      %3442 = vst.msk [vmem:[#allocation3 + $0x128] sm:$0xff] %vm239, %v3395
      %3443 = vst.msk [vmem:[#allocation3 + $0x130] sm:$0xff] %vm239, %v3396
      %3444 = vst.msk [vmem:[#allocation3 + $0x138] sm:$0xff] %vm239, %v3397
      %3445 = vst.msk [vmem:[#allocation3 + $0x140] sm:$0xff] %vm239, %v3398
      %3446 = vst.msk [vmem:[#allocation3 + $0x148] sm:$0xff] %vm239, %v3399
      %3447 = vst.msk [vmem:[#allocation3 + $0x150] sm:$0xff] %vm239, %v3400
      %3448 = vst.msk [vmem:[#allocation3 + $0x158] sm:$0xff] %vm239, %v3401
      %3449 = vst.msk [vmem:[#allocation3 + $0x160] sm:$0xff] %vm239, %v3402
      %3450 = vst.msk [vmem:[#allocation3 + $0x168] sm:$0xff] %vm239, %v3403
      %3451 = vst.msk [vmem:[#allocation3 + $0x170] sm:$0xff] %vm239, %v3404
      %v3452 = vld [vmem:[#allocation2 + $0x30] sm:$0xff]
      %v3453 = vld [vmem:[#allocation2 + $0x38] sm:$0xff]
      %v3454 = vld [vmem:[#allocation2 + $0x40] sm:$0xff]
      %v3455 = vld [vmem:[#allocation2 + $0x48] sm:$0xff]
      %v3456 = vld [vmem:[#allocation2 + $0x50] sm:$0xff]
      %v3457 = vld [vmem:[#allocation2 + $0x58] sm:$0xff]
      %v3458 = vld [vmem:[#allocation2 + $0x60] sm:$0xff]
      %v3459 = vld [vmem:[#allocation2 + $0x68] sm:$0xff]
      %v3460 = vld [vmem:[#allocation2 + $0x70] sm:$0xff]
      %v3461 = vld [vmem:[#allocation2 + $0x78] sm:$0xff]
      %v3462 = vld [vmem:[#allocation2 + $0x80] sm:$0xff]
      %v3463 = vld [vmem:[#allocation2 + $0x88] sm:$0xff]
      %v3464 = vld [vmem:[#allocation2 + $0x90] sm:$0xff]
      %v3465 = vld [vmem:[#allocation2 + $0x98] sm:$0xff]
      %v3466 = vld [vmem:[#allocation2 + $0xa0] sm:$0xff]
      %v3467 = vld [vmem:[#allocation2 + $0xa8] sm:$0xff]
      %v3468 = vld [vmem:[#allocation2 + $0xb0] sm:$0xff]
      %v3469 = vld [vmem:[#allocation2 + $0xb8] sm:$0xff]
      %v3470 = vld [vmem:[#allocation2 + $0xc0] sm:$0xff]
      %v3471 = vld [vmem:[#allocation2 + $0xc8] sm:$0xff]
      %v3472 = vld [vmem:[#allocation2 + $0xd0] sm:$0xff]
      %v3473 = vld [vmem:[#allocation2 + $0xd8] sm:$0xff]
      %v3474 = vld [vmem:[#allocation2 + $0xe0] sm:$0xff]
      %v3475 = vld [vmem:[#allocation2 + $0xe8] sm:$0xff]
      %v3476 = vld [vmem:[#allocation2 + $0xf0] sm:$0xff]
      %v3477 = vld [vmem:[#allocation2 + $0xf8] sm:$0xff]
      %v3478 = vld [vmem:[#allocation2 + $0x100] sm:$0xff]
      %v3479 = vld [vmem:[#allocation2 + $0x108] sm:$0xff]
      %v3480 = vld [vmem:[#allocation2 + $0x110] sm:$0xff]
      %v3481 = vld [vmem:[#allocation2 + $0x118] sm:$0xff]
      %v3482 = vld [vmem:[#allocation2 + $0x120] sm:$0xff]
      %v3483 = vld [vmem:[#allocation2 + $0x128] sm:$0xff]
      %v3484 = vld [vmem:[#allocation2 + $0x130] sm:$0xff]
      %v3485 = vld [vmem:[#allocation2 + $0x138] sm:$0xff]
      %v3486 = vld [vmem:[#allocation2 + $0x140] sm:$0xff]
      %v3487 = vld [vmem:[#allocation2 + $0x148] sm:$0xff]
      %v3488 = vld [vmem:[#allocation2 + $0x150] sm:$0xff]
      %v3489 = vld [vmem:[#allocation2 + $0x158] sm:$0xff]
      %v3490 = vld [vmem:[#allocation2 + $0x160] sm:$0xff]
      %v3491 = vld [vmem:[#allocation2 + $0x168] sm:$0xff]
      %v3492 = vld [vmem:[#allocation2 + $0x170] sm:$0xff]
      %v3493 = vld [vmem:[#allocation2 + $0x178] sm:$0xff]
      %v3494 = vld [vmem:[#allocation2 + $0x180] sm:$0xff]
      %v3495 = vld [vmem:[#allocation2 + $0x188] sm:$0xff]
      %v3496 = vld [vmem:[#allocation2 + $0x190] sm:$0xff]
      %v3497 = vld [vmem:[#allocation2 + $0x198] sm:$0xff]
      %v3498 = vld [vmem:[#allocation2 + $0x1a0] sm:$0xff]
      %v3499 = vpack.c.bf16 %v3453, %v3452
      %v3500 = vpack.c.bf16 %v3455, %v3454
      %v3501 = vpack.c.bf16 %v3457, %v3456
      %v3502 = vpack.c.bf16 %v3459, %v3458
      %v3503 = vpack.c.bf16 %v3461, %v3460
      %v3504 = vpack.c.bf16 %v3463, %v3462
      %v3505 = vpack.c.bf16 %v3465, %v3464
      %v3506 = vpack.c.bf16 %v3467, %v3466
      %v3507 = vpack.c.bf16 %v3469, %v3468
      %v3508 = vpack.c.bf16 %v3471, %v3470
      %v3509 = vpack.c.bf16 %v3473, %v3472
      %v3510 = vpack.c.bf16 %v3475, %v3474
      %v3511 = vpack.c.bf16 %v3477, %v3476
      %v3512 = vpack.c.bf16 %v3479, %v3478
      %v3513 = vpack.c.bf16 %v3481, %v3480
      %v3514 = vpack.c.bf16 %v3483, %v3482
      %v3515 = vpack.c.bf16 %v3485, %v3484
      %v3516 = vpack.c.bf16 %v3487, %v3486
      %v3517 = vpack.c.bf16 %v3489, %v3488
      %v3518 = vpack.c.bf16 %v3491, %v3490
      %v3519 = vpack.c.bf16 %v3493, %v3492
      %v3520 = vpack.c.bf16 %v3495, %v3494
      %v3521 = vpack.c.bf16 %v3497, %v3496
      %v3522 = vpack.c.bf16 %v3498, %v3498
      %s3523 = scalar_lea.vmem %s3, 12
      %v3524 = vld [vmem:[%s3523] sm:$0x3]
      %v3526 = vsel %vm239, %v3499, 0
      %v3529 = vsel %vm239, %v3500, 0
      %v3532 = vsel %vm239, %v3501, 0
      %v3535 = vsel %vm239, %v3502, 0
      %v3538 = vsel %vm239, %v3503, 0
      %v3541 = vsel %vm239, %v3504, 0
      %v3544 = vsel %vm239, %v3505, 0
      %v3547 = vsel %vm239, %v3506, 0
      %v3550 = vsel %vm239, %v3507, 0
      %v3553 = vsel %vm239, %v3508, 0
      %v3556 = vsel %vm239, %v3509, 0
      %v3559 = vsel %vm239, %v3510, 0
      %v3562 = vsel %vm239, %v3511, 0
      %v3565 = vsel %vm239, %v3512, 0
      %v3568 = vsel %vm239, %v3513, 0
      %v3571 = vsel %vm239, %v3514, 0
      %v3574 = vsel %vm239, %v3515, 0
      %v3577 = vsel %vm239, %v3516, 0
      %v3580 = vsel %vm239, %v3517, 0
      %v3583 = vsel %vm239, %v3518, 0
      %v3586 = vsel %vm239, %v3519, 0
      %v3589 = vsel %vm239, %v3520, 0
      %v3592 = vsel %vm239, %v3521, 0
      %v3595 = vsel %vm239, %v3522, 0
      %v3598 = vsel %vm612, %v3524, 0
      %3600 = vmatprep.subr.bf16.mxu0 0
      %3601 = vmatpush1.bf16.msra.mxu0 0
      %3602 = vmatprep.subr.bf16.mxu0 0
      %3603 = vmatpush1.bf16.msra.mxu0 0
      %3604 = vmatprep.subr.bf16.mxu0 0
      %3605 = vmatpush1.bf16.msra.mxu0 0
      %3606 = vmatprep.subr.bf16.mxu0 0
      %3607 = vmatpush1.bf16.msra.mxu0 0
      %3608 = vmatprep.subr.bf16.mxu0 0
      %3609 = vmatpush1.bf16.msra.mxu0 0
      %3610 = vmatprep.subr.bf16.mxu0 0
      %3611 = vmatpush1.bf16.msra.mxu0 0
      %3612 = vmatprep.subr.bf16.mxu0 0
      %3613 = vmatpush1.bf16.msra.mxu0 0
      %3614 = vmatprep.subr.bf16.mxu0 0
      %3615 = vmatpush1.bf16.msra.mxu0 %v3598
      %3616 = vmatprep.subr.bf16.mxu0 0
      %3617 = vmatpush2.bf16.msra.mxu0 0
      %3618 = vmatprep.subr.bf16.mxu0 0
      %3619 = vmatpush2.bf16.msra.mxu0 0
      %3620 = vmatprep.subr.bf16.mxu0 0
      %3621 = vmatpush2.bf16.msra.mxu0 0
      %3622 = vmatprep.subr.bf16.mxu0 0
      %3623 = vmatpush2.bf16.msra.mxu0 0
      %3624 = vmatprep.subr.bf16.mxu0 0
      %3625 = vmatpush2.bf16.msra.mxu0 0
      %3626 = vmatprep.subr.bf16.mxu0 0
      %3627 = vmatpush2.bf16.msra.mxu0 0
      %3628 = vmatprep.subr.bf16.mxu0 0
      %3629 = vmatpush2.bf16.msra.mxu0 0
      %3630 = vmatprep.subr.bf16.mxu0 0
      %3631 = vmatpush2.bf16.msra.mxu0 0
      %3632 = vmatprep.mubr.bf16.mxu0 0
      %3633 = vmatmul.mubr.bf16.gmra.mxu0 %v3526
      %v3634 = vpop.f32.mrf.mxu0
      %v3635 = vadd.f32 0.0, %v3634
      %v3636 = vpop.f32.mrf.mxu0
      %v3637 = vpop.f32.mrf.mxu0
      %v3638 = vadd.f32 0.0, %v3637
      %v3639 = vpop.f32.mrf.mxu0
      %3640 = vmatprep.mubr.bf16.mxu0 0
      %3641 = vmatmul.mubr.bf16.gmra.mxu0 %v3529
      %v3642 = vpop.f32.mrf.mxu0
      %v3643 = vadd.f32 0.0, %v3642
      %v3644 = vpop.f32.mrf.mxu0
      %v3645 = vpop.f32.mrf.mxu0
      %v3646 = vadd.f32 0.0, %v3645
      %v3647 = vpop.f32.mrf.mxu0
      %3648 = vmatprep.mubr.bf16.mxu0 0
      %3649 = vmatmul.mubr.bf16.gmra.mxu0 %v3532
      %v3650 = vpop.f32.mrf.mxu0
      %v3651 = vadd.f32 0.0, %v3650
      %v3652 = vpop.f32.mrf.mxu0
      %v3653 = vpop.f32.mrf.mxu0
      %v3654 = vadd.f32 0.0, %v3653
      %v3655 = vpop.f32.mrf.mxu0
      %3656 = vmatprep.mubr.bf16.mxu0 0
      %3657 = vmatmul.mubr.bf16.gmra.mxu0 %v3535
      %v3658 = vpop.f32.mrf.mxu0
      %v3659 = vadd.f32 0.0, %v3658
      %v3660 = vpop.f32.mrf.mxu0
      %v3661 = vpop.f32.mrf.mxu0
      %v3662 = vadd.f32 0.0, %v3661
      %v3663 = vpop.f32.mrf.mxu0
      %3664 = vmatprep.mubr.bf16.mxu0 0
      %3665 = vmatmul.mubr.bf16.gmra.mxu0 %v3538
      %v3666 = vpop.f32.mrf.mxu0
      %v3667 = vadd.f32 0.0, %v3666
      %v3668 = vpop.f32.mrf.mxu0
      %v3669 = vpop.f32.mrf.mxu0
      %v3670 = vadd.f32 0.0, %v3669
      %v3671 = vpop.f32.mrf.mxu0
      %3672 = vmatprep.mubr.bf16.mxu0 0
      %3673 = vmatmul.mubr.bf16.gmra.mxu0 %v3541
      %v3674 = vpop.f32.mrf.mxu0
      %v3675 = vadd.f32 0.0, %v3674
      %v3676 = vpop.f32.mrf.mxu0
      %v3677 = vpop.f32.mrf.mxu0
      %v3678 = vadd.f32 0.0, %v3677
      %v3679 = vpop.f32.mrf.mxu0
      %3680 = vmatprep.mubr.bf16.mxu0 0
      %3681 = vmatmul.mubr.bf16.gmra.mxu0 %v3544
      %v3682 = vpop.f32.mrf.mxu0
      %v3683 = vadd.f32 0.0, %v3682
      %v3684 = vpop.f32.mrf.mxu0
      %v3685 = vpop.f32.mrf.mxu0
      %v3686 = vadd.f32 0.0, %v3685
      %v3687 = vpop.f32.mrf.mxu0
      %3688 = vmatprep.mubr.bf16.mxu0 0
      %3689 = vmatmul.mubr.bf16.gmra.mxu0 %v3547
      %v3690 = vpop.f32.mrf.mxu0
      %v3691 = vadd.f32 0.0, %v3690
      %v3692 = vpop.f32.mrf.mxu0
      %v3693 = vpop.f32.mrf.mxu0
      %v3694 = vadd.f32 0.0, %v3693
      %v3695 = vpop.f32.mrf.mxu0
      %3696 = vmatprep.mubr.bf16.mxu0 0
      %3697 = vmatmul.mubr.bf16.gmra.mxu0 %v3550
      %v3698 = vpop.f32.mrf.mxu0
      %v3699 = vadd.f32 0.0, %v3698
      %v3700 = vpop.f32.mrf.mxu0
      %v3701 = vpop.f32.mrf.mxu0
      %v3702 = vadd.f32 0.0, %v3701
      %v3703 = vpop.f32.mrf.mxu0
      %3704 = vmatprep.mubr.bf16.mxu0 0
      %3705 = vmatmul.mubr.bf16.gmra.mxu0 %v3553
      %v3706 = vpop.f32.mrf.mxu0
      %v3707 = vadd.f32 0.0, %v3706
      %v3708 = vpop.f32.mrf.mxu0
      %v3709 = vpop.f32.mrf.mxu0
      %v3710 = vadd.f32 0.0, %v3709
      %v3711 = vpop.f32.mrf.mxu0
      %3712 = vmatprep.mubr.bf16.mxu0 0
      %3713 = vmatmul.mubr.bf16.gmra.mxu0 %v3556
      %v3714 = vpop.f32.mrf.mxu0
      %v3715 = vadd.f32 0.0, %v3714
      %v3716 = vpop.f32.mrf.mxu0
      %v3717 = vpop.f32.mrf.mxu0
      %v3718 = vadd.f32 0.0, %v3717
      %v3719 = vpop.f32.mrf.mxu0
      %3720 = vmatprep.mubr.bf16.mxu0 0
      %3721 = vmatmul.mubr.bf16.gmra.mxu0 %v3559
      %v3722 = vpop.f32.mrf.mxu0
      %v3723 = vadd.f32 0.0, %v3722
      %v3724 = vpop.f32.mrf.mxu0
      %v3725 = vpop.f32.mrf.mxu0
      %v3726 = vadd.f32 0.0, %v3725
      %v3727 = vpop.f32.mrf.mxu0
      %3728 = vmatprep.mubr.bf16.mxu0 0
      %3729 = vmatmul.mubr.bf16.gmra.mxu0 %v3562
      %v3730 = vpop.f32.mrf.mxu0
      %v3731 = vadd.f32 0.0, %v3730
      %v3732 = vpop.f32.mrf.mxu0
      %v3733 = vpop.f32.mrf.mxu0
      %v3734 = vadd.f32 0.0, %v3733
      %v3735 = vpop.f32.mrf.mxu0
      %3736 = vmatprep.mubr.bf16.mxu0 0
      %3737 = vmatmul.mubr.bf16.gmra.mxu0 %v3565
      %v3738 = vpop.f32.mrf.mxu0
      %v3739 = vadd.f32 0.0, %v3738
      %v3740 = vpop.f32.mrf.mxu0
      %v3741 = vpop.f32.mrf.mxu0
      %v3742 = vadd.f32 0.0, %v3741
      %v3743 = vpop.f32.mrf.mxu0
      %3744 = vmatprep.mubr.bf16.mxu0 0
      %3745 = vmatmul.mubr.bf16.gmra.mxu0 %v3568
      %v3746 = vpop.f32.mrf.mxu0
      %v3747 = vadd.f32 0.0, %v3746
      %v3748 = vpop.f32.mrf.mxu0
      %v3749 = vpop.f32.mrf.mxu0
      %v3750 = vadd.f32 0.0, %v3749
      %v3751 = vpop.f32.mrf.mxu0
      %3752 = vmatprep.mubr.bf16.mxu0 0
      %3753 = vmatmul.mubr.bf16.gmra.mxu0 %v3571
      %v3754 = vpop.f32.mrf.mxu0
      %v3755 = vadd.f32 0.0, %v3754
      %v3756 = vpop.f32.mrf.mxu0
      %v3757 = vpop.f32.mrf.mxu0
      %v3758 = vadd.f32 0.0, %v3757
      %v3759 = vpop.f32.mrf.mxu0
      %3760 = vmatprep.mubr.bf16.mxu0 0
      %3761 = vmatmul.mubr.bf16.gmra.mxu0 %v3574
      %v3762 = vpop.f32.mrf.mxu0
      %v3763 = vadd.f32 0.0, %v3762
      %v3764 = vpop.f32.mrf.mxu0
      %v3765 = vpop.f32.mrf.mxu0
      %v3766 = vadd.f32 0.0, %v3765
      %v3767 = vpop.f32.mrf.mxu0
      %3768 = vmatprep.mubr.bf16.mxu0 0
      %3769 = vmatmul.mubr.bf16.gmra.mxu0 %v3577
      %v3770 = vpop.f32.mrf.mxu0
      %v3771 = vadd.f32 0.0, %v3770
      %v3772 = vpop.f32.mrf.mxu0
      %v3773 = vpop.f32.mrf.mxu0
      %v3774 = vadd.f32 0.0, %v3773
      %v3775 = vpop.f32.mrf.mxu0
      %3776 = vmatprep.mubr.bf16.mxu0 0
      %3777 = vmatmul.mubr.bf16.gmra.mxu0 %v3580
      %v3778 = vpop.f32.mrf.mxu0
      %v3779 = vadd.f32 0.0, %v3778
      %v3780 = vpop.f32.mrf.mxu0
      %v3781 = vpop.f32.mrf.mxu0
      %v3782 = vadd.f32 0.0, %v3781
      %v3783 = vpop.f32.mrf.mxu0
      %3784 = vmatprep.mubr.bf16.mxu0 0
      %3785 = vmatmul.mubr.bf16.gmra.mxu0 %v3583
      %v3786 = vpop.f32.mrf.mxu0
      %v3787 = vadd.f32 0.0, %v3786
      %v3788 = vpop.f32.mrf.mxu0
      %v3789 = vpop.f32.mrf.mxu0
      %v3790 = vadd.f32 0.0, %v3789
      %v3791 = vpop.f32.mrf.mxu0
      %3792 = vmatprep.mubr.bf16.mxu0 0
      %3793 = vmatmul.mubr.bf16.gmra.mxu0 %v3586
      %v3794 = vpop.f32.mrf.mxu0
      %v3795 = vadd.f32 0.0, %v3794
      %v3796 = vpop.f32.mrf.mxu0
      %v3797 = vpop.f32.mrf.mxu0
      %v3798 = vadd.f32 0.0, %v3797
      %v3799 = vpop.f32.mrf.mxu0
      %3800 = vmatprep.mubr.bf16.mxu0 0
      %3801 = vmatmul.mubr.bf16.gmra.mxu0 %v3589
      %v3802 = vpop.f32.mrf.mxu0
      %v3803 = vadd.f32 0.0, %v3802
      %v3804 = vpop.f32.mrf.mxu0
      %v3805 = vpop.f32.mrf.mxu0
      %v3806 = vadd.f32 0.0, %v3805
      %v3807 = vpop.f32.mrf.mxu0
      %3808 = vmatprep.mubr.bf16.mxu0 0
      %3809 = vmatmul.mubr.bf16.gmra.mxu0 %v3592
      %v3810 = vpop.f32.mrf.mxu0
      %v3811 = vadd.f32 0.0, %v3810
      %v3812 = vpop.f32.mrf.mxu0
      %v3813 = vpop.f32.mrf.mxu0
      %v3814 = vadd.f32 0.0, %v3813
      %v3815 = vpop.f32.mrf.mxu0
      %3816 = vmatprep.mubr.bf16.mxu0 0
      %3817 = vmatmul.mubr.bf16.gmra.mxu0 %v3595
      %v3818 = vpop.f32.mrf.mxu0
      %v3819 = vadd.f32 0.0, %v3818
      %v3820 = vpop.f32.mrf.mxu0
      %v3821 = vpop.f32.mrf.mxu0
      %v3822 = vpop.f32.mrf.mxu0
      %3823 = vdwg.mxu0
      %v3824 = vld [vmem:[#allocation3] sm:$0xff]
      %v3825 = vld [vmem:[#allocation3 + $0x8] sm:$0xff]
      %v3826 = vld [vmem:[#allocation3 + $0x10] sm:$0xff]
      %v3827 = vld [vmem:[#allocation3 + $0x18] sm:$0xff]
      %v3828 = vld [vmem:[#allocation3 + $0x20] sm:$0xff]
      %v3829 = vld [vmem:[#allocation3 + $0x28] sm:$0xff]
      %v3830 = vld [vmem:[#allocation3 + $0x30] sm:$0xff]
      %v3831 = vld [vmem:[#allocation3 + $0x38] sm:$0xff]
      %v3832 = vld [vmem:[#allocation3 + $0x40] sm:$0xff]
      %v3833 = vld [vmem:[#allocation3 + $0x48] sm:$0xff]
      %v3834 = vld [vmem:[#allocation3 + $0x50] sm:$0xff]
      %v3835 = vld [vmem:[#allocation3 + $0x58] sm:$0xff]
      %v3836 = vld [vmem:[#allocation3 + $0x60] sm:$0xff]
      %v3837 = vld [vmem:[#allocation3 + $0x68] sm:$0xff]
      %v3838 = vld [vmem:[#allocation3 + $0x70] sm:$0xff]
      %v3839 = vld [vmem:[#allocation3 + $0x78] sm:$0xff]
      %v3840 = vld [vmem:[#allocation3 + $0x80] sm:$0xff]
      %v3841 = vld [vmem:[#allocation3 + $0x88] sm:$0xff]
      %v3842 = vld [vmem:[#allocation3 + $0x90] sm:$0xff]
      %v3843 = vld [vmem:[#allocation3 + $0x98] sm:$0xff]
      %v3844 = vld [vmem:[#allocation3 + $0xa0] sm:$0xff]
      %v3845 = vld [vmem:[#allocation3 + $0xa8] sm:$0xff]
      %v3846 = vld [vmem:[#allocation3 + $0xb0] sm:$0xff]
      %v3847 = vld [vmem:[#allocation3 + $0xb8] sm:$0xff]
      %v3848 = vld [vmem:[#allocation3 + $0xc0] sm:$0xff]
      %v3849 = vld [vmem:[#allocation3 + $0xc8] sm:$0xff]
      %v3850 = vld [vmem:[#allocation3 + $0xd0] sm:$0xff]
      %v3851 = vld [vmem:[#allocation3 + $0xd8] sm:$0xff]
      %v3852 = vld [vmem:[#allocation3 + $0xe0] sm:$0xff]
      %v3853 = vld [vmem:[#allocation3 + $0xe8] sm:$0xff]
      %v3854 = vld [vmem:[#allocation3 + $0xf0] sm:$0xff]
      %v3855 = vld [vmem:[#allocation3 + $0xf8] sm:$0xff]
      %v3856 = vld [vmem:[#allocation3 + $0x100] sm:$0xff]
      %v3857 = vld [vmem:[#allocation3 + $0x108] sm:$0xff]
      %v3858 = vld [vmem:[#allocation3 + $0x110] sm:$0xff]
      %v3859 = vld [vmem:[#allocation3 + $0x118] sm:$0xff]
      %v3860 = vld [vmem:[#allocation3 + $0x120] sm:$0xff]
      %v3861 = vld [vmem:[#allocation3 + $0x128] sm:$0xff]
      %v3862 = vld [vmem:[#allocation3 + $0x130] sm:$0xff]
      %v3863 = vld [vmem:[#allocation3 + $0x138] sm:$0xff]
      %v3864 = vld [vmem:[#allocation3 + $0x140] sm:$0xff]
      %v3865 = vld [vmem:[#allocation3 + $0x148] sm:$0xff]
      %v3866 = vld [vmem:[#allocation3 + $0x150] sm:$0xff]
      %v3867 = vld [vmem:[#allocation3 + $0x158] sm:$0xff]
      %v3868 = vld [vmem:[#allocation3 + $0x160] sm:$0xff]
      %v3869 = vld [vmem:[#allocation3 + $0x168] sm:$0xff]
      %v3870 = vld [vmem:[#allocation3 + $0x170] sm:$0xff]
      %v3871 = vadd.f32 %v3824, %v3635
      %v3872 = vadd.f32 %v3825, %v3638
      %v3873 = vadd.f32 %v3826, %v3643
      %v3874 = vadd.f32 %v3827, %v3646
      %v3875 = vadd.f32 %v3828, %v3651
      %v3876 = vadd.f32 %v3829, %v3654
      %v3877 = vadd.f32 %v3830, %v3659
      %v3878 = vadd.f32 %v3831, %v3662
      %v3879 = vadd.f32 %v3832, %v3667
      %v3880 = vadd.f32 %v3833, %v3670
      %v3881 = vadd.f32 %v3834, %v3675
      %v3882 = vadd.f32 %v3835, %v3678
      %v3883 = vadd.f32 %v3836, %v3683
      %v3884 = vadd.f32 %v3837, %v3686
      %v3885 = vadd.f32 %v3838, %v3691
      %v3886 = vadd.f32 %v3839, %v3694
      %v3887 = vadd.f32 %v3840, %v3699
      %v3888 = vadd.f32 %v3841, %v3702
      %v3889 = vadd.f32 %v3842, %v3707
      %v3890 = vadd.f32 %v3843, %v3710
      %v3891 = vadd.f32 %v3844, %v3715
      %v3892 = vadd.f32 %v3845, %v3718
      %v3893 = vadd.f32 %v3846, %v3723
      %v3894 = vadd.f32 %v3847, %v3726
      %v3895 = vadd.f32 %v3848, %v3731
      %v3896 = vadd.f32 %v3849, %v3734
      %v3897 = vadd.f32 %v3850, %v3739
      %v3898 = vadd.f32 %v3851, %v3742
      %v3899 = vadd.f32 %v3852, %v3747
      %v3900 = vadd.f32 %v3853, %v3750
      %v3901 = vadd.f32 %v3854, %v3755
      %v3902 = vadd.f32 %v3855, %v3758
      %v3903 = vadd.f32 %v3856, %v3763
      %v3904 = vadd.f32 %v3857, %v3766
      %v3905 = vadd.f32 %v3858, %v3771
      %v3906 = vadd.f32 %v3859, %v3774
      %v3907 = vadd.f32 %v3860, %v3779
      %v3908 = vadd.f32 %v3861, %v3782
      %v3909 = vadd.f32 %v3862, %v3787
      %v3910 = vadd.f32 %v3863, %v3790
      %v3911 = vadd.f32 %v3864, %v3795
      %v3912 = vadd.f32 %v3865, %v3798
      %v3913 = vadd.f32 %v3866, %v3803
      %v3914 = vadd.f32 %v3867, %v3806
      %v3915 = vadd.f32 %v3868, %v3811
      %v3916 = vadd.f32 %v3869, %v3814
      %v3917 = vadd.f32 %v3870, %v3819
      %3918 = vst.msk [vmem:[#allocation3] sm:$0xff] %vm239, %v3871
      %3919 = vst.msk [vmem:[#allocation3 + $0x8] sm:$0xff] %vm239, %v3872
      %3920 = vst.msk [vmem:[#allocation3 + $0x10] sm:$0xff] %vm239, %v3873
      %3921 = vst.msk [vmem:[#allocation3 + $0x18] sm:$0xff] %vm239, %v3874
      %3922 = vst.msk [vmem:[#allocation3 + $0x20] sm:$0xff] %vm239, %v3875
      %3923 = vst.msk [vmem:[#allocation3 + $0x28] sm:$0xff] %vm239, %v3876
      %3924 = vst.msk [vmem:[#allocation3 + $0x30] sm:$0xff] %vm239, %v3877
      %3925 = vst.msk [vmem:[#allocation3 + $0x38] sm:$0xff] %vm239, %v3878
      %3926 = vst.msk [vmem:[#allocation3 + $0x40] sm:$0xff] %vm239, %v3879
      %3927 = vst.msk [vmem:[#allocation3 + $0x48] sm:$0xff] %vm239, %v3880
      %3928 = vst.msk [vmem:[#allocation3 + $0x50] sm:$0xff] %vm239, %v3881
      %3929 = vst.msk [vmem:[#allocation3 + $0x58] sm:$0xff] %vm239, %v3882
      %3930 = vst.msk [vmem:[#allocation3 + $0x60] sm:$0xff] %vm239, %v3883
      %3931 = vst.msk [vmem:[#allocation3 + $0x68] sm:$0xff] %vm239, %v3884
      %3932 = vst.msk [vmem:[#allocation3 + $0x70] sm:$0xff] %vm239, %v3885
      %3933 = vst.msk [vmem:[#allocation3 + $0x78] sm:$0xff] %vm239, %v3886
      %3934 = vst.msk [vmem:[#allocation3 + $0x80] sm:$0xff] %vm239, %v3887
      %3935 = vst.msk [vmem:[#allocation3 + $0x88] sm:$0xff] %vm239, %v3888
      %3936 = vst.msk [vmem:[#allocation3 + $0x90] sm:$0xff] %vm239, %v3889
      %3937 = vst.msk [vmem:[#allocation3 + $0x98] sm:$0xff] %vm239, %v3890
      %3938 = vst.msk [vmem:[#allocation3 + $0xa0] sm:$0xff] %vm239, %v3891
      %3939 = vst.msk [vmem:[#allocation3 + $0xa8] sm:$0xff] %vm239, %v3892
      %3940 = vst.msk [vmem:[#allocation3 + $0xb0] sm:$0xff] %vm239, %v3893
      %3941 = vst.msk [vmem:[#allocation3 + $0xb8] sm:$0xff] %vm239, %v3894
      %3942 = vst.msk [vmem:[#allocation3 + $0xc0] sm:$0xff] %vm239, %v3895
      %3943 = vst.msk [vmem:[#allocation3 + $0xc8] sm:$0xff] %vm239, %v3896
      %3944 = vst.msk [vmem:[#allocation3 + $0xd0] sm:$0xff] %vm239, %v3897
      %3945 = vst.msk [vmem:[#allocation3 + $0xd8] sm:$0xff] %vm239, %v3898
      %3946 = vst.msk [vmem:[#allocation3 + $0xe0] sm:$0xff] %vm239, %v3899
      %3947 = vst.msk [vmem:[#allocation3 + $0xe8] sm:$0xff] %vm239, %v3900
      %3948 = vst.msk [vmem:[#allocation3 + $0xf0] sm:$0xff] %vm239, %v3901
      %3949 = vst.msk [vmem:[#allocation3 + $0xf8] sm:$0xff] %vm239, %v3902
      %3950 = vst.msk [vmem:[#allocation3 + $0x100] sm:$0xff] %vm239, %v3903
      %3951 = vst.msk [vmem:[#allocation3 + $0x108] sm:$0xff] %vm239, %v3904
      %3952 = vst.msk [vmem:[#allocation3 + $0x110] sm:$0xff] %vm239, %v3905
      %3953 = vst.msk [vmem:[#allocation3 + $0x118] sm:$0xff] %vm239, %v3906
      %3954 = vst.msk [vmem:[#allocation3 + $0x120] sm:$0xff] %vm239, %v3907
      %3955 = vst.msk [vmem:[#allocation3 + $0x128] sm:$0xff] %vm239, %v3908
      %3956 = vst.msk [vmem:[#allocation3 + $0x130] sm:$0xff] %vm239, %v3909
      %3957 = vst.msk [vmem:[#allocation3 + $0x138] sm:$0xff] %vm239, %v3910
      %3958 = vst.msk [vmem:[#allocation3 + $0x140] sm:$0xff] %vm239, %v3911
      %3959 = vst.msk [vmem:[#allocation3 + $0x148] sm:$0xff] %vm239, %v3912
      %3960 = vst.msk [vmem:[#allocation3 + $0x150] sm:$0xff] %vm239, %v3913
      %3961 = vst.msk [vmem:[#allocation3 + $0x158] sm:$0xff] %vm239, %v3914
      %3962 = vst.msk [vmem:[#allocation3 + $0x160] sm:$0xff] %vm239, %v3915
      %3963 = vst.msk [vmem:[#allocation3 + $0x168] sm:$0xff] %vm239, %v3916
      %3964 = vst.msk [vmem:[#allocation3 + $0x170] sm:$0xff] %vm239, %v3917
      %v3965 = vld [vmem:[#allocation2 + $0x31] sm:$0xff]
      %v3966 = vld [vmem:[#allocation2 + $0x39] sm:$0xff]
      %v3967 = vld [vmem:[#allocation2 + $0x41] sm:$0xff]
      %v3968 = vld [vmem:[#allocation2 + $0x49] sm:$0xff]
      %v3969 = vld [vmem:[#allocation2 + $0x51] sm:$0xff]
      %v3970 = vld [vmem:[#allocation2 + $0x59] sm:$0xff]
      %v3971 = vld [vmem:[#allocation2 + $0x61] sm:$0xff]
      %v3972 = vld [vmem:[#allocation2 + $0x69] sm:$0xff]
      %v3973 = vld [vmem:[#allocation2 + $0x71] sm:$0xff]
      %v3974 = vld [vmem:[#allocation2 + $0x79] sm:$0xff]
      %v3975 = vld [vmem:[#allocation2 + $0x81] sm:$0xff]
      %v3976 = vld [vmem:[#allocation2 + $0x89] sm:$0xff]
      %v3977 = vld [vmem:[#allocation2 + $0x91] sm:$0xff]
      %v3978 = vld [vmem:[#allocation2 + $0x99] sm:$0xff]
      %v3979 = vld [vmem:[#allocation2 + $0xa1] sm:$0xff]
      %v3980 = vld [vmem:[#allocation2 + $0xa9] sm:$0xff]
      %v3981 = vld [vmem:[#allocation2 + $0xb1] sm:$0xff]
      %v3982 = vld [vmem:[#allocation2 + $0xb9] sm:$0xff]
      %v3983 = vld [vmem:[#allocation2 + $0xc1] sm:$0xff]
      %v3984 = vld [vmem:[#allocation2 + $0xc9] sm:$0xff]
      %v3985 = vld [vmem:[#allocation2 + $0xd1] sm:$0xff]
      %v3986 = vld [vmem:[#allocation2 + $0xd9] sm:$0xff]
      %v3987 = vld [vmem:[#allocation2 + $0xe1] sm:$0xff]
      %v3988 = vld [vmem:[#allocation2 + $0xe9] sm:$0xff]
      %v3989 = vld [vmem:[#allocation2 + $0xf1] sm:$0xff]
      %v3990 = vld [vmem:[#allocation2 + $0xf9] sm:$0xff]
      %v3991 = vld [vmem:[#allocation2 + $0x101] sm:$0xff]
      %v3992 = vld [vmem:[#allocation2 + $0x109] sm:$0xff]
      %v3993 = vld [vmem:[#allocation2 + $0x111] sm:$0xff]
      %v3994 = vld [vmem:[#allocation2 + $0x119] sm:$0xff]
      %v3995 = vld [vmem:[#allocation2 + $0x121] sm:$0xff]
      %v3996 = vld [vmem:[#allocation2 + $0x129] sm:$0xff]
      %v3997 = vld [vmem:[#allocation2 + $0x131] sm:$0xff]
      %v3998 = vld [vmem:[#allocation2 + $0x139] sm:$0xff]
      %v3999 = vld [vmem:[#allocation2 + $0x141] sm:$0xff]
      %v4000 = vld [vmem:[#allocation2 + $0x149] sm:$0xff]
      %v4001 = vld [vmem:[#allocation2 + $0x151] sm:$0xff]
      %v4002 = vld [vmem:[#allocation2 + $0x159] sm:$0xff]
      %v4003 = vld [vmem:[#allocation2 + $0x161] sm:$0xff]
      %v4004 = vld [vmem:[#allocation2 + $0x169] sm:$0xff]
      %v4005 = vld [vmem:[#allocation2 + $0x171] sm:$0xff]
      %v4006 = vld [vmem:[#allocation2 + $0x179] sm:$0xff]
      %v4007 = vld [vmem:[#allocation2 + $0x181] sm:$0xff]
      %v4008 = vld [vmem:[#allocation2 + $0x189] sm:$0xff]
      %v4009 = vld [vmem:[#allocation2 + $0x191] sm:$0xff]
      %v4010 = vld [vmem:[#allocation2 + $0x199] sm:$0xff]
      %v4011 = vld [vmem:[#allocation2 + $0x1a1] sm:$0xff]
      %v4012 = vpack.c.bf16 %v3966, %v3965
      %v4013 = vpack.c.bf16 %v3968, %v3967
      %v4014 = vpack.c.bf16 %v3970, %v3969
      %v4015 = vpack.c.bf16 %v3972, %v3971
      %v4016 = vpack.c.bf16 %v3974, %v3973
      %v4017 = vpack.c.bf16 %v3976, %v3975
      %v4018 = vpack.c.bf16 %v3978, %v3977
      %v4019 = vpack.c.bf16 %v3980, %v3979
      %v4020 = vpack.c.bf16 %v3982, %v3981
      %v4021 = vpack.c.bf16 %v3984, %v3983
      %v4022 = vpack.c.bf16 %v3986, %v3985
      %v4023 = vpack.c.bf16 %v3988, %v3987
      %v4024 = vpack.c.bf16 %v3990, %v3989
      %v4025 = vpack.c.bf16 %v3992, %v3991
      %v4026 = vpack.c.bf16 %v3994, %v3993
      %v4027 = vpack.c.bf16 %v3996, %v3995
      %v4028 = vpack.c.bf16 %v3998, %v3997
      %v4029 = vpack.c.bf16 %v4000, %v3999
      %v4030 = vpack.c.bf16 %v4002, %v4001
      %v4031 = vpack.c.bf16 %v4004, %v4003
      %v4032 = vpack.c.bf16 %v4006, %v4005
      %v4033 = vpack.c.bf16 %v4008, %v4007
      %v4034 = vpack.c.bf16 %v4010, %v4009
      %v4035 = vpack.c.bf16 %v4011, %v4011
      %s4036 = scalar_lea.vmem %s3, 14
      %v4037 = vld [vmem:[%s4036] sm:$0x3]
      %v4039 = vsel %vm239, %v4012, 0
      %v4042 = vsel %vm239, %v4013, 0
      %v4045 = vsel %vm239, %v4014, 0
      %v4048 = vsel %vm239, %v4015, 0
      %v4051 = vsel %vm239, %v4016, 0
      %v4054 = vsel %vm239, %v4017, 0
      %v4057 = vsel %vm239, %v4018, 0
      %v4060 = vsel %vm239, %v4019, 0
      %v4063 = vsel %vm239, %v4020, 0
      %v4066 = vsel %vm239, %v4021, 0
      %v4069 = vsel %vm239, %v4022, 0
      %v4072 = vsel %vm239, %v4023, 0
      %v4075 = vsel %vm239, %v4024, 0
      %v4078 = vsel %vm239, %v4025, 0
      %v4081 = vsel %vm239, %v4026, 0
      %v4084 = vsel %vm239, %v4027, 0
      %v4087 = vsel %vm239, %v4028, 0
      %v4090 = vsel %vm239, %v4029, 0
      %v4093 = vsel %vm239, %v4030, 0
      %v4096 = vsel %vm239, %v4031, 0
      %v4099 = vsel %vm239, %v4032, 0
      %v4102 = vsel %vm239, %v4033, 0
      %v4105 = vsel %vm239, %v4034, 0
      %v4108 = vsel %vm239, %v4035, 0
      %v4111 = vsel %vm612, %v4037, 0
      %4113 = vmatprep.subr.bf16.mxu0 0
      %4114 = vmatpush1.bf16.msra.mxu0 0
      %4115 = vmatprep.subr.bf16.mxu0 0
      %4116 = vmatpush1.bf16.msra.mxu0 0
      %4117 = vmatprep.subr.bf16.mxu0 0
      %4118 = vmatpush1.bf16.msra.mxu0 0
      %4119 = vmatprep.subr.bf16.mxu0 0
      %4120 = vmatpush1.bf16.msra.mxu0 0
      %4121 = vmatprep.subr.bf16.mxu0 0
      %4122 = vmatpush1.bf16.msra.mxu0 0
      %4123 = vmatprep.subr.bf16.mxu0 0
      %4124 = vmatpush1.bf16.msra.mxu0 0
      %4125 = vmatprep.subr.bf16.mxu0 0
      %4126 = vmatpush1.bf16.msra.mxu0 0
      %4127 = vmatprep.subr.bf16.mxu0 0
      %4128 = vmatpush1.bf16.msra.mxu0 %v4111
      %4129 = vmatprep.subr.bf16.mxu0 0
      %4130 = vmatpush2.bf16.msra.mxu0 0
      %4131 = vmatprep.subr.bf16.mxu0 0
      %4132 = vmatpush2.bf16.msra.mxu0 0
      %4133 = vmatprep.subr.bf16.mxu0 0
      %4134 = vmatpush2.bf16.msra.mxu0 0
      %4135 = vmatprep.subr.bf16.mxu0 0
      %4136 = vmatpush2.bf16.msra.mxu0 0
      %4137 = vmatprep.subr.bf16.mxu0 0
      %4138 = vmatpush2.bf16.msra.mxu0 0
      %4139 = vmatprep.subr.bf16.mxu0 0
      %4140 = vmatpush2.bf16.msra.mxu0 0
      %4141 = vmatprep.subr.bf16.mxu0 0
      %4142 = vmatpush2.bf16.msra.mxu0 0
      %4143 = vmatprep.subr.bf16.mxu0 0
      %4144 = vmatpush2.bf16.msra.mxu0 0
      %4145 = vmatprep.mubr.bf16.mxu0 0
      %4146 = vmatmul.mubr.bf16.gmra.mxu0 %v4039
      %v4147 = vpop.f32.mrf.mxu0
      %v4148 = vadd.f32 0.0, %v4147
      %v4149 = vpop.f32.mrf.mxu0
      %v4150 = vpop.f32.mrf.mxu0
      %v4151 = vadd.f32 0.0, %v4150
      %v4152 = vpop.f32.mrf.mxu0
      %4153 = vmatprep.mubr.bf16.mxu0 0
      %4154 = vmatmul.mubr.bf16.gmra.mxu0 %v4042
      %v4155 = vpop.f32.mrf.mxu0
      %v4156 = vadd.f32 0.0, %v4155
      %v4157 = vpop.f32.mrf.mxu0
      %v4158 = vpop.f32.mrf.mxu0
      %v4159 = vadd.f32 0.0, %v4158
      %v4160 = vpop.f32.mrf.mxu0
      %4161 = vmatprep.mubr.bf16.mxu0 0
      %4162 = vmatmul.mubr.bf16.gmra.mxu0 %v4045
      %v4163 = vpop.f32.mrf.mxu0
      %v4164 = vadd.f32 0.0, %v4163
      %v4165 = vpop.f32.mrf.mxu0
      %v4166 = vpop.f32.mrf.mxu0
      %v4167 = vadd.f32 0.0, %v4166
      %v4168 = vpop.f32.mrf.mxu0
      %4169 = vmatprep.mubr.bf16.mxu0 0
      %4170 = vmatmul.mubr.bf16.gmra.mxu0 %v4048
      %v4171 = vpop.f32.mrf.mxu0
      %v4172 = vadd.f32 0.0, %v4171
      %v4173 = vpop.f32.mrf.mxu0
      %v4174 = vpop.f32.mrf.mxu0
      %v4175 = vadd.f32 0.0, %v4174
      %v4176 = vpop.f32.mrf.mxu0
      %4177 = vmatprep.mubr.bf16.mxu0 0
      %4178 = vmatmul.mubr.bf16.gmra.mxu0 %v4051
      %v4179 = vpop.f32.mrf.mxu0
      %v4180 = vadd.f32 0.0, %v4179
      %v4181 = vpop.f32.mrf.mxu0
      %v4182 = vpop.f32.mrf.mxu0
      %v4183 = vadd.f32 0.0, %v4182
      %v4184 = vpop.f32.mrf.mxu0
      %4185 = vmatprep.mubr.bf16.mxu0 0
      %4186 = vmatmul.mubr.bf16.gmra.mxu0 %v4054
      %v4187 = vpop.f32.mrf.mxu0
      %v4188 = vadd.f32 0.0, %v4187
      %v4189 = vpop.f32.mrf.mxu0
      %v4190 = vpop.f32.mrf.mxu0
      %v4191 = vadd.f32 0.0, %v4190
      %v4192 = vpop.f32.mrf.mxu0
      %4193 = vmatprep.mubr.bf16.mxu0 0
      %4194 = vmatmul.mubr.bf16.gmra.mxu0 %v4057
      %v4195 = vpop.f32.mrf.mxu0
      %v4196 = vadd.f32 0.0, %v4195
      %v4197 = vpop.f32.mrf.mxu0
      %v4198 = vpop.f32.mrf.mxu0
      %v4199 = vadd.f32 0.0, %v4198
      %v4200 = vpop.f32.mrf.mxu0
      %4201 = vmatprep.mubr.bf16.mxu0 0
      %4202 = vmatmul.mubr.bf16.gmra.mxu0 %v4060
      %v4203 = vpop.f32.mrf.mxu0
      %v4204 = vadd.f32 0.0, %v4203
      %v4205 = vpop.f32.mrf.mxu0
      %v4206 = vpop.f32.mrf.mxu0
      %v4207 = vadd.f32 0.0, %v4206
      %v4208 = vpop.f32.mrf.mxu0
      %4209 = vmatprep.mubr.bf16.mxu0 0
      %4210 = vmatmul.mubr.bf16.gmra.mxu0 %v4063
      %v4211 = vpop.f32.mrf.mxu0
      %v4212 = vadd.f32 0.0, %v4211
      %v4213 = vpop.f32.mrf.mxu0
      %v4214 = vpop.f32.mrf.mxu0
      %v4215 = vadd.f32 0.0, %v4214
      %v4216 = vpop.f32.mrf.mxu0
      %4217 = vmatprep.mubr.bf16.mxu0 0
      %4218 = vmatmul.mubr.bf16.gmra.mxu0 %v4066
      %v4219 = vpop.f32.mrf.mxu0
      %v4220 = vadd.f32 0.0, %v4219
      %v4221 = vpop.f32.mrf.mxu0
      %v4222 = vpop.f32.mrf.mxu0
      %v4223 = vadd.f32 0.0, %v4222
      %v4224 = vpop.f32.mrf.mxu0
      %4225 = vmatprep.mubr.bf16.mxu0 0
      %4226 = vmatmul.mubr.bf16.gmra.mxu0 %v4069
      %v4227 = vpop.f32.mrf.mxu0
      %v4228 = vadd.f32 0.0, %v4227
      %v4229 = vpop.f32.mrf.mxu0
      %v4230 = vpop.f32.mrf.mxu0
      %v4231 = vadd.f32 0.0, %v4230
      %v4232 = vpop.f32.mrf.mxu0
      %4233 = vmatprep.mubr.bf16.mxu0 0
      %4234 = vmatmul.mubr.bf16.gmra.mxu0 %v4072
      %v4235 = vpop.f32.mrf.mxu0
      %v4236 = vadd.f32 0.0, %v4235
      %v4237 = vpop.f32.mrf.mxu0
      %v4238 = vpop.f32.mrf.mxu0
      %v4239 = vadd.f32 0.0, %v4238
      %v4240 = vpop.f32.mrf.mxu0
      %4241 = vmatprep.mubr.bf16.mxu0 0
      %4242 = vmatmul.mubr.bf16.gmra.mxu0 %v4075
      %v4243 = vpop.f32.mrf.mxu0
      %v4244 = vadd.f32 0.0, %v4243
      %v4245 = vpop.f32.mrf.mxu0
      %v4246 = vpop.f32.mrf.mxu0
      %v4247 = vadd.f32 0.0, %v4246
      %v4248 = vpop.f32.mrf.mxu0
      %4249 = vmatprep.mubr.bf16.mxu0 0
      %4250 = vmatmul.mubr.bf16.gmra.mxu0 %v4078
      %v4251 = vpop.f32.mrf.mxu0
      %v4252 = vadd.f32 0.0, %v4251
      %v4253 = vpop.f32.mrf.mxu0
      %v4254 = vpop.f32.mrf.mxu0
      %v4255 = vadd.f32 0.0, %v4254
      %v4256 = vpop.f32.mrf.mxu0
      %4257 = vmatprep.mubr.bf16.mxu0 0
      %4258 = vmatmul.mubr.bf16.gmra.mxu0 %v4081
      %v4259 = vpop.f32.mrf.mxu0
      %v4260 = vadd.f32 0.0, %v4259
      %v4261 = vpop.f32.mrf.mxu0
      %v4262 = vpop.f32.mrf.mxu0
      %v4263 = vadd.f32 0.0, %v4262
      %v4264 = vpop.f32.mrf.mxu0
      %4265 = vmatprep.mubr.bf16.mxu0 0
      %4266 = vmatmul.mubr.bf16.gmra.mxu0 %v4084
      %v4267 = vpop.f32.mrf.mxu0
      %v4268 = vadd.f32 0.0, %v4267
      %v4269 = vpop.f32.mrf.mxu0
      %v4270 = vpop.f32.mrf.mxu0
      %v4271 = vadd.f32 0.0, %v4270
      %v4272 = vpop.f32.mrf.mxu0
      %4273 = vmatprep.mubr.bf16.mxu0 0
      %4274 = vmatmul.mubr.bf16.gmra.mxu0 %v4087
      %v4275 = vpop.f32.mrf.mxu0
      %v4276 = vadd.f32 0.0, %v4275
      %v4277 = vpop.f32.mrf.mxu0
      %v4278 = vpop.f32.mrf.mxu0
      %v4279 = vadd.f32 0.0, %v4278
      %v4280 = vpop.f32.mrf.mxu0
      %4281 = vmatprep.mubr.bf16.mxu0 0
      %4282 = vmatmul.mubr.bf16.gmra.mxu0 %v4090
      %v4283 = vpop.f32.mrf.mxu0
      %v4284 = vadd.f32 0.0, %v4283
      %v4285 = vpop.f32.mrf.mxu0
      %v4286 = vpop.f32.mrf.mxu0
      %v4287 = vadd.f32 0.0, %v4286
      %v4288 = vpop.f32.mrf.mxu0
      %4289 = vmatprep.mubr.bf16.mxu0 0
      %4290 = vmatmul.mubr.bf16.gmra.mxu0 %v4093
      %v4291 = vpop.f32.mrf.mxu0
      %v4292 = vadd.f32 0.0, %v4291
      %v4293 = vpop.f32.mrf.mxu0
      %v4294 = vpop.f32.mrf.mxu0
      %v4295 = vadd.f32 0.0, %v4294
      %v4296 = vpop.f32.mrf.mxu0
      %4297 = vmatprep.mubr.bf16.mxu0 0
      %4298 = vmatmul.mubr.bf16.gmra.mxu0 %v4096
      %v4299 = vpop.f32.mrf.mxu0
      %v4300 = vadd.f32 0.0, %v4299
      %v4301 = vpop.f32.mrf.mxu0
      %v4302 = vpop.f32.mrf.mxu0
      %v4303 = vadd.f32 0.0, %v4302
      %v4304 = vpop.f32.mrf.mxu0
      %4305 = vmatprep.mubr.bf16.mxu0 0
      %4306 = vmatmul.mubr.bf16.gmra.mxu0 %v4099
      %v4307 = vpop.f32.mrf.mxu0
      %v4308 = vadd.f32 0.0, %v4307
      %v4309 = vpop.f32.mrf.mxu0
      %v4310 = vpop.f32.mrf.mxu0
      %v4311 = vadd.f32 0.0, %v4310
      %v4312 = vpop.f32.mrf.mxu0
      %4313 = vmatprep.mubr.bf16.mxu0 0
      %4314 = vmatmul.mubr.bf16.gmra.mxu0 %v4102
      %v4315 = vpop.f32.mrf.mxu0
      %v4316 = vadd.f32 0.0, %v4315
      %v4317 = vpop.f32.mrf.mxu0
      %v4318 = vpop.f32.mrf.mxu0
      %v4319 = vadd.f32 0.0, %v4318
      %v4320 = vpop.f32.mrf.mxu0
      %4321 = vmatprep.mubr.bf16.mxu0 0
      %4322 = vmatmul.mubr.bf16.gmra.mxu0 %v4105
      %v4323 = vpop.f32.mrf.mxu0
      %v4324 = vadd.f32 0.0, %v4323
      %v4325 = vpop.f32.mrf.mxu0
      %v4326 = vpop.f32.mrf.mxu0
      %v4327 = vadd.f32 0.0, %v4326
      %v4328 = vpop.f32.mrf.mxu0
      %4329 = vmatprep.mubr.bf16.mxu0 0
      %4330 = vmatmul.mubr.bf16.gmra.mxu0 %v4108
      %v4331 = vpop.f32.mrf.mxu0
      %v4332 = vadd.f32 0.0, %v4331
      %v4333 = vpop.f32.mrf.mxu0
      %v4334 = vpop.f32.mrf.mxu0
      %v4335 = vpop.f32.mrf.mxu0
      %4336 = vdwg.mxu0
      %v4337 = vld [vmem:[#allocation3] sm:$0xff]
      %v4338 = vld [vmem:[#allocation3 + $0x8] sm:$0xff]
      %v4339 = vld [vmem:[#allocation3 + $0x10] sm:$0xff]
      %v4340 = vld [vmem:[#allocation3 + $0x18] sm:$0xff]
      %v4341 = vld [vmem:[#allocation3 + $0x20] sm:$0xff]
      %v4342 = vld [vmem:[#allocation3 + $0x28] sm:$0xff]
      %v4343 = vld [vmem:[#allocation3 + $0x30] sm:$0xff]
      %v4344 = vld [vmem:[#allocation3 + $0x38] sm:$0xff]
      %v4345 = vld [vmem:[#allocation3 + $0x40] sm:$0xff]
      %v4346 = vld [vmem:[#allocation3 + $0x48] sm:$0xff]
      %v4347 = vld [vmem:[#allocation3 + $0x50] sm:$0xff]
      %v4348 = vld [vmem:[#allocation3 + $0x58] sm:$0xff]
      %v4349 = vld [vmem:[#allocation3 + $0x60] sm:$0xff]
      %v4350 = vld [vmem:[#allocation3 + $0x68] sm:$0xff]
      %v4351 = vld [vmem:[#allocation3 + $0x70] sm:$0xff]
      %v4352 = vld [vmem:[#allocation3 + $0x78] sm:$0xff]
      %v4353 = vld [vmem:[#allocation3 + $0x80] sm:$0xff]
      %v4354 = vld [vmem:[#allocation3 + $0x88] sm:$0xff]
      %v4355 = vld [vmem:[#allocation3 + $0x90] sm:$0xff]
      %v4356 = vld [vmem:[#allocation3 + $0x98] sm:$0xff]
      %v4357 = vld [vmem:[#allocation3 + $0xa0] sm:$0xff]
      %v4358 = vld [vmem:[#allocation3 + $0xa8] sm:$0xff]
      %v4359 = vld [vmem:[#allocation3 + $0xb0] sm:$0xff]
      %v4360 = vld [vmem:[#allocation3 + $0xb8] sm:$0xff]
      %v4361 = vld [vmem:[#allocation3 + $0xc0] sm:$0xff]
      %v4362 = vld [vmem:[#allocation3 + $0xc8] sm:$0xff]
      %v4363 = vld [vmem:[#allocation3 + $0xd0] sm:$0xff]
      %v4364 = vld [vmem:[#allocation3 + $0xd8] sm:$0xff]
      %v4365 = vld [vmem:[#allocation3 + $0xe0] sm:$0xff]
      %v4366 = vld [vmem:[#allocation3 + $0xe8] sm:$0xff]
      %v4367 = vld [vmem:[#allocation3 + $0xf0] sm:$0xff]
      %v4368 = vld [vmem:[#allocation3 + $0xf8] sm:$0xff]
      %v4369 = vld [vmem:[#allocation3 + $0x100] sm:$0xff]
      %v4370 = vld [vmem:[#allocation3 + $0x108] sm:$0xff]
      %v4371 = vld [vmem:[#allocation3 + $0x110] sm:$0xff]
      %v4372 = vld [vmem:[#allocation3 + $0x118] sm:$0xff]
      %v4373 = vld [vmem:[#allocation3 + $0x120] sm:$0xff]
      %v4374 = vld [vmem:[#allocation3 + $0x128] sm:$0xff]
      %v4375 = vld [vmem:[#allocation3 + $0x130] sm:$0xff]
      %v4376 = vld [vmem:[#allocation3 + $0x138] sm:$0xff]
      %v4377 = vld [vmem:[#allocation3 + $0x140] sm:$0xff]
      %v4378 = vld [vmem:[#allocation3 + $0x148] sm:$0xff]
      %v4379 = vld [vmem:[#allocation3 + $0x150] sm:$0xff]
      %v4380 = vld [vmem:[#allocation3 + $0x158] sm:$0xff]
      %v4381 = vld [vmem:[#allocation3 + $0x160] sm:$0xff]
      %v4382 = vld [vmem:[#allocation3 + $0x168] sm:$0xff]
      %v4383 = vld [vmem:[#allocation3 + $0x170] sm:$0xff]
      %v4384 = vadd.f32 %v4337, %v4148
      %v4385 = vadd.f32 %v4338, %v4151
      %v4386 = vadd.f32 %v4339, %v4156
      %v4387 = vadd.f32 %v4340, %v4159
      %v4388 = vadd.f32 %v4341, %v4164
      %v4389 = vadd.f32 %v4342, %v4167
      %v4390 = vadd.f32 %v4343, %v4172
      %v4391 = vadd.f32 %v4344, %v4175
      %v4392 = vadd.f32 %v4345, %v4180
      %v4393 = vadd.f32 %v4346, %v4183
      %v4394 = vadd.f32 %v4347, %v4188
      %v4395 = vadd.f32 %v4348, %v4191
      %v4396 = vadd.f32 %v4349, %v4196
      %v4397 = vadd.f32 %v4350, %v4199
      %v4398 = vadd.f32 %v4351, %v4204
      %v4399 = vadd.f32 %v4352, %v4207
      %v4400 = vadd.f32 %v4353, %v4212
      %v4401 = vadd.f32 %v4354, %v4215
      %v4402 = vadd.f32 %v4355, %v4220
      %v4403 = vadd.f32 %v4356, %v4223
      %v4404 = vadd.f32 %v4357, %v4228
      %v4405 = vadd.f32 %v4358, %v4231
      %v4406 = vadd.f32 %v4359, %v4236
      %v4407 = vadd.f32 %v4360, %v4239
      %v4408 = vadd.f32 %v4361, %v4244
      %v4409 = vadd.f32 %v4362, %v4247
      %v4410 = vadd.f32 %v4363, %v4252
      %v4411 = vadd.f32 %v4364, %v4255
      %v4412 = vadd.f32 %v4365, %v4260
      %v4413 = vadd.f32 %v4366, %v4263
      %v4414 = vadd.f32 %v4367, %v4268
      %v4415 = vadd.f32 %v4368, %v4271
      %v4416 = vadd.f32 %v4369, %v4276
      %v4417 = vadd.f32 %v4370, %v4279
      %v4418 = vadd.f32 %v4371, %v4284
      %v4419 = vadd.f32 %v4372, %v4287
      %v4420 = vadd.f32 %v4373, %v4292
      %v4421 = vadd.f32 %v4374, %v4295
      %v4422 = vadd.f32 %v4375, %v4300
      %v4423 = vadd.f32 %v4376, %v4303
      %v4424 = vadd.f32 %v4377, %v4308
      %v4425 = vadd.f32 %v4378, %v4311
      %v4426 = vadd.f32 %v4379, %v4316
      %v4427 = vadd.f32 %v4380, %v4319
      %v4428 = vadd.f32 %v4381, %v4324
      %v4429 = vadd.f32 %v4382, %v4327
      %v4430 = vadd.f32 %v4383, %v4332
      %4431 = vst.msk [vmem:[#allocation3] sm:$0xff] %vm239, %v4384
      %4432 = vst.msk [vmem:[#allocation3 + $0x8] sm:$0xff] %vm239, %v4385
      %4433 = vst.msk [vmem:[#allocation3 + $0x10] sm:$0xff] %vm239, %v4386
      %4434 = vst.msk [vmem:[#allocation3 + $0x18] sm:$0xff] %vm239, %v4387
      %4435 = vst.msk [vmem:[#allocation3 + $0x20] sm:$0xff] %vm239, %v4388
      %4436 = vst.msk [vmem:[#allocation3 + $0x28] sm:$0xff] %vm239, %v4389
      %4437 = vst.msk [vmem:[#allocation3 + $0x30] sm:$0xff] %vm239, %v4390
      %4438 = vst.msk [vmem:[#allocation3 + $0x38] sm:$0xff] %vm239, %v4391
      %4439 = vst.msk [vmem:[#allocation3 + $0x40] sm:$0xff] %vm239, %v4392
      %4440 = vst.msk [vmem:[#allocation3 + $0x48] sm:$0xff] %vm239, %v4393
      %4441 = vst.msk [vmem:[#allocation3 + $0x50] sm:$0xff] %vm239, %v4394
      %4442 = vst.msk [vmem:[#allocation3 + $0x58] sm:$0xff] %vm239, %v4395
      %4443 = vst.msk [vmem:[#allocation3 + $0x60] sm:$0xff] %vm239, %v4396
      %4444 = vst.msk [vmem:[#allocation3 + $0x68] sm:$0xff] %vm239, %v4397
      %4445 = vst.msk [vmem:[#allocation3 + $0x70] sm:$0xff] %vm239, %v4398
      %4446 = vst.msk [vmem:[#allocation3 + $0x78] sm:$0xff] %vm239, %v4399
      %4447 = vst.msk [vmem:[#allocation3 + $0x80] sm:$0xff] %vm239, %v4400
      %4448 = vst.msk [vmem:[#allocation3 + $0x88] sm:$0xff] %vm239, %v4401
      %4449 = vst.msk [vmem:[#allocation3 + $0x90] sm:$0xff] %vm239, %v4402
      %4450 = vst.msk [vmem:[#allocation3 + $0x98] sm:$0xff] %vm239, %v4403
      %4451 = vst.msk [vmem:[#allocation3 + $0xa0] sm:$0xff] %vm239, %v4404
      %4452 = vst.msk [vmem:[#allocation3 + $0xa8] sm:$0xff] %vm239, %v4405
      %4453 = vst.msk [vmem:[#allocation3 + $0xb0] sm:$0xff] %vm239, %v4406
      %4454 = vst.msk [vmem:[#allocation3 + $0xb8] sm:$0xff] %vm239, %v4407
      %4455 = vst.msk [vmem:[#allocation3 + $0xc0] sm:$0xff] %vm239, %v4408
      %4456 = vst.msk [vmem:[#allocation3 + $0xc8] sm:$0xff] %vm239, %v4409
      %4457 = vst.msk [vmem:[#allocation3 + $0xd0] sm:$0xff] %vm239, %v4410
      %4458 = vst.msk [vmem:[#allocation3 + $0xd8] sm:$0xff] %vm239, %v4411
      %4459 = vst.msk [vmem:[#allocation3 + $0xe0] sm:$0xff] %vm239, %v4412
      %4460 = vst.msk [vmem:[#allocation3 + $0xe8] sm:$0xff] %vm239, %v4413
      %4461 = vst.msk [vmem:[#allocation3 + $0xf0] sm:$0xff] %vm239, %v4414
      %4462 = vst.msk [vmem:[#allocation3 + $0xf8] sm:$0xff] %vm239, %v4415
      %4463 = vst.msk [vmem:[#allocation3 + $0x100] sm:$0xff] %vm239, %v4416
      %4464 = vst.msk [vmem:[#allocation3 + $0x108] sm:$0xff] %vm239, %v4417
      %4465 = vst.msk [vmem:[#allocation3 + $0x110] sm:$0xff] %vm239, %v4418
      %4466 = vst.msk [vmem:[#allocation3 + $0x118] sm:$0xff] %vm239, %v4419
      %4467 = vst.msk [vmem:[#allocation3 + $0x120] sm:$0xff] %vm239, %v4420
      %4468 = vst.msk [vmem:[#allocation3 + $0x128] sm:$0xff] %vm239, %v4421
      %4469 = vst.msk [vmem:[#allocation3 + $0x130] sm:$0xff] %vm239, %v4422
      %4470 = vst.msk [vmem:[#allocation3 + $0x138] sm:$0xff] %vm239, %v4423
      %4471 = vst.msk [vmem:[#allocation3 + $0x140] sm:$0xff] %vm239, %v4424
      %4472 = vst.msk [vmem:[#allocation3 + $0x148] sm:$0xff] %vm239, %v4425
      %4473 = vst.msk [vmem:[#allocation3 + $0x150] sm:$0xff] %vm239, %v4426
      %4474 = vst.msk [vmem:[#allocation3 + $0x158] sm:$0xff] %vm239, %v4427
      %4475 = vst.msk [vmem:[#allocation3 + $0x160] sm:$0xff] %vm239, %v4428
      %4476 = vst.msk [vmem:[#allocation3 + $0x168] sm:$0xff] %vm239, %v4429
      %4477 = vst.msk [vmem:[#allocation3 + $0x170] sm:$0xff] %vm239, %v4430
      %v4478 = vld [vmem:[#allocation2 + $0x32] sm:$0xff]
      %v4479 = vld [vmem:[#allocation2 + $0x3a] sm:$0xff]
      %v4480 = vld [vmem:[#allocation2 + $0x42] sm:$0xff]
      %v4481 = vld [vmem:[#allocation2 + $0x4a] sm:$0xff]
      %v4482 = vld [vmem:[#allocation2 + $0x52] sm:$0xff]
      %v4483 = vld [vmem:[#allocation2 + $0x5a] sm:$0xff]
      %v4484 = vld [vmem:[#allocation2 + $0x62] sm:$0xff]
      %v4485 = vld [vmem:[#allocation2 + $0x6a] sm:$0xff]
      %v4486 = vld [vmem:[#allocation2 + $0x72] sm:$0xff]
      %v4487 = vld [vmem:[#allocation2 + $0x7a] sm:$0xff]
      %v4488 = vld [vmem:[#allocation2 + $0x82] sm:$0xff]
      %v4489 = vld [vmem:[#allocation2 + $0x8a] sm:$0xff]
      %v4490 = vld [vmem:[#allocation2 + $0x92] sm:$0xff]
      %v4491 = vld [vmem:[#allocation2 + $0x9a] sm:$0xff]
      %v4492 = vld [vmem:[#allocation2 + $0xa2] sm:$0xff]
      %v4493 = vld [vmem:[#allocation2 + $0xaa] sm:$0xff]
      %v4494 = vld [vmem:[#allocation2 + $0xb2] sm:$0xff]
      %v4495 = vld [vmem:[#allocation2 + $0xba] sm:$0xff]
      %v4496 = vld [vmem:[#allocation2 + $0xc2] sm:$0xff]
      %v4497 = vld [vmem:[#allocation2 + $0xca] sm:$0xff]
      %v4498 = vld [vmem:[#allocation2 + $0xd2] sm:$0xff]
      %v4499 = vld [vmem:[#allocation2 + $0xda] sm:$0xff]
      %v4500 = vld [vmem:[#allocation2 + $0xe2] sm:$0xff]
      %v4501 = vld [vmem:[#allocation2 + $0xea] sm:$0xff]
      %v4502 = vld [vmem:[#allocation2 + $0xf2] sm:$0xff]
      %v4503 = vld [vmem:[#allocation2 + $0xfa] sm:$0xff]
      %v4504 = vld [vmem:[#allocation2 + $0x102] sm:$0xff]
      %v4505 = vld [vmem:[#allocation2 + $0x10a] sm:$0xff]
      %v4506 = vld [vmem:[#allocation2 + $0x112] sm:$0xff]
      %v4507 = vld [vmem:[#allocation2 + $0x11a] sm:$0xff]
      %v4508 = vld [vmem:[#allocation2 + $0x122] sm:$0xff]
      %v4509 = vld [vmem:[#allocation2 + $0x12a] sm:$0xff]
      %v4510 = vld [vmem:[#allocation2 + $0x132] sm:$0xff]
      %v4511 = vld [vmem:[#allocation2 + $0x13a] sm:$0xff]
      %v4512 = vld [vmem:[#allocation2 + $0x142] sm:$0xff]
      %v4513 = vld [vmem:[#allocation2 + $0x14a] sm:$0xff]
      %v4514 = vld [vmem:[#allocation2 + $0x152] sm:$0xff]
      %v4515 = vld [vmem:[#allocation2 + $0x15a] sm:$0xff]
      %v4516 = vld [vmem:[#allocation2 + $0x162] sm:$0xff]
      %v4517 = vld [vmem:[#allocation2 + $0x16a] sm:$0xff]
      %v4518 = vld [vmem:[#allocation2 + $0x172] sm:$0xff]
      %v4519 = vld [vmem:[#allocation2 + $0x17a] sm:$0xff]
      %v4520 = vld [vmem:[#allocation2 + $0x182] sm:$0xff]
      %v4521 = vld [vmem:[#allocation2 + $0x18a] sm:$0xff]
      %v4522 = vld [vmem:[#allocation2 + $0x192] sm:$0xff]
      %v4523 = vld [vmem:[#allocation2 + $0x19a] sm:$0xff]
      %v4524 = vld [vmem:[#allocation2 + $0x1a2] sm:$0xff]
      %v4525 = vpack.c.bf16 %v4479, %v4478
      %v4526 = vpack.c.bf16 %v4481, %v4480
      %v4527 = vpack.c.bf16 %v4483, %v4482
      %v4528 = vpack.c.bf16 %v4485, %v4484
      %v4529 = vpack.c.bf16 %v4487, %v4486
      %v4530 = vpack.c.bf16 %v4489, %v4488
      %v4531 = vpack.c.bf16 %v4491, %v4490
      %v4532 = vpack.c.bf16 %v4493, %v4492
      %v4533 = vpack.c.bf16 %v4495, %v4494
      %v4534 = vpack.c.bf16 %v4497, %v4496
      %v4535 = vpack.c.bf16 %v4499, %v4498
      %v4536 = vpack.c.bf16 %v4501, %v4500
      %v4537 = vpack.c.bf16 %v4503, %v4502
      %v4538 = vpack.c.bf16 %v4505, %v4504
      %v4539 = vpack.c.bf16 %v4507, %v4506
      %v4540 = vpack.c.bf16 %v4509, %v4508
      %v4541 = vpack.c.bf16 %v4511, %v4510
      %v4542 = vpack.c.bf16 %v4513, %v4512
      %v4543 = vpack.c.bf16 %v4515, %v4514
      %v4544 = vpack.c.bf16 %v4517, %v4516
      %v4545 = vpack.c.bf16 %v4519, %v4518
      %v4546 = vpack.c.bf16 %v4521, %v4520
      %v4547 = vpack.c.bf16 %v4523, %v4522
      %v4548 = vpack.c.bf16 %v4524, %v4524
      %s4549 = scalar_lea.vmem %s3, 16
      %v4550 = vld [vmem:[%s4549] sm:$0x3]
      %v4552 = vsel %vm239, %v4525, 0
      %v4555 = vsel %vm239, %v4526, 0
      %v4558 = vsel %vm239, %v4527, 0
      %v4561 = vsel %vm239, %v4528, 0
      %v4564 = vsel %vm239, %v4529, 0
      %v4567 = vsel %vm239, %v4530, 0
      %v4570 = vsel %vm239, %v4531, 0
      %v4573 = vsel %vm239, %v4532, 0
      %v4576 = vsel %vm239, %v4533, 0
      %v4579 = vsel %vm239, %v4534, 0
      %v4582 = vsel %vm239, %v4535, 0
      %v4585 = vsel %vm239, %v4536, 0
      %v4588 = vsel %vm239, %v4537, 0
      %v4591 = vsel %vm239, %v4538, 0
      %v4594 = vsel %vm239, %v4539, 0
      %v4597 = vsel %vm239, %v4540, 0
      %v4600 = vsel %vm239, %v4541, 0
      %v4603 = vsel %vm239, %v4542, 0
      %v4606 = vsel %vm239, %v4543, 0
      %v4609 = vsel %vm239, %v4544, 0
      %v4612 = vsel %vm239, %v4545, 0
      %v4615 = vsel %vm239, %v4546, 0
      %v4618 = vsel %vm239, %v4547, 0
      %v4621 = vsel %vm239, %v4548, 0
      %v4624 = vsel %vm612, %v4550, 0
      %4626 = vmatprep.subr.bf16.mxu0 0
      %4627 = vmatpush1.bf16.msra.mxu0 0
      %4628 = vmatprep.subr.bf16.mxu0 0
      %4629 = vmatpush1.bf16.msra.mxu0 0
      %4630 = vmatprep.subr.bf16.mxu0 0
      %4631 = vmatpush1.bf16.msra.mxu0 0
      %4632 = vmatprep.subr.bf16.mxu0 0
      %4633 = vmatpush1.bf16.msra.mxu0 0
      %4634 = vmatprep.subr.bf16.mxu0 0
      %4635 = vmatpush1.bf16.msra.mxu0 0
      %4636 = vmatprep.subr.bf16.mxu0 0
      %4637 = vmatpush1.bf16.msra.mxu0 0
      %4638 = vmatprep.subr.bf16.mxu0 0
      %4639 = vmatpush1.bf16.msra.mxu0 0
      %4640 = vmatprep.subr.bf16.mxu0 0
      %4641 = vmatpush1.bf16.msra.mxu0 %v4624
      %4642 = vmatprep.subr.bf16.mxu0 0
      %4643 = vmatpush2.bf16.msra.mxu0 0
      %4644 = vmatprep.subr.bf16.mxu0 0
      %4645 = vmatpush2.bf16.msra.mxu0 0
      %4646 = vmatprep.subr.bf16.mxu0 0
      %4647 = vmatpush2.bf16.msra.mxu0 0
      %4648 = vmatprep.subr.bf16.mxu0 0
      %4649 = vmatpush2.bf16.msra.mxu0 0
      %4650 = vmatprep.subr.bf16.mxu0 0
      %4651 = vmatpush2.bf16.msra.mxu0 0
      %4652 = vmatprep.subr.bf16.mxu0 0
      %4653 = vmatpush2.bf16.msra.mxu0 0
      %4654 = vmatprep.subr.bf16.mxu0 0
      %4655 = vmatpush2.bf16.msra.mxu0 0
      %4656 = vmatprep.subr.bf16.mxu0 0
      %4657 = vmatpush2.bf16.msra.mxu0 0
      %4658 = vmatprep.mubr.bf16.mxu0 0
      %4659 = vmatmul.mubr.bf16.gmra.mxu0 %v4552
      %v4660 = vpop.f32.mrf.mxu0
      %v4661 = vadd.f32 0.0, %v4660
      %v4662 = vpop.f32.mrf.mxu0
      %v4663 = vpop.f32.mrf.mxu0
      %v4664 = vadd.f32 0.0, %v4663
      %v4665 = vpop.f32.mrf.mxu0
      %4666 = vmatprep.mubr.bf16.mxu0 0
      %4667 = vmatmul.mubr.bf16.gmra.mxu0 %v4555
      %v4668 = vpop.f32.mrf.mxu0
      %v4669 = vadd.f32 0.0, %v4668
      %v4670 = vpop.f32.mrf.mxu0
      %v4671 = vpop.f32.mrf.mxu0
      %v4672 = vadd.f32 0.0, %v4671
      %v4673 = vpop.f32.mrf.mxu0
      %4674 = vmatprep.mubr.bf16.mxu0 0
      %4675 = vmatmul.mubr.bf16.gmra.mxu0 %v4558
      %v4676 = vpop.f32.mrf.mxu0
      %v4677 = vadd.f32 0.0, %v4676
      %v4678 = vpop.f32.mrf.mxu0
      %v4679 = vpop.f32.mrf.mxu0
      %v4680 = vadd.f32 0.0, %v4679
      %v4681 = vpop.f32.mrf.mxu0
      %4682 = vmatprep.mubr.bf16.mxu0 0
      %4683 = vmatmul.mubr.bf16.gmra.mxu0 %v4561
      %v4684 = vpop.f32.mrf.mxu0
      %v4685 = vadd.f32 0.0, %v4684
      %v4686 = vpop.f32.mrf.mxu0
      %v4687 = vpop.f32.mrf.mxu0
      %v4688 = vadd.f32 0.0, %v4687
      %v4689 = vpop.f32.mrf.mxu0
      %4690 = vmatprep.mubr.bf16.mxu0 0
      %4691 = vmatmul.mubr.bf16.gmra.mxu0 %v4564
      %v4692 = vpop.f32.mrf.mxu0
      %v4693 = vadd.f32 0.0, %v4692
      %v4694 = vpop.f32.mrf.mxu0
      %v4695 = vpop.f32.mrf.mxu0
      %v4696 = vadd.f32 0.0, %v4695
      %v4697 = vpop.f32.mrf.mxu0
      %4698 = vmatprep.mubr.bf16.mxu0 0
      %4699 = vmatmul.mubr.bf16.gmra.mxu0 %v4567
      %v4700 = vpop.f32.mrf.mxu0
      %v4701 = vadd.f32 0.0, %v4700
      %v4702 = vpop.f32.mrf.mxu0
      %v4703 = vpop.f32.mrf.mxu0
      %v4704 = vadd.f32 0.0, %v4703
      %v4705 = vpop.f32.mrf.mxu0
      %4706 = vmatprep.mubr.bf16.mxu0 0
      %4707 = vmatmul.mubr.bf16.gmra.mxu0 %v4570
      %v4708 = vpop.f32.mrf.mxu0
      %v4709 = vadd.f32 0.0, %v4708
      %v4710 = vpop.f32.mrf.mxu0
      %v4711 = vpop.f32.mrf.mxu0
      %v4712 = vadd.f32 0.0, %v4711
      %v4713 = vpop.f32.mrf.mxu0
      %4714 = vmatprep.mubr.bf16.mxu0 0
      %4715 = vmatmul.mubr.bf16.gmra.mxu0 %v4573
      %v4716 = vpop.f32.mrf.mxu0
      %v4717 = vadd.f32 0.0, %v4716
      %v4718 = vpop.f32.mrf.mxu0
      %v4719 = vpop.f32.mrf.mxu0
      %v4720 = vadd.f32 0.0, %v4719
      %v4721 = vpop.f32.mrf.mxu0
      %4722 = vmatprep.mubr.bf16.mxu0 0
      %4723 = vmatmul.mubr.bf16.gmra.mxu0 %v4576
      %v4724 = vpop.f32.mrf.mxu0
      %v4725 = vadd.f32 0.0, %v4724
      %v4726 = vpop.f32.mrf.mxu0
      %v4727 = vpop.f32.mrf.mxu0
      %v4728 = vadd.f32 0.0, %v4727
      %v4729 = vpop.f32.mrf.mxu0
      %4730 = vmatprep.mubr.bf16.mxu0 0
      %4731 = vmatmul.mubr.bf16.gmra.mxu0 %v4579
      %v4732 = vpop.f32.mrf.mxu0
      %v4733 = vadd.f32 0.0, %v4732
      %v4734 = vpop.f32.mrf.mxu0
      %v4735 = vpop.f32.mrf.mxu0
      %v4736 = vadd.f32 0.0, %v4735
      %v4737 = vpop.f32.mrf.mxu0
      %4738 = vmatprep.mubr.bf16.mxu0 0
      %4739 = vmatmul.mubr.bf16.gmra.mxu0 %v4582
      %v4740 = vpop.f32.mrf.mxu0
      %v4741 = vadd.f32 0.0, %v4740
      %v4742 = vpop.f32.mrf.mxu0
      %v4743 = vpop.f32.mrf.mxu0
      %v4744 = vadd.f32 0.0, %v4743
      %v4745 = vpop.f32.mrf.mxu0
      %4746 = vmatprep.mubr.bf16.mxu0 0
      %4747 = vmatmul.mubr.bf16.gmra.mxu0 %v4585
      %v4748 = vpop.f32.mrf.mxu0
      %v4749 = vadd.f32 0.0, %v4748
      %v4750 = vpop.f32.mrf.mxu0
      %v4751 = vpop.f32.mrf.mxu0
      %v4752 = vadd.f32 0.0, %v4751
      %v4753 = vpop.f32.mrf.mxu0
      %4754 = vmatprep.mubr.bf16.mxu0 0
      %4755 = vmatmul.mubr.bf16.gmra.mxu0 %v4588
      %v4756 = vpop.f32.mrf.mxu0
      %v4757 = vadd.f32 0.0, %v4756
      %v4758 = vpop.f32.mrf.mxu0
      %v4759 = vpop.f32.mrf.mxu0
      %v4760 = vadd.f32 0.0, %v4759
      %v4761 = vpop.f32.mrf.mxu0
      %4762 = vmatprep.mubr.bf16.mxu0 0
      %4763 = vmatmul.mubr.bf16.gmra.mxu0 %v4591
      %v4764 = vpop.f32.mrf.mxu0
      %v4765 = vadd.f32 0.0, %v4764
      %v4766 = vpop.f32.mrf.mxu0
      %v4767 = vpop.f32.mrf.mxu0
      %v4768 = vadd.f32 0.0, %v4767
      %v4769 = vpop.f32.mrf.mxu0
      %4770 = vmatprep.mubr.bf16.mxu0 0
      %4771 = vmatmul.mubr.bf16.gmra.mxu0 %v4594
      %v4772 = vpop.f32.mrf.mxu0
      %v4773 = vadd.f32 0.0, %v4772
      %v4774 = vpop.f32.mrf.mxu0
      %v4775 = vpop.f32.mrf.mxu0
      %v4776 = vadd.f32 0.0, %v4775
      %v4777 = vpop.f32.mrf.mxu0
      %4778 = vmatprep.mubr.bf16.mxu0 0
      %4779 = vmatmul.mubr.bf16.gmra.mxu0 %v4597
      %v4780 = vpop.f32.mrf.mxu0
      %v4781 = vadd.f32 0.0, %v4780
      %v4782 = vpop.f32.mrf.mxu0
      %v4783 = vpop.f32.mrf.mxu0
      %v4784 = vadd.f32 0.0, %v4783
      %v4785 = vpop.f32.mrf.mxu0
      %4786 = vmatprep.mubr.bf16.mxu0 0
      %4787 = vmatmul.mubr.bf16.gmra.mxu0 %v4600
      %v4788 = vpop.f32.mrf.mxu0
      %v4789 = vadd.f32 0.0, %v4788
      %v4790 = vpop.f32.mrf.mxu0
      %v4791 = vpop.f32.mrf.mxu0
      %v4792 = vadd.f32 0.0, %v4791
      %v4793 = vpop.f32.mrf.mxu0
      %4794 = vmatprep.mubr.bf16.mxu0 0
      %4795 = vmatmul.mubr.bf16.gmra.mxu0 %v4603
      %v4796 = vpop.f32.mrf.mxu0
      %v4797 = vadd.f32 0.0, %v4796
      %v4798 = vpop.f32.mrf.mxu0
      %v4799 = vpop.f32.mrf.mxu0
      %v4800 = vadd.f32 0.0, %v4799
      %v4801 = vpop.f32.mrf.mxu0
      %4802 = vmatprep.mubr.bf16.mxu0 0
      %4803 = vmatmul.mubr.bf16.gmra.mxu0 %v4606
      %v4804 = vpop.f32.mrf.mxu0
      %v4805 = vadd.f32 0.0, %v4804
      %v4806 = vpop.f32.mrf.mxu0
      %v4807 = vpop.f32.mrf.mxu0
      %v4808 = vadd.f32 0.0, %v4807
      %v4809 = vpop.f32.mrf.mxu0
      %4810 = vmatprep.mubr.bf16.mxu0 0
      %4811 = vmatmul.mubr.bf16.gmra.mxu0 %v4609
      %v4812 = vpop.f32.mrf.mxu0
      %v4813 = vadd.f32 0.0, %v4812
      %v4814 = vpop.f32.mrf.mxu0
      %v4815 = vpop.f32.mrf.mxu0
      %v4816 = vadd.f32 0.0, %v4815
      %v4817 = vpop.f32.mrf.mxu0
      %4818 = vmatprep.mubr.bf16.mxu0 0
      %4819 = vmatmul.mubr.bf16.gmra.mxu0 %v4612
      %v4820 = vpop.f32.mrf.mxu0
      %v4821 = vadd.f32 0.0, %v4820
      %v4822 = vpop.f32.mrf.mxu0
      %v4823 = vpop.f32.mrf.mxu0
      %v4824 = vadd.f32 0.0, %v4823
      %v4825 = vpop.f32.mrf.mxu0
      %4826 = vmatprep.mubr.bf16.mxu0 0
      %4827 = vmatmul.mubr.bf16.gmra.mxu0 %v4615
      %v4828 = vpop.f32.mrf.mxu0
      %v4829 = vadd.f32 0.0, %v4828
      %v4830 = vpop.f32.mrf.mxu0
      %v4831 = vpop.f32.mrf.mxu0
      %v4832 = vadd.f32 0.0, %v4831
      %v4833 = vpop.f32.mrf.mxu0
      %4834 = vmatprep.mubr.bf16.mxu0 0
      %4835 = vmatmul.mubr.bf16.gmra.mxu0 %v4618
      %v4836 = vpop.f32.mrf.mxu0
      %v4837 = vadd.f32 0.0, %v4836
      %v4838 = vpop.f32.mrf.mxu0
      %v4839 = vpop.f32.mrf.mxu0
      %v4840 = vadd.f32 0.0, %v4839
      %v4841 = vpop.f32.mrf.mxu0
      %4842 = vmatprep.mubr.bf16.mxu0 0
      %4843 = vmatmul.mubr.bf16.gmra.mxu0 %v4621
      %v4844 = vpop.f32.mrf.mxu0
      %v4845 = vadd.f32 0.0, %v4844
      %v4846 = vpop.f32.mrf.mxu0
      %v4847 = vpop.f32.mrf.mxu0
      %v4848 = vpop.f32.mrf.mxu0
      %4849 = vdwg.mxu0
      %v4850 = vld [vmem:[#allocation3] sm:$0xff]
      %v4851 = vld [vmem:[#allocation3 + $0x8] sm:$0xff]
      %v4852 = vld [vmem:[#allocation3 + $0x10] sm:$0xff]
      %v4853 = vld [vmem:[#allocation3 + $0x18] sm:$0xff]
      %v4854 = vld [vmem:[#allocation3 + $0x20] sm:$0xff]
      %v4855 = vld [vmem:[#allocation3 + $0x28] sm:$0xff]
      %v4856 = vld [vmem:[#allocation3 + $0x30] sm:$0xff]
      %v4857 = vld [vmem:[#allocation3 + $0x38] sm:$0xff]
      %v4858 = vld [vmem:[#allocation3 + $0x40] sm:$0xff]
      %v4859 = vld [vmem:[#allocation3 + $0x48] sm:$0xff]
      %v4860 = vld [vmem:[#allocation3 + $0x50] sm:$0xff]
      %v4861 = vld [vmem:[#allocation3 + $0x58] sm:$0xff]
      %v4862 = vld [vmem:[#allocation3 + $0x60] sm:$0xff]
      %v4863 = vld [vmem:[#allocation3 + $0x68] sm:$0xff]
      %v4864 = vld [vmem:[#allocation3 + $0x70] sm:$0xff]
      %v4865 = vld [vmem:[#allocation3 + $0x78] sm:$0xff]
      %v4866 = vld [vmem:[#allocation3 + $0x80] sm:$0xff]
      %v4867 = vld [vmem:[#allocation3 + $0x88] sm:$0xff]
      %v4868 = vld [vmem:[#allocation3 + $0x90] sm:$0xff]
      %v4869 = vld [vmem:[#allocation3 + $0x98] sm:$0xff]
      %v4870 = vld [vmem:[#allocation3 + $0xa0] sm:$0xff]
      %v4871 = vld [vmem:[#allocation3 + $0xa8] sm:$0xff]
      %v4872 = vld [vmem:[#allocation3 + $0xb0] sm:$0xff]
      %v4873 = vld [vmem:[#allocation3 + $0xb8] sm:$0xff]
      %v4874 = vld [vmem:[#allocation3 + $0xc0] sm:$0xff]
      %v4875 = vld [vmem:[#allocation3 + $0xc8] sm:$0xff]
      %v4876 = vld [vmem:[#allocation3 + $0xd0] sm:$0xff]
      %v4877 = vld [vmem:[#allocation3 + $0xd8] sm:$0xff]
      %v4878 = vld [vmem:[#allocation3 + $0xe0] sm:$0xff]
      %v4879 = vld [vmem:[#allocation3 + $0xe8] sm:$0xff]
      %v4880 = vld [vmem:[#allocation3 + $0xf0] sm:$0xff]
      %v4881 = vld [vmem:[#allocation3 + $0xf8] sm:$0xff]
      %v4882 = vld [vmem:[#allocation3 + $0x100] sm:$0xff]
      %v4883 = vld [vmem:[#allocation3 + $0x108] sm:$0xff]
      %v4884 = vld [vmem:[#allocation3 + $0x110] sm:$0xff]
      %v4885 = vld [vmem:[#allocation3 + $0x118] sm:$0xff]
      %v4886 = vld [vmem:[#allocation3 + $0x120] sm:$0xff]
      %v4887 = vld [vmem:[#allocation3 + $0x128] sm:$0xff]
      %v4888 = vld [vmem:[#allocation3 + $0x130] sm:$0xff]
      %v4889 = vld [vmem:[#allocation3 + $0x138] sm:$0xff]
      %v4890 = vld [vmem:[#allocation3 + $0x140] sm:$0xff]
      %v4891 = vld [vmem:[#allocation3 + $0x148] sm:$0xff]
      %v4892 = vld [vmem:[#allocation3 + $0x150] sm:$0xff]
      %v4893 = vld [vmem:[#allocation3 + $0x158] sm:$0xff]
      %v4894 = vld [vmem:[#allocation3 + $0x160] sm:$0xff]
      %v4895 = vld [vmem:[#allocation3 + $0x168] sm:$0xff]
      %v4896 = vld [vmem:[#allocation3 + $0x170] sm:$0xff]
      %v4897 = vadd.f32 %v4850, %v4661
      %v4898 = vadd.f32 %v4851, %v4664
      %v4899 = vadd.f32 %v4852, %v4669
      %v4900 = vadd.f32 %v4853, %v4672
      %v4901 = vadd.f32 %v4854, %v4677
      %v4902 = vadd.f32 %v4855, %v4680
      %v4903 = vadd.f32 %v4856, %v4685
      %v4904 = vadd.f32 %v4857, %v4688
      %v4905 = vadd.f32 %v4858, %v4693
      %v4906 = vadd.f32 %v4859, %v4696
      %v4907 = vadd.f32 %v4860, %v4701
      %v4908 = vadd.f32 %v4861, %v4704
      %v4909 = vadd.f32 %v4862, %v4709
      %v4910 = vadd.f32 %v4863, %v4712
      %v4911 = vadd.f32 %v4864, %v4717
      %v4912 = vadd.f32 %v4865, %v4720
      %v4913 = vadd.f32 %v4866, %v4725
      %v4914 = vadd.f32 %v4867, %v4728
      %v4915 = vadd.f32 %v4868, %v4733
      %v4916 = vadd.f32 %v4869, %v4736
      %v4917 = vadd.f32 %v4870, %v4741
      %v4918 = vadd.f32 %v4871, %v4744
      %v4919 = vadd.f32 %v4872, %v4749
      %v4920 = vadd.f32 %v4873, %v4752
      %v4921 = vadd.f32 %v4874, %v4757
      %v4922 = vadd.f32 %v4875, %v4760
      %v4923 = vadd.f32 %v4876, %v4765
      %v4924 = vadd.f32 %v4877, %v4768
      %v4925 = vadd.f32 %v4878, %v4773
      %v4926 = vadd.f32 %v4879, %v4776
      %v4927 = vadd.f32 %v4880, %v4781
      %v4928 = vadd.f32 %v4881, %v4784
      %v4929 = vadd.f32 %v4882, %v4789
      %v4930 = vadd.f32 %v4883, %v4792
      %v4931 = vadd.f32 %v4884, %v4797
      %v4932 = vadd.f32 %v4885, %v4800
      %v4933 = vadd.f32 %v4886, %v4805
      %v4934 = vadd.f32 %v4887, %v4808
      %v4935 = vadd.f32 %v4888, %v4813
      %v4936 = vadd.f32 %v4889, %v4816
      %v4937 = vadd.f32 %v4890, %v4821
      %v4938 = vadd.f32 %v4891, %v4824
      %v4939 = vadd.f32 %v4892, %v4829
      %v4940 = vadd.f32 %v4893, %v4832
      %v4941 = vadd.f32 %v4894, %v4837
      %v4942 = vadd.f32 %v4895, %v4840
      %v4943 = vadd.f32 %v4896, %v4845
      %4944 = vst.msk [vmem:[#allocation3] sm:$0xff] %vm239, %v4897
      %4945 = vst.msk [vmem:[#allocation3 + $0x8] sm:$0xff] %vm239, %v4898
      %4946 = vst.msk [vmem:[#allocation3 + $0x10] sm:$0xff] %vm239, %v4899
      %4947 = vst.msk [vmem:[#allocation3 + $0x18] sm:$0xff] %vm239, %v4900
      %4948 = vst.msk [vmem:[#allocation3 + $0x20] sm:$0xff] %vm239, %v4901
      %4949 = vst.msk [vmem:[#allocation3 + $0x28] sm:$0xff] %vm239, %v4902
      %4950 = vst.msk [vmem:[#allocation3 + $0x30] sm:$0xff] %vm239, %v4903
      %4951 = vst.msk [vmem:[#allocation3 + $0x38] sm:$0xff] %vm239, %v4904
      %4952 = vst.msk [vmem:[#allocation3 + $0x40] sm:$0xff] %vm239, %v4905
      %4953 = vst.msk [vmem:[#allocation3 + $0x48] sm:$0xff] %vm239, %v4906
      %4954 = vst.msk [vmem:[#allocation3 + $0x50] sm:$0xff] %vm239, %v4907
      %4955 = vst.msk [vmem:[#allocation3 + $0x58] sm:$0xff] %vm239, %v4908
      %4956 = vst.msk [vmem:[#allocation3 + $0x60] sm:$0xff] %vm239, %v4909
      %4957 = vst.msk [vmem:[#allocation3 + $0x68] sm:$0xff] %vm239, %v4910
      %4958 = vst.msk [vmem:[#allocation3 + $0x70] sm:$0xff] %vm239, %v4911
      %4959 = vst.msk [vmem:[#allocation3 + $0x78] sm:$0xff] %vm239, %v4912
      %4960 = vst.msk [vmem:[#allocation3 + $0x80] sm:$0xff] %vm239, %v4913
      %4961 = vst.msk [vmem:[#allocation3 + $0x88] sm:$0xff] %vm239, %v4914
      %4962 = vst.msk [vmem:[#allocation3 + $0x90] sm:$0xff] %vm239, %v4915
      %4963 = vst.msk [vmem:[#allocation3 + $0x98] sm:$0xff] %vm239, %v4916
      %4964 = vst.msk [vmem:[#allocation3 + $0xa0] sm:$0xff] %vm239, %v4917
      %4965 = vst.msk [vmem:[#allocation3 + $0xa8] sm:$0xff] %vm239, %v4918
      %4966 = vst.msk [vmem:[#allocation3 + $0xb0] sm:$0xff] %vm239, %v4919
      %4967 = vst.msk [vmem:[#allocation3 + $0xb8] sm:$0xff] %vm239, %v4920
      %4968 = vst.msk [vmem:[#allocation3 + $0xc0] sm:$0xff] %vm239, %v4921
      %4969 = vst.msk [vmem:[#allocation3 + $0xc8] sm:$0xff] %vm239, %v4922
      %4970 = vst.msk [vmem:[#allocation3 + $0xd0] sm:$0xff] %vm239, %v4923
      %4971 = vst.msk [vmem:[#allocation3 + $0xd8] sm:$0xff] %vm239, %v4924
      %4972 = vst.msk [vmem:[#allocation3 + $0xe0] sm:$0xff] %vm239, %v4925
      %4973 = vst.msk [vmem:[#allocation3 + $0xe8] sm:$0xff] %vm239, %v4926
      %4974 = vst.msk [vmem:[#allocation3 + $0xf0] sm:$0xff] %vm239, %v4927
      %4975 = vst.msk [vmem:[#allocation3 + $0xf8] sm:$0xff] %vm239, %v4928
      %4976 = vst.msk [vmem:[#allocation3 + $0x100] sm:$0xff] %vm239, %v4929
      %4977 = vst.msk [vmem:[#allocation3 + $0x108] sm:$0xff] %vm239, %v4930
      %4978 = vst.msk [vmem:[#allocation3 + $0x110] sm:$0xff] %vm239, %v4931
      %4979 = vst.msk [vmem:[#allocation3 + $0x118] sm:$0xff] %vm239, %v4932
      %4980 = vst.msk [vmem:[#allocation3 + $0x120] sm:$0xff] %vm239, %v4933
      %4981 = vst.msk [vmem:[#allocation3 + $0x128] sm:$0xff] %vm239, %v4934
      %4982 = vst.msk [vmem:[#allocation3 + $0x130] sm:$0xff] %vm239, %v4935
      %4983 = vst.msk [vmem:[#allocation3 + $0x138] sm:$0xff] %vm239, %v4936
      %4984 = vst.msk [vmem:[#allocation3 + $0x140] sm:$0xff] %vm239, %v4937
      %4985 = vst.msk [vmem:[#allocation3 + $0x148] sm:$0xff] %vm239, %v4938
      %4986 = vst.msk [vmem:[#allocation3 + $0x150] sm:$0xff] %vm239, %v4939
      %4987 = vst.msk [vmem:[#allocation3 + $0x158] sm:$0xff] %vm239, %v4940
      %4988 = vst.msk [vmem:[#allocation3 + $0x160] sm:$0xff] %vm239, %v4941
      %4989 = vst.msk [vmem:[#allocation3 + $0x168] sm:$0xff] %vm239, %v4942
      %4990 = vst.msk [vmem:[#allocation3 + $0x170] sm:$0xff] %vm239, %v4943
      %v4991 = vld [vmem:[#allocation3] sm:$0xff]
      %v4992 = vld [vmem:[#allocation3 + $0x8] sm:$0xff]
      %v4993 = vld [vmem:[#allocation3 + $0x10] sm:$0xff]
      %v4994 = vld [vmem:[#allocation3 + $0x18] sm:$0xff]
      %v4995 = vld [vmem:[#allocation3 + $0x20] sm:$0xff]
      %v4996 = vld [vmem:[#allocation3 + $0x28] sm:$0xff]
      %v4997 = vld [vmem:[#allocation3 + $0x30] sm:$0xff]
      %v4998 = vld [vmem:[#allocation3 + $0x38] sm:$0xff]
      %v4999 = vld [vmem:[#allocation3 + $0x40] sm:$0xff]
      %v5000 = vld [vmem:[#allocation3 + $0x48] sm:$0xff]
      %v5001 = vld [vmem:[#allocation3 + $0x50] sm:$0xff]
      %v5002 = vld [vmem:[#allocation3 + $0x58] sm:$0xff]
      %v5003 = vld [vmem:[#allocation3 + $0x60] sm:$0xff]
      %v5004 = vld [vmem:[#allocation3 + $0x68] sm:$0xff]
      %v5005 = vld [vmem:[#allocation3 + $0x70] sm:$0xff]
      %v5006 = vld [vmem:[#allocation3 + $0x78] sm:$0xff]
      %v5007 = vld [vmem:[#allocation3 + $0x80] sm:$0xff]
      %v5008 = vld [vmem:[#allocation3 + $0x88] sm:$0xff]
      %v5009 = vld [vmem:[#allocation3 + $0x90] sm:$0xff]
      %v5010 = vld [vmem:[#allocation3 + $0x98] sm:$0xff]
      %v5011 = vld [vmem:[#allocation3 + $0xa0] sm:$0xff]
      %v5012 = vld [vmem:[#allocation3 + $0xa8] sm:$0xff]
      %v5013 = vld [vmem:[#allocation3 + $0xb0] sm:$0xff]
      %v5014 = vld [vmem:[#allocation3 + $0xb8] sm:$0xff]
      %v5015 = vld [vmem:[#allocation3 + $0xc0] sm:$0xff]
      %v5016 = vld [vmem:[#allocation3 + $0xc8] sm:$0xff]
      %v5017 = vld [vmem:[#allocation3 + $0xd0] sm:$0xff]
      %v5018 = vld [vmem:[#allocation3 + $0xd8] sm:$0xff]
      %v5019 = vld [vmem:[#allocation3 + $0xe0] sm:$0xff]
      %v5020 = vld [vmem:[#allocation3 + $0xe8] sm:$0xff]
      %v5021 = vld [vmem:[#allocation3 + $0xf0] sm:$0xff]
      %v5022 = vld [vmem:[#allocation3 + $0xf8] sm:$0xff]
      %v5023 = vld [vmem:[#allocation3 + $0x100] sm:$0xff]
      %v5024 = vld [vmem:[#allocation3 + $0x108] sm:$0xff]
      %v5025 = vld [vmem:[#allocation3 + $0x110] sm:$0xff]
      %v5026 = vld [vmem:[#allocation3 + $0x118] sm:$0xff]
      %v5027 = vld [vmem:[#allocation3 + $0x120] sm:$0xff]
      %v5028 = vld [vmem:[#allocation3 + $0x128] sm:$0xff]
      %v5029 = vld [vmem:[#allocation3 + $0x130] sm:$0xff]
      %v5030 = vld [vmem:[#allocation3 + $0x138] sm:$0xff]
      %v5031 = vld [vmem:[#allocation3 + $0x140] sm:$0xff]
      %v5032 = vld [vmem:[#allocation3 + $0x148] sm:$0xff]
      %v5033 = vld [vmem:[#allocation3 + $0x150] sm:$0xff]
      %v5034 = vld [vmem:[#allocation3 + $0x158] sm:$0xff]
      %v5035 = vld [vmem:[#allocation3 + $0x160] sm:$0xff]
      %v5036 = vld [vmem:[#allocation3 + $0x168] sm:$0xff]
      %v5037 = vld [vmem:[#allocation3 + $0x170] sm:$0xff]
      %v5038 = vlaneseq
      %v5039 = vshrl.u32 %v5038, 7
      %v5040 = vadd.s32 %v5039, 8
      %v5041 = vadd.s32 %v5039, 16
      %v5042 = vadd.s32 %v5039, 24
      %v5043 = vadd.s32 %v5039, 32
      %v5044 = vadd.s32 %v5039, 40
      %v5045 = vadd.s32 %v5039, 48
      %v5046 = vadd.s32 %v5039, 56
      %v5047 = vadd.s32 %v5039, 64
      %v5048 = vadd.s32 %v5039, 72
      %v5049 = vadd.s32 %v5039, 80
      %v5050 = vadd.s32 %v5039, 88
      %v5051 = vadd.s32 %v5039, 96
      %v5052 = vadd.s32 %v5039, 104
      %v5053 = vadd.s32 %v5039, 112
      %v5054 = vadd.s32 %v5039, 120
      %v5055 = vadd.s32 %v5039, 128
      %v5056 = vadd.s32 %v5039, 136
      %v5057 = vadd.s32 %v5039, 144
      %v5058 = vadd.s32 %v5039, 152
      %v5059 = vadd.s32 %v5039, 160
      %v5060 = vadd.s32 %v5039, 168
      %v5061 = vadd.s32 %v5039, 176
      %v5062 = vadd.s32 %v5039, 184
      %v5063 = vadd.s32 %v5039, 192
      %v5064 = vadd.s32 %v5039, 200
      %v5065 = vadd.s32 %v5039, 208
      %v5066 = vadd.s32 %v5039, 216
      %v5067 = vadd.s32 %v5039, 224
      %v5068 = vadd.s32 %v5039, 232
      %v5069 = vadd.s32 %v5039, 240
      %v5070 = vadd.s32 %v5039, 248
      %v5071 = vadd.s32 %v5039, 256
      %v5072 = vadd.s32 %v5039, 264
      %v5073 = vadd.s32 %v5039, 272
      %v5074 = vadd.s32 %v5039, 280
      %v5075 = vadd.s32 %v5039, 288
      %v5076 = vadd.s32 %v5039, 296
      %v5077 = vadd.s32 %v5039, 304
      %v5078 = vadd.s32 %v5039, 312
      %v5079 = vadd.s32 %v5039, 320
      %v5080 = vadd.s32 %v5039, 328
      %v5081 = vadd.s32 %v5039, 336
      %v5082 = vadd.s32 %v5039, 344
      %v5083 = vadd.s32 %v5039, 352
      %v5084 = vadd.s32 %v5039, 360
      %v5085 = vadd.s32 %v5039, 368
      %vm5086 = vcmp.lt.s32.totalorder %v5039, 0
      %v5087 = vsub.s32 0, %v5039
      %v5088 = vsel %vm5086, %v5087, %v5039
      %v5089 = vmul.u32.u64.compose %v5088, 2863311531
      %v5090 = vextract.low.u32 %v5089
      %v5091 = vextract.high.u32 %v5089
      %v5092 = vshrl.u32 %v5091, 4
      %v5093 = vmul.u32 %v5092, 24
      %v5094 = vsub.s32 %v5088, %v5093
      %v5095 = vsub.s32 0, %v5094
      %v5096 = vsel %vm5086, %v5095, %v5094
      %vm5097 = vcmp.lt.s32.totalorder %v5040, 0
      %v5098 = vsub.s32 0, %v5040
      %v5099 = vsel %vm5097, %v5098, %v5040
      %v5100 = vmul.u32.u64.compose %v5099, 2863311531
      %v5101 = vextract.low.u32 %v5100
      %v5102 = vextract.high.u32 %v5100
      %v5103 = vshrl.u32 %v5102, 4
      %v5104 = vmul.u32 %v5103, 24
      %v5105 = vsub.s32 %v5099, %v5104
      %v5106 = vsub.s32 0, %v5105
      %v5107 = vsel %vm5097, %v5106, %v5105
      %vm5108 = vcmp.lt.s32.totalorder %v5041, 0
      %v5109 = vsub.s32 0, %v5041
      %v5110 = vsel %vm5108, %v5109, %v5041
      %v5111 = vmul.u32.u64.compose %v5110, 2863311531
      %v5112 = vextract.low.u32 %v5111
      %v5113 = vextract.high.u32 %v5111
      %v5114 = vshrl.u32 %v5113, 4
      %v5115 = vmul.u32 %v5114, 24
      %v5116 = vsub.s32 %v5110, %v5115
      %v5117 = vsub.s32 0, %v5116
      %v5118 = vsel %vm5108, %v5117, %v5116
      %vm5119 = vcmp.lt.s32.totalorder %v5042, 0
      %v5120 = vsub.s32 0, %v5042
      %v5121 = vsel %vm5119, %v5120, %v5042
      %v5122 = vmul.u32.u64.compose %v5121, 2863311531
      %v5123 = vextract.low.u32 %v5122
      %v5124 = vextract.high.u32 %v5122
      %v5125 = vshrl.u32 %v5124, 4
      %v5126 = vmul.u32 %v5125, 24
      %v5127 = vsub.s32 %v5121, %v5126
      %v5128 = vsub.s32 0, %v5127
      %v5129 = vsel %vm5119, %v5128, %v5127
      %vm5130 = vcmp.lt.s32.totalorder %v5043, 0
      %v5131 = vsub.s32 0, %v5043
      %v5132 = vsel %vm5130, %v5131, %v5043
      %v5133 = vmul.u32.u64.compose %v5132, 2863311531
      %v5134 = vextract.low.u32 %v5133
      %v5135 = vextract.high.u32 %v5133
      %v5136 = vshrl.u32 %v5135, 4
      %v5137 = vmul.u32 %v5136, 24
      %v5138 = vsub.s32 %v5132, %v5137
      %v5139 = vsub.s32 0, %v5138
      %v5140 = vsel %vm5130, %v5139, %v5138
      %vm5141 = vcmp.lt.s32.totalorder %v5044, 0
      %v5142 = vsub.s32 0, %v5044
      %v5143 = vsel %vm5141, %v5142, %v5044
      %v5144 = vmul.u32.u64.compose %v5143, 2863311531
      %v5145 = vextract.low.u32 %v5144
      %v5146 = vextract.high.u32 %v5144
      %v5147 = vshrl.u32 %v5146, 4
      %v5148 = vmul.u32 %v5147, 24
      %v5149 = vsub.s32 %v5143, %v5148
      %v5150 = vsub.s32 0, %v5149
      %v5151 = vsel %vm5141, %v5150, %v5149
      %vm5152 = vcmp.lt.s32.totalorder %v5045, 0
      %v5153 = vsub.s32 0, %v5045
      %v5154 = vsel %vm5152, %v5153, %v5045
      %v5155 = vmul.u32.u64.compose %v5154, 2863311531
      %v5156 = vextract.low.u32 %v5155
      %v5157 = vextract.high.u32 %v5155
      %v5158 = vshrl.u32 %v5157, 4
      %v5159 = vmul.u32 %v5158, 24
      %v5160 = vsub.s32 %v5154, %v5159
      %v5161 = vsub.s32 0, %v5160
      %v5162 = vsel %vm5152, %v5161, %v5160
      %vm5163 = vcmp.lt.s32.totalorder %v5046, 0
      %v5164 = vsub.s32 0, %v5046
      %v5165 = vsel %vm5163, %v5164, %v5046
      %v5166 = vmul.u32.u64.compose %v5165, 2863311531
      %v5167 = vextract.low.u32 %v5166
      %v5168 = vextract.high.u32 %v5166
      %v5169 = vshrl.u32 %v5168, 4
      %v5170 = vmul.u32 %v5169, 24
      %v5171 = vsub.s32 %v5165, %v5170
      %v5172 = vsub.s32 0, %v5171
      %v5173 = vsel %vm5163, %v5172, %v5171
      %vm5174 = vcmp.lt.s32.totalorder %v5047, 0
      %v5175 = vsub.s32 0, %v5047
      %v5176 = vsel %vm5174, %v5175, %v5047
      %v5177 = vmul.u32.u64.compose %v5176, 2863311531
      %v5178 = vextract.low.u32 %v5177
      %v5179 = vextract.high.u32 %v5177
      %v5180 = vshrl.u32 %v5179, 4
      %v5181 = vmul.u32 %v5180, 24
      %v5182 = vsub.s32 %v5176, %v5181
      %v5183 = vsub.s32 0, %v5182
      %v5184 = vsel %vm5174, %v5183, %v5182
      %vm5185 = vcmp.lt.s32.totalorder %v5048, 0
      %v5186 = vsub.s32 0, %v5048
      %v5187 = vsel %vm5185, %v5186, %v5048
      %v5188 = vmul.u32.u64.compose %v5187, 2863311531
      %v5189 = vextract.low.u32 %v5188
      %v5190 = vextract.high.u32 %v5188
      %v5191 = vshrl.u32 %v5190, 4
      %v5192 = vmul.u32 %v5191, 24
      %v5193 = vsub.s32 %v5187, %v5192
      %v5194 = vsub.s32 0, %v5193
      %v5195 = vsel %vm5185, %v5194, %v5193
      %vm5196 = vcmp.lt.s32.totalorder %v5049, 0
      %v5197 = vsub.s32 0, %v5049
      %v5198 = vsel %vm5196, %v5197, %v5049
      %v5199 = vmul.u32.u64.compose %v5198, 2863311531
      %v5200 = vextract.low.u32 %v5199
      %v5201 = vextract.high.u32 %v5199
      %v5202 = vshrl.u32 %v5201, 4
      %v5203 = vmul.u32 %v5202, 24
      %v5204 = vsub.s32 %v5198, %v5203
      %v5205 = vsub.s32 0, %v5204
      %v5206 = vsel %vm5196, %v5205, %v5204
      %vm5207 = vcmp.lt.s32.totalorder %v5050, 0
      %v5208 = vsub.s32 0, %v5050
      %v5209 = vsel %vm5207, %v5208, %v5050
      %v5210 = vmul.u32.u64.compose %v5209, 2863311531
      %v5211 = vextract.low.u32 %v5210
      %v5212 = vextract.high.u32 %v5210
      %v5213 = vshrl.u32 %v5212, 4
      %v5214 = vmul.u32 %v5213, 24
      %v5215 = vsub.s32 %v5209, %v5214
      %v5216 = vsub.s32 0, %v5215
      %v5217 = vsel %vm5207, %v5216, %v5215
      %vm5218 = vcmp.lt.s32.totalorder %v5051, 0
      %v5219 = vsub.s32 0, %v5051
      %v5220 = vsel %vm5218, %v5219, %v5051
      %v5221 = vmul.u32.u64.compose %v5220, 2863311531
      %v5222 = vextract.low.u32 %v5221
      %v5223 = vextract.high.u32 %v5221
      %v5224 = vshrl.u32 %v5223, 4
      %v5225 = vmul.u32 %v5224, 24
      %v5226 = vsub.s32 %v5220, %v5225
      %v5227 = vsub.s32 0, %v5226
      %v5228 = vsel %vm5218, %v5227, %v5226
      %vm5229 = vcmp.lt.s32.totalorder %v5052, 0
      %v5230 = vsub.s32 0, %v5052
      %v5231 = vsel %vm5229, %v5230, %v5052
      %v5232 = vmul.u32.u64.compose %v5231, 2863311531
      %v5233 = vextract.low.u32 %v5232
      %v5234 = vextract.high.u32 %v5232
      %v5235 = vshrl.u32 %v5234, 4
      %v5236 = vmul.u32 %v5235, 24
      %v5237 = vsub.s32 %v5231, %v5236
      %v5238 = vsub.s32 0, %v5237
      %v5239 = vsel %vm5229, %v5238, %v5237
      %vm5240 = vcmp.lt.s32.totalorder %v5053, 0
      %v5241 = vsub.s32 0, %v5053
      %v5242 = vsel %vm5240, %v5241, %v5053
      %v5243 = vmul.u32.u64.compose %v5242, 2863311531
      %v5244 = vextract.low.u32 %v5243
      %v5245 = vextract.high.u32 %v5243
      %v5246 = vshrl.u32 %v5245, 4
      %v5247 = vmul.u32 %v5246, 24
      %v5248 = vsub.s32 %v5242, %v5247
      %v5249 = vsub.s32 0, %v5248
      %v5250 = vsel %vm5240, %v5249, %v5248
      %vm5251 = vcmp.lt.s32.totalorder %v5054, 0
      %v5252 = vsub.s32 0, %v5054
      %v5253 = vsel %vm5251, %v5252, %v5054
      %v5254 = vmul.u32.u64.compose %v5253, 2863311531
      %v5255 = vextract.low.u32 %v5254
      %v5256 = vextract.high.u32 %v5254
      %v5257 = vshrl.u32 %v5256, 4
      %v5258 = vmul.u32 %v5257, 24
      %v5259 = vsub.s32 %v5253, %v5258
      %v5260 = vsub.s32 0, %v5259
      %v5261 = vsel %vm5251, %v5260, %v5259
      %vm5262 = vcmp.lt.s32.totalorder %v5055, 0
      %v5263 = vsub.s32 0, %v5055
      %v5264 = vsel %vm5262, %v5263, %v5055
      %v5265 = vmul.u32.u64.compose %v5264, 2863311531
      %v5266 = vextract.low.u32 %v5265
      %v5267 = vextract.high.u32 %v5265
      %v5268 = vshrl.u32 %v5267, 4
      %v5269 = vmul.u32 %v5268, 24
      %v5270 = vsub.s32 %v5264, %v5269
      %v5271 = vsub.s32 0, %v5270
      %v5272 = vsel %vm5262, %v5271, %v5270
      %vm5273 = vcmp.lt.s32.totalorder %v5056, 0
      %v5274 = vsub.s32 0, %v5056
      %v5275 = vsel %vm5273, %v5274, %v5056
      %v5276 = vmul.u32.u64.compose %v5275, 2863311531
      %v5277 = vextract.low.u32 %v5276
      %v5278 = vextract.high.u32 %v5276
      %v5279 = vshrl.u32 %v5278, 4
      %v5280 = vmul.u32 %v5279, 24
      %v5281 = vsub.s32 %v5275, %v5280
      %v5282 = vsub.s32 0, %v5281
      %v5283 = vsel %vm5273, %v5282, %v5281
      %vm5284 = vcmp.lt.s32.totalorder %v5057, 0
      %v5285 = vsub.s32 0, %v5057
      %v5286 = vsel %vm5284, %v5285, %v5057
      %v5287 = vmul.u32.u64.compose %v5286, 2863311531
      %v5288 = vextract.low.u32 %v5287
      %v5289 = vextract.high.u32 %v5287
      %v5290 = vshrl.u32 %v5289, 4
      %v5291 = vmul.u32 %v5290, 24
      %v5292 = vsub.s32 %v5286, %v5291
      %v5293 = vsub.s32 0, %v5292
      %v5294 = vsel %vm5284, %v5293, %v5292
      %vm5295 = vcmp.lt.s32.totalorder %v5058, 0
      %v5296 = vsub.s32 0, %v5058
      %v5297 = vsel %vm5295, %v5296, %v5058
      %v5298 = vmul.u32.u64.compose %v5297, 2863311531
      %v5299 = vextract.low.u32 %v5298
      %v5300 = vextract.high.u32 %v5298
      %v5301 = vshrl.u32 %v5300, 4
      %v5302 = vmul.u32 %v5301, 24
      %v5303 = vsub.s32 %v5297, %v5302
      %v5304 = vsub.s32 0, %v5303
      %v5305 = vsel %vm5295, %v5304, %v5303
      %vm5306 = vcmp.lt.s32.totalorder %v5059, 0
      %v5307 = vsub.s32 0, %v5059
      %v5308 = vsel %vm5306, %v5307, %v5059
      %v5309 = vmul.u32.u64.compose %v5308, 2863311531
      %v5310 = vextract.low.u32 %v5309
      %v5311 = vextract.high.u32 %v5309
      %v5312 = vshrl.u32 %v5311, 4
      %v5313 = vmul.u32 %v5312, 24
      %v5314 = vsub.s32 %v5308, %v5313
      %v5315 = vsub.s32 0, %v5314
      %v5316 = vsel %vm5306, %v5315, %v5314
      %vm5317 = vcmp.lt.s32.totalorder %v5060, 0
      %v5318 = vsub.s32 0, %v5060
      %v5319 = vsel %vm5317, %v5318, %v5060
      %v5320 = vmul.u32.u64.compose %v5319, 2863311531
      %v5321 = vextract.low.u32 %v5320
      %v5322 = vextract.high.u32 %v5320
      %v5323 = vshrl.u32 %v5322, 4
      %v5324 = vmul.u32 %v5323, 24
      %v5325 = vsub.s32 %v5319, %v5324
      %v5326 = vsub.s32 0, %v5325
      %v5327 = vsel %vm5317, %v5326, %v5325
      %vm5328 = vcmp.lt.s32.totalorder %v5061, 0
      %v5329 = vsub.s32 0, %v5061
      %v5330 = vsel %vm5328, %v5329, %v5061
      %v5331 = vmul.u32.u64.compose %v5330, 2863311531
      %v5332 = vextract.low.u32 %v5331
      %v5333 = vextract.high.u32 %v5331
      %v5334 = vshrl.u32 %v5333, 4
      %v5335 = vmul.u32 %v5334, 24
      %v5336 = vsub.s32 %v5330, %v5335
      %v5337 = vsub.s32 0, %v5336
      %v5338 = vsel %vm5328, %v5337, %v5336
      %vm5339 = vcmp.lt.s32.totalorder %v5062, 0
      %v5340 = vsub.s32 0, %v5062
      %v5341 = vsel %vm5339, %v5340, %v5062
      %v5342 = vmul.u32.u64.compose %v5341, 2863311531
      %v5343 = vextract.low.u32 %v5342
      %v5344 = vextract.high.u32 %v5342
      %v5345 = vshrl.u32 %v5344, 4
      %v5346 = vmul.u32 %v5345, 24
      %v5347 = vsub.s32 %v5341, %v5346
      %v5348 = vsub.s32 0, %v5347
      %v5349 = vsel %vm5339, %v5348, %v5347
      %vm5350 = vcmp.lt.s32.totalorder %v5063, 0
      %v5351 = vsub.s32 0, %v5063
      %v5352 = vsel %vm5350, %v5351, %v5063
      %v5353 = vmul.u32.u64.compose %v5352, 2863311531
      %v5354 = vextract.low.u32 %v5353
      %v5355 = vextract.high.u32 %v5353
      %v5356 = vshrl.u32 %v5355, 4
      %v5357 = vmul.u32 %v5356, 24
      %v5358 = vsub.s32 %v5352, %v5357
      %v5359 = vsub.s32 0, %v5358
      %v5360 = vsel %vm5350, %v5359, %v5358
      %vm5361 = vcmp.lt.s32.totalorder %v5064, 0
      %v5362 = vsub.s32 0, %v5064
      %v5363 = vsel %vm5361, %v5362, %v5064
      %v5364 = vmul.u32.u64.compose %v5363, 2863311531
      %v5365 = vextract.low.u32 %v5364
      %v5366 = vextract.high.u32 %v5364
      %v5367 = vshrl.u32 %v5366, 4
      %v5368 = vmul.u32 %v5367, 24
      %v5369 = vsub.s32 %v5363, %v5368
      %v5370 = vsub.s32 0, %v5369
      %v5371 = vsel %vm5361, %v5370, %v5369
      %vm5372 = vcmp.lt.s32.totalorder %v5065, 0
      %v5373 = vsub.s32 0, %v5065
      %v5374 = vsel %vm5372, %v5373, %v5065
      %v5375 = vmul.u32.u64.compose %v5374, 2863311531
      %v5376 = vextract.low.u32 %v5375
      %v5377 = vextract.high.u32 %v5375
      %v5378 = vshrl.u32 %v5377, 4
      %v5379 = vmul.u32 %v5378, 24
      %v5380 = vsub.s32 %v5374, %v5379
      %v5381 = vsub.s32 0, %v5380
      %v5382 = vsel %vm5372, %v5381, %v5380
      %vm5383 = vcmp.lt.s32.totalorder %v5066, 0
      %v5384 = vsub.s32 0, %v5066
      %v5385 = vsel %vm5383, %v5384, %v5066
      %v5386 = vmul.u32.u64.compose %v5385, 2863311531
      %v5387 = vextract.low.u32 %v5386
      %v5388 = vextract.high.u32 %v5386
      %v5389 = vshrl.u32 %v5388, 4
      %v5390 = vmul.u32 %v5389, 24
      %v5391 = vsub.s32 %v5385, %v5390
      %v5392 = vsub.s32 0, %v5391
      %v5393 = vsel %vm5383, %v5392, %v5391
      %vm5394 = vcmp.lt.s32.totalorder %v5067, 0
      %v5395 = vsub.s32 0, %v5067
      %v5396 = vsel %vm5394, %v5395, %v5067
      %v5397 = vmul.u32.u64.compose %v5396, 2863311531
      %v5398 = vextract.low.u32 %v5397
      %v5399 = vextract.high.u32 %v5397
      %v5400 = vshrl.u32 %v5399, 4
      %v5401 = vmul.u32 %v5400, 24
      %v5402 = vsub.s32 %v5396, %v5401
      %v5403 = vsub.s32 0, %v5402
      %v5404 = vsel %vm5394, %v5403, %v5402
      %vm5405 = vcmp.lt.s32.totalorder %v5068, 0
      %v5406 = vsub.s32 0, %v5068
      %v5407 = vsel %vm5405, %v5406, %v5068
      %v5408 = vmul.u32.u64.compose %v5407, 2863311531
      %v5409 = vextract.low.u32 %v5408
      %v5410 = vextract.high.u32 %v5408
      %v5411 = vshrl.u32 %v5410, 4
      %v5412 = vmul.u32 %v5411, 24
      %v5413 = vsub.s32 %v5407, %v5412
      %v5414 = vsub.s32 0, %v5413
      %v5415 = vsel %vm5405, %v5414, %v5413
      %vm5416 = vcmp.lt.s32.totalorder %v5069, 0
      %v5417 = vsub.s32 0, %v5069
      %v5418 = vsel %vm5416, %v5417, %v5069
      %v5419 = vmul.u32.u64.compose %v5418, 2863311531
      %v5420 = vextract.low.u32 %v5419
      %v5421 = vextract.high.u32 %v5419
      %v5422 = vshrl.u32 %v5421, 4
      %v5423 = vmul.u32 %v5422, 24
      %v5424 = vsub.s32 %v5418, %v5423
      %v5425 = vsub.s32 0, %v5424
      %v5426 = vsel %vm5416, %v5425, %v5424
      %vm5427 = vcmp.lt.s32.totalorder %v5070, 0
      %v5428 = vsub.s32 0, %v5070
      %v5429 = vsel %vm5427, %v5428, %v5070
      %v5430 = vmul.u32.u64.compose %v5429, 2863311531
      %v5431 = vextract.low.u32 %v5430
      %v5432 = vextract.high.u32 %v5430
      %v5433 = vshrl.u32 %v5432, 4
      %v5434 = vmul.u32 %v5433, 24
      %v5435 = vsub.s32 %v5429, %v5434
      %v5436 = vsub.s32 0, %v5435
      %v5437 = vsel %vm5427, %v5436, %v5435
      %vm5438 = vcmp.lt.s32.totalorder %v5071, 0
      %v5439 = vsub.s32 0, %v5071
      %v5440 = vsel %vm5438, %v5439, %v5071
      %v5441 = vmul.u32.u64.compose %v5440, 2863311531
      %v5442 = vextract.low.u32 %v5441
      %v5443 = vextract.high.u32 %v5441
      %v5444 = vshrl.u32 %v5443, 4
      %v5445 = vmul.u32 %v5444, 24
      %v5446 = vsub.s32 %v5440, %v5445
      %v5447 = vsub.s32 0, %v5446
      %v5448 = vsel %vm5438, %v5447, %v5446
      %vm5449 = vcmp.lt.s32.totalorder %v5072, 0
      %v5450 = vsub.s32 0, %v5072
      %v5451 = vsel %vm5449, %v5450, %v5072
      %v5452 = vmul.u32.u64.compose %v5451, 2863311531
      %v5453 = vextract.low.u32 %v5452
      %v5454 = vextract.high.u32 %v5452
      %v5455 = vshrl.u32 %v5454, 4
      %v5456 = vmul.u32 %v5455, 24
      %v5457 = vsub.s32 %v5451, %v5456
      %v5458 = vsub.s32 0, %v5457
      %v5459 = vsel %vm5449, %v5458, %v5457
      %vm5460 = vcmp.lt.s32.totalorder %v5073, 0
      %v5461 = vsub.s32 0, %v5073
      %v5462 = vsel %vm5460, %v5461, %v5073
      %v5463 = vmul.u32.u64.compose %v5462, 2863311531
      %v5464 = vextract.low.u32 %v5463
      %v5465 = vextract.high.u32 %v5463
      %v5466 = vshrl.u32 %v5465, 4
      %v5467 = vmul.u32 %v5466, 24
      %v5468 = vsub.s32 %v5462, %v5467
      %v5469 = vsub.s32 0, %v5468
      %v5470 = vsel %vm5460, %v5469, %v5468
      %vm5471 = vcmp.lt.s32.totalorder %v5074, 0
      %v5472 = vsub.s32 0, %v5074
      %v5473 = vsel %vm5471, %v5472, %v5074
      %v5474 = vmul.u32.u64.compose %v5473, 2863311531
      %v5475 = vextract.low.u32 %v5474
      %v5476 = vextract.high.u32 %v5474
      %v5477 = vshrl.u32 %v5476, 4
      %v5478 = vmul.u32 %v5477, 24
      %v5479 = vsub.s32 %v5473, %v5478
      %v5480 = vsub.s32 0, %v5479
      %v5481 = vsel %vm5471, %v5480, %v5479
      %vm5482 = vcmp.lt.s32.totalorder %v5075, 0
      %v5483 = vsub.s32 0, %v5075
      %v5484 = vsel %vm5482, %v5483, %v5075
      %v5485 = vmul.u32.u64.compose %v5484, 2863311531
      %v5486 = vextract.low.u32 %v5485
      %v5487 = vextract.high.u32 %v5485
      %v5488 = vshrl.u32 %v5487, 4
      %v5489 = vmul.u32 %v5488, 24
      %v5490 = vsub.s32 %v5484, %v5489
      %v5491 = vsub.s32 0, %v5490
      %v5492 = vsel %vm5482, %v5491, %v5490
      %vm5493 = vcmp.lt.s32.totalorder %v5076, 0
      %v5494 = vsub.s32 0, %v5076
      %v5495 = vsel %vm5493, %v5494, %v5076
      %v5496 = vmul.u32.u64.compose %v5495, 2863311531
      %v5497 = vextract.low.u32 %v5496
      %v5498 = vextract.high.u32 %v5496
      %v5499 = vshrl.u32 %v5498, 4
      %v5500 = vmul.u32 %v5499, 24
      %v5501 = vsub.s32 %v5495, %v5500
      %v5502 = vsub.s32 0, %v5501
      %v5503 = vsel %vm5493, %v5502, %v5501
      %vm5504 = vcmp.lt.s32.totalorder %v5077, 0
      %v5505 = vsub.s32 0, %v5077
      %v5506 = vsel %vm5504, %v5505, %v5077
      %v5507 = vmul.u32.u64.compose %v5506, 2863311531
      %v5508 = vextract.low.u32 %v5507
      %v5509 = vextract.high.u32 %v5507
      %v5510 = vshrl.u32 %v5509, 4
      %v5511 = vmul.u32 %v5510, 24
      %v5512 = vsub.s32 %v5506, %v5511
      %v5513 = vsub.s32 0, %v5512
      %v5514 = vsel %vm5504, %v5513, %v5512
      %vm5515 = vcmp.lt.s32.totalorder %v5078, 0
      %v5516 = vsub.s32 0, %v5078
      %v5517 = vsel %vm5515, %v5516, %v5078
      %v5518 = vmul.u32.u64.compose %v5517, 2863311531
      %v5519 = vextract.low.u32 %v5518
      %v5520 = vextract.high.u32 %v5518
      %v5521 = vshrl.u32 %v5520, 4
      %v5522 = vmul.u32 %v5521, 24
      %v5523 = vsub.s32 %v5517, %v5522
      %v5524 = vsub.s32 0, %v5523
      %v5525 = vsel %vm5515, %v5524, %v5523
      %vm5526 = vcmp.lt.s32.totalorder %v5079, 0
      %v5527 = vsub.s32 0, %v5079
      %v5528 = vsel %vm5526, %v5527, %v5079
      %v5529 = vmul.u32.u64.compose %v5528, 2863311531
      %v5530 = vextract.low.u32 %v5529
      %v5531 = vextract.high.u32 %v5529
      %v5532 = vshrl.u32 %v5531, 4
      %v5533 = vmul.u32 %v5532, 24
      %v5534 = vsub.s32 %v5528, %v5533
      %v5535 = vsub.s32 0, %v5534
      %v5536 = vsel %vm5526, %v5535, %v5534
      %vm5537 = vcmp.lt.s32.totalorder %v5080, 0
      %v5538 = vsub.s32 0, %v5080
      %v5539 = vsel %vm5537, %v5538, %v5080
      %v5540 = vmul.u32.u64.compose %v5539, 2863311531
      %v5541 = vextract.low.u32 %v5540
      %v5542 = vextract.high.u32 %v5540
      %v5543 = vshrl.u32 %v5542, 4
      %v5544 = vmul.u32 %v5543, 24
      %v5545 = vsub.s32 %v5539, %v5544
      %v5546 = vsub.s32 0, %v5545
      %v5547 = vsel %vm5537, %v5546, %v5545
      %vm5548 = vcmp.lt.s32.totalorder %v5081, 0
      %v5549 = vsub.s32 0, %v5081
      %v5550 = vsel %vm5548, %v5549, %v5081
      %v5551 = vmul.u32.u64.compose %v5550, 2863311531
      %v5552 = vextract.low.u32 %v5551
      %v5553 = vextract.high.u32 %v5551
      %v5554 = vshrl.u32 %v5553, 4
      %v5555 = vmul.u32 %v5554, 24
      %v5556 = vsub.s32 %v5550, %v5555
      %v5557 = vsub.s32 0, %v5556
      %v5558 = vsel %vm5548, %v5557, %v5556
      %vm5559 = vcmp.lt.s32.totalorder %v5082, 0
      %v5560 = vsub.s32 0, %v5082
      %v5561 = vsel %vm5559, %v5560, %v5082
      %v5562 = vmul.u32.u64.compose %v5561, 2863311531
      %v5563 = vextract.low.u32 %v5562
      %v5564 = vextract.high.u32 %v5562
      %v5565 = vshrl.u32 %v5564, 4
      %v5566 = vmul.u32 %v5565, 24
      %v5567 = vsub.s32 %v5561, %v5566
      %v5568 = vsub.s32 0, %v5567
      %v5569 = vsel %vm5559, %v5568, %v5567
      %vm5570 = vcmp.lt.s32.totalorder %v5083, 0
      %v5571 = vsub.s32 0, %v5083
      %v5572 = vsel %vm5570, %v5571, %v5083
      %v5573 = vmul.u32.u64.compose %v5572, 2863311531
      %v5574 = vextract.low.u32 %v5573
      %v5575 = vextract.high.u32 %v5573
      %v5576 = vshrl.u32 %v5575, 4
      %v5577 = vmul.u32 %v5576, 24
      %v5578 = vsub.s32 %v5572, %v5577
      %v5579 = vsub.s32 0, %v5578
      %v5580 = vsel %vm5570, %v5579, %v5578
      %vm5581 = vcmp.lt.s32.totalorder %v5084, 0
      %v5582 = vsub.s32 0, %v5084
      %v5583 = vsel %vm5581, %v5582, %v5084
      %v5584 = vmul.u32.u64.compose %v5583, 2863311531
      %v5585 = vextract.low.u32 %v5584
      %v5586 = vextract.high.u32 %v5584
      %v5587 = vshrl.u32 %v5586, 4
      %v5588 = vmul.u32 %v5587, 24
      %v5589 = vsub.s32 %v5583, %v5588
      %v5590 = vsub.s32 0, %v5589
      %v5591 = vsel %vm5581, %v5590, %v5589
      %vm5592 = vcmp.lt.s32.totalorder %v5085, 0
      %v5593 = vsub.s32 0, %v5085
      %v5594 = vsel %vm5592, %v5593, %v5085
      %v5595 = vmul.u32.u64.compose %v5594, 2863311531
      %v5596 = vextract.low.u32 %v5595
      %v5597 = vextract.high.u32 %v5595
      %v5598 = vshrl.u32 %v5597, 4
      %v5599 = vmul.u32 %v5598, 24
      %v5600 = vsub.s32 %v5594, %v5599
      %v5601 = vsub.s32 0, %v5600
      %v5602 = vsel %vm5592, %v5601, %v5600
      %vm5603 = vcmp.ne.s32.totalorder %v5096, 0
      %vm5604 = vcmp.ne.s32.totalorder %v5107, 0
      %vm5605 = vcmp.ne.s32.totalorder %v5118, 0
      %vm5606 = vcmp.ne.s32.totalorder %v5129, 0
      %vm5607 = vcmp.ne.s32.totalorder %v5140, 0
      %vm5608 = vcmp.ne.s32.totalorder %v5151, 0
      %vm5609 = vcmp.ne.s32.totalorder %v5162, 0
      %vm5610 = vcmp.ne.s32.totalorder %v5173, 0
      %vm5611 = vcmp.ne.s32.totalorder %v5184, 0
      %vm5612 = vcmp.ne.s32.totalorder %v5195, 0
      %vm5613 = vcmp.ne.s32.totalorder %v5206, 0
      %vm5614 = vcmp.ne.s32.totalorder %v5217, 0
      %vm5615 = vcmp.ne.s32.totalorder %v5228, 0
      %vm5616 = vcmp.ne.s32.totalorder %v5239, 0
      %vm5617 = vcmp.ne.s32.totalorder %v5250, 0
      %vm5618 = vcmp.ne.s32.totalorder %v5261, 0
      %vm5619 = vcmp.ne.s32.totalorder %v5272, 0
      %vm5620 = vcmp.ne.s32.totalorder %v5283, 0
      %vm5621 = vcmp.ne.s32.totalorder %v5294, 0
      %vm5622 = vcmp.ne.s32.totalorder %v5305, 0
      %vm5623 = vcmp.ne.s32.totalorder %v5316, 0
      %vm5624 = vcmp.ne.s32.totalorder %v5327, 0
      %vm5625 = vcmp.ne.s32.totalorder %v5338, 0
      %vm5626 = vcmp.ne.s32.totalorder %v5349, 0
      %vm5627 = vcmp.ne.s32.totalorder %v5360, 0
      %vm5628 = vcmp.ne.s32.totalorder %v5371, 0
      %vm5629 = vcmp.ne.s32.totalorder %v5382, 0
      %vm5630 = vcmp.ne.s32.totalorder %v5393, 0
      %vm5631 = vcmp.ne.s32.totalorder %v5404, 0
      %vm5632 = vcmp.ne.s32.totalorder %v5415, 0
      %vm5633 = vcmp.ne.s32.totalorder %v5426, 0
      %vm5634 = vcmp.ne.s32.totalorder %v5437, 0
      %vm5635 = vcmp.ne.s32.totalorder %v5448, 0
      %vm5636 = vcmp.ne.s32.totalorder %v5459, 0
      %vm5637 = vcmp.ne.s32.totalorder %v5470, 0
      %vm5638 = vcmp.ne.s32.totalorder %v5481, 0
      %vm5639 = vcmp.ne.s32.totalorder %v5492, 0
      %vm5640 = vcmp.ne.s32.totalorder %v5503, 0
      %vm5641 = vcmp.ne.s32.totalorder %v5514, 0
      %vm5642 = vcmp.ne.s32.totalorder %v5525, 0
      %vm5643 = vcmp.ne.s32.totalorder %v5536, 0
      %vm5644 = vcmp.ne.s32.totalorder %v5547, 0
      %vm5645 = vcmp.ne.s32.totalorder %v5558, 0
      %vm5646 = vcmp.ne.s32.totalorder %v5569, 0
      %vm5647 = vcmp.ne.s32.totalorder %v5580, 0
      %vm5648 = vcmp.ne.s32.totalorder %v5591, 0
      %vm5649 = vcmp.ne.s32.totalorder %v5602, 0
      %vm5650 = vcmp.lt.s32.totalorder %v5096, 0
      %vm5651 = vcmp.lt.s32.totalorder %v5107, 0
      %vm5652 = vcmp.lt.s32.totalorder %v5118, 0
      %vm5653 = vcmp.lt.s32.totalorder %v5129, 0
      %vm5654 = vcmp.lt.s32.totalorder %v5140, 0
      %vm5655 = vcmp.lt.s32.totalorder %v5151, 0
      %vm5656 = vcmp.lt.s32.totalorder %v5162, 0
      %vm5657 = vcmp.lt.s32.totalorder %v5173, 0
      %vm5658 = vcmp.lt.s32.totalorder %v5184, 0
      %vm5659 = vcmp.lt.s32.totalorder %v5195, 0
      %vm5660 = vcmp.lt.s32.totalorder %v5206, 0
      %vm5661 = vcmp.lt.s32.totalorder %v5217, 0
      %vm5662 = vcmp.lt.s32.totalorder %v5228, 0
      %vm5663 = vcmp.lt.s32.totalorder %v5239, 0
      %vm5664 = vcmp.lt.s32.totalorder %v5250, 0
      %vm5665 = vcmp.lt.s32.totalorder %v5261, 0
      %vm5666 = vcmp.lt.s32.totalorder %v5272, 0
      %vm5667 = vcmp.lt.s32.totalorder %v5283, 0
      %vm5668 = vcmp.lt.s32.totalorder %v5294, 0
      %vm5669 = vcmp.lt.s32.totalorder %v5305, 0
      %vm5670 = vcmp.lt.s32.totalorder %v5316, 0
      %vm5671 = vcmp.lt.s32.totalorder %v5327, 0
      %vm5672 = vcmp.lt.s32.totalorder %v5338, 0
      %vm5673 = vcmp.lt.s32.totalorder %v5349, 0
      %vm5674 = vcmp.lt.s32.totalorder %v5360, 0
      %vm5675 = vcmp.lt.s32.totalorder %v5371, 0
      %vm5676 = vcmp.lt.s32.totalorder %v5382, 0
      %vm5677 = vcmp.lt.s32.totalorder %v5393, 0
      %vm5678 = vcmp.lt.s32.totalorder %v5404, 0
      %vm5679 = vcmp.lt.s32.totalorder %v5415, 0
      %vm5680 = vcmp.lt.s32.totalorder %v5426, 0
      %vm5681 = vcmp.lt.s32.totalorder %v5437, 0
      %vm5682 = vcmp.lt.s32.totalorder %v5448, 0
      %vm5683 = vcmp.lt.s32.totalorder %v5459, 0
      %vm5684 = vcmp.lt.s32.totalorder %v5470, 0
      %vm5685 = vcmp.lt.s32.totalorder %v5481, 0
      %vm5686 = vcmp.lt.s32.totalorder %v5492, 0
      %vm5687 = vcmp.lt.s32.totalorder %v5503, 0
      %vm5688 = vcmp.lt.s32.totalorder %v5514, 0
      %vm5689 = vcmp.lt.s32.totalorder %v5525, 0
      %vm5690 = vcmp.lt.s32.totalorder %v5536, 0
      %vm5691 = vcmp.lt.s32.totalorder %v5547, 0
      %vm5692 = vcmp.lt.s32.totalorder %v5558, 0
      %vm5693 = vcmp.lt.s32.totalorder %v5569, 0
      %vm5694 = vcmp.lt.s32.totalorder %v5580, 0
      %vm5695 = vcmp.lt.s32.totalorder %v5591, 0
      %vm5696 = vcmp.lt.s32.totalorder %v5602, 0
      %vm5697 = vmand %vm5650, %vm5603
      %vm5698 = vmand %vm5651, %vm5604
      %vm5699 = vmand %vm5652, %vm5605
      %vm5700 = vmand %vm5653, %vm5606
      %vm5701 = vmand %vm5654, %vm5607
      %vm5702 = vmand %vm5655, %vm5608
      %vm5703 = vmand %vm5656, %vm5609
      %vm5704 = vmand %vm5657, %vm5610
      %vm5705 = vmand %vm5658, %vm5611
      %vm5706 = vmand %vm5659, %vm5612
      %vm5707 = vmand %vm5660, %vm5613
      %vm5708 = vmand %vm5661, %vm5614
      %vm5709 = vmand %vm5662, %vm5615
      %vm5710 = vmand %vm5663, %vm5616
      %vm5711 = vmand %vm5664, %vm5617
      %vm5712 = vmand %vm5665, %vm5618
      %vm5713 = vmand %vm5666, %vm5619
      %vm5714 = vmand %vm5667, %vm5620
      %vm5715 = vmand %vm5668, %vm5621
      %vm5716 = vmand %vm5669, %vm5622
      %vm5717 = vmand %vm5670, %vm5623
      %vm5718 = vmand %vm5671, %vm5624
      %vm5719 = vmand %vm5672, %vm5625
      %vm5720 = vmand %vm5673, %vm5626
      %vm5721 = vmand %vm5674, %vm5627
      %vm5722 = vmand %vm5675, %vm5628
      %vm5723 = vmand %vm5676, %vm5629
      %vm5724 = vmand %vm5677, %vm5630
      %vm5725 = vmand %vm5678, %vm5631
      %vm5726 = vmand %vm5679, %vm5632
      %vm5727 = vmand %vm5680, %vm5633
      %vm5728 = vmand %vm5681, %vm5634
      %vm5729 = vmand %vm5682, %vm5635
      %vm5730 = vmand %vm5683, %vm5636
      %vm5731 = vmand %vm5684, %vm5637
      %vm5732 = vmand %vm5685, %vm5638
      %vm5733 = vmand %vm5686, %vm5639
      %vm5734 = vmand %vm5687, %vm5640
      %vm5735 = vmand %vm5688, %vm5641
      %vm5736 = vmand %vm5689, %vm5642
      %vm5737 = vmand %vm5690, %vm5643
      %vm5738 = vmand %vm5691, %vm5644
      %vm5739 = vmand %vm5692, %vm5645
      %vm5740 = vmand %vm5693, %vm5646
      %vm5741 = vmand %vm5694, %vm5647
      %vm5742 = vmand %vm5695, %vm5648
      %vm5743 = vmand %vm5696, %vm5649
      %v5744 = vadd.s32 %v5096, 24
      %v5745 = vadd.s32 %v5107, 24
      %v5746 = vadd.s32 %v5118, 24
      %v5747 = vadd.s32 %v5129, 24
      %v5748 = vadd.s32 %v5140, 24
      %v5749 = vadd.s32 %v5151, 24
      %v5750 = vadd.s32 %v5162, 24
      %v5751 = vadd.s32 %v5173, 24
      %v5752 = vadd.s32 %v5184, 24
      %v5753 = vadd.s32 %v5195, 24
      %v5754 = vadd.s32 %v5206, 24
      %v5755 = vadd.s32 %v5217, 24
      %v5756 = vadd.s32 %v5228, 24
      %v5757 = vadd.s32 %v5239, 24
      %v5758 = vadd.s32 %v5250, 24
      %v5759 = vadd.s32 %v5261, 24
      %v5760 = vadd.s32 %v5272, 24
      %v5761 = vadd.s32 %v5283, 24
      %v5762 = vadd.s32 %v5294, 24
      %v5763 = vadd.s32 %v5305, 24
      %v5764 = vadd.s32 %v5316, 24
      %v5765 = vadd.s32 %v5327, 24
      %v5766 = vadd.s32 %v5338, 24
      %v5767 = vadd.s32 %v5349, 24
      %v5768 = vadd.s32 %v5360, 24
      %v5769 = vadd.s32 %v5371, 24
      %v5770 = vadd.s32 %v5382, 24
      %v5771 = vadd.s32 %v5393, 24
      %v5772 = vadd.s32 %v5404, 24
      %v5773 = vadd.s32 %v5415, 24
      %v5774 = vadd.s32 %v5426, 24
      %v5775 = vadd.s32 %v5437, 24
      %v5776 = vadd.s32 %v5448, 24
      %v5777 = vadd.s32 %v5459, 24
      %v5778 = vadd.s32 %v5470, 24
      %v5779 = vadd.s32 %v5481, 24
      %v5780 = vadd.s32 %v5492, 24
      %v5781 = vadd.s32 %v5503, 24
      %v5782 = vadd.s32 %v5514, 24
      %v5783 = vadd.s32 %v5525, 24
      %v5784 = vadd.s32 %v5536, 24
      %v5785 = vadd.s32 %v5547, 24
      %v5786 = vadd.s32 %v5558, 24
      %v5787 = vadd.s32 %v5569, 24
      %v5788 = vadd.s32 %v5580, 24
      %v5789 = vadd.s32 %v5591, 24
      %v5790 = vadd.s32 %v5602, 24
      %v5791 = vsel %vm5697, %v5744, %v5096
      %v5792 = vsel %vm5698, %v5745, %v5107
      %v5793 = vsel %vm5699, %v5746, %v5118
      %v5794 = vsel %vm5700, %v5747, %v5129
      %v5795 = vsel %vm5701, %v5748, %v5140
      %v5796 = vsel %vm5702, %v5749, %v5151
      %v5797 = vsel %vm5703, %v5750, %v5162
      %v5798 = vsel %vm5704, %v5751, %v5173
      %v5799 = vsel %vm5705, %v5752, %v5184
      %v5800 = vsel %vm5706, %v5753, %v5195
      %v5801 = vsel %vm5707, %v5754, %v5206
      %v5802 = vsel %vm5708, %v5755, %v5217
      %v5803 = vsel %vm5709, %v5756, %v5228
      %v5804 = vsel %vm5710, %v5757, %v5239
      %v5805 = vsel %vm5711, %v5758, %v5250
      %v5806 = vsel %vm5712, %v5759, %v5261
      %v5807 = vsel %vm5713, %v5760, %v5272
      %v5808 = vsel %vm5714, %v5761, %v5283
      %v5809 = vsel %vm5715, %v5762, %v5294
      %v5810 = vsel %vm5716, %v5763, %v5305
      %v5811 = vsel %vm5717, %v5764, %v5316
      %v5812 = vsel %vm5718, %v5765, %v5327
      %v5813 = vsel %vm5719, %v5766, %v5338
      %v5814 = vsel %vm5720, %v5767, %v5349
      %v5815 = vsel %vm5721, %v5768, %v5360
      %v5816 = vsel %vm5722, %v5769, %v5371
      %v5817 = vsel %vm5723, %v5770, %v5382
      %v5818 = vsel %vm5724, %v5771, %v5393
      %v5819 = vsel %vm5725, %v5772, %v5404
      %v5820 = vsel %vm5726, %v5773, %v5415
      %v5821 = vsel %vm5727, %v5774, %v5426
      %v5822 = vsel %vm5728, %v5775, %v5437
      %v5823 = vsel %vm5729, %v5776, %v5448
      %v5824 = vsel %vm5730, %v5777, %v5459
      %v5825 = vsel %vm5731, %v5778, %v5470
      %v5826 = vsel %vm5732, %v5779, %v5481
      %v5827 = vsel %vm5733, %v5780, %v5492
      %v5828 = vsel %vm5734, %v5781, %v5503
      %v5829 = vsel %vm5735, %v5782, %v5514
      %v5830 = vsel %vm5736, %v5783, %v5525
      %v5831 = vsel %vm5737, %v5784, %v5536
      %v5832 = vsel %vm5738, %v5785, %v5547
      %v5833 = vsel %vm5739, %v5786, %v5558
      %v5834 = vsel %vm5740, %v5787, %v5569
      %v5835 = vsel %vm5741, %v5788, %v5580
      %v5836 = vsel %vm5742, %v5789, %v5591
      %v5837 = vsel %vm5743, %v5790, %v5602
      %vm5838 = vcmp.lt.s32.totalorder %v5791, 16
      %vm5839 = vcmp.lt.s32.totalorder %v5792, 16
      %vm5840 = vcmp.lt.s32.totalorder %v5793, 16
      %vm5841 = vcmp.lt.s32.totalorder %v5794, 16
      %vm5842 = vcmp.lt.s32.totalorder %v5795, 16
      %vm5843 = vcmp.lt.s32.totalorder %v5796, 16
      %vm5844 = vcmp.lt.s32.totalorder %v5797, 16
      %vm5845 = vcmp.lt.s32.totalorder %v5798, 16
      %vm5846 = vcmp.lt.s32.totalorder %v5799, 16
      %vm5847 = vcmp.lt.s32.totalorder %v5800, 16
      %vm5848 = vcmp.lt.s32.totalorder %v5801, 16
      %vm5849 = vcmp.lt.s32.totalorder %v5802, 16
      %vm5850 = vcmp.lt.s32.totalorder %v5803, 16
      %vm5851 = vcmp.lt.s32.totalorder %v5804, 16
      %vm5852 = vcmp.lt.s32.totalorder %v5805, 16
      %vm5853 = vcmp.lt.s32.totalorder %v5806, 16
      %vm5854 = vcmp.lt.s32.totalorder %v5807, 16
      %vm5855 = vcmp.lt.s32.totalorder %v5808, 16
      %vm5856 = vcmp.lt.s32.totalorder %v5809, 16
      %vm5857 = vcmp.lt.s32.totalorder %v5810, 16
      %vm5858 = vcmp.lt.s32.totalorder %v5811, 16
      %vm5859 = vcmp.lt.s32.totalorder %v5812, 16
      %vm5860 = vcmp.lt.s32.totalorder %v5813, 16
      %vm5861 = vcmp.lt.s32.totalorder %v5814, 16
      %vm5862 = vcmp.lt.s32.totalorder %v5815, 16
      %vm5863 = vcmp.lt.s32.totalorder %v5816, 16
      %vm5864 = vcmp.lt.s32.totalorder %v5817, 16
      %vm5865 = vcmp.lt.s32.totalorder %v5818, 16
      %vm5866 = vcmp.lt.s32.totalorder %v5819, 16
      %vm5867 = vcmp.lt.s32.totalorder %v5820, 16
      %vm5868 = vcmp.lt.s32.totalorder %v5821, 16
      %vm5869 = vcmp.lt.s32.totalorder %v5822, 16
      %vm5870 = vcmp.lt.s32.totalorder %v5823, 16
      %vm5871 = vcmp.lt.s32.totalorder %v5824, 16
      %vm5872 = vcmp.lt.s32.totalorder %v5825, 16
      %vm5873 = vcmp.lt.s32.totalorder %v5826, 16
      %vm5874 = vcmp.lt.s32.totalorder %v5827, 16
      %vm5875 = vcmp.lt.s32.totalorder %v5828, 16
      %vm5876 = vcmp.lt.s32.totalorder %v5829, 16
      %vm5877 = vcmp.lt.s32.totalorder %v5830, 16
      %vm5878 = vcmp.lt.s32.totalorder %v5831, 16
      %vm5879 = vcmp.lt.s32.totalorder %v5832, 16
      %vm5880 = vcmp.lt.s32.totalorder %v5833, 16
      %vm5881 = vcmp.lt.s32.totalorder %v5834, 16
      %vm5882 = vcmp.lt.s32.totalorder %v5835, 16
      %vm5883 = vcmp.lt.s32.totalorder %v5836, 16
      %vm5884 = vcmp.lt.s32.totalorder %v5837, 16
      %v5885 = vsel %vm5838, 1, 0
      %v5886 = vsel %vm5839, 1, 0
      %v5887 = vsel %vm5840, 1, 0
      %v5888 = vsel %vm5841, 1, 0
      %v5889 = vsel %vm5842, 1, 0
      %v5890 = vsel %vm5843, 1, 0
      %v5891 = vsel %vm5844, 1, 0
      %v5892 = vsel %vm5845, 1, 0
      %v5893 = vsel %vm5846, 1, 0
      %v5894 = vsel %vm5847, 1, 0
      %v5895 = vsel %vm5848, 1, 0
      %v5896 = vsel %vm5849, 1, 0
      %v5897 = vsel %vm5850, 1, 0
      %v5898 = vsel %vm5851, 1, 0
      %v5899 = vsel %vm5852, 1, 0
      %v5900 = vsel %vm5853, 1, 0
      %v5901 = vsel %vm5854, 1, 0
      %v5902 = vsel %vm5855, 1, 0
      %v5903 = vsel %vm5856, 1, 0
      %v5904 = vsel %vm5857, 1, 0
      %v5905 = vsel %vm5858, 1, 0
      %v5906 = vsel %vm5859, 1, 0
      %v5907 = vsel %vm5860, 1, 0
      %v5908 = vsel %vm5861, 1, 0
      %v5909 = vsel %vm5862, 1, 0
      %v5910 = vsel %vm5863, 1, 0
      %v5911 = vsel %vm5864, 1, 0
      %v5912 = vsel %vm5865, 1, 0
      %v5913 = vsel %vm5866, 1, 0
      %v5914 = vsel %vm5867, 1, 0
      %v5915 = vsel %vm5868, 1, 0
      %v5916 = vsel %vm5869, 1, 0
      %v5917 = vsel %vm5870, 1, 0
      %v5918 = vsel %vm5871, 1, 0
      %v5919 = vsel %vm5872, 1, 0
      %v5920 = vsel %vm5873, 1, 0
      %v5921 = vsel %vm5874, 1, 0
      %v5922 = vsel %vm5875, 1, 0
      %v5923 = vsel %vm5876, 1, 0
      %v5924 = vsel %vm5877, 1, 0
      %v5925 = vsel %vm5878, 1, 0
      %v5926 = vsel %vm5879, 1, 0
      %v5927 = vsel %vm5880, 1, 0
      %v5928 = vsel %vm5881, 1, 0
      %v5929 = vsel %vm5882, 1, 0
      %v5930 = vsel %vm5883, 1, 0
      %v5931 = vsel %vm5884, 1, 0
      %vm5932 = vcmp.eq.s32.totalorder %v5885, 1
      %vm5933 = vcmp.eq.s32.totalorder %v5886, 1
      %vm5934 = vcmp.eq.s32.totalorder %v5887, 1
      %vm5935 = vcmp.eq.s32.totalorder %v5888, 1
      %vm5936 = vcmp.eq.s32.totalorder %v5889, 1
      %vm5937 = vcmp.eq.s32.totalorder %v5890, 1
      %vm5938 = vcmp.eq.s32.totalorder %v5891, 1
      %vm5939 = vcmp.eq.s32.totalorder %v5892, 1
      %vm5940 = vcmp.eq.s32.totalorder %v5893, 1
      %vm5941 = vcmp.eq.s32.totalorder %v5894, 1
      %vm5942 = vcmp.eq.s32.totalorder %v5895, 1
      %vm5943 = vcmp.eq.s32.totalorder %v5896, 1
      %vm5944 = vcmp.eq.s32.totalorder %v5897, 1
      %vm5945 = vcmp.eq.s32.totalorder %v5898, 1
      %vm5946 = vcmp.eq.s32.totalorder %v5899, 1
      %vm5947 = vcmp.eq.s32.totalorder %v5900, 1
      %vm5948 = vcmp.eq.s32.totalorder %v5901, 1
      %vm5949 = vcmp.eq.s32.totalorder %v5902, 1
      %vm5950 = vcmp.eq.s32.totalorder %v5903, 1
      %vm5951 = vcmp.eq.s32.totalorder %v5904, 1
      %vm5952 = vcmp.eq.s32.totalorder %v5905, 1
      %vm5953 = vcmp.eq.s32.totalorder %v5906, 1
      %vm5954 = vcmp.eq.s32.totalorder %v5907, 1
      %vm5955 = vcmp.eq.s32.totalorder %v5908, 1
      %vm5956 = vcmp.eq.s32.totalorder %v5909, 1
      %vm5957 = vcmp.eq.s32.totalorder %v5910, 1
      %vm5958 = vcmp.eq.s32.totalorder %v5911, 1
      %vm5959 = vcmp.eq.s32.totalorder %v5912, 1
      %vm5960 = vcmp.eq.s32.totalorder %v5913, 1
      %vm5961 = vcmp.eq.s32.totalorder %v5914, 1
      %vm5962 = vcmp.eq.s32.totalorder %v5915, 1
      %vm5963 = vcmp.eq.s32.totalorder %v5916, 1
      %vm5964 = vcmp.eq.s32.totalorder %v5917, 1
      %vm5965 = vcmp.eq.s32.totalorder %v5918, 1
      %vm5966 = vcmp.eq.s32.totalorder %v5919, 1
      %vm5967 = vcmp.eq.s32.totalorder %v5920, 1
      %vm5968 = vcmp.eq.s32.totalorder %v5921, 1
      %vm5969 = vcmp.eq.s32.totalorder %v5922, 1
      %vm5970 = vcmp.eq.s32.totalorder %v5923, 1
      %vm5971 = vcmp.eq.s32.totalorder %v5924, 1
      %vm5972 = vcmp.eq.s32.totalorder %v5925, 1
      %vm5973 = vcmp.eq.s32.totalorder %v5926, 1
      %vm5974 = vcmp.eq.s32.totalorder %v5927, 1
      %vm5975 = vcmp.eq.s32.totalorder %v5928, 1
      %vm5976 = vcmp.eq.s32.totalorder %v5929, 1
      %vm5977 = vcmp.eq.s32.totalorder %v5930, 1
      %vm5978 = vcmp.eq.s32.totalorder %v5931, 1
      %v5979 = vsel %vm5932, %v4991, 0.0
      %v5980 = vsel %vm5933, %v4992, 0.0
      %v5981 = vsel %vm5934, %v4993, 0.0
      %v5982 = vsel %vm5935, %v4994, 0.0
      %v5983 = vsel %vm5936, %v4995, 0.0
      %v5984 = vsel %vm5937, %v4996, 0.0
      %v5985 = vsel %vm5938, %v4997, 0.0
      %v5986 = vsel %vm5939, %v4998, 0.0
      %v5987 = vsel %vm5940, %v4999, 0.0
      %v5988 = vsel %vm5941, %v5000, 0.0
      %v5989 = vsel %vm5942, %v5001, 0.0
      %v5990 = vsel %vm5943, %v5002, 0.0
      %v5991 = vsel %vm5944, %v5003, 0.0
      %v5992 = vsel %vm5945, %v5004, 0.0
      %v5993 = vsel %vm5946, %v5005, 0.0
      %v5994 = vsel %vm5947, %v5006, 0.0
      %v5995 = vsel %vm5948, %v5007, 0.0
      %v5996 = vsel %vm5949, %v5008, 0.0
      %v5997 = vsel %vm5950, %v5009, 0.0
      %v5998 = vsel %vm5951, %v5010, 0.0
      %v5999 = vsel %vm5952, %v5011, 0.0
      %v6000 = vsel %vm5953, %v5012, 0.0
      %v6001 = vsel %vm5954, %v5013, 0.0
      %v6002 = vsel %vm5955, %v5014, 0.0
      %v6003 = vsel %vm5956, %v5015, 0.0
      %v6004 = vsel %vm5957, %v5016, 0.0
      %v6005 = vsel %vm5958, %v5017, 0.0
      %v6006 = vsel %vm5959, %v5018, 0.0
      %v6007 = vsel %vm5960, %v5019, 0.0
      %v6008 = vsel %vm5961, %v5020, 0.0
      %v6009 = vsel %vm5962, %v5021, 0.0
      %v6010 = vsel %vm5963, %v5022, 0.0
      %v6011 = vsel %vm5964, %v5023, 0.0
      %v6012 = vsel %vm5965, %v5024, 0.0
      %v6013 = vsel %vm5966, %v5025, 0.0
      %v6014 = vsel %vm5967, %v5026, 0.0
      %v6015 = vsel %vm5968, %v5027, 0.0
      %v6016 = vsel %vm5969, %v5028, 0.0
      %v6017 = vsel %vm5970, %v5029, 0.0
      %v6018 = vsel %vm5971, %v5030, 0.0
      %v6019 = vsel %vm5972, %v5031, 0.0
      %v6020 = vsel %vm5973, %v5032, 0.0
      %v6021 = vsel %vm5974, %v5033, 0.0
      %v6022 = vsel %vm5975, %v5034, 0.0
      %v6023 = vsel %vm5976, %v5035, 0.0
      %v6024 = vsel %vm5977, %v5036, 0.0
      %v6025 = vsel %vm5978, %v5037, 0.0
      %v6026 = vsel %vm239, %v5979, 0.0
      %v6027 = vsel %vm239, %v5980, 0.0
      %v6028 = vadd.f32 %v6026, %v6027
      %v6029 = vsel %vm239, %v5981, 0.0
      %v6030 = vadd.f32 %v6028, %v6029
      %v6031 = vsel %vm239, %v5982, 0.0
      %v6032 = vadd.f32 %v6030, %v6031
      %v6033 = vsel %vm239, %v5983, 0.0
      %v6034 = vadd.f32 %v6032, %v6033
      %v6035 = vsel %vm239, %v5984, 0.0
      %v6036 = vadd.f32 %v6034, %v6035
      %v6037 = vsel %vm239, %v5985, 0.0
      %v6038 = vadd.f32 %v6036, %v6037
      %v6039 = vsel %vm239, %v5986, 0.0
      %v6040 = vadd.f32 %v6038, %v6039
      %v6041 = vsel %vm239, %v5987, 0.0
      %v6042 = vadd.f32 %v6040, %v6041
      %v6043 = vsel %vm239, %v5988, 0.0
      %v6044 = vadd.f32 %v6042, %v6043
      %v6045 = vsel %vm239, %v5989, 0.0
      %v6046 = vadd.f32 %v6044, %v6045
      %v6047 = vsel %vm239, %v5990, 0.0
      %v6048 = vadd.f32 %v6046, %v6047
      %v6049 = vsel %vm239, %v5991, 0.0
      %v6050 = vadd.f32 %v6048, %v6049
      %v6051 = vsel %vm239, %v5992, 0.0
      %v6052 = vadd.f32 %v6050, %v6051
      %v6053 = vsel %vm239, %v5993, 0.0
      %v6054 = vadd.f32 %v6052, %v6053
      %v6055 = vsel %vm239, %v5994, 0.0
      %v6056 = vadd.f32 %v6054, %v6055
      %v6057 = vsel %vm239, %v5995, 0.0
      %v6058 = vadd.f32 %v6056, %v6057
      %v6059 = vsel %vm239, %v5996, 0.0
      %v6060 = vadd.f32 %v6058, %v6059
      %v6061 = vsel %vm239, %v5997, 0.0
      %v6062 = vadd.f32 %v6060, %v6061
      %v6063 = vsel %vm239, %v5998, 0.0
      %v6064 = vadd.f32 %v6062, %v6063
      %v6065 = vsel %vm239, %v5999, 0.0
      %v6066 = vadd.f32 %v6064, %v6065
      %v6067 = vsel %vm239, %v6000, 0.0
      %v6068 = vadd.f32 %v6066, %v6067
      %v6069 = vsel %vm239, %v6001, 0.0
      %v6070 = vadd.f32 %v6068, %v6069
      %v6071 = vsel %vm239, %v6002, 0.0
      %v6072 = vadd.f32 %v6070, %v6071
      %v6073 = vsel %vm239, %v6003, 0.0
      %v6074 = vadd.f32 %v6072, %v6073
      %v6075 = vsel %vm239, %v6004, 0.0
      %v6076 = vadd.f32 %v6074, %v6075
      %v6077 = vsel %vm239, %v6005, 0.0
      %v6078 = vadd.f32 %v6076, %v6077
      %v6079 = vsel %vm239, %v6006, 0.0
      %v6080 = vadd.f32 %v6078, %v6079
      %v6081 = vsel %vm239, %v6007, 0.0
      %v6082 = vadd.f32 %v6080, %v6081
      %v6083 = vsel %vm239, %v6008, 0.0
      %v6084 = vadd.f32 %v6082, %v6083
      %v6085 = vsel %vm239, %v6009, 0.0
      %v6086 = vadd.f32 %v6084, %v6085
      %v6087 = vsel %vm239, %v6010, 0.0
      %v6088 = vadd.f32 %v6086, %v6087
      %v6089 = vsel %vm239, %v6011, 0.0
      %v6090 = vadd.f32 %v6088, %v6089
      %v6091 = vsel %vm239, %v6012, 0.0
      %v6092 = vadd.f32 %v6090, %v6091
      %v6093 = vsel %vm239, %v6013, 0.0
      %v6094 = vadd.f32 %v6092, %v6093
      %v6095 = vsel %vm239, %v6014, 0.0
      %v6096 = vadd.f32 %v6094, %v6095
      %v6097 = vsel %vm239, %v6015, 0.0
      %v6098 = vadd.f32 %v6096, %v6097
      %v6099 = vsel %vm239, %v6016, 0.0
      %v6100 = vadd.f32 %v6098, %v6099
      %v6101 = vsel %vm239, %v6017, 0.0
      %v6102 = vadd.f32 %v6100, %v6101
      %v6103 = vsel %vm239, %v6018, 0.0
      %v6104 = vadd.f32 %v6102, %v6103
      %v6105 = vsel %vm239, %v6019, 0.0
      %v6106 = vadd.f32 %v6104, %v6105
      %v6107 = vsel %vm239, %v6020, 0.0
      %v6108 = vadd.f32 %v6106, %v6107
      %v6109 = vsel %vm239, %v6021, 0.0
      %v6110 = vadd.f32 %v6108, %v6109
      %v6111 = vsel %vm239, %v6022, 0.0
      %v6112 = vadd.f32 %v6110, %v6111
      %v6113 = vsel %vm239, %v6023, 0.0
      %v6114 = vadd.f32 %v6112, %v6113
      %v6115 = vsel %vm239, %v6024, 0.0
      %v6116 = vadd.f32 %v6114, %v6115
      %v6117 = vsel %vm239, %v6025, 0.0
      %v6118 = vadd.f32 %v6116, %v6117
      %v6119 = vrot.slane %v6118, 4
      %v6120 = vadd.f32 %v6118, %v6119
      %v6121 = vrot.slane %v6120, 2
      %v6122 = vadd.f32 %v6120, %v6121
      %v6123 = vrot.slane %v6122, 1
      %v6124 = vadd.f32 %v6122, %v6123
      %v6125 = vmul.f32 %v6124, 0.00390625
      %v6126 = vsub.f32 %v4991, %v6125
      %v6127 = vsub.f32 %v4992, %v6125
      %v6128 = vsub.f32 %v4993, %v6125
      %v6129 = vsub.f32 %v4994, %v6125
      %v6130 = vsub.f32 %v4995, %v6125
      %v6131 = vsub.f32 %v4996, %v6125
      %v6132 = vsub.f32 %v4997, %v6125
      %v6133 = vsub.f32 %v4998, %v6125
      %v6134 = vsub.f32 %v4999, %v6125
      %v6135 = vsub.f32 %v5000, %v6125
      %v6136 = vsub.f32 %v5001, %v6125
      %v6137 = vsub.f32 %v5002, %v6125
      %v6138 = vsub.f32 %v5003, %v6125
      %v6139 = vsub.f32 %v5004, %v6125
      %v6140 = vsub.f32 %v5005, %v6125
      %v6141 = vsub.f32 %v5006, %v6125
      %v6142 = vsub.f32 %v5007, %v6125
      %v6143 = vsub.f32 %v5008, %v6125
      %v6144 = vsub.f32 %v5009, %v6125
      %v6145 = vsub.f32 %v5010, %v6125
      %v6146 = vsub.f32 %v5011, %v6125
      %v6147 = vsub.f32 %v5012, %v6125
      %v6148 = vsub.f32 %v5013, %v6125
      %v6149 = vsub.f32 %v5014, %v6125
      %v6150 = vsub.f32 %v5015, %v6125
      %v6151 = vsub.f32 %v5016, %v6125
      %v6152 = vsub.f32 %v5017, %v6125
      %v6153 = vsub.f32 %v5018, %v6125
      %v6154 = vsub.f32 %v5019, %v6125
      %v6155 = vsub.f32 %v5020, %v6125
      %v6156 = vsub.f32 %v5021, %v6125
      %v6157 = vsub.f32 %v5022, %v6125
      %v6158 = vsub.f32 %v5023, %v6125
      %v6159 = vsub.f32 %v5024, %v6125
      %v6160 = vsub.f32 %v5025, %v6125
      %v6161 = vsub.f32 %v5026, %v6125
      %v6162 = vsub.f32 %v5027, %v6125
      %v6163 = vsub.f32 %v5028, %v6125
      %v6164 = vsub.f32 %v5029, %v6125
      %v6165 = vsub.f32 %v5030, %v6125
      %v6166 = vsub.f32 %v5031, %v6125
      %v6167 = vsub.f32 %v5032, %v6125
      %v6168 = vsub.f32 %v5033, %v6125
      %v6169 = vsub.f32 %v5034, %v6125
      %v6170 = vsub.f32 %v5035, %v6125
      %v6171 = vsub.f32 %v5036, %v6125
      %v6172 = vsub.f32 %v5037, %v6125
      %v6173 = vsel %vm5932, %v6126, 0.0
      %v6174 = vsel %vm5933, %v6127, 0.0
      %v6175 = vsel %vm5934, %v6128, 0.0
      %v6176 = vsel %vm5935, %v6129, 0.0
      %v6177 = vsel %vm5936, %v6130, 0.0
      %v6178 = vsel %vm5937, %v6131, 0.0
      %v6179 = vsel %vm5938, %v6132, 0.0
      %v6180 = vsel %vm5939, %v6133, 0.0
      %v6181 = vsel %vm5940, %v6134, 0.0
      %v6182 = vsel %vm5941, %v6135, 0.0
      %v6183 = vsel %vm5942, %v6136, 0.0
      %v6184 = vsel %vm5943, %v6137, 0.0
      %v6185 = vsel %vm5944, %v6138, 0.0
      %v6186 = vsel %vm5945, %v6139, 0.0
      %v6187 = vsel %vm5946, %v6140, 0.0
      %v6188 = vsel %vm5947, %v6141, 0.0
      %v6189 = vsel %vm5948, %v6142, 0.0
      %v6190 = vsel %vm5949, %v6143, 0.0
      %v6191 = vsel %vm5950, %v6144, 0.0
      %v6192 = vsel %vm5951, %v6145, 0.0
      %v6193 = vsel %vm5952, %v6146, 0.0
      %v6194 = vsel %vm5953, %v6147, 0.0
      %v6195 = vsel %vm5954, %v6148, 0.0
      %v6196 = vsel %vm5955, %v6149, 0.0
      %v6197 = vsel %vm5956, %v6150, 0.0
      %v6198 = vsel %vm5957, %v6151, 0.0
      %v6199 = vsel %vm5958, %v6152, 0.0
      %v6200 = vsel %vm5959, %v6153, 0.0
      %v6201 = vsel %vm5960, %v6154, 0.0
      %v6202 = vsel %vm5961, %v6155, 0.0
      %v6203 = vsel %vm5962, %v6156, 0.0
      %v6204 = vsel %vm5963, %v6157, 0.0
      %v6205 = vsel %vm5964, %v6158, 0.0
      %v6206 = vsel %vm5965, %v6159, 0.0
      %v6207 = vsel %vm5966, %v6160, 0.0
      %v6208 = vsel %vm5967, %v6161, 0.0
      %v6209 = vsel %vm5968, %v6162, 0.0
      %v6210 = vsel %vm5969, %v6163, 0.0
      %v6211 = vsel %vm5970, %v6164, 0.0
      %v6212 = vsel %vm5971, %v6165, 0.0
      %v6213 = vsel %vm5972, %v6166, 0.0
      %v6214 = vsel %vm5973, %v6167, 0.0
      %v6215 = vsel %vm5974, %v6168, 0.0
      %v6216 = vsel %vm5975, %v6169, 0.0
      %v6217 = vsel %vm5976, %v6170, 0.0
      %v6218 = vsel %vm5977, %v6171, 0.0
      %v6219 = vsel %vm5978, %v6172, 0.0
      %v6220 = vmul.f32 %v6173, %v6173
      %v6221 = vmul.f32 %v6174, %v6174
      %v6222 = vmul.f32 %v6175, %v6175
      %v6223 = vmul.f32 %v6176, %v6176
      %v6224 = vmul.f32 %v6177, %v6177
      %v6225 = vmul.f32 %v6178, %v6178
      %v6226 = vmul.f32 %v6179, %v6179
      %v6227 = vmul.f32 %v6180, %v6180
      %v6228 = vmul.f32 %v6181, %v6181
      %v6229 = vmul.f32 %v6182, %v6182
      %v6230 = vmul.f32 %v6183, %v6183
      %v6231 = vmul.f32 %v6184, %v6184
      %v6232 = vmul.f32 %v6185, %v6185
      %v6233 = vmul.f32 %v6186, %v6186
      %v6234 = vmul.f32 %v6187, %v6187
      %v6235 = vmul.f32 %v6188, %v6188
      %v6236 = vmul.f32 %v6189, %v6189
      %v6237 = vmul.f32 %v6190, %v6190
      %v6238 = vmul.f32 %v6191, %v6191
      %v6239 = vmul.f32 %v6192, %v6192
      %v6240 = vmul.f32 %v6193, %v6193
      %v6241 = vmul.f32 %v6194, %v6194
      %v6242 = vmul.f32 %v6195, %v6195
      %v6243 = vmul.f32 %v6196, %v6196
      %v6244 = vmul.f32 %v6197, %v6197
      %v6245 = vmul.f32 %v6198, %v6198
      %v6246 = vmul.f32 %v6199, %v6199
      %v6247 = vmul.f32 %v6200, %v6200
      %v6248 = vmul.f32 %v6201, %v6201
      %v6249 = vmul.f32 %v6202, %v6202
      %v6250 = vmul.f32 %v6203, %v6203
      %v6251 = vmul.f32 %v6204, %v6204
      %v6252 = vmul.f32 %v6205, %v6205
      %v6253 = vmul.f32 %v6206, %v6206
      %v6254 = vmul.f32 %v6207, %v6207
      %v6255 = vmul.f32 %v6208, %v6208
      %v6256 = vmul.f32 %v6209, %v6209
      %v6257 = vmul.f32 %v6210, %v6210
      %v6258 = vmul.f32 %v6211, %v6211
      %v6259 = vmul.f32 %v6212, %v6212
      %v6260 = vmul.f32 %v6213, %v6213
      %v6261 = vmul.f32 %v6214, %v6214
      %v6262 = vmul.f32 %v6215, %v6215
      %v6263 = vmul.f32 %v6216, %v6216
      %v6264 = vmul.f32 %v6217, %v6217
      %v6265 = vmul.f32 %v6218, %v6218
      %v6266 = vmul.f32 %v6219, %v6219
      %v6267 = vsel %vm239, %v6220, 0.0
      %v6268 = vsel %vm239, %v6221, 0.0
      %v6269 = vadd.f32 %v6267, %v6268
      %v6270 = vsel %vm239, %v6222, 0.0
      %v6271 = vadd.f32 %v6269, %v6270
      %v6272 = vsel %vm239, %v6223, 0.0
      %v6273 = vadd.f32 %v6271, %v6272
      %v6274 = vsel %vm239, %v6224, 0.0
      %v6275 = vadd.f32 %v6273, %v6274
      %v6276 = vsel %vm239, %v6225, 0.0
      %v6277 = vadd.f32 %v6275, %v6276
      %v6278 = vsel %vm239, %v6226, 0.0
      %v6279 = vadd.f32 %v6277, %v6278
      %v6280 = vsel %vm239, %v6227, 0.0
      %v6281 = vadd.f32 %v6279, %v6280
      %v6282 = vsel %vm239, %v6228, 0.0
      %v6283 = vadd.f32 %v6281, %v6282
      %v6284 = vsel %vm239, %v6229, 0.0
      %v6285 = vadd.f32 %v6283, %v6284
      %v6286 = vsel %vm239, %v6230, 0.0
      %v6287 = vadd.f32 %v6285, %v6286
      %v6288 = vsel %vm239, %v6231, 0.0
      %v6289 = vadd.f32 %v6287, %v6288
      %v6290 = vsel %vm239, %v6232, 0.0
      %v6291 = vadd.f32 %v6289, %v6290
      %v6292 = vsel %vm239, %v6233, 0.0
      %v6293 = vadd.f32 %v6291, %v6292
      %v6294 = vsel %vm239, %v6234, 0.0
      %v6295 = vadd.f32 %v6293, %v6294
      %v6296 = vsel %vm239, %v6235, 0.0
      %v6297 = vadd.f32 %v6295, %v6296
      %v6298 = vsel %vm239, %v6236, 0.0
      %v6299 = vadd.f32 %v6297, %v6298
      %v6300 = vsel %vm239, %v6237, 0.0
      %v6301 = vadd.f32 %v6299, %v6300
      %v6302 = vsel %vm239, %v6238, 0.0
      %v6303 = vadd.f32 %v6301, %v6302
      %v6304 = vsel %vm239, %v6239, 0.0
      %v6305 = vadd.f32 %v6303, %v6304
      %v6306 = vsel %vm239, %v6240, 0.0
      %v6307 = vadd.f32 %v6305, %v6306
      %v6308 = vsel %vm239, %v6241, 0.0
      %v6309 = vadd.f32 %v6307, %v6308
      %v6310 = vsel %vm239, %v6242, 0.0
      %v6311 = vadd.f32 %v6309, %v6310
      %v6312 = vsel %vm239, %v6243, 0.0
      %v6313 = vadd.f32 %v6311, %v6312
      %v6314 = vsel %vm239, %v6244, 0.0
      %v6315 = vadd.f32 %v6313, %v6314
      %v6316 = vsel %vm239, %v6245, 0.0
      %v6317 = vadd.f32 %v6315, %v6316
      %v6318 = vsel %vm239, %v6246, 0.0
      %v6319 = vadd.f32 %v6317, %v6318
      %v6320 = vsel %vm239, %v6247, 0.0
      %v6321 = vadd.f32 %v6319, %v6320
      %v6322 = vsel %vm239, %v6248, 0.0
      %v6323 = vadd.f32 %v6321, %v6322
      %v6324 = vsel %vm239, %v6249, 0.0
      %v6325 = vadd.f32 %v6323, %v6324
      %v6326 = vsel %vm239, %v6250, 0.0
      %v6327 = vadd.f32 %v6325, %v6326
      %v6328 = vsel %vm239, %v6251, 0.0
      %v6329 = vadd.f32 %v6327, %v6328
      %v6330 = vsel %vm239, %v6252, 0.0
      %v6331 = vadd.f32 %v6329, %v6330
      %v6332 = vsel %vm239, %v6253, 0.0
      %v6333 = vadd.f32 %v6331, %v6332
      %v6334 = vsel %vm239, %v6254, 0.0
      %v6335 = vadd.f32 %v6333, %v6334
      %v6336 = vsel %vm239, %v6255, 0.0
      %v6337 = vadd.f32 %v6335, %v6336
      %v6338 = vsel %vm239, %v6256, 0.0
      %v6339 = vadd.f32 %v6337, %v6338
      %v6340 = vsel %vm239, %v6257, 0.0
      %v6341 = vadd.f32 %v6339, %v6340
      %v6342 = vsel %vm239, %v6258, 0.0
      %v6343 = vadd.f32 %v6341, %v6342
      %v6344 = vsel %vm239, %v6259, 0.0
      %v6345 = vadd.f32 %v6343, %v6344
      %v6346 = vsel %vm239, %v6260, 0.0
      %v6347 = vadd.f32 %v6345, %v6346
      %v6348 = vsel %vm239, %v6261, 0.0
      %v6349 = vadd.f32 %v6347, %v6348
      %v6350 = vsel %vm239, %v6262, 0.0
      %v6351 = vadd.f32 %v6349, %v6350
      %v6352 = vsel %vm239, %v6263, 0.0
      %v6353 = vadd.f32 %v6351, %v6352
      %v6354 = vsel %vm239, %v6264, 0.0
      %v6355 = vadd.f32 %v6353, %v6354
      %v6356 = vsel %vm239, %v6265, 0.0
      %v6357 = vadd.f32 %v6355, %v6356
      %v6358 = vsel %vm239, %v6266, 0.0
      %v6359 = vadd.f32 %v6357, %v6358
      %v6360 = vrot.slane %v6359, 4
      %v6361 = vadd.f32 %v6359, %v6360
      %v6362 = vrot.slane %v6361, 2
      %v6363 = vadd.f32 %v6361, %v6362
      %v6364 = vrot.slane %v6363, 1
      %v6365 = vadd.f32 %v6363, %v6364
      %vm6366 = vcmask 1040384
      %v6367 = vsel %vm6366, %v6124, %v6365
      %vm6368 = vcmask 25600
      %6369 = vst.msk [vmem:[%s235] sm:$0x3] %vm6368, %v6367
      %v6370 = vld [vmem:[#allocation3] sm:$0xff]
      %v6371 = vld [vmem:[#allocation3 + $0x8] sm:$0xff]
      %v6372 = vpack.c.bf16 %v6371, %v6370
      %v6374 = vunpack.c.l.b16 %v6372
      %v6375 = vunpack.c.h.b16 %v6372
      %v6376 = vpack.c.b16 %v6374, %v6374
      %v6377 = vpack.c.b16 %v6375, %v6375
      %vm6380 = vcmask 27648
      %6381 = vst.msk [vmem:[%s231] sm:$0xf] %vm6380, %v6376
      %6382 = vst.msk [vmem:[%s231 + $0x4] sm:$0xf] %vm6380, %v6377
      %v6383 = vld [vmem:[#allocation3 + $0x18] sm:$0xff]
      %v6384 = vld [vmem:[#allocation3 + $0x20] sm:$0xff]
      %v6385 = vpack.c.bf16 %v6384, %v6383
      %v6387 = vunpack.c.l.b16 %v6385
      %v6388 = vunpack.c.h.b16 %v6385
      %v6389 = vpack.c.b16 %v6387, %v6387
      %v6390 = vpack.c.b16 %v6388, %v6388
      %6393 = vst.msk [vmem:[%s231 + $0x8] sm:$0xf] %vm6380, %v6389
      %6394 = vst.msk [vmem:[%s231 + $0xc] sm:$0xf] %vm6380, %v6390
      %v6395 = vld [vmem:[#allocation3 + $0x30] sm:$0xff]
      %v6396 = vld [vmem:[#allocation3 + $0x38] sm:$0xff]
      %v6397 = vpack.c.bf16 %v6396, %v6395
      %v6399 = vunpack.c.l.b16 %v6397
      %v6400 = vunpack.c.h.b16 %v6397
      %v6401 = vpack.c.b16 %v6399, %v6399
      %v6402 = vpack.c.b16 %v6400, %v6400
      %6405 = vst.msk [vmem:[%s231 + $0x10] sm:$0xf] %vm6380, %v6401
      %6406 = vst.msk [vmem:[%s231 + $0x14] sm:$0xf] %vm6380, %v6402
      %v6407 = vld [vmem:[#allocation3 + $0x48] sm:$0xff]
      %v6408 = vld [vmem:[#allocation3 + $0x50] sm:$0xff]
      %v6409 = vpack.c.bf16 %v6408, %v6407
      %v6411 = vunpack.c.l.b16 %v6409
      %v6412 = vunpack.c.h.b16 %v6409
      %v6413 = vpack.c.b16 %v6411, %v6411
      %v6414 = vpack.c.b16 %v6412, %v6412
      %6417 = vst.msk [vmem:[%s231 + $0x18] sm:$0xf] %vm6380, %v6413
      %6418 = vst.msk [vmem:[%s231 + $0x1c] sm:$0xf] %vm6380, %v6414
      %v6419 = vld [vmem:[#allocation3 + $0x60] sm:$0xff]
      %v6420 = vld [vmem:[#allocation3 + $0x68] sm:$0xff]
      %v6421 = vpack.c.bf16 %v6420, %v6419
      %v6423 = vunpack.c.l.b16 %v6421
      %v6424 = vunpack.c.h.b16 %v6421
      %v6425 = vpack.c.b16 %v6423, %v6423
      %v6426 = vpack.c.b16 %v6424, %v6424
      %6429 = vst.msk [vmem:[%s231 + $0x20] sm:$0xf] %vm6380, %v6425
      %6430 = vst.msk [vmem:[%s231 + $0x24] sm:$0xf] %vm6380, %v6426
      %v6431 = vld [vmem:[#allocation3 + $0x78] sm:$0xff]
      %v6432 = vld [vmem:[#allocation3 + $0x80] sm:$0xff]
      %v6433 = vpack.c.bf16 %v6432, %v6431
      %v6435 = vunpack.c.l.b16 %v6433
      %v6436 = vunpack.c.h.b16 %v6433
      %v6437 = vpack.c.b16 %v6435, %v6435
      %v6438 = vpack.c.b16 %v6436, %v6436
      %6441 = vst.msk [vmem:[%s231 + $0x28] sm:$0xf] %vm6380, %v6437
      %6442 = vst.msk [vmem:[%s231 + $0x2c] sm:$0xf] %vm6380, %v6438
      %v6443 = vld [vmem:[#allocation3 + $0x90] sm:$0xff]
      %v6444 = vld [vmem:[#allocation3 + $0x98] sm:$0xff]
      %v6445 = vpack.c.bf16 %v6444, %v6443
      %v6447 = vunpack.c.l.b16 %v6445
      %v6448 = vunpack.c.h.b16 %v6445
      %v6449 = vpack.c.b16 %v6447, %v6447
      %v6450 = vpack.c.b16 %v6448, %v6448
      %6453 = vst.msk [vmem:[%s231 + $0x30] sm:$0xf] %vm6380, %v6449
      %6454 = vst.msk [vmem:[%s231 + $0x34] sm:$0xf] %vm6380, %v6450
      %v6455 = vld [vmem:[#allocation3 + $0xa8] sm:$0xff]
      %v6456 = vld [vmem:[#allocation3 + $0xb0] sm:$0xff]
      %v6457 = vpack.c.bf16 %v6456, %v6455
      %v6459 = vunpack.c.l.b16 %v6457
      %v6460 = vunpack.c.h.b16 %v6457
      %v6461 = vpack.c.b16 %v6459, %v6459
      %v6462 = vpack.c.b16 %v6460, %v6460
      %6465 = vst.msk [vmem:[%s231 + $0x38] sm:$0xf] %vm6380, %v6461
      %6466 = vst.msk [vmem:[%s231 + $0x3c] sm:$0xf] %vm6380, %v6462
      %v6467 = vld [vmem:[#allocation3 + $0xc0] sm:$0xff]
      %v6468 = vld [vmem:[#allocation3 + $0xc8] sm:$0xff]
      %v6469 = vpack.c.bf16 %v6468, %v6467
      %v6471 = vunpack.c.l.b16 %v6469
      %v6472 = vunpack.c.h.b16 %v6469
      %v6473 = vpack.c.b16 %v6471, %v6471
      %v6474 = vpack.c.b16 %v6472, %v6472
      %6477 = vst.msk [vmem:[%s231 + $0x40] sm:$0xf] %vm6380, %v6473
      %6478 = vst.msk [vmem:[%s231 + $0x44] sm:$0xf] %vm6380, %v6474
      %v6479 = vld [vmem:[#allocation3 + $0xd8] sm:$0xff]
      %v6480 = vld [vmem:[#allocation3 + $0xe0] sm:$0xff]
      %v6481 = vpack.c.bf16 %v6480, %v6479
      %v6483 = vunpack.c.l.b16 %v6481
      %v6484 = vunpack.c.h.b16 %v6481
      %v6485 = vpack.c.b16 %v6483, %v6483
      %v6486 = vpack.c.b16 %v6484, %v6484
      %6489 = vst.msk [vmem:[%s231 + $0x48] sm:$0xf] %vm6380, %v6485
      %6490 = vst.msk [vmem:[%s231 + $0x4c] sm:$0xf] %vm6380, %v6486
      %v6491 = vld [vmem:[#allocation3 + $0xf0] sm:$0xff]
      %v6492 = vld [vmem:[#allocation3 + $0xf8] sm:$0xff]
      %v6493 = vpack.c.bf16 %v6492, %v6491
      %v6495 = vunpack.c.l.b16 %v6493
      %v6496 = vunpack.c.h.b16 %v6493
      %v6497 = vpack.c.b16 %v6495, %v6495
      %v6498 = vpack.c.b16 %v6496, %v6496
      %6501 = vst.msk [vmem:[%s231 + $0x50] sm:$0xf] %vm6380, %v6497
      %6502 = vst.msk [vmem:[%s231 + $0x54] sm:$0xf] %vm6380, %v6498
      %v6503 = vld [vmem:[#allocation3 + $0x108] sm:$0xff]
      %v6504 = vld [vmem:[#allocation3 + $0x110] sm:$0xff]
      %v6505 = vpack.c.bf16 %v6504, %v6503
      %v6507 = vunpack.c.l.b16 %v6505
      %v6508 = vunpack.c.h.b16 %v6505
      %v6509 = vpack.c.b16 %v6507, %v6507
      %v6510 = vpack.c.b16 %v6508, %v6508
      %6513 = vst.msk [vmem:[%s231 + $0x58] sm:$0xf] %vm6380, %v6509
      %6514 = vst.msk [vmem:[%s231 + $0x5c] sm:$0xf] %vm6380, %v6510
      %v6515 = vld [vmem:[#allocation3 + $0x120] sm:$0xff]
      %v6516 = vld [vmem:[#allocation3 + $0x128] sm:$0xff]
      %v6517 = vpack.c.bf16 %v6516, %v6515
      %v6519 = vunpack.c.l.b16 %v6517
      %v6520 = vunpack.c.h.b16 %v6517
      %v6521 = vpack.c.b16 %v6519, %v6519
      %v6522 = vpack.c.b16 %v6520, %v6520
      %6525 = vst.msk [vmem:[%s231 + $0x60] sm:$0xf] %vm6380, %v6521
      %6526 = vst.msk [vmem:[%s231 + $0x64] sm:$0xf] %vm6380, %v6522
      %v6527 = vld [vmem:[#allocation3 + $0x138] sm:$0xff]
      %v6528 = vld [vmem:[#allocation3 + $0x140] sm:$0xff]
      %v6529 = vpack.c.bf16 %v6528, %v6527
      %v6531 = vunpack.c.l.b16 %v6529
      %v6532 = vunpack.c.h.b16 %v6529
      %v6533 = vpack.c.b16 %v6531, %v6531
      %v6534 = vpack.c.b16 %v6532, %v6532
      %6537 = vst.msk [vmem:[%s231 + $0x68] sm:$0xf] %vm6380, %v6533
      %6538 = vst.msk [vmem:[%s231 + $0x6c] sm:$0xf] %vm6380, %v6534
      %v6539 = vld [vmem:[#allocation3 + $0x150] sm:$0xff]
      %v6540 = vld [vmem:[#allocation3 + $0x158] sm:$0xff]
      %v6541 = vpack.c.bf16 %v6540, %v6539
      %v6543 = vunpack.c.l.b16 %v6541
      %v6544 = vunpack.c.h.b16 %v6541
      %v6545 = vpack.c.b16 %v6543, %v6543
      %v6546 = vpack.c.b16 %v6544, %v6544
      %6549 = vst.msk [vmem:[%s231 + $0x70] sm:$0xf] %vm6380, %v6545
      %6550 = vst.msk [vmem:[%s231 + $0x74] sm:$0xf] %vm6380, %v6546
      %v6551 = vld [vmem:[#allocation3 + $0x168] sm:$0xff]
      %v6552 = vld [vmem:[#allocation3 + $0x170] sm:$0xff]
      %v6553 = vpack.c.bf16 %v6552, %v6551
      %v6555 = vunpack.c.l.b16 %v6553
      %v6556 = vunpack.c.h.b16 %v6553
      %v6557 = vpack.c.b16 %v6555, %v6555
      %v6558 = vpack.c.b16 %v6556, %v6556
      %6561 = vst.msk [vmem:[%s231 + $0x78] sm:$0xf] %vm6380, %v6557
      %6562 = vst.msk [vmem:[%s231 + $0x7c] sm:$0xf] %vm6380, %v6558
      %p6563 = scmp.lt.s32.totalorder %s17, 1
      %s6564 = scalar_select %p6563, %s17, 1
      %s6565 = smul.addr %s6564, 32
      %s6566 = smul.addr %s6565, 4
      %s6567 = scalar_lea.vmem %s4, %s6566
      %p6568 = scmp.lt.s32.totalorder %s17, 1
      %s6569 = scalar_select %p6568, %s17, 1
      %s6570 = smul.addr %s6569, 2
      %s6571 = scalar_lea.vmem %s5, %s6570
      // Predicated region
      $region37: #{block_forward.5} parent=35 // pred_check
        %p6572 = pneg %p124
      $region38: #{block_forward.5} parent=35 // pred_check_branch
        %6574 = sbr.rel (%p6572) target = $region40
      $region39: #{block_forward.5} parent=35 // pred_region
        _
      $region40: #{block_forward.5} parent=35 // pred_fallthru
        _
      // Predicated region
      $region41: #{block_forward.5} parent=35 // pred_check
        %p6575 = pneg %p150
      $region42: #{block_forward.5} parent=35 // pred_check_branch
        %6577 = sbr.rel (%p6575) target = $region44
      $region43: #{block_forward.5} parent=35 // pred_region
        _
      $region44: #{block_forward.5} parent=35 // pred_fallthru
        _
    $region36: #{block_forward.5} parent=5 // pred_fallthru
      _
    %p6578 = scmp.le.s32.totalorder 2, %s12
    // Predicated region
    $region45: #{block_forward.5} parent=5 // pred_check
      %p6579 = pneg %p6578
    $region46: #{block_forward.5} parent=5 // pred_check_branch
      %6581 = sbr.rel (%p6579) target = $region48
    $region47: #{block_forward.5} parent=5 // pred_region
      %s6582 = ssub.s32 %s12, 2
      // Predicated region
      $region49: #{block_forward.5} parent=47 // pred_check
        %p6583 = pneg %p130
      $region50: #{block_forward.5} parent=47 // pred_check_branch
        %6585 = sbr.rel (%p6583) target = $region52
      $region51: #{block_forward.5} parent=47 // pred_region
        %p6586 = scmp.lt.s32.totalorder %s18, 1
        %s6587 = scalar_select %p6586, %s18, 1
        %s6588 = smul.addr %s6587, 32
        %s6589 = smul.addr %s6588, 4
        %s6590 = scalar_lea.vmem %s4, %s6589
      $region52: #{block_forward.5} parent=47 // pred_fallthru
        _
      // Predicated region
      $region53: #{block_forward.5} parent=47 // pred_check
        %p6591 = pneg %p156
      $region54: #{block_forward.5} parent=47 // pred_check_branch
        %6593 = sbr.rel (%p6591) target = $region56
      $region55: #{block_forward.5} parent=47 // pred_region
        %p6594 = scmp.lt.s32.totalorder %s18, 1
        %s6595 = scalar_select %p6594, %s18, 1
        %s6596 = smul.addr %s6595, 2
        %s6597 = scalar_lea.vmem %s5, %s6596
      $region56: #{block_forward.5} parent=47 // pred_fallthru
        _
    $region48: #{block_forward.5} parent=5 // pred_fallthru
      _
  $region6: #{block_forward.5} parent=0 // loop_footer
    %s16 = sadd.s32 1, %s12
  $region7: #{block_forward.5} parent=0 // loop_footer_branch
    %11 = sbr.rel target = $region3
  $region8: #{block_forward.5} parent=0 // loop_exit
    _

</llo_original>
